<compile_context>
chip_gen: v7x
topology: tpu7x:2x2x1
jax: 0.10.0
libtpu: 0.0.40
codegen_flags: <defaults>
</compile_context>

<pallas_src>
import math

import jax
import jax.numpy as jnp
from jax.experimental import pallas as pl
from jax.experimental.pallas import tpu as pltpu

# ----------------------------- config (small) -------------------------------
B, S = 2, 8            # batch, sequence
H = 32                 # hidden_size
VOCAB = 100
PAD_IDX = 1
RB_LAYERS = 2          # synthetic "bert" depth
RB_HEADS = 4           # encoder attention heads (H // RB_HEADS = 8)
FFN = 64               # encoder intermediate size
MHA_HEADS = 8          # slf_attn heads (per module __init__)
D_K = 64               # slf_attn d_k
D_V = 64               # slf_attn d_v
NUM_LABELS = 3
CLS_PAD = 128          # lane-dense classifier output width (sliced outside)
NEG_INF = -1e9


# ------------------------- fused forward Pallas kernel ----------------------

def _fused_forward_kernel(
    bias_ref,                       # (B, 1, S)   additive mask bias for encoder
    x_ref,                          # (B, S, H)   summed embeddings (pre-LN)
    emb_g_ref, emb_b_ref,           # (1, H)
    wqkv_ref, bqkv_ref,             # (L, H, 3H), (L, 1, 3H)
    wo_ref, bo_ref,                 # (L, H, H),  (L, 1, H)
    ln1g_ref, ln1b_ref,             # (L, 1, H)
    wi_ref, bi_ref,                 # (L, H, FFN), (L, 1, FFN)
    wo2_ref, bo2_ref,               # (L, FFN, H), (L, 1, H)
    ln2g_ref, ln2b_ref,             # (L, 1, H)
    mha_wqkv_ref,                   # (H, 3 * MHA_HEADS * D_K) = (32, 1536)
    mha_fc_ref,                     # (MHA_HEADS * D_V, H)     = (512, 32)
    mha_g_ref, mha_b_ref,           # (1, H)
    cls_w_ref, cls_b_ref,           # (H, CLS_PAD), (1, CLS_PAD)
    out_ref,                        # (B, CLS_PAD)
):
    f32 = jnp.float32

    def layernorm(x, g, b, eps):
        mu = jnp.mean(x, axis=-1, keepdims=True)
        xc = x - mu
        var = jnp.mean(xc * xc, axis=-1, keepdims=True)
        return xc * jax.lax.rsqrt(var + eps) * g + b

    def softmax(s):
        s = s - jnp.max(s, axis=-1, keepdims=True)
        e = jnp.exp(s)
        return e * pl.reciprocal(jnp.sum(e, axis=-1, keepdims=True), approx=True)

    def mha_block(x2, wqkv, w_out, n_heads, d_k, d_v, scale, bias=None, bqkv=None):
        """Fused-QKV multi-head attention; merge-heads fused into w_out projection."""
        qkv = jnp.dot(x2, wqkv, preferred_element_type=f32)        # (B*S, nH*(2dk+dv))
        if bqkv is not None:
            qkv = qkv + bqkv
        qkv3 = qkv.reshape(B, S, n_heads * (2 * d_k + d_v))
        koff = n_heads * d_k
        voff = 2 * n_heads * d_k
        acc = jnp.zeros((B * S, w_out.shape[-1]), f32)
        for h in range(n_heads):                                   # static unrolled loop
            qh = qkv3[:, :, h * d_k:(h + 1) * d_k]                 # (B, S, d_k)
            kh = qkv3[:, :, koff + h * d_k:koff + (h + 1) * d_k]   # (B, S, d_k)
            vh = qkv3[:, :, voff + h * d_v:voff + (h + 1) * d_v]   # (B, S, d_v)
            # contract last dims directly — no k transpose materialized.
            s = jnp.einsum('bqd,bkd->bqk', qh, kh,
                           preferred_element_type=f32) * scale     # (B, S, S)
            if bias is not None:
                s = s + bias                                        # (B, 1, S) broadcast
            p_att = softmax(s)
            ctx = jnp.einsum('bqk,bkd->bqd', p_att, vh,
                             preferred_element_type=f32)            # (B, S, d_v)
            # merge heads fused into the output projection (no concat/transpose).
            acc = acc + jnp.dot(ctx.reshape(B * S, d_v),
                                w_out[h * d_v:(h + 1) * d_v, :],
                                preferred_element_type=f32)
        return acc                                                  # (B*S, out_dim)

    bias = bias_ref[...]                                            # (B, 1, S)

    # ---- embeddings LayerNorm (no zero-residual add) ----
    x2 = layernorm(x_ref[...].reshape(B * S, H),
                   emb_g_ref[...], emb_b_ref[...], 1e-12)

    # ---- synthetic BERT encoder layers ----
    hd = H // RB_HEADS
    rb_scale = 1.0 / math.sqrt(hd)
    for l in range(RB_LAYERS):                                      # static unrolled
        attn = mha_block(x2, wqkv_ref[l], wo_ref[l], RB_HEADS, hd, hd,
                         rb_scale, bias=bias, bqkv=bqkv_ref[l])
        attn = attn + bo_ref[l]
        x2 = layernorm(attn + x2, ln1g_ref[l], ln1b_ref[l], 1e-12)
        ff = jnp.dot(x2, wi_ref[l], preferred_element_type=f32) + bi_ref[l]
        ff = 0.5 * ff * (1.0 + jax.lax.erf(ff * 0.7071067811865475))  # exact gelu
        ff = jnp.dot(ff, wo2_ref[l], preferred_element_type=f32) + bo2_ref[l]
        x2 = layernorm(ff + x2, ln2g_ref[l], ln2b_ref[l], 1e-12)

    # ---- slf_attn: MultiHeadAttention(8, H, 64, 64), post-norm, no mask ----
    residual = x2
    attn = mha_block(x2, mha_wqkv_ref[...], mha_fc_ref[...],
                     MHA_HEADS, D_K, D_V, 1.0 / math.sqrt(D_K),
                     bias=None, bqkv=None)                          # fc has no bias
    x2 = layernorm(attn + residual, mha_g_ref[...], mha_b_ref[...], 1e-6)

    # ---- head: sum over sequence -> dropout(eval)=id -> relu -> linear ----
    h_n = jnp.maximum(jnp.sum(x2.reshape(B, S, H), axis=1), 0.0)    # (B, H)
    out_ref[...] = (jnp.dot(h_n, cls_w_ref[...], preferred_element_type=f32)
                    + cls_b_ref[...])                               # (B, CLS_PAD)


def _full_spec(shape):
    zeros = (0,) * len(shape)
    return pl.BlockSpec(shape, lambda i, _z=zeros: _z)


def fused_forward(p, attn_bias, x_emb):
    args = (
        attn_bias, x_emb,
        p["emb_ln_g"], p["emb_ln_b"],
        p["wqkv"], p["bqkv"], p["wo"], p["bo"], p["ln1_g"], p["ln1_b"],
        p["wi"], p["bi"], p["wo2"], p["bo2"], p["ln2_g"], p["ln2_b"],
        p["mha_wqkv"], p["mha_fc"], p["mha_ln_g"], p["mha_ln_b"],
        p["cls_w"], p["cls_b"],
    )
    return pl.pallas_call(
        _fused_forward_kernel,
        out_shape=jax.ShapeDtypeStruct((B, CLS_PAD), jnp.float32),
        grid=(1,),
        in_specs=[_full_spec(a.shape) for a in args],
        out_specs=_full_spec((B, CLS_PAD)),
        compiler_params=pltpu.CompilerParams(dimension_semantics=("arbitrary",)),
    )(*args)


# --------------------------- params (synthetic) ------------------------------

def _xavier(key, shape, gain=1.0):
    fan_in, fan_out = shape[0], shape[1]
    std = gain * math.sqrt(2.0 / (fan_in + fan_out))
    return std * jax.random.normal(key, shape, jnp.float32)


def init_params(key):
    keys = iter(jax.random.split(key, 256))
    nk = lambda: next(keys)
    p = {}
    # --- synthetic bert embeddings ---
    p["word_emb"] = 0.02 * jax.random.normal(nk(), (VOCAB, H), jnp.float32)
    p["pos_emb"] = 0.02 * jax.random.normal(nk(), (S + 2, H), jnp.float32)
    p["type_emb"] = 0.02 * jax.random.normal(nk(), (H,), jnp.float32)
    p["emb_ln_g"] = jnp.ones((1, H), jnp.float32)
    p["emb_ln_b"] = jnp.zeros((1, H), jnp.float32)

    # --- encoder layers, stacked along a leading layer axis ---
    stacks = {k: [] for k in ["wqkv", "bqkv", "wo", "bo", "ln1_g", "ln1_b",
                              "wi", "bi", "wo2", "bo2", "ln2_g", "ln2_b"]}
    for _ in range(RB_LAYERS):
        wq = _xavier(nk(), (H, H))
        wk = _xavier(nk(), (H, H))
        wv = _xavier(nk(), (H, H))
        stacks["wqkv"].append(jnp.concatenate([wq, wk, wv], axis=1))   # (H, 3H) fused QKV
        stacks["bqkv"].append(jnp.zeros((1, 3 * H), jnp.float32))
        stacks["wo"].append(_xavier(nk(), (H, H)))
        stacks["bo"].append(jnp.zeros((1, H), jnp.float32))
        stacks["ln1_g"].append(jnp.ones((1, H), jnp.float32))
        stacks["ln1_b"].append(jnp.zeros((1, H), jnp.float32))
        stacks["wi"].append(_xavier(nk(), (H, FFN)))
        stacks["bi"].append(jnp.zeros((1, FFN), jnp.float32))
        stacks["wo2"].append(_xavier(nk(), (FFN, H)))
        stacks["bo2"].append(jnp.zeros((1, H), jnp.float32))
        stacks["ln2_g"].append(jnp.ones((1, H), jnp.float32))
        stacks["ln2_b"].append(jnp.zeros((1, H), jnp.float32))
    for k, v in stacks.items():
        p[k] = jnp.stack(v)                                            # (L, ...)

    # --- slf_attn MultiHeadAttention(8, H, 64, 64), fused QKV, no biases ---
    p["mha_wqkv"] = jnp.concatenate(
        [_xavier(nk(), (H, MHA_HEADS * D_K)),
         _xavier(nk(), (H, MHA_HEADS * D_K)),
         _xavier(nk(), (H, MHA_HEADS * D_V))], axis=1)                 # (H, 1536)
    p["mha_fc"] = _xavier(nk(), (MHA_HEADS * D_V, H))                  # (512, H)
    p["mha_ln_g"] = jnp.ones((1, H), jnp.float32)
    p["mha_ln_b"] = jnp.zeros((1, H), jnp.float32)

    # --- final classifier, padded to 128 lanes for lane-dense stores ---
    cls_w = _xavier(nk(), (H, NUM_LABELS))
    p["cls_w"] = jnp.zeros((H, CLS_PAD), jnp.float32).at[:, :NUM_LABELS].set(cls_w)
    p["cls_b"] = jnp.zeros((1, CLS_PAD), jnp.float32)
    return p


# --------------------------- forward (glue in JAX) ---------------------------

@jax.jit
def joint_forward(p, inputs, lens, mask, labels):
    del lens, labels                                                   # unused by forward
    # embedding gathers stay in XLA (tiny); everything else is one fused kernel.
    m = mask.astype(jnp.int32)
    pos_ids = (jnp.cumsum(m, axis=1) * m + PAD_IDX).astype(jnp.int32)  # (B, S)
    x_emb = (p["word_emb"][inputs] + p["pos_emb"][pos_ids]
             + p["type_emb"]).astype(jnp.float32)                      # (B, S, H)
    attn_bias = ((1.0 - mask) * NEG_INF)[:, None, :].astype(jnp.float32)  # (B, 1, S)
    logits_pad = fused_forward(p, attn_bias, x_emb)                    # (B, CLS_PAD)
    return logits_pad[:, :NUM_LABELS]


# ---------------------------------- main -------------------------------------

if __name__ == "__main__":
    key = jax.random.PRNGKey(0)
    kp, ki = jax.random.split(key, 2)

    params = init_params(kp)

    inputs = jax.random.randint(ki, (B, S), 2, VOCAB, dtype=jnp.int32)   # token ids
    lens = jnp.array([S, S - 2], dtype=jnp.int32)
    mask = (jnp.arange(S)[None, :] < lens[:, None]).astype(jnp.float32)  # (B, S)
    labels = jnp.zeros((B,), dtype=jnp.int32)

    logits = joint_forward(params, inputs, lens, mask, labels)
    jax.block_until_ready(logits)
    assert logits.shape == (B, NUM_LABELS)
    print("KERNEL_OK")
</pallas_src>

<mosaic_0001>
module attributes {stable_mosaic.version = 11 : i64} {
  func.func @_fused_forward_kernel(%arg0: i32, %arg1: memref<2x1x8xf32, #tpu.memory_space<vmem>>, %arg2: memref<2x8x32xf32, #tpu.memory_space<vmem>>, %arg3: memref<1x32xf32, #tpu.memory_space<vmem>>, %arg4: memref<1x32xf32, #tpu.memory_space<vmem>>, %arg5: memref<2x32x96xf32, #tpu.memory_space<vmem>>, %arg6: memref<2x1x96xf32, #tpu.memory_space<vmem>>, %arg7: memref<2x32x32xf32, #tpu.memory_space<vmem>>, %arg8: memref<2x1x32xf32, #tpu.memory_space<vmem>>, %arg9: memref<2x1x32xf32, #tpu.memory_space<vmem>>, %arg10: memref<2x1x32xf32, #tpu.memory_space<vmem>>, %arg11: memref<2x32x64xf32, #tpu.memory_space<vmem>>, %arg12: memref<2x1x64xf32, #tpu.memory_space<vmem>>, %arg13: memref<2x64x32xf32, #tpu.memory_space<vmem>>, %arg14: memref<2x1x32xf32, #tpu.memory_space<vmem>>, %arg15: memref<2x1x32xf32, #tpu.memory_space<vmem>>, %arg16: memref<2x1x32xf32, #tpu.memory_space<vmem>>, %arg17: memref<32x1536xf32, #tpu.memory_space<vmem>>, %arg18: memref<512x32xf32, #tpu.memory_space<vmem>>, %arg19: memref<1x32xf32, #tpu.memory_space<vmem>>, %arg20: memref<1x32xf32, #tpu.memory_space<vmem>>, %arg21: memref<32x128xf32, #tpu.memory_space<vmem>>, %arg22: memref<1x128xf32, #tpu.memory_space<vmem>>, %arg23: memref<2x128xf32, #tpu.memory_space<vmem>>) attributes {dimension_semantics = [#tpu.dimension_semantics<arbitrary>], iteration_bounds = array<i64: 1>, scalar_prefetch = 0 : i64, scratch_operands = 0 : i64, tpu.core_type = #tpu.core_type<tc>, window_params = [{pipeline_mode = #tpu.pipeline_mode<synchronous>, transform_indices = @transform_0, window_bounds = array<i64: 2, 1, 8>}, {pipeline_mode = #tpu.pipeline_mode<synchronous>, transform_indices = @transform_1, window_bounds = array<i64: 2, 8, 32>}, {pipeline_mode = #tpu.pipeline_mode<synchronous>, transform_indices = @transform_2, window_bounds = array<i64: 1, 32>}, {pipeline_mode = #tpu.pipeline_mode<synchronous>, transform_indices = @transform_3, window_bounds = array<i64: 1, 32>}, {pipeline_mode = #tpu.pipeline_mode<synchronous>, transform_indices = @transform_4, window_bounds = array<i64: 2, 32, 96>}, {pipeline_mode = #tpu.pipeline_mode<synchronous>, transform_indices = @transform_5, window_bounds = array<i64: 2, 1, 96>}, {pipeline_mode = #tpu.pipeline_mode<synchronous>, transform_indices = @transform_6, window_bounds = array<i64: 2, 32, 32>}, {pipeline_mode = #tpu.pipeline_mode<synchronous>, transform_indices = @transform_7, window_bounds = array<i64: 2, 1, 32>}, {pipeline_mode = #tpu.pipeline_mode<synchronous>, transform_indices = @transform_8, window_bounds = array<i64: 2, 1, 32>}, {pipeline_mode = #tpu.pipeline_mode<synchronous>, transform_indices = @transform_9, window_bounds = array<i64: 2, 1, 32>}, {pipeline_mode = #tpu.pipeline_mode<synchronous>, transform_indices = @transform_10, window_bounds = array<i64: 2, 32, 64>}, {pipeline_mode = #tpu.pipeline_mode<synchronous>, transform_indices = @transform_11, window_bounds = array<i64: 2, 1, 64>}, {pipeline_mode = #tpu.pipeline_mode<synchronous>, transform_indices = @transform_12, window_bounds = array<i64: 2, 64, 32>}, {pipeline_mode = #tpu.pipeline_mode<synchronous>, transform_indices = @transform_13, window_bounds = array<i64: 2, 1, 32>}, {pipeline_mode = #tpu.pipeline_mode<synchronous>, transform_indices = @transform_14, window_bounds = array<i64: 2, 1, 32>}, {pipeline_mode = #tpu.pipeline_mode<synchronous>, transform_indices = @transform_15, window_bounds = array<i64: 2, 1, 32>}, {pipeline_mode = #tpu.pipeline_mode<synchronous>, transform_indices = @transform_16, window_bounds = array<i64: 32, 1536>}, {pipeline_mode = #tpu.pipeline_mode<synchronous>, transform_indices = @transform_17, window_bounds = array<i64: 512, 32>}, {pipeline_mode = #tpu.pipeline_mode<synchronous>, transform_indices = @transform_18, window_bounds = array<i64: 1, 32>}, {pipeline_mode = #tpu.pipeline_mode<synchronous>, transform_indices = @transform_19, window_bounds = array<i64: 1, 32>}, {pipeline_mode = #tpu.pipeline_mode<synchronous>, transform_indices = @transform_20, window_bounds = array<i64: 32, 128>}, {pipeline_mode = #tpu.pipeline_mode<synchronous>, transform_indices = @transform_21, window_bounds = array<i64: 1, 128>}, {pipeline_mode = #tpu.pipeline_mode<synchronous>, transform_indices = @transform_22, window_bounds = array<i64: 2, 128>}]} {
    %c0 = arith.constant 0 : index
    %c0_0 = arith.constant 0 : index
    %c0_1 = arith.constant 0 : index
    %0 = vector.load %arg1[%c0, %c0_0, %c0_1] : memref<2x1x8xf32, #tpu.memory_space<vmem>>, vector<2x1x8xf32>
    %c0_2 = arith.constant 0 : index
    %c0_3 = arith.constant 0 : index
    %c0_4 = arith.constant 0 : index
    %1 = vector.load %arg2[%c0_2, %c0_3, %c0_4] : memref<2x8x32xf32, #tpu.memory_space<vmem>>, vector<2x8x32xf32>
    %2 = vector.shape_cast %1 : vector<2x8x32xf32> to vector<16x32xf32>
    %c0_5 = arith.constant 0 : index
    %c0_6 = arith.constant 0 : index
    %3 = vector.load %arg3[%c0_5, %c0_6] : memref<1x32xf32, #tpu.memory_space<vmem>>, vector<1x32xf32>
    %c0_7 = arith.constant 0 : index
    %c0_8 = arith.constant 0 : index
    %4 = vector.load %arg4[%c0_7, %c0_8] : memref<1x32xf32, #tpu.memory_space<vmem>>, vector<1x32xf32>
    %cst = arith.constant dense<0.000000e+00> : vector<16xf32>
    %5 = vector.multi_reduction <add>, %2, %cst [1] : vector<16x32xf32> to vector<16xf32>
    %6 = vector.shape_cast %5 : vector<16xf32> to vector<16x1xf32>
    %cst_9 = arith.constant 3.200000e+01 : f32
    %7 = vector.broadcast %cst_9 : f32 to vector<16x1xf32>
    %8 = arith.divf %6, %7 : vector<16x1xf32>
    %9 = vector.broadcast %8 : vector<16x1xf32> to vector<16x32xf32>
    %10 = arith.subf %2, %9 : vector<16x32xf32>
    %11 = arith.mulf %10, %10 : vector<16x32xf32>
    %cst_10 = arith.constant dense<0.000000e+00> : vector<16xf32>
    %12 = vector.multi_reduction <add>, %11, %cst_10 [1] : vector<16x32xf32> to vector<16xf32>
    %13 = vector.shape_cast %12 : vector<16xf32> to vector<16x1xf32>
    %cst_11 = arith.constant 3.200000e+01 : f32
    %14 = vector.broadcast %cst_11 : f32 to vector<16x1xf32>
    %15 = arith.divf %13, %14 : vector<16x1xf32>
    %cst_12 = arith.constant 9.99999996E-13 : f32
    %16 = vector.broadcast %cst_12 : f32 to vector<16x1xf32>
    %17 = arith.addf %15, %16 : vector<16x1xf32>
    %18 = math.rsqrt %17 : vector<16x1xf32>
    %19 = vector.broadcast %18 : vector<16x1xf32> to vector<16x32xf32>
    %20 = arith.mulf %10, %19 : vector<16x32xf32>
    %21 = vector.broadcast %3 : vector<1x32xf32> to vector<16x32xf32>
    %22 = arith.mulf %20, %21 : vector<16x32xf32>
    %23 = vector.broadcast %4 : vector<1x32xf32> to vector<16x32xf32>
    %24 = arith.addf %22, %23 : vector<16x32xf32>
    %c0_13 = arith.constant 0 : index
    %c0_14 = arith.constant 0 : index
    %c0_15 = arith.constant 0 : index
    %25 = vector.load %arg5[%c0_13, %c0_14, %c0_15] : memref<2x32x96xf32, #tpu.memory_space<vmem>>, vector<1x32x96xf32>
    %26 = vector.shape_cast %25 : vector<1x32x96xf32> to vector<32x96xf32>
    %c0_16 = arith.constant 0 : index
    %c0_17 = arith.constant 0 : index
    %c0_18 = arith.constant 0 : index
    %27 = vector.load %arg7[%c0_16, %c0_17, %c0_18] : memref<2x32x32xf32, #tpu.memory_space<vmem>>, vector<1x32x32xf32>
    %28 = vector.shape_cast %27 : vector<1x32x32xf32> to vector<32x32xf32>
    %c0_19 = arith.constant 0 : index
    %c0_20 = arith.constant 0 : index
    %c0_21 = arith.constant 0 : index
    %29 = vector.load %arg6[%c0_19, %c0_20, %c0_21] : memref<2x1x96xf32, #tpu.memory_space<vmem>>, vector<1x1x96xf32>
    %30 = vector.shape_cast %29 : vector<1x1x96xf32> to vector<1x96xf32>
    %cst_22 = arith.constant dense<0.000000e+00> : vector<16x96xf32>
    %31 = tpu.matmul %24, %26, %cst_22 {dimension_numbers = #tpu.dot_dimension_numbers<[1], [0], [0], [1], [0, 0, 1, 1], [], []>} : vector<16x32xf32>, vector<32x96xf32>, vector<16x96xf32> -> vector<16x96xf32>
    %32 = vector.broadcast %30 : vector<1x96xf32> to vector<16x96xf32>
    %33 = arith.addf %31, %32 : vector<16x96xf32>
    %34 = vector.shape_cast %33 : vector<16x96xf32> to vector<2x8x96xf32>
    %cst_23 = arith.constant 0.000000e+00 : f32
    %35 = vector.broadcast %cst_23 : f32 to vector<16x32xf32>
    %36 = vector.extract_strided_slice %34 {offsets = [0, 0, 0], sizes = [2, 8, 8], strides = [1, 1, 1]} : vector<2x8x96xf32> to vector<2x8x8xf32>
    %37 = vector.extract_strided_slice %34 {offsets = [0, 0, 32], sizes = [2, 8, 8], strides = [1, 1, 1]} : vector<2x8x96xf32> to vector<2x8x8xf32>
    %38 = vector.extract_strided_slice %34 {offsets = [0, 0, 64], sizes = [2, 8, 8], strides = [1, 1, 1]} : vector<2x8x96xf32> to vector<2x8x8xf32>
    "tpu.trace_start"() <{level = 10 : i32, message = "bqd,bkd->bqk"}> : () -> ()
    %cst_24 = arith.constant dense<0.000000e+00> : vector<2x8x8xf32>
    %39 = tpu.matmul %36, %37, %cst_24 {dimension_numbers = #tpu.dot_dimension_numbers<[2], [2], [1], [1], [0, 0, 0, 1, 1, 1], [0], [0]>} : vector<2x8x8xf32>, vector<2x8x8xf32>, vector<2x8x8xf32> -> vector<2x8x8xf32>
    "tpu.trace_stop"() : () -> ()
    %cst_25 = arith.constant 0.353553385 : f32
    %40 = vector.broadcast %cst_25 : f32 to vector<2x8x8xf32>
    %41 = arith.mulf %39, %40 : vector<2x8x8xf32>
    %42 = vector.broadcast %0 : vector<2x1x8xf32> to vector<2x8x8xf32>
    %43 = arith.addf %41, %42 : vector<2x8x8xf32>
    %cst_26 = arith.constant dense<0xFF800000> : vector<2x8xf32>
    %44 = vector.multi_reduction <maximumf>, %43, %cst_26 [2] : vector<2x8x8xf32> to vector<2x8xf32>
    %45 = vector.shape_cast %44 : vector<2x8xf32> to vector<2x8x1xf32>
    %46 = vector.broadcast %45 : vector<2x8x1xf32> to vector<2x8x8xf32>
    %47 = arith.subf %43, %46 : vector<2x8x8xf32>
    %48 = math.exp %47 : vector<2x8x8xf32>
    %cst_27 = arith.constant dense<0.000000e+00> : vector<2x8xf32>
    %49 = vector.multi_reduction <add>, %48, %cst_27 [2] : vector<2x8x8xf32> to vector<2x8xf32>
    %50 = vector.shape_cast %49 : vector<2x8xf32> to vector<2x8x1xf32>
    %51 = tpu.reciprocal %50 {approx = true} : vector<2x8x1xf32> -> vector<2x8x1xf32>
    %52 = vector.broadcast %51 : vector<2x8x1xf32> to vector<2x8x8xf32>
    %53 = arith.mulf %48, %52 : vector<2x8x8xf32>
    "tpu.trace_start"() <{level = 10 : i32, message = "bqk,bkd->bqd"}> : () -> ()
    %cst_28 = arith.constant dense<0.000000e+00> : vector<2x8x8xf32>
    %54 = tpu.matmul %53, %38, %cst_28 {dimension_numbers = #tpu.dot_dimension_numbers<[2], [1], [1], [2], [0, 0, 0, 1, 1, 2], [0], [0]>} : vector<2x8x8xf32>, vector<2x8x8xf32>, vector<2x8x8xf32> -> vector<2x8x8xf32>
    "tpu.trace_stop"() : () -> ()
    %55 = vector.shape_cast %54 : vector<2x8x8xf32> to vector<16x8xf32>
    %56 = vector.extract_strided_slice %28 {offsets = [0, 0], sizes = [8, 32], strides = [1, 1]} : vector<32x32xf32> to vector<8x32xf32>
    %cst_29 = arith.constant dense<0.000000e+00> : vector<16x32xf32>
    %57 = tpu.matmul %55, %56, %cst_29 {dimension_numbers = #tpu.dot_dimension_numbers<[1], [0], [0], [1], [0, 0, 1, 1], [], []>} : vector<16x8xf32>, vector<8x32xf32>, vector<16x32xf32> -> vector<16x32xf32>
    %58 = arith.addf %35, %57 : vector<16x32xf32>
    %59 = vector.extract_strided_slice %34 {offsets = [0, 0, 8], sizes = [2, 8, 8], strides = [1, 1, 1]} : vector<2x8x96xf32> to vector<2x8x8xf32>
    %60 = vector.extract_strided_slice %34 {offsets = [0, 0, 40], sizes = [2, 8, 8], strides = [1, 1, 1]} : vector<2x8x96xf32> to vector<2x8x8xf32>
    %61 = vector.extract_strided_slice %34 {offsets = [0, 0, 72], sizes = [2, 8, 8], strides = [1, 1, 1]} : vector<2x8x96xf32> to vector<2x8x8xf32>
    "tpu.trace_start"() <{level = 10 : i32, message = "bqd,bkd->bqk"}> : () -> ()
    %cst_30 = arith.constant dense<0.000000e+00> : vector<2x8x8xf32>
    %62 = tpu.matmul %59, %60, %cst_30 {dimension_numbers = #tpu.dot_dimension_numbers<[2], [2], [1], [1], [0, 0, 0, 1, 1, 1], [0], [0]>} : vector<2x8x8xf32>, vector<2x8x8xf32>, vector<2x8x8xf32> -> vector<2x8x8xf32>
    "tpu.trace_stop"() : () -> ()
    %cst_31 = arith.constant 0.353553385 : f32
    %63 = vector.broadcast %cst_31 : f32 to vector<2x8x8xf32>
    %64 = arith.mulf %62, %63 : vector<2x8x8xf32>
    %65 = vector.broadcast %0 : vector<2x1x8xf32> to vector<2x8x8xf32>
    %66 = arith.addf %64, %65 : vector<2x8x8xf32>
    %cst_32 = arith.constant dense<0xFF800000> : vector<2x8xf32>
    %67 = vector.multi_reduction <maximumf>, %66, %cst_32 [2] : vector<2x8x8xf32> to vector<2x8xf32>
    %68 = vector.shape_cast %67 : vector<2x8xf32> to vector<2x8x1xf32>
    %69 = vector.broadcast %68 : vector<2x8x1xf32> to vector<2x8x8xf32>
    %70 = arith.subf %66, %69 : vector<2x8x8xf32>
    %71 = math.exp %70 : vector<2x8x8xf32>
    %cst_33 = arith.constant dense<0.000000e+00> : vector<2x8xf32>
    %72 = vector.multi_reduction <add>, %71, %cst_33 [2] : vector<2x8x8xf32> to vector<2x8xf32>
    %73 = vector.shape_cast %72 : vector<2x8xf32> to vector<2x8x1xf32>
    %74 = tpu.reciprocal %73 {approx = true} : vector<2x8x1xf32> -> vector<2x8x1xf32>
    %75 = vector.broadcast %74 : vector<2x8x1xf32> to vector<2x8x8xf32>
    %76 = arith.mulf %71, %75 : vector<2x8x8xf32>
    "tpu.trace_start"() <{level = 10 : i32, message = "bqk,bkd->bqd"}> : () -> ()
    %cst_34 = arith.constant dense<0.000000e+00> : vector<2x8x8xf32>
    %77 = tpu.matmul %76, %61, %cst_34 {dimension_numbers = #tpu.dot_dimension_numbers<[2], [1], [1], [2], [0, 0, 0, 1, 1, 2], [0], [0]>} : vector<2x8x8xf32>, vector<2x8x8xf32>, vector<2x8x8xf32> -> vector<2x8x8xf32>
    "tpu.trace_stop"() : () -> ()
    %78 = vector.shape_cast %77 : vector<2x8x8xf32> to vector<16x8xf32>
    %79 = vector.extract_strided_slice %28 {offsets = [8, 0], sizes = [8, 32], strides = [1, 1]} : vector<32x32xf32> to vector<8x32xf32>
    %cst_35 = arith.constant dense<0.000000e+00> : vector<16x32xf32>
    %80 = tpu.matmul %78, %79, %cst_35 {dimension_numbers = #tpu.dot_dimension_numbers<[1], [0], [0], [1], [0, 0, 1, 1], [], []>} : vector<16x8xf32>, vector<8x32xf32>, vector<16x32xf32> -> vector<16x32xf32>
    %81 = arith.addf %58, %80 : vector<16x32xf32>
    %82 = vector.extract_strided_slice %34 {offsets = [0, 0, 16], sizes = [2, 8, 8], strides = [1, 1, 1]} : vector<2x8x96xf32> to vector<2x8x8xf32>
    %83 = vector.extract_strided_slice %34 {offsets = [0, 0, 48], sizes = [2, 8, 8], strides = [1, 1, 1]} : vector<2x8x96xf32> to vector<2x8x8xf32>
    %84 = vector.extract_strided_slice %34 {offsets = [0, 0, 80], sizes = [2, 8, 8], strides = [1, 1, 1]} : vector<2x8x96xf32> to vector<2x8x8xf32>
    "tpu.trace_start"() <{level = 10 : i32, message = "bqd,bkd->bqk"}> : () -> ()
    %cst_36 = arith.constant dense<0.000000e+00> : vector<2x8x8xf32>
    %85 = tpu.matmul %82, %83, %cst_36 {dimension_numbers = #tpu.dot_dimension_numbers<[2], [2], [1], [1], [0, 0, 0, 1, 1, 1], [0], [0]>} : vector<2x8x8xf32>, vector<2x8x8xf32>, vector<2x8x8xf32> -> vector<2x8x8xf32>
    "tpu.trace_stop"() : () -> ()
    %cst_37 = arith.constant 0.353553385 : f32
    %86 = vector.broadcast %cst_37 : f32 to vector<2x8x8xf32>
    %87 = arith.mulf %85, %86 : vector<2x8x8xf32>
    %88 = vector.broadcast %0 : vector<2x1x8xf32> to vector<2x8x8xf32>
    %89 = arith.addf %87, %88 : vector<2x8x8xf32>
    %cst_38 = arith.constant dense<0xFF800000> : vector<2x8xf32>
    %90 = vector.multi_reduction <maximumf>, %89, %cst_38 [2] : vector<2x8x8xf32> to vector<2x8xf32>
    %91 = vector.shape_cast %90 : vector<2x8xf32> to vector<2x8x1xf32>
    %92 = vector.broadcast %91 : vector<2x8x1xf32> to vector<2x8x8xf32>
    %93 = arith.subf %89, %92 : vector<2x8x8xf32>
    %94 = math.exp %93 : vector<2x8x8xf32>
    %cst_39 = arith.constant dense<0.000000e+00> : vector<2x8xf32>
    %95 = vector.multi_reduction <add>, %94, %cst_39 [2] : vector<2x8x8xf32> to vector<2x8xf32>
    %96 = vector.shape_cast %95 : vector<2x8xf32> to vector<2x8x1xf32>
    %97 = tpu.reciprocal %96 {approx = true} : vector<2x8x1xf32> -> vector<2x8x1xf32>
    %98 = vector.broadcast %97 : vector<2x8x1xf32> to vector<2x8x8xf32>
    %99 = arith.mulf %94, %98 : vector<2x8x8xf32>
    "tpu.trace_start"() <{level = 10 : i32, message = "bqk,bkd->bqd"}> : () -> ()
    %cst_40 = arith.constant dense<0.000000e+00> : vector<2x8x8xf32>
    %100 = tpu.matmul %99, %84, %cst_40 {dimension_numbers = #tpu.dot_dimension_numbers<[2], [1], [1], [2], [0, 0, 0, 1, 1, 2], [0], [0]>} : vector<2x8x8xf32>, vector<2x8x8xf32>, vector<2x8x8xf32> -> vector<2x8x8xf32>
    "tpu.trace_stop"() : () -> ()
    %101 = vector.shape_cast %100 : vector<2x8x8xf32> to vector<16x8xf32>
    %102 = vector.extract_strided_slice %28 {offsets = [16, 0], sizes = [8, 32], strides = [1, 1]} : vector<32x32xf32> to vector<8x32xf32>
    %cst_41 = arith.constant dense<0.000000e+00> : vector<16x32xf32>
    %103 = tpu.matmul %101, %102, %cst_41 {dimension_numbers = #tpu.dot_dimension_numbers<[1], [0], [0], [1], [0, 0, 1, 1], [], []>} : vector<16x8xf32>, vector<8x32xf32>, vector<16x32xf32> -> vector<16x32xf32>
    %104 = arith.addf %81, %103 : vector<16x32xf32>
    %105 = vector.extract_strided_slice %34 {offsets = [0, 0, 24], sizes = [2, 8, 8], strides = [1, 1, 1]} : vector<2x8x96xf32> to vector<2x8x8xf32>
    %106 = vector.extract_strided_slice %34 {offsets = [0, 0, 56], sizes = [2, 8, 8], strides = [1, 1, 1]} : vector<2x8x96xf32> to vector<2x8x8xf32>
    %107 = vector.extract_strided_slice %34 {offsets = [0, 0, 88], sizes = [2, 8, 8], strides = [1, 1, 1]} : vector<2x8x96xf32> to vector<2x8x8xf32>
    "tpu.trace_start"() <{level = 10 : i32, message = "bqd,bkd->bqk"}> : () -> ()
    %cst_42 = arith.constant dense<0.000000e+00> : vector<2x8x8xf32>
    %108 = tpu.matmul %105, %106, %cst_42 {dimension_numbers = #tpu.dot_dimension_numbers<[2], [2], [1], [1], [0, 0, 0, 1, 1, 1], [0], [0]>} : vector<2x8x8xf32>, vector<2x8x8xf32>, vector<2x8x8xf32> -> vector<2x8x8xf32>
    "tpu.trace_stop"() : () -> ()
    %cst_43 = arith.constant 0.353553385 : f32
    %109 = vector.broadcast %cst_43 : f32 to vector<2x8x8xf32>
    %110 = arith.mulf %108, %109 : vector<2x8x8xf32>
    %111 = vector.broadcast %0 : vector<2x1x8xf32> to vector<2x8x8xf32>
    %112 = arith.addf %110, %111 : vector<2x8x8xf32>
    %cst_44 = arith.constant dense<0xFF800000> : vector<2x8xf32>
    %113 = vector.multi_reduction <maximumf>, %112, %cst_44 [2] : vector<2x8x8xf32> to vector<2x8xf32>
    %114 = vector.shape_cast %113 : vector<2x8xf32> to vector<2x8x1xf32>
    %115 = vector.broadcast %114 : vector<2x8x1xf32> to vector<2x8x8xf32>
    %116 = arith.subf %112, %115 : vector<2x8x8xf32>
    %117 = math.exp %116 : vector<2x8x8xf32>
    %cst_45 = arith.constant dense<0.000000e+00> : vector<2x8xf32>
    %118 = vector.multi_reduction <add>, %117, %cst_45 [2] : vector<2x8x8xf32> to vector<2x8xf32>
    %119 = vector.shape_cast %118 : vector<2x8xf32> to vector<2x8x1xf32>
    %120 = tpu.reciprocal %119 {approx = true} : vector<2x8x1xf32> -> vector<2x8x1xf32>
    %121 = vector.broadcast %120 : vector<2x8x1xf32> to vector<2x8x8xf32>
    %122 = arith.mulf %117, %121 : vector<2x8x8xf32>
    "tpu.trace_start"() <{level = 10 : i32, message = "bqk,bkd->bqd"}> : () -> ()
    %cst_46 = arith.constant dense<0.000000e+00> : vector<2x8x8xf32>
    %123 = tpu.matmul %122, %107, %cst_46 {dimension_numbers = #tpu.dot_dimension_numbers<[2], [1], [1], [2], [0, 0, 0, 1, 1, 2], [0], [0]>} : vector<2x8x8xf32>, vector<2x8x8xf32>, vector<2x8x8xf32> -> vector<2x8x8xf32>
    "tpu.trace_stop"() : () -> ()
    %124 = vector.shape_cast %123 : vector<2x8x8xf32> to vector<16x8xf32>
    %125 = vector.extract_strided_slice %28 {offsets = [24, 0], sizes = [8, 32], strides = [1, 1]} : vector<32x32xf32> to vector<8x32xf32>
    %cst_47 = arith.constant dense<0.000000e+00> : vector<16x32xf32>
    %126 = tpu.matmul %124, %125, %cst_47 {dimension_numbers = #tpu.dot_dimension_numbers<[1], [0], [0], [1], [0, 0, 1, 1], [], []>} : vector<16x8xf32>, vector<8x32xf32>, vector<16x32xf32> -> vector<16x32xf32>
    %127 = arith.addf %104, %126 : vector<16x32xf32>
    %c0_48 = arith.constant 0 : index
    %c0_49 = arith.constant 0 : index
    %c0_50 = arith.constant 0 : index
    %128 = vector.load %arg8[%c0_48, %c0_49, %c0_50] : memref<2x1x32xf32, #tpu.memory_space<vmem>>, vector<1x1x32xf32>
    %129 = vector.shape_cast %128 : vector<1x1x32xf32> to vector<1x32xf32>
    %130 = vector.broadcast %129 : vector<1x32xf32> to vector<16x32xf32>
    %131 = arith.addf %127, %130 : vector<16x32xf32>
    %132 = arith.addf %131, %24 : vector<16x32xf32>
    %c0_51 = arith.constant 0 : index
    %c0_52 = arith.constant 0 : index
    %c0_53 = arith.constant 0 : index
    %133 = vector.load %arg9[%c0_51, %c0_52, %c0_53] : memref<2x1x32xf32, #tpu.memory_space<vmem>>, vector<1x1x32xf32>
    %134 = vector.shape_cast %133 : vector<1x1x32xf32> to vector<1x32xf32>
    %c0_54 = arith.constant 0 : index
    %c0_55 = arith.constant 0 : index
    %c0_56 = arith.constant 0 : index
    %135 = vector.load %arg10[%c0_54, %c0_55, %c0_56] : memref<2x1x32xf32, #tpu.memory_space<vmem>>, vector<1x1x32xf32>
    %136 = vector.shape_cast %135 : vector<1x1x32xf32> to vector<1x32xf32>
    %cst_57 = arith.constant dense<0.000000e+00> : vector<16xf32>
    %137 = vector.multi_reduction <add>, %132, %cst_57 [1] : vector<16x32xf32> to vector<16xf32>
    %138 = vector.shape_cast %137 : vector<16xf32> to vector<16x1xf32>
    %cst_58 = arith.constant 3.200000e+01 : f32
    %139 = vector.broadcast %cst_58 : f32 to vector<16x1xf32>
    %140 = arith.divf %138, %139 : vector<16x1xf32>
    %141 = vector.broadcast %140 : vector<16x1xf32> to vector<16x32xf32>
    %142 = arith.subf %132, %141 : vector<16x32xf32>
    %143 = arith.mulf %142, %142 : vector<16x32xf32>
    %cst_59 = arith.constant dense<0.000000e+00> : vector<16xf32>
    %144 = vector.multi_reduction <add>, %143, %cst_59 [1] : vector<16x32xf32> to vector<16xf32>
    %145 = vector.shape_cast %144 : vector<16xf32> to vector<16x1xf32>
    %cst_60 = arith.constant 3.200000e+01 : f32
    %146 = vector.broadcast %cst_60 : f32 to vector<16x1xf32>
    %147 = arith.divf %145, %146 : vector<16x1xf32>
    %cst_61 = arith.constant 9.99999996E-13 : f32
    %148 = vector.broadcast %cst_61 : f32 to vector<16x1xf32>
    %149 = arith.addf %147, %148 : vector<16x1xf32>
    %150 = math.rsqrt %149 : vector<16x1xf32>
    %151 = vector.broadcast %150 : vector<16x1xf32> to vector<16x32xf32>
    %152 = arith.mulf %142, %151 : vector<16x32xf32>
    %153 = vector.broadcast %134 : vector<1x32xf32> to vector<16x32xf32>
    %154 = arith.mulf %152, %153 : vector<16x32xf32>
    %155 = vector.broadcast %136 : vector<1x32xf32> to vector<16x32xf32>
    %156 = arith.addf %154, %155 : vector<16x32xf32>
    %c0_62 = arith.constant 0 : index
    %c0_63 = arith.constant 0 : index
    %c0_64 = arith.constant 0 : index
    %157 = vector.load %arg11[%c0_62, %c0_63, %c0_64] : memref<2x32x64xf32, #tpu.memory_space<vmem>>, vector<1x32x64xf32>
    %158 = vector.shape_cast %157 : vector<1x32x64xf32> to vector<32x64xf32>
    %cst_65 = arith.constant dense<0.000000e+00> : vector<16x64xf32>
    %159 = tpu.matmul %156, %158, %cst_65 {dimension_numbers = #tpu.dot_dimension_numbers<[1], [0], [0], [1], [0, 0, 1, 1], [], []>} : vector<16x32xf32>, vector<32x64xf32>, vector<16x64xf32> -> vector<16x64xf32>
    %c0_66 = arith.constant 0 : index
    %c0_67 = arith.constant 0 : index
    %c0_68 = arith.constant 0 : index
    %160 = vector.load %arg12[%c0_66, %c0_67, %c0_68] : memref<2x1x64xf32, #tpu.memory_space<vmem>>, vector<1x1x64xf32>
    %161 = vector.shape_cast %160 : vector<1x1x64xf32> to vector<1x64xf32>
    %162 = vector.broadcast %161 : vector<1x64xf32> to vector<16x64xf32>
    %163 = arith.addf %159, %162 : vector<16x64xf32>
    %cst_69 = arith.constant 5.000000e-01 : f32
    %164 = vector.broadcast %cst_69 : f32 to vector<16x64xf32>
    %165 = arith.mulf %164, %163 : vector<16x64xf32>
    %cst_70 = arith.constant 0.707106769 : f32
    %166 = vector.broadcast %cst_70 : f32 to vector<16x64xf32>
    %167 = arith.mulf %163, %166 : vector<16x64xf32>
    %168 = math.erf %167 : vector<16x64xf32>
    %cst_71 = arith.constant 1.000000e+00 : f32
    %169 = vector.broadcast %cst_71 : f32 to vector<16x64xf32>
    %170 = arith.addf %169, %168 : vector<16x64xf32>
    %171 = arith.mulf %165, %170 : vector<16x64xf32>
    %c0_72 = arith.constant 0 : index
    %c0_73 = arith.constant 0 : index
    %c0_74 = arith.constant 0 : index
    %172 = vector.load %arg13[%c0_72, %c0_73, %c0_74] : memref<2x64x32xf32, #tpu.memory_space<vmem>>, vector<1x64x32xf32>
    %173 = vector.shape_cast %172 : vector<1x64x32xf32> to vector<64x32xf32>
    %cst_75 = arith.constant dense<0.000000e+00> : vector<16x32xf32>
    %174 = tpu.matmul %171, %173, %cst_75 {dimension_numbers = #tpu.dot_dimension_numbers<[1], [0], [0], [1], [0, 0, 1, 1], [], []>} : vector<16x64xf32>, vector<64x32xf32>, vector<16x32xf32> -> vector<16x32xf32>
    %c0_76 = arith.constant 0 : index
    %c0_77 = arith.constant 0 : index
    %c0_78 = arith.constant 0 : index
    %175 = vector.load %arg14[%c0_76, %c0_77, %c0_78] : memref<2x1x32xf32, #tpu.memory_space<vmem>>, vector<1x1x32xf32>
    %176 = vector.shape_cast %175 : vector<1x1x32xf32> to vector<1x32xf32>
    %177 = vector.broadcast %176 : vector<1x32xf32> to vector<16x32xf32>
    %178 = arith.addf %174, %177 : vector<16x32xf32>
    %179 = arith.addf %178, %156 : vector<16x32xf32>
    %c0_79 = arith.constant 0 : index
    %c0_80 = arith.constant 0 : index
    %c0_81 = arith.constant 0 : index
    %180 = vector.load %arg15[%c0_79, %c0_80, %c0_81] : memref<2x1x32xf32, #tpu.memory_space<vmem>>, vector<1x1x32xf32>
    %181 = vector.shape_cast %180 : vector<1x1x32xf32> to vector<1x32xf32>
    %c0_82 = arith.constant 0 : index
    %c0_83 = arith.constant 0 : index
    %c0_84 = arith.constant 0 : index
    %182 = vector.load %arg16[%c0_82, %c0_83, %c0_84] : memref<2x1x32xf32, #tpu.memory_space<vmem>>, vector<1x1x32xf32>
    %183 = vector.shape_cast %182 : vector<1x1x32xf32> to vector<1x32xf32>
    %cst_85 = arith.constant dense<0.000000e+00> : vector<16xf32>
    %184 = vector.multi_reduction <add>, %179, %cst_85 [1] : vector<16x32xf32> to vector<16xf32>
    %185 = vector.shape_cast %184 : vector<16xf32> to vector<16x1xf32>
    %cst_86 = arith.constant 3.200000e+01 : f32
    %186 = vector.broadcast %cst_86 : f32 to vector<16x1xf32>
    %187 = arith.divf %185, %186 : vector<16x1xf32>
    %188 = vector.broadcast %187 : vector<16x1xf32> to vector<16x32xf32>
    %189 = arith.subf %179, %188 : vector<16x32xf32>
    %190 = arith.mulf %189, %189 : vector<16x32xf32>
    %cst_87 = arith.constant dense<0.000000e+00> : vector<16xf32>
    %191 = vector.multi_reduction <add>, %190, %cst_87 [1] : vector<16x32xf32> to vector<16xf32>
    %192 = vector.shape_cast %191 : vector<16xf32> to vector<16x1xf32>
    %cst_88 = arith.constant 3.200000e+01 : f32
    %193 = vector.broadcast %cst_88 : f32 to vector<16x1xf32>
    %194 = arith.divf %192, %193 : vector<16x1xf32>
    %cst_89 = arith.constant 9.99999996E-13 : f32
    %195 = vector.broadcast %cst_89 : f32 to vector<16x1xf32>
    %196 = arith.addf %194, %195 : vector<16x1xf32>
    %197 = math.rsqrt %196 : vector<16x1xf32>
    %198 = vector.broadcast %197 : vector<16x1xf32> to vector<16x32xf32>
    %199 = arith.mulf %189, %198 : vector<16x32xf32>
    %200 = vector.broadcast %181 : vector<1x32xf32> to vector<16x32xf32>
    %201 = arith.mulf %199, %200 : vector<16x32xf32>
    %202 = vector.broadcast %183 : vector<1x32xf32> to vector<16x32xf32>
    %203 = arith.addf %201, %202 : vector<16x32xf32>
    %c1 = arith.constant 1 : index
    %c0_90 = arith.constant 0 : index
    %c0_91 = arith.constant 0 : index
    %204 = vector.load %arg5[%c1, %c0_90, %c0_91] : memref<2x32x96xf32, #tpu.memory_space<vmem>>, vector<1x32x96xf32>
    %205 = vector.shape_cast %204 : vector<1x32x96xf32> to vector<32x96xf32>
    %c1_92 = arith.constant 1 : index
    %c0_93 = arith.constant 0 : index
    %c0_94 = arith.constant 0 : index
    %206 = vector.load %arg7[%c1_92, %c0_93, %c0_94] : memref<2x32x32xf32, #tpu.memory_space<vmem>>, vector<1x32x32xf32>
    %207 = vector.shape_cast %206 : vector<1x32x32xf32> to vector<32x32xf32>
    %c1_95 = arith.constant 1 : index
    %c0_96 = arith.constant 0 : index
    %c0_97 = arith.constant 0 : index
    %208 = vector.load %arg6[%c1_95, %c0_96, %c0_97] : memref<2x1x96xf32, #tpu.memory_space<vmem>>, vector<1x1x96xf32>
    %209 = vector.shape_cast %208 : vector<1x1x96xf32> to vector<1x96xf32>
    %cst_98 = arith.constant dense<0.000000e+00> : vector<16x96xf32>
    %210 = tpu.matmul %203, %205, %cst_98 {dimension_numbers = #tpu.dot_dimension_numbers<[1], [0], [0], [1], [0, 0, 1, 1], [], []>} : vector<16x32xf32>, vector<32x96xf32>, vector<16x96xf32> -> vector<16x96xf32>
    %211 = vector.broadcast %209 : vector<1x96xf32> to vector<16x96xf32>
    %212 = arith.addf %210, %211 : vector<16x96xf32>
    %213 = vector.shape_cast %212 : vector<16x96xf32> to vector<2x8x96xf32>
    %cst_99 = arith.constant 0.000000e+00 : f32
    %214 = vector.broadcast %cst_99 : f32 to vector<16x32xf32>
    %215 = vector.extract_strided_slice %213 {offsets = [0, 0, 0], sizes = [2, 8, 8], strides = [1, 1, 1]} : vector<2x8x96xf32> to vector<2x8x8xf32>
    %216 = vector.extract_strided_slice %213 {offsets = [0, 0, 32], sizes = [2, 8, 8], strides = [1, 1, 1]} : vector<2x8x96xf32> to vector<2x8x8xf32>
    %217 = vector.extract_strided_slice %213 {offsets = [0, 0, 64], sizes = [2, 8, 8], strides = [1, 1, 1]} : vector<2x8x96xf32> to vector<2x8x8xf32>
    "tpu.trace_start"() <{level = 10 : i32, message = "bqd,bkd->bqk"}> : () -> ()
    %cst_100 = arith.constant dense<0.000000e+00> : vector<2x8x8xf32>
    %218 = tpu.matmul %215, %216, %cst_100 {dimension_numbers = #tpu.dot_dimension_numbers<[2], [2], [1], [1], [0, 0, 0, 1, 1, 1], [0], [0]>} : vector<2x8x8xf32>, vector<2x8x8xf32>, vector<2x8x8xf32> -> vector<2x8x8xf32>
    "tpu.trace_stop"() : () -> ()
    %cst_101 = arith.constant 0.353553385 : f32
    %219 = vector.broadcast %cst_101 : f32 to vector<2x8x8xf32>
    %220 = arith.mulf %218, %219 : vector<2x8x8xf32>
    %221 = vector.broadcast %0 : vector<2x1x8xf32> to vector<2x8x8xf32>
    %222 = arith.addf %220, %221 : vector<2x8x8xf32>
    %cst_102 = arith.constant dense<0xFF800000> : vector<2x8xf32>
    %223 = vector.multi_reduction <maximumf>, %222, %cst_102 [2] : vector<2x8x8xf32> to vector<2x8xf32>
    %224 = vector.shape_cast %223 : vector<2x8xf32> to vector<2x8x1xf32>
    %225 = vector.broadcast %224 : vector<2x8x1xf32> to vector<2x8x8xf32>
    %226 = arith.subf %222, %225 : vector<2x8x8xf32>
    %227 = math.exp %226 : vector<2x8x8xf32>
    %cst_103 = arith.constant dense<0.000000e+00> : vector<2x8xf32>
    %228 = vector.multi_reduction <add>, %227, %cst_103 [2] : vector<2x8x8xf32> to vector<2x8xf32>
    %229 = vector.shape_cast %228 : vector<2x8xf32> to vector<2x8x1xf32>
    %230 = tpu.reciprocal %229 {approx = true} : vector<2x8x1xf32> -> vector<2x8x1xf32>
    %231 = vector.broadcast %230 : vector<2x8x1xf32> to vector<2x8x8xf32>
    %232 = arith.mulf %227, %231 : vector<2x8x8xf32>
    "tpu.trace_start"() <{level = 10 : i32, message = "bqk,bkd->bqd"}> : () -> ()
    %cst_104 = arith.constant dense<0.000000e+00> : vector<2x8x8xf32>
    %233 = tpu.matmul %232, %217, %cst_104 {dimension_numbers = #tpu.dot_dimension_numbers<[2], [1], [1], [2], [0, 0, 0, 1, 1, 2], [0], [0]>} : vector<2x8x8xf32>, vector<2x8x8xf32>, vector<2x8x8xf32> -> vector<2x8x8xf32>
    "tpu.trace_stop"() : () -> ()
    %234 = vector.shape_cast %233 : vector<2x8x8xf32> to vector<16x8xf32>
    %235 = vector.extract_strided_slice %207 {offsets = [0, 0], sizes = [8, 32], strides = [1, 1]} : vector<32x32xf32> to vector<8x32xf32>
    %cst_105 = arith.constant dense<0.000000e+00> : vector<16x32xf32>
    %236 = tpu.matmul %234, %235, %cst_105 {dimension_numbers = #tpu.dot_dimension_numbers<[1], [0], [0], [1], [0, 0, 1, 1], [], []>} : vector<16x8xf32>, vector<8x32xf32>, vector<16x32xf32> -> vector<16x32xf32>
    %237 = arith.addf %214, %236 : vector<16x32xf32>
    %238 = vector.extract_strided_slice %213 {offsets = [0, 0, 8], sizes = [2, 8, 8], strides = [1, 1, 1]} : vector<2x8x96xf32> to vector<2x8x8xf32>
    %239 = vector.extract_strided_slice %213 {offsets = [0, 0, 40], sizes = [2, 8, 8], strides = [1, 1, 1]} : vector<2x8x96xf32> to vector<2x8x8xf32>
    %240 = vector.extract_strided_slice %213 {offsets = [0, 0, 72], sizes = [2, 8, 8], strides = [1, 1, 1]} : vector<2x8x96xf32> to vector<2x8x8xf32>
    "tpu.trace_start"() <{level = 10 : i32, message = "bqd,bkd->bqk"}> : () -> ()
    %cst_106 = arith.constant dense<0.000000e+00> : vector<2x8x8xf32>
    %241 = tpu.matmul %238, %239, %cst_106 {dimension_numbers = #tpu.dot_dimension_numbers<[2], [2], [1], [1], [0, 0, 0, 1, 1, 1], [0], [0]>} : vector<2x8x8xf32>, vector<2x8x8xf32>, vector<2x8x8xf32> -> vector<2x8x8xf32>
    "tpu.trace_stop"() : () -> ()
    %cst_107 = arith.constant 0.353553385 : f32
    %242 = vector.broadcast %cst_107 : f32 to vector<2x8x8xf32>
    %243 = arith.mulf %241, %242 : vector<2x8x8xf32>
    %244 = vector.broadcast %0 : vector<2x1x8xf32> to vector<2x8x8xf32>
    %245 = arith.addf %243, %244 : vector<2x8x8xf32>
    %cst_108 = arith.constant dense<0xFF800000> : vector<2x8xf32>
    %246 = vector.multi_reduction <maximumf>, %245, %cst_108 [2] : vector<2x8x8xf32> to vector<2x8xf32>
    %247 = vector.shape_cast %246 : vector<2x8xf32> to vector<2x8x1xf32>
    %248 = vector.broadcast %247 : vector<2x8x1xf32> to vector<2x8x8xf32>
    %249 = arith.subf %245, %248 : vector<2x8x8xf32>
    %250 = math.exp %249 : vector<2x8x8xf32>
    %cst_109 = arith.constant dense<0.000000e+00> : vector<2x8xf32>
    %251 = vector.multi_reduction <add>, %250, %cst_109 [2] : vector<2x8x8xf32> to vector<2x8xf32>
    %252 = vector.shape_cast %251 : vector<2x8xf32> to vector<2x8x1xf32>
    %253 = tpu.reciprocal %252 {approx = true} : vector<2x8x1xf32> -> vector<2x8x1xf32>
    %254 = vector.broadcast %253 : vector<2x8x1xf32> to vector<2x8x8xf32>
    %255 = arith.mulf %250, %254 : vector<2x8x8xf32>
    "tpu.trace_start"() <{level = 10 : i32, message = "bqk,bkd->bqd"}> : () -> ()
    %cst_110 = arith.constant dense<0.000000e+00> : vector<2x8x8xf32>
    %256 = tpu.matmul %255, %240, %cst_110 {dimension_numbers = #tpu.dot_dimension_numbers<[2], [1], [1], [2], [0, 0, 0, 1, 1, 2], [0], [0]>} : vector<2x8x8xf32>, vector<2x8x8xf32>, vector<2x8x8xf32> -> vector<2x8x8xf32>
    "tpu.trace_stop"() : () -> ()
    %257 = vector.shape_cast %256 : vector<2x8x8xf32> to vector<16x8xf32>
    %258 = vector.extract_strided_slice %207 {offsets = [8, 0], sizes = [8, 32], strides = [1, 1]} : vector<32x32xf32> to vector<8x32xf32>
    %cst_111 = arith.constant dense<0.000000e+00> : vector<16x32xf32>
    %259 = tpu.matmul %257, %258, %cst_111 {dimension_numbers = #tpu.dot_dimension_numbers<[1], [0], [0], [1], [0, 0, 1, 1], [], []>} : vector<16x8xf32>, vector<8x32xf32>, vector<16x32xf32> -> vector<16x32xf32>
    %260 = arith.addf %237, %259 : vector<16x32xf32>
    %261 = vector.extract_strided_slice %213 {offsets = [0, 0, 16], sizes = [2, 8, 8], strides = [1, 1, 1]} : vector<2x8x96xf32> to vector<2x8x8xf32>
    %262 = vector.extract_strided_slice %213 {offsets = [0, 0, 48], sizes = [2, 8, 8], strides = [1, 1, 1]} : vector<2x8x96xf32> to vector<2x8x8xf32>
    %263 = vector.extract_strided_slice %213 {offsets = [0, 0, 80], sizes = [2, 8, 8], strides = [1, 1, 1]} : vector<2x8x96xf32> to vector<2x8x8xf32>
    "tpu.trace_start"() <{level = 10 : i32, message = "bqd,bkd->bqk"}> : () -> ()
    %cst_112 = arith.constant dense<0.000000e+00> : vector<2x8x8xf32>
    %264 = tpu.matmul %261, %262, %cst_112 {dimension_numbers = #tpu.dot_dimension_numbers<[2], [2], [1], [1], [0, 0, 0, 1, 1, 1], [0], [0]>} : vector<2x8x8xf32>, vector<2x8x8xf32>, vector<2x8x8xf32> -> vector<2x8x8xf32>
    "tpu.trace_stop"() : () -> ()
    %cst_113 = arith.constant 0.353553385 : f32
    %265 = vector.broadcast %cst_113 : f32 to vector<2x8x8xf32>
    %266 = arith.mulf %264, %265 : vector<2x8x8xf32>
    %267 = vector.broadcast %0 : vector<2x1x8xf32> to vector<2x8x8xf32>
    %268 = arith.addf %266, %267 : vector<2x8x8xf32>
    %cst_114 = arith.constant dense<0xFF800000> : vector<2x8xf32>
    %269 = vector.multi_reduction <maximumf>, %268, %cst_114 [2] : vector<2x8x8xf32> to vector<2x8xf32>
    %270 = vector.shape_cast %269 : vector<2x8xf32> to vector<2x8x1xf32>
    %271 = vector.broadcast %270 : vector<2x8x1xf32> to vector<2x8x8xf32>
    %272 = arith.subf %268, %271 : vector<2x8x8xf32>
    %273 = math.exp %272 : vector<2x8x8xf32>
    %cst_115 = arith.constant dense<0.000000e+00> : vector<2x8xf32>
    %274 = vector.multi_reduction <add>, %273, %cst_115 [2] : vector<2x8x8xf32> to vector<2x8xf32>
    %275 = vector.shape_cast %274 : vector<2x8xf32> to vector<2x8x1xf32>
    %276 = tpu.reciprocal %275 {approx = true} : vector<2x8x1xf32> -> vector<2x8x1xf32>
    %277 = vector.broadcast %276 : vector<2x8x1xf32> to vector<2x8x8xf32>
    %278 = arith.mulf %273, %277 : vector<2x8x8xf32>
    "tpu.trace_start"() <{level = 10 : i32, message = "bqk,bkd->bqd"}> : () -> ()
    %cst_116 = arith.constant dense<0.000000e+00> : vector<2x8x8xf32>
    %279 = tpu.matmul %278, %263, %cst_116 {dimension_numbers = #tpu.dot_dimension_numbers<[2], [1], [1], [2], [0, 0, 0, 1, 1, 2], [0], [0]>} : vector<2x8x8xf32>, vector<2x8x8xf32>, vector<2x8x8xf32> -> vector<2x8x8xf32>
    "tpu.trace_stop"() : () -> ()
    %280 = vector.shape_cast %279 : vector<2x8x8xf32> to vector<16x8xf32>
    %281 = vector.extract_strided_slice %207 {offsets = [16, 0], sizes = [8, 32], strides = [1, 1]} : vector<32x32xf32> to vector<8x32xf32>
    %cst_117 = arith.constant dense<0.000000e+00> : vector<16x32xf32>
    %282 = tpu.matmul %280, %281, %cst_117 {dimension_numbers = #tpu.dot_dimension_numbers<[1], [0], [0], [1], [0, 0, 1, 1], [], []>} : vector<16x8xf32>, vector<8x32xf32>, vector<16x32xf32> -> vector<16x32xf32>
    %283 = arith.addf %260, %282 : vector<16x32xf32>
    %284 = vector.extract_strided_slice %213 {offsets = [0, 0, 24], sizes = [2, 8, 8], strides = [1, 1, 1]} : vector<2x8x96xf32> to vector<2x8x8xf32>
    %285 = vector.extract_strided_slice %213 {offsets = [0, 0, 56], sizes = [2, 8, 8], strides = [1, 1, 1]} : vector<2x8x96xf32> to vector<2x8x8xf32>
    %286 = vector.extract_strided_slice %213 {offsets = [0, 0, 88], sizes = [2, 8, 8], strides = [1, 1, 1]} : vector<2x8x96xf32> to vector<2x8x8xf32>
    "tpu.trace_start"() <{level = 10 : i32, message = "bqd,bkd->bqk"}> : () -> ()
    %cst_118 = arith.constant dense<0.000000e+00> : vector<2x8x8xf32>
    %287 = tpu.matmul %284, %285, %cst_118 {dimension_numbers = #tpu.dot_dimension_numbers<[2], [2], [1], [1], [0, 0, 0, 1, 1, 1], [0], [0]>} : vector<2x8x8xf32>, vector<2x8x8xf32>, vector<2x8x8xf32> -> vector<2x8x8xf32>
    "tpu.trace_stop"() : () -> ()
    %cst_119 = arith.constant 0.353553385 : f32
    %288 = vector.broadcast %cst_119 : f32 to vector<2x8x8xf32>
    %289 = arith.mulf %287, %288 : vector<2x8x8xf32>
    %290 = vector.broadcast %0 : vector<2x1x8xf32> to vector<2x8x8xf32>
    %291 = arith.addf %289, %290 : vector<2x8x8xf32>
    %cst_120 = arith.constant dense<0xFF800000> : vector<2x8xf32>
    %292 = vector.multi_reduction <maximumf>, %291, %cst_120 [2] : vector<2x8x8xf32> to vector<2x8xf32>
    %293 = vector.shape_cast %292 : vector<2x8xf32> to vector<2x8x1xf32>
    %294 = vector.broadcast %293 : vector<2x8x1xf32> to vector<2x8x8xf32>
    %295 = arith.subf %291, %294 : vector<2x8x8xf32>
    %296 = math.exp %295 : vector<2x8x8xf32>
    %cst_121 = arith.constant dense<0.000000e+00> : vector<2x8xf32>
    %297 = vector.multi_reduction <add>, %296, %cst_121 [2] : vector<2x8x8xf32> to vector<2x8xf32>
    %298 = vector.shape_cast %297 : vector<2x8xf32> to vector<2x8x1xf32>
    %299 = tpu.reciprocal %298 {approx = true} : vector<2x8x1xf32> -> vector<2x8x1xf32>
    %300 = vector.broadcast %299 : vector<2x8x1xf32> to vector<2x8x8xf32>
    %301 = arith.mulf %296, %300 : vector<2x8x8xf32>
    "tpu.trace_start"() <{level = 10 : i32, message = "bqk,bkd->bqd"}> : () -> ()
    %cst_122 = arith.constant dense<0.000000e+00> : vector<2x8x8xf32>
    %302 = tpu.matmul %301, %286, %cst_122 {dimension_numbers = #tpu.dot_dimension_numbers<[2], [1], [1], [2], [0, 0, 0, 1, 1, 2], [0], [0]>} : vector<2x8x8xf32>, vector<2x8x8xf32>, vector<2x8x8xf32> -> vector<2x8x8xf32>
    "tpu.trace_stop"() : () -> ()
    %303 = vector.shape_cast %302 : vector<2x8x8xf32> to vector<16x8xf32>
    %304 = vector.extract_strided_slice %207 {offsets = [24, 0], sizes = [8, 32], strides = [1, 1]} : vector<32x32xf32> to vector<8x32xf32>
    %cst_123 = arith.constant dense<0.000000e+00> : vector<16x32xf32>
    %305 = tpu.matmul %303, %304, %cst_123 {dimension_numbers = #tpu.dot_dimension_numbers<[1], [0], [0], [1], [0, 0, 1, 1], [], []>} : vector<16x8xf32>, vector<8x32xf32>, vector<16x32xf32> -> vector<16x32xf32>
    %306 = arith.addf %283, %305 : vector<16x32xf32>
    %c1_124 = arith.constant 1 : index
    %c0_125 = arith.constant 0 : index
    %c0_126 = arith.constant 0 : index
    %307 = vector.load %arg8[%c1_124, %c0_125, %c0_126] : memref<2x1x32xf32, #tpu.memory_space<vmem>>, vector<1x1x32xf32>
    %308 = vector.shape_cast %307 : vector<1x1x32xf32> to vector<1x32xf32>
    %309 = vector.broadcast %308 : vector<1x32xf32> to vector<16x32xf32>
    %310 = arith.addf %306, %309 : vector<16x32xf32>
    %311 = arith.addf %310, %203 : vector<16x32xf32>
    %c1_127 = arith.constant 1 : index
    %c0_128 = arith.constant 0 : index
    %c0_129 = arith.constant 0 : index
    %312 = vector.load %arg9[%c1_127, %c0_128, %c0_129] : memref<2x1x32xf32, #tpu.memory_space<vmem>>, vector<1x1x32xf32>
    %313 = vector.shape_cast %312 : vector<1x1x32xf32> to vector<1x32xf32>
    %c1_130 = arith.constant 1 : index
    %c0_131 = arith.constant 0 : index
    %c0_132 = arith.constant 0 : index
    %314 = vector.load %arg10[%c1_130, %c0_131, %c0_132] : memref<2x1x32xf32, #tpu.memory_space<vmem>>, vector<1x1x32xf32>
    %315 = vector.shape_cast %314 : vector<1x1x32xf32> to vector<1x32xf32>
    %cst_133 = arith.constant dense<0.000000e+00> : vector<16xf32>
    %316 = vector.multi_reduction <add>, %311, %cst_133 [1] : vector<16x32xf32> to vector<16xf32>
    %317 = vector.shape_cast %316 : vector<16xf32> to vector<16x1xf32>
    %cst_134 = arith.constant 3.200000e+01 : f32
    %318 = vector.broadcast %cst_134 : f32 to vector<16x1xf32>
    %319 = arith.divf %317, %318 : vector<16x1xf32>
    %320 = vector.broadcast %319 : vector<16x1xf32> to vector<16x32xf32>
    %321 = arith.subf %311, %320 : vector<16x32xf32>
    %322 = arith.mulf %321, %321 : vector<16x32xf32>
    %cst_135 = arith.constant dense<0.000000e+00> : vector<16xf32>
    %323 = vector.multi_reduction <add>, %322, %cst_135 [1] : vector<16x32xf32> to vector<16xf32>
    %324 = vector.shape_cast %323 : vector<16xf32> to vector<16x1xf32>
    %cst_136 = arith.constant 3.200000e+01 : f32
    %325 = vector.broadcast %cst_136 : f32 to vector<16x1xf32>
    %326 = arith.divf %324, %325 : vector<16x1xf32>
    %cst_137 = arith.constant 9.99999996E-13 : f32
    %327 = vector.broadcast %cst_137 : f32 to vector<16x1xf32>
    %328 = arith.addf %326, %327 : vector<16x1xf32>
    %329 = math.rsqrt %328 : vector<16x1xf32>
    %330 = vector.broadcast %329 : vector<16x1xf32> to vector<16x32xf32>
    %331 = arith.mulf %321, %330 : vector<16x32xf32>
    %332 = vector.broadcast %313 : vector<1x32xf32> to vector<16x32xf32>
    %333 = arith.mulf %331, %332 : vector<16x32xf32>
    %334 = vector.broadcast %315 : vector<1x32xf32> to vector<16x32xf32>
    %335 = arith.addf %333, %334 : vector<16x32xf32>
    %c1_138 = arith.constant 1 : index
    %c0_139 = arith.constant 0 : index
    %c0_140 = arith.constant 0 : index
    %336 = vector.load %arg11[%c1_138, %c0_139, %c0_140] : memref<2x32x64xf32, #tpu.memory_space<vmem>>, vector<1x32x64xf32>
    %337 = vector.shape_cast %336 : vector<1x32x64xf32> to vector<32x64xf32>
    %cst_141 = arith.constant dense<0.000000e+00> : vector<16x64xf32>
    %338 = tpu.matmul %335, %337, %cst_141 {dimension_numbers = #tpu.dot_dimension_numbers<[1], [0], [0], [1], [0, 0, 1, 1], [], []>} : vector<16x32xf32>, vector<32x64xf32>, vector<16x64xf32> -> vector<16x64xf32>
    %c1_142 = arith.constant 1 : index
    %c0_143 = arith.constant 0 : index
    %c0_144 = arith.constant 0 : index
    %339 = vector.load %arg12[%c1_142, %c0_143, %c0_144] : memref<2x1x64xf32, #tpu.memory_space<vmem>>, vector<1x1x64xf32>
    %340 = vector.shape_cast %339 : vector<1x1x64xf32> to vector<1x64xf32>
    %341 = vector.broadcast %340 : vector<1x64xf32> to vector<16x64xf32>
    %342 = arith.addf %338, %341 : vector<16x64xf32>
    %cst_145 = arith.constant 5.000000e-01 : f32
    %343 = vector.broadcast %cst_145 : f32 to vector<16x64xf32>
    %344 = arith.mulf %343, %342 : vector<16x64xf32>
    %cst_146 = arith.constant 0.707106769 : f32
    %345 = vector.broadcast %cst_146 : f32 to vector<16x64xf32>
    %346 = arith.mulf %342, %345 : vector<16x64xf32>
    %347 = math.erf %346 : vector<16x64xf32>
    %cst_147 = arith.constant 1.000000e+00 : f32
    %348 = vector.broadcast %cst_147 : f32 to vector<16x64xf32>
    %349 = arith.addf %348, %347 : vector<16x64xf32>
    %350 = arith.mulf %344, %349 : vector<16x64xf32>
    %c1_148 = arith.constant 1 : index
    %c0_149 = arith.constant 0 : index
    %c0_150 = arith.constant 0 : index
    %351 = vector.load %arg13[%c1_148, %c0_149, %c0_150] : memref<2x64x32xf32, #tpu.memory_space<vmem>>, vector<1x64x32xf32>
    %352 = vector.shape_cast %351 : vector<1x64x32xf32> to vector<64x32xf32>
    %cst_151 = arith.constant dense<0.000000e+00> : vector<16x32xf32>
    %353 = tpu.matmul %350, %352, %cst_151 {dimension_numbers = #tpu.dot_dimension_numbers<[1], [0], [0], [1], [0, 0, 1, 1], [], []>} : vector<16x64xf32>, vector<64x32xf32>, vector<16x32xf32> -> vector<16x32xf32>
    %c1_152 = arith.constant 1 : index
    %c0_153 = arith.constant 0 : index
    %c0_154 = arith.constant 0 : index
    %354 = vector.load %arg14[%c1_152, %c0_153, %c0_154] : memref<2x1x32xf32, #tpu.memory_space<vmem>>, vector<1x1x32xf32>
    %355 = vector.shape_cast %354 : vector<1x1x32xf32> to vector<1x32xf32>
    %356 = vector.broadcast %355 : vector<1x32xf32> to vector<16x32xf32>
    %357 = arith.addf %353, %356 : vector<16x32xf32>
    %358 = arith.addf %357, %335 : vector<16x32xf32>
    %c1_155 = arith.constant 1 : index
    %c0_156 = arith.constant 0 : index
    %c0_157 = arith.constant 0 : index
    %359 = vector.load %arg15[%c1_155, %c0_156, %c0_157] : memref<2x1x32xf32, #tpu.memory_space<vmem>>, vector<1x1x32xf32>
    %360 = vector.shape_cast %359 : vector<1x1x32xf32> to vector<1x32xf32>
    %c1_158 = arith.constant 1 : index
    %c0_159 = arith.constant 0 : index
    %c0_160 = arith.constant 0 : index
    %361 = vector.load %arg16[%c1_158, %c0_159, %c0_160] : memref<2x1x32xf32, #tpu.memory_space<vmem>>, vector<1x1x32xf32>
    %362 = vector.shape_cast %361 : vector<1x1x32xf32> to vector<1x32xf32>
    %cst_161 = arith.constant dense<0.000000e+00> : vector<16xf32>
    %363 = vector.multi_reduction <add>, %358, %cst_161 [1] : vector<16x32xf32> to vector<16xf32>
    %364 = vector.shape_cast %363 : vector<16xf32> to vector<16x1xf32>
    %cst_162 = arith.constant 3.200000e+01 : f32
    %365 = vector.broadcast %cst_162 : f32 to vector<16x1xf32>
    %366 = arith.divf %364, %365 : vector<16x1xf32>
    %367 = vector.broadcast %366 : vector<16x1xf32> to vector<16x32xf32>
    %368 = arith.subf %358, %367 : vector<16x32xf32>
    %369 = arith.mulf %368, %368 : vector<16x32xf32>
    %cst_163 = arith.constant dense<0.000000e+00> : vector<16xf32>
    %370 = vector.multi_reduction <add>, %369, %cst_163 [1] : vector<16x32xf32> to vector<16xf32>
    %371 = vector.shape_cast %370 : vector<16xf32> to vector<16x1xf32>
    %cst_164 = arith.constant 3.200000e+01 : f32
    %372 = vector.broadcast %cst_164 : f32 to vector<16x1xf32>
    %373 = arith.divf %371, %372 : vector<16x1xf32>
    %cst_165 = arith.constant 9.99999996E-13 : f32
    %374 = vector.broadcast %cst_165 : f32 to vector<16x1xf32>
    %375 = arith.addf %373, %374 : vector<16x1xf32>
    %376 = math.rsqrt %375 : vector<16x1xf32>
    %377 = vector.broadcast %376 : vector<16x1xf32> to vector<16x32xf32>
    %378 = arith.mulf %368, %377 : vector<16x32xf32>
    %379 = vector.broadcast %360 : vector<1x32xf32> to vector<16x32xf32>
    %380 = arith.mulf %378, %379 : vector<16x32xf32>
    %381 = vector.broadcast %362 : vector<1x32xf32> to vector<16x32xf32>
    %382 = arith.addf %380, %381 : vector<16x32xf32>
    %c0_166 = arith.constant 0 : index
    %c0_167 = arith.constant 0 : index
    %383 = vector.load %arg17[%c0_166, %c0_167] : memref<32x1536xf32, #tpu.memory_space<vmem>>, vector<32x1536xf32>
    %c0_168 = arith.constant 0 : index
    %c0_169 = arith.constant 0 : index
    %384 = vector.load %arg18[%c0_168, %c0_169] : memref<512x32xf32, #tpu.memory_space<vmem>>, vector<512x32xf32>
    %cst_170 = arith.constant dense<0.000000e+00> : vector<16x1536xf32>
    %385 = tpu.matmul %382, %383, %cst_170 {dimension_numbers = #tpu.dot_dimension_numbers<[1], [0], [0], [1], [0, 0, 1, 1], [], []>} : vector<16x32xf32>, vector<32x1536xf32>, vector<16x1536xf32> -> vector<16x1536xf32>
    %386 = vector.shape_cast %385 : vector<16x1536xf32> to vector<2x8x1536xf32>
    %cst_171 = arith.constant 0.000000e+00 : f32
    %387 = vector.broadcast %cst_171 : f32 to vector<16x32xf32>
    %388 = vector.extract_strided_slice %386 {offsets = [0, 0, 0], sizes = [2, 8, 64], strides = [1, 1, 1]} : vector<2x8x1536xf32> to vector<2x8x64xf32>
    %389 = vector.extract_strided_slice %386 {offsets = [0, 0, 512], sizes = [2, 8, 64], strides = [1, 1, 1]} : vector<2x8x1536xf32> to vector<2x8x64xf32>
    %390 = vector.extract_strided_slice %386 {offsets = [0, 0, 1024], sizes = [2, 8, 64], strides = [1, 1, 1]} : vector<2x8x1536xf32> to vector<2x8x64xf32>
    "tpu.trace_start"() <{level = 10 : i32, message = "bqd,bkd->bqk"}> : () -> ()
    %cst_172 = arith.constant dense<0.000000e+00> : vector<2x8x8xf32>
    %391 = tpu.matmul %388, %389, %cst_172 {dimension_numbers = #tpu.dot_dimension_numbers<[2], [2], [1], [1], [0, 0, 0, 1, 1, 1], [0], [0]>} : vector<2x8x64xf32>, vector<2x8x64xf32>, vector<2x8x8xf32> -> vector<2x8x8xf32>
    "tpu.trace_stop"() : () -> ()
    %cst_173 = arith.constant 1.250000e-01 : f32
    %392 = vector.broadcast %cst_173 : f32 to vector<2x8x8xf32>
    %393 = arith.mulf %391, %392 : vector<2x8x8xf32>
    %cst_174 = arith.constant dense<0xFF800000> : vector<2x8xf32>
    %394 = vector.multi_reduction <maximumf>, %393, %cst_174 [2] : vector<2x8x8xf32> to vector<2x8xf32>
    %395 = vector.shape_cast %394 : vector<2x8xf32> to vector<2x8x1xf32>
    %396 = vector.broadcast %395 : vector<2x8x1xf32> to vector<2x8x8xf32>
    %397 = arith.subf %393, %396 : vector<2x8x8xf32>
    %398 = math.exp %397 : vector<2x8x8xf32>
    %cst_175 = arith.constant dense<0.000000e+00> : vector<2x8xf32>
    %399 = vector.multi_reduction <add>, %398, %cst_175 [2] : vector<2x8x8xf32> to vector<2x8xf32>
    %400 = vector.shape_cast %399 : vector<2x8xf32> to vector<2x8x1xf32>
    %401 = tpu.reciprocal %400 {approx = true} : vector<2x8x1xf32> -> vector<2x8x1xf32>
    %402 = vector.broadcast %401 : vector<2x8x1xf32> to vector<2x8x8xf32>
    %403 = arith.mulf %398, %402 : vector<2x8x8xf32>
    "tpu.trace_start"() <{level = 10 : i32, message = "bqk,bkd->bqd"}> : () -> ()
    %cst_176 = arith.constant dense<0.000000e+00> : vector<2x8x64xf32>
    %404 = tpu.matmul %403, %390, %cst_176 {dimension_numbers = #tpu.dot_dimension_numbers<[2], [1], [1], [2], [0, 0, 0, 1, 1, 2], [0], [0]>} : vector<2x8x8xf32>, vector<2x8x64xf32>, vector<2x8x64xf32> -> vector<2x8x64xf32>
    "tpu.trace_stop"() : () -> ()
    %405 = vector.shape_cast %404 : vector<2x8x64xf32> to vector<16x64xf32>
    %406 = vector.extract_strided_slice %384 {offsets = [0, 0], sizes = [64, 32], strides = [1, 1]} : vector<512x32xf32> to vector<64x32xf32>
    %cst_177 = arith.constant dense<0.000000e+00> : vector<16x32xf32>
    %407 = tpu.matmul %405, %406, %cst_177 {dimension_numbers = #tpu.dot_dimension_numbers<[1], [0], [0], [1], [0, 0, 1, 1], [], []>} : vector<16x64xf32>, vector<64x32xf32>, vector<16x32xf32> -> vector<16x32xf32>
    %408 = arith.addf %387, %407 : vector<16x32xf32>
    %409 = vector.extract_strided_slice %386 {offsets = [0, 0, 64], sizes = [2, 8, 64], strides = [1, 1, 1]} : vector<2x8x1536xf32> to vector<2x8x64xf32>
    %410 = vector.extract_strided_slice %386 {offsets = [0, 0, 576], sizes = [2, 8, 64], strides = [1, 1, 1]} : vector<2x8x1536xf32> to vector<2x8x64xf32>
    %411 = vector.extract_strided_slice %386 {offsets = [0, 0, 1088], sizes = [2, 8, 64], strides = [1, 1, 1]} : vector<2x8x1536xf32> to vector<2x8x64xf32>
    "tpu.trace_start"() <{level = 10 : i32, message = "bqd,bkd->bqk"}> : () -> ()
    %cst_178 = arith.constant dense<0.000000e+00> : vector<2x8x8xf32>
    %412 = tpu.matmul %409, %410, %cst_178 {dimension_numbers = #tpu.dot_dimension_numbers<[2], [2], [1], [1], [0, 0, 0, 1, 1, 1], [0], [0]>} : vector<2x8x64xf32>, vector<2x8x64xf32>, vector<2x8x8xf32> -> vector<2x8x8xf32>
    "tpu.trace_stop"() : () -> ()
    %cst_179 = arith.constant 1.250000e-01 : f32
    %413 = vector.broadcast %cst_179 : f32 to vector<2x8x8xf32>
    %414 = arith.mulf %412, %413 : vector<2x8x8xf32>
    %cst_180 = arith.constant dense<0xFF800000> : vector<2x8xf32>
    %415 = vector.multi_reduction <maximumf>, %414, %cst_180 [2] : vector<2x8x8xf32> to vector<2x8xf32>
    %416 = vector.shape_cast %415 : vector<2x8xf32> to vector<2x8x1xf32>
    %417 = vector.broadcast %416 : vector<2x8x1xf32> to vector<2x8x8xf32>
    %418 = arith.subf %414, %417 : vector<2x8x8xf32>
    %419 = math.exp %418 : vector<2x8x8xf32>
    %cst_181 = arith.constant dense<0.000000e+00> : vector<2x8xf32>
    %420 = vector.multi_reduction <add>, %419, %cst_181 [2] : vector<2x8x8xf32> to vector<2x8xf32>
    %421 = vector.shape_cast %420 : vector<2x8xf32> to vector<2x8x1xf32>
    %422 = tpu.reciprocal %421 {approx = true} : vector<2x8x1xf32> -> vector<2x8x1xf32>
    %423 = vector.broadcast %422 : vector<2x8x1xf32> to vector<2x8x8xf32>
    %424 = arith.mulf %419, %423 : vector<2x8x8xf32>
    "tpu.trace_start"() <{level = 10 : i32, message = "bqk,bkd->bqd"}> : () -> ()
    %cst_182 = arith.constant dense<0.000000e+00> : vector<2x8x64xf32>
    %425 = tpu.matmul %424, %411, %cst_182 {dimension_numbers = #tpu.dot_dimension_numbers<[2], [1], [1], [2], [0, 0, 0, 1, 1, 2], [0], [0]>} : vector<2x8x8xf32>, vector<2x8x64xf32>, vector<2x8x64xf32> -> vector<2x8x64xf32>
    "tpu.trace_stop"() : () -> ()
    %426 = vector.shape_cast %425 : vector<2x8x64xf32> to vector<16x64xf32>
    %427 = vector.extract_strided_slice %384 {offsets = [64, 0], sizes = [64, 32], strides = [1, 1]} : vector<512x32xf32> to vector<64x32xf32>
    %cst_183 = arith.constant dense<0.000000e+00> : vector<16x32xf32>
    %428 = tpu.matmul %426, %427, %cst_183 {dimension_numbers = #tpu.dot_dimension_numbers<[1], [0], [0], [1], [0, 0, 1, 1], [], []>} : vector<16x64xf32>, vector<64x32xf32>, vector<16x32xf32> -> vector<16x32xf32>
    %429 = arith.addf %408, %428 : vector<16x32xf32>
    %430 = vector.extract_strided_slice %386 {offsets = [0, 0, 128], sizes = [2, 8, 64], strides = [1, 1, 1]} : vector<2x8x1536xf32> to vector<2x8x64xf32>
    %431 = vector.extract_strided_slice %386 {offsets = [0, 0, 640], sizes = [2, 8, 64], strides = [1, 1, 1]} : vector<2x8x1536xf32> to vector<2x8x64xf32>
    %432 = vector.extract_strided_slice %386 {offsets = [0, 0, 1152], sizes = [2, 8, 64], strides = [1, 1, 1]} : vector<2x8x1536xf32> to vector<2x8x64xf32>
    "tpu.trace_start"() <{level = 10 : i32, message = "bqd,bkd->bqk"}> : () -> ()
    %cst_184 = arith.constant dense<0.000000e+00> : vector<2x8x8xf32>
    %433 = tpu.matmul %430, %431, %cst_184 {dimension_numbers = #tpu.dot_dimension_numbers<[2], [2], [1], [1], [0, 0, 0, 1, 1, 1], [0], [0]>} : vector<2x8x64xf32>, vector<2x8x64xf32>, vector<2x8x8xf32> -> vector<2x8x8xf32>
    "tpu.trace_stop"() : () -> ()
    %cst_185 = arith.constant 1.250000e-01 : f32
    %434 = vector.broadcast %cst_185 : f32 to vector<2x8x8xf32>
    %435 = arith.mulf %433, %434 : vector<2x8x8xf32>
    %cst_186 = arith.constant dense<0xFF800000> : vector<2x8xf32>
    %436 = vector.multi_reduction <maximumf>, %435, %cst_186 [2] : vector<2x8x8xf32> to vector<2x8xf32>
    %437 = vector.shape_cast %436 : vector<2x8xf32> to vector<2x8x1xf32>
    %438 = vector.broadcast %437 : vector<2x8x1xf32> to vector<2x8x8xf32>
    %439 = arith.subf %435, %438 : vector<2x8x8xf32>
    %440 = math.exp %439 : vector<2x8x8xf32>
    %cst_187 = arith.constant dense<0.000000e+00> : vector<2x8xf32>
    %441 = vector.multi_reduction <add>, %440, %cst_187 [2] : vector<2x8x8xf32> to vector<2x8xf32>
    %442 = vector.shape_cast %441 : vector<2x8xf32> to vector<2x8x1xf32>
    %443 = tpu.reciprocal %442 {approx = true} : vector<2x8x1xf32> -> vector<2x8x1xf32>
    %444 = vector.broadcast %443 : vector<2x8x1xf32> to vector<2x8x8xf32>
    %445 = arith.mulf %440, %444 : vector<2x8x8xf32>
    "tpu.trace_start"() <{level = 10 : i32, message = "bqk,bkd->bqd"}> : () -> ()
    %cst_188 = arith.constant dense<0.000000e+00> : vector<2x8x64xf32>
    %446 = tpu.matmul %445, %432, %cst_188 {dimension_numbers = #tpu.dot_dimension_numbers<[2], [1], [1], [2], [0, 0, 0, 1, 1, 2], [0], [0]>} : vector<2x8x8xf32>, vector<2x8x64xf32>, vector<2x8x64xf32> -> vector<2x8x64xf32>
    "tpu.trace_stop"() : () -> ()
    %447 = vector.shape_cast %446 : vector<2x8x64xf32> to vector<16x64xf32>
    %448 = vector.extract_strided_slice %384 {offsets = [128, 0], sizes = [64, 32], strides = [1, 1]} : vector<512x32xf32> to vector<64x32xf32>
    %cst_189 = arith.constant dense<0.000000e+00> : vector<16x32xf32>
    %449 = tpu.matmul %447, %448, %cst_189 {dimension_numbers = #tpu.dot_dimension_numbers<[1], [0], [0], [1], [0, 0, 1, 1], [], []>} : vector<16x64xf32>, vector<64x32xf32>, vector<16x32xf32> -> vector<16x32xf32>
    %450 = arith.addf %429, %449 : vector<16x32xf32>
    %451 = vector.extract_strided_slice %386 {offsets = [0, 0, 192], sizes = [2, 8, 64], strides = [1, 1, 1]} : vector<2x8x1536xf32> to vector<2x8x64xf32>
    %452 = vector.extract_strided_slice %386 {offsets = [0, 0, 704], sizes = [2, 8, 64], strides = [1, 1, 1]} : vector<2x8x1536xf32> to vector<2x8x64xf32>
    %453 = vector.extract_strided_slice %386 {offsets = [0, 0, 1216], sizes = [2, 8, 64], strides = [1, 1, 1]} : vector<2x8x1536xf32> to vector<2x8x64xf32>
    "tpu.trace_start"() <{level = 10 : i32, message = "bqd,bkd->bqk"}> : () -> ()
    %cst_190 = arith.constant dense<0.000000e+00> : vector<2x8x8xf32>
    %454 = tpu.matmul %451, %452, %cst_190 {dimension_numbers = #tpu.dot_dimension_numbers<[2], [2], [1], [1], [0, 0, 0, 1, 1, 1], [0], [0]>} : vector<2x8x64xf32>, vector<2x8x64xf32>, vector<2x8x8xf32> -> vector<2x8x8xf32>
    "tpu.trace_stop"() : () -> ()
    %cst_191 = arith.constant 1.250000e-01 : f32
    %455 = vector.broadcast %cst_191 : f32 to vector<2x8x8xf32>
    %456 = arith.mulf %454, %455 : vector<2x8x8xf32>
    %cst_192 = arith.constant dense<0xFF800000> : vector<2x8xf32>
    %457 = vector.multi_reduction <maximumf>, %456, %cst_192 [2] : vector<2x8x8xf32> to vector<2x8xf32>
    %458 = vector.shape_cast %457 : vector<2x8xf32> to vector<2x8x1xf32>
    %459 = vector.broadcast %458 : vector<2x8x1xf32> to vector<2x8x8xf32>
    %460 = arith.subf %456, %459 : vector<2x8x8xf32>
    %461 = math.exp %460 : vector<2x8x8xf32>
    %cst_193 = arith.constant dense<0.000000e+00> : vector<2x8xf32>
    %462 = vector.multi_reduction <add>, %461, %cst_193 [2] : vector<2x8x8xf32> to vector<2x8xf32>
    %463 = vector.shape_cast %462 : vector<2x8xf32> to vector<2x8x1xf32>
    %464 = tpu.reciprocal %463 {approx = true} : vector<2x8x1xf32> -> vector<2x8x1xf32>
    %465 = vector.broadcast %464 : vector<2x8x1xf32> to vector<2x8x8xf32>
    %466 = arith.mulf %461, %465 : vector<2x8x8xf32>
    "tpu.trace_start"() <{level = 10 : i32, message = "bqk,bkd->bqd"}> : () -> ()
    %cst_194 = arith.constant dense<0.000000e+00> : vector<2x8x64xf32>
    %467 = tpu.matmul %466, %453, %cst_194 {dimension_numbers = #tpu.dot_dimension_numbers<[2], [1], [1], [2], [0, 0, 0, 1, 1, 2], [0], [0]>} : vector<2x8x8xf32>, vector<2x8x64xf32>, vector<2x8x64xf32> -> vector<2x8x64xf32>
    "tpu.trace_stop"() : () -> ()
    %468 = vector.shape_cast %467 : vector<2x8x64xf32> to vector<16x64xf32>
    %469 = vector.extract_strided_slice %384 {offsets = [192, 0], sizes = [64, 32], strides = [1, 1]} : vector<512x32xf32> to vector<64x32xf32>
    %cst_195 = arith.constant dense<0.000000e+00> : vector<16x32xf32>
    %470 = tpu.matmul %468, %469, %cst_195 {dimension_numbers = #tpu.dot_dimension_numbers<[1], [0], [0], [1], [0, 0, 1, 1], [], []>} : vector<16x64xf32>, vector<64x32xf32>, vector<16x32xf32> -> vector<16x32xf32>
    %471 = arith.addf %450, %470 : vector<16x32xf32>
    %472 = vector.extract_strided_slice %386 {offsets = [0, 0, 256], sizes = [2, 8, 64], strides = [1, 1, 1]} : vector<2x8x1536xf32> to vector<2x8x64xf32>
    %473 = vector.extract_strided_slice %386 {offsets = [0, 0, 768], sizes = [2, 8, 64], strides = [1, 1, 1]} : vector<2x8x1536xf32> to vector<2x8x64xf32>
    %474 = vector.extract_strided_slice %386 {offsets = [0, 0, 1280], sizes = [2, 8, 64], strides = [1, 1, 1]} : vector<2x8x1536xf32> to vector<2x8x64xf32>
    "tpu.trace_start"() <{level = 10 : i32, message = "bqd,bkd->bqk"}> : () -> ()
    %cst_196 = arith.constant dense<0.000000e+00> : vector<2x8x8xf32>
    %475 = tpu.matmul %472, %473, %cst_196 {dimension_numbers = #tpu.dot_dimension_numbers<[2], [2], [1], [1], [0, 0, 0, 1, 1, 1], [0], [0]>} : vector<2x8x64xf32>, vector<2x8x64xf32>, vector<2x8x8xf32> -> vector<2x8x8xf32>
    "tpu.trace_stop"() : () -> ()
    %cst_197 = arith.constant 1.250000e-01 : f32
    %476 = vector.broadcast %cst_197 : f32 to vector<2x8x8xf32>
    %477 = arith.mulf %475, %476 : vector<2x8x8xf32>
    %cst_198 = arith.constant dense<0xFF800000> : vector<2x8xf32>
    %478 = vector.multi_reduction <maximumf>, %477, %cst_198 [2] : vector<2x8x8xf32> to vector<2x8xf32>
    %479 = vector.shape_cast %478 : vector<2x8xf32> to vector<2x8x1xf32>
    %480 = vector.broadcast %479 : vector<2x8x1xf32> to vector<2x8x8xf32>
    %481 = arith.subf %477, %480 : vector<2x8x8xf32>
    %482 = math.exp %481 : vector<2x8x8xf32>
    %cst_199 = arith.constant dense<0.000000e+00> : vector<2x8xf32>
    %483 = vector.multi_reduction <add>, %482, %cst_199 [2] : vector<2x8x8xf32> to vector<2x8xf32>
    %484 = vector.shape_cast %483 : vector<2x8xf32> to vector<2x8x1xf32>
    %485 = tpu.reciprocal %484 {approx = true} : vector<2x8x1xf32> -> vector<2x8x1xf32>
    %486 = vector.broadcast %485 : vector<2x8x1xf32> to vector<2x8x8xf32>
    %487 = arith.mulf %482, %486 : vector<2x8x8xf32>
    "tpu.trace_start"() <{level = 10 : i32, message = "bqk,bkd->bqd"}> : () -> ()
    %cst_200 = arith.constant dense<0.000000e+00> : vector<2x8x64xf32>
    %488 = tpu.matmul %487, %474, %cst_200 {dimension_numbers = #tpu.dot_dimension_numbers<[2], [1], [1], [2], [0, 0, 0, 1, 1, 2], [0], [0]>} : vector<2x8x8xf32>, vector<2x8x64xf32>, vector<2x8x64xf32> -> vector<2x8x64xf32>
    "tpu.trace_stop"() : () -> ()
    %489 = vector.shape_cast %488 : vector<2x8x64xf32> to vector<16x64xf32>
    %490 = vector.extract_strided_slice %384 {offsets = [256, 0], sizes = [64, 32], strides = [1, 1]} : vector<512x32xf32> to vector<64x32xf32>
    %cst_201 = arith.constant dense<0.000000e+00> : vector<16x32xf32>
    %491 = tpu.matmul %489, %490, %cst_201 {dimension_numbers = #tpu.dot_dimension_numbers<[1], [0], [0], [1], [0, 0, 1, 1], [], []>} : vector<16x64xf32>, vector<64x32xf32>, vector<16x32xf32> -> vector<16x32xf32>
    %492 = arith.addf %471, %491 : vector<16x32xf32>
    %493 = vector.extract_strided_slice %386 {offsets = [0, 0, 320], sizes = [2, 8, 64], strides = [1, 1, 1]} : vector<2x8x1536xf32> to vector<2x8x64xf32>
    %494 = vector.extract_strided_slice %386 {offsets = [0, 0, 832], sizes = [2, 8, 64], strides = [1, 1, 1]} : vector<2x8x1536xf32> to vector<2x8x64xf32>
    %495 = vector.extract_strided_slice %386 {offsets = [0, 0, 1344], sizes = [2, 8, 64], strides = [1, 1, 1]} : vector<2x8x1536xf32> to vector<2x8x64xf32>
    "tpu.trace_start"() <{level = 10 : i32, message = "bqd,bkd->bqk"}> : () -> ()
    %cst_202 = arith.constant dense<0.000000e+00> : vector<2x8x8xf32>
    %496 = tpu.matmul %493, %494, %cst_202 {dimension_numbers = #tpu.dot_dimension_numbers<[2], [2], [1], [1], [0, 0, 0, 1, 1, 1], [0], [0]>} : vector<2x8x64xf32>, vector<2x8x64xf32>, vector<2x8x8xf32> -> vector<2x8x8xf32>
    "tpu.trace_stop"() : () -> ()
    %cst_203 = arith.constant 1.250000e-01 : f32
    %497 = vector.broadcast %cst_203 : f32 to vector<2x8x8xf32>
    %498 = arith.mulf %496, %497 : vector<2x8x8xf32>
    %cst_204 = arith.constant dense<0xFF800000> : vector<2x8xf32>
    %499 = vector.multi_reduction <maximumf>, %498, %cst_204 [2] : vector<2x8x8xf32> to vector<2x8xf32>
    %500 = vector.shape_cast %499 : vector<2x8xf32> to vector<2x8x1xf32>
    %501 = vector.broadcast %500 : vector<2x8x1xf32> to vector<2x8x8xf32>
    %502 = arith.subf %498, %501 : vector<2x8x8xf32>
    %503 = math.exp %502 : vector<2x8x8xf32>
    %cst_205 = arith.constant dense<0.000000e+00> : vector<2x8xf32>
    %504 = vector.multi_reduction <add>, %503, %cst_205 [2] : vector<2x8x8xf32> to vector<2x8xf32>
    %505 = vector.shape_cast %504 : vector<2x8xf32> to vector<2x8x1xf32>
    %506 = tpu.reciprocal %505 {approx = true} : vector<2x8x1xf32> -> vector<2x8x1xf32>
    %507 = vector.broadcast %506 : vector<2x8x1xf32> to vector<2x8x8xf32>
    %508 = arith.mulf %503, %507 : vector<2x8x8xf32>
    "tpu.trace_start"() <{level = 10 : i32, message = "bqk,bkd->bqd"}> : () -> ()
    %cst_206 = arith.constant dense<0.000000e+00> : vector<2x8x64xf32>
    %509 = tpu.matmul %508, %495, %cst_206 {dimension_numbers = #tpu.dot_dimension_numbers<[2], [1], [1], [2], [0, 0, 0, 1, 1, 2], [0], [0]>} : vector<2x8x8xf32>, vector<2x8x64xf32>, vector<2x8x64xf32> -> vector<2x8x64xf32>
    "tpu.trace_stop"() : () -> ()
    %510 = vector.shape_cast %509 : vector<2x8x64xf32> to vector<16x64xf32>
    %511 = vector.extract_strided_slice %384 {offsets = [320, 0], sizes = [64, 32], strides = [1, 1]} : vector<512x32xf32> to vector<64x32xf32>
    %cst_207 = arith.constant dense<0.000000e+00> : vector<16x32xf32>
    %512 = tpu.matmul %510, %511, %cst_207 {dimension_numbers = #tpu.dot_dimension_numbers<[1], [0], [0], [1], [0, 0, 1, 1], [], []>} : vector<16x64xf32>, vector<64x32xf32>, vector<16x32xf32> -> vector<16x32xf32>
    %513 = arith.addf %492, %512 : vector<16x32xf32>
    %514 = vector.extract_strided_slice %386 {offsets = [0, 0, 384], sizes = [2, 8, 64], strides = [1, 1, 1]} : vector<2x8x1536xf32> to vector<2x8x64xf32>
    %515 = vector.extract_strided_slice %386 {offsets = [0, 0, 896], sizes = [2, 8, 64], strides = [1, 1, 1]} : vector<2x8x1536xf32> to vector<2x8x64xf32>
    %516 = vector.extract_strided_slice %386 {offsets = [0, 0, 1408], sizes = [2, 8, 64], strides = [1, 1, 1]} : vector<2x8x1536xf32> to vector<2x8x64xf32>
    "tpu.trace_start"() <{level = 10 : i32, message = "bqd,bkd->bqk"}> : () -> ()
    %cst_208 = arith.constant dense<0.000000e+00> : vector<2x8x8xf32>
    %517 = tpu.matmul %514, %515, %cst_208 {dimension_numbers = #tpu.dot_dimension_numbers<[2], [2], [1], [1], [0, 0, 0, 1, 1, 1], [0], [0]>} : vector<2x8x64xf32>, vector<2x8x64xf32>, vector<2x8x8xf32> -> vector<2x8x8xf32>
    "tpu.trace_stop"() : () -> ()
    %cst_209 = arith.constant 1.250000e-01 : f32
    %518 = vector.broadcast %cst_209 : f32 to vector<2x8x8xf32>
    %519 = arith.mulf %517, %518 : vector<2x8x8xf32>
    %cst_210 = arith.constant dense<0xFF800000> : vector<2x8xf32>
    %520 = vector.multi_reduction <maximumf>, %519, %cst_210 [2] : vector<2x8x8xf32> to vector<2x8xf32>
    %521 = vector.shape_cast %520 : vector<2x8xf32> to vector<2x8x1xf32>
    %522 = vector.broadcast %521 : vector<2x8x1xf32> to vector<2x8x8xf32>
    %523 = arith.subf %519, %522 : vector<2x8x8xf32>
    %524 = math.exp %523 : vector<2x8x8xf32>
    %cst_211 = arith.constant dense<0.000000e+00> : vector<2x8xf32>
    %525 = vector.multi_reduction <add>, %524, %cst_211 [2] : vector<2x8x8xf32> to vector<2x8xf32>
    %526 = vector.shape_cast %525 : vector<2x8xf32> to vector<2x8x1xf32>
    %527 = tpu.reciprocal %526 {approx = true} : vector<2x8x1xf32> -> vector<2x8x1xf32>
    %528 = vector.broadcast %527 : vector<2x8x1xf32> to vector<2x8x8xf32>
    %529 = arith.mulf %524, %528 : vector<2x8x8xf32>
    "tpu.trace_start"() <{level = 10 : i32, message = "bqk,bkd->bqd"}> : () -> ()
    %cst_212 = arith.constant dense<0.000000e+00> : vector<2x8x64xf32>
    %530 = tpu.matmul %529, %516, %cst_212 {dimension_numbers = #tpu.dot_dimension_numbers<[2], [1], [1], [2], [0, 0, 0, 1, 1, 2], [0], [0]>} : vector<2x8x8xf32>, vector<2x8x64xf32>, vector<2x8x64xf32> -> vector<2x8x64xf32>
    "tpu.trace_stop"() : () -> ()
    %531 = vector.shape_cast %530 : vector<2x8x64xf32> to vector<16x64xf32>
    %532 = vector.extract_strided_slice %384 {offsets = [384, 0], sizes = [64, 32], strides = [1, 1]} : vector<512x32xf32> to vector<64x32xf32>
    %cst_213 = arith.constant dense<0.000000e+00> : vector<16x32xf32>
    %533 = tpu.matmul %531, %532, %cst_213 {dimension_numbers = #tpu.dot_dimension_numbers<[1], [0], [0], [1], [0, 0, 1, 1], [], []>} : vector<16x64xf32>, vector<64x32xf32>, vector<16x32xf32> -> vector<16x32xf32>
    %534 = arith.addf %513, %533 : vector<16x32xf32>
    %535 = vector.extract_strided_slice %386 {offsets = [0, 0, 448], sizes = [2, 8, 64], strides = [1, 1, 1]} : vector<2x8x1536xf32> to vector<2x8x64xf32>
    %536 = vector.extract_strided_slice %386 {offsets = [0, 0, 960], sizes = [2, 8, 64], strides = [1, 1, 1]} : vector<2x8x1536xf32> to vector<2x8x64xf32>
    %537 = vector.extract_strided_slice %386 {offsets = [0, 0, 1472], sizes = [2, 8, 64], strides = [1, 1, 1]} : vector<2x8x1536xf32> to vector<2x8x64xf32>
    "tpu.trace_start"() <{level = 10 : i32, message = "bqd,bkd->bqk"}> : () -> ()
    %cst_214 = arith.constant dense<0.000000e+00> : vector<2x8x8xf32>
    %538 = tpu.matmul %535, %536, %cst_214 {dimension_numbers = #tpu.dot_dimension_numbers<[2], [2], [1], [1], [0, 0, 0, 1, 1, 1], [0], [0]>} : vector<2x8x64xf32>, vector<2x8x64xf32>, vector<2x8x8xf32> -> vector<2x8x8xf32>
    "tpu.trace_stop"() : () -> ()
    %cst_215 = arith.constant 1.250000e-01 : f32
    %539 = vector.broadcast %cst_215 : f32 to vector<2x8x8xf32>
    %540 = arith.mulf %538, %539 : vector<2x8x8xf32>
    %cst_216 = arith.constant dense<0xFF800000> : vector<2x8xf32>
    %541 = vector.multi_reduction <maximumf>, %540, %cst_216 [2] : vector<2x8x8xf32> to vector<2x8xf32>
    %542 = vector.shape_cast %541 : vector<2x8xf32> to vector<2x8x1xf32>
    %543 = vector.broadcast %542 : vector<2x8x1xf32> to vector<2x8x8xf32>
    %544 = arith.subf %540, %543 : vector<2x8x8xf32>
    %545 = math.exp %544 : vector<2x8x8xf32>
    %cst_217 = arith.constant dense<0.000000e+00> : vector<2x8xf32>
    %546 = vector.multi_reduction <add>, %545, %cst_217 [2] : vector<2x8x8xf32> to vector<2x8xf32>
    %547 = vector.shape_cast %546 : vector<2x8xf32> to vector<2x8x1xf32>
    %548 = tpu.reciprocal %547 {approx = true} : vector<2x8x1xf32> -> vector<2x8x1xf32>
    %549 = vector.broadcast %548 : vector<2x8x1xf32> to vector<2x8x8xf32>
    %550 = arith.mulf %545, %549 : vector<2x8x8xf32>
    "tpu.trace_start"() <{level = 10 : i32, message = "bqk,bkd->bqd"}> : () -> ()
    %cst_218 = arith.constant dense<0.000000e+00> : vector<2x8x64xf32>
    %551 = tpu.matmul %550, %537, %cst_218 {dimension_numbers = #tpu.dot_dimension_numbers<[2], [1], [1], [2], [0, 0, 0, 1, 1, 2], [0], [0]>} : vector<2x8x8xf32>, vector<2x8x64xf32>, vector<2x8x64xf32> -> vector<2x8x64xf32>
    "tpu.trace_stop"() : () -> ()
    %552 = vector.shape_cast %551 : vector<2x8x64xf32> to vector<16x64xf32>
    %553 = vector.extract_strided_slice %384 {offsets = [448, 0], sizes = [64, 32], strides = [1, 1]} : vector<512x32xf32> to vector<64x32xf32>
    %cst_219 = arith.constant dense<0.000000e+00> : vector<16x32xf32>
    %554 = tpu.matmul %552, %553, %cst_219 {dimension_numbers = #tpu.dot_dimension_numbers<[1], [0], [0], [1], [0, 0, 1, 1], [], []>} : vector<16x64xf32>, vector<64x32xf32>, vector<16x32xf32> -> vector<16x32xf32>
    %555 = arith.addf %534, %554 : vector<16x32xf32>
    %556 = arith.addf %555, %382 : vector<16x32xf32>
    %c0_220 = arith.constant 0 : index
    %c0_221 = arith.constant 0 : index
    %557 = vector.load %arg19[%c0_220, %c0_221] : memref<1x32xf32, #tpu.memory_space<vmem>>, vector<1x32xf32>
    %c0_222 = arith.constant 0 : index
    %c0_223 = arith.constant 0 : index
    %558 = vector.load %arg20[%c0_222, %c0_223] : memref<1x32xf32, #tpu.memory_space<vmem>>, vector<1x32xf32>
    %cst_224 = arith.constant dense<0.000000e+00> : vector<16xf32>
    %559 = vector.multi_reduction <add>, %556, %cst_224 [1] : vector<16x32xf32> to vector<16xf32>
    %560 = vector.shape_cast %559 : vector<16xf32> to vector<16x1xf32>
    %cst_225 = arith.constant 3.200000e+01 : f32
    %561 = vector.broadcast %cst_225 : f32 to vector<16x1xf32>
    %562 = arith.divf %560, %561 : vector<16x1xf32>
    %563 = vector.broadcast %562 : vector<16x1xf32> to vector<16x32xf32>
    %564 = arith.subf %556, %563 : vector<16x32xf32>
    %565 = arith.mulf %564, %564 : vector<16x32xf32>
    %cst_226 = arith.constant dense<0.000000e+00> : vector<16xf32>
    %566 = vector.multi_reduction <add>, %565, %cst_226 [1] : vector<16x32xf32> to vector<16xf32>
    %567 = vector.shape_cast %566 : vector<16xf32> to vector<16x1xf32>
    %cst_227 = arith.constant 3.200000e+01 : f32
    %568 = vector.broadcast %cst_227 : f32 to vector<16x1xf32>
    %569 = arith.divf %567, %568 : vector<16x1xf32>
    %cst_228 = arith.constant 9.99999997E-7 : f32
    %570 = vector.broadcast %cst_228 : f32 to vector<16x1xf32>
    %571 = arith.addf %569, %570 : vector<16x1xf32>
    %572 = math.rsqrt %571 : vector<16x1xf32>
    %573 = vector.broadcast %572 : vector<16x1xf32> to vector<16x32xf32>
    %574 = arith.mulf %564, %573 : vector<16x32xf32>
    %575 = vector.broadcast %557 : vector<1x32xf32> to vector<16x32xf32>
    %576 = arith.mulf %574, %575 : vector<16x32xf32>
    %577 = vector.broadcast %558 : vector<1x32xf32> to vector<16x32xf32>
    %578 = arith.addf %576, %577 : vector<16x32xf32>
    %579 = vector.shape_cast %578 : vector<16x32xf32> to vector<2x8x32xf32>
    %cst_229 = arith.constant dense<0.000000e+00> : vector<2x32xf32>
    %580 = vector.multi_reduction <add>, %579, %cst_229 [1] : vector<2x8x32xf32> to vector<2x32xf32>
    %cst_230 = arith.constant 0.000000e+00 : f32
    %581 = vector.broadcast %cst_230 : f32 to vector<2x32xf32>
    %582 = arith.maximumf %580, %581 : vector<2x32xf32>
    %c0_231 = arith.constant 0 : index
    %c0_232 = arith.constant 0 : index
    %583 = vector.load %arg21[%c0_231, %c0_232] : memref<32x128xf32, #tpu.memory_space<vmem>>, vector<32x128xf32>
    %cst_233 = arith.constant dense<0.000000e+00> : vector<2x128xf32>
    %584 = tpu.matmul %582, %583, %cst_233 {dimension_numbers = #tpu.dot_dimension_numbers<[1], [0], [0], [1], [0, 0, 1, 1], [], []>} : vector<2x32xf32>, vector<32x128xf32>, vector<2x128xf32> -> vector<2x128xf32>
    %c0_234 = arith.constant 0 : index
    %c0_235 = arith.constant 0 : index
    %585 = vector.load %arg22[%c0_234, %c0_235] : memref<1x128xf32, #tpu.memory_space<vmem>>, vector<1x128xf32>
    %586 = vector.broadcast %585 : vector<1x128xf32> to vector<2x128xf32>
    %587 = arith.addf %584, %586 : vector<2x128xf32>
    %c0_236 = arith.constant 0 : index
    %c0_237 = arith.constant 0 : index
    %588 = vector.load %arg23[%c0_236, %c0_237] : memref<2x128xf32, #tpu.memory_space<vmem>>, vector<2x128xf32>
    tpu.vector_store %arg23[%c0_236, %c0_237], %587 {strides = array<i32>} : memref<2x128xf32, #tpu.memory_space<vmem>>, vector<2x128xf32>,
    return
  }
  func.func @transform_0(%arg0: i32) -> (i32, i32, i32) {
    %c0_i32 = arith.constant 0 : i32
    %c0_i32_0 = arith.constant 0 : i32
    %c0_i32_1 = arith.constant 0 : i32
    %c0_i32_2 = arith.constant 0 : i32
    return %c0_i32, %c0_i32_0, %c0_i32_1 : i32, i32, i32
  }
  func.func @transform_1(%arg0: i32) -> (i32, i32, i32) {
    %c0_i32 = arith.constant 0 : i32
    %c0_i32_0 = arith.constant 0 : i32
    %c0_i32_1 = arith.constant 0 : i32
    %c0_i32_2 = arith.constant 0 : i32
    return %c0_i32, %c0_i32_0, %c0_i32_1 : i32, i32, i32
  }
  func.func @transform_2(%arg0: i32) -> (i32, i32) {
    %c0_i32 = arith.constant 0 : i32
    %c0_i32_0 = arith.constant 0 : i32
    %c0_i32_1 = arith.constant 0 : i32
    return %c0_i32, %c0_i32_0 : i32, i32
  }
  func.func @transform_3(%arg0: i32) -> (i32, i32) {
    %c0_i32 = arith.constant 0 : i32
    %c0_i32_0 = arith.constant 0 : i32
    %c0_i32_1 = arith.constant 0 : i32
    return %c0_i32, %c0_i32_0 : i32, i32
  }
  func.func @transform_4(%arg0: i32) -> (i32, i32, i32) {
    %c0_i32 = arith.constant 0 : i32
    %c0_i32_0 = arith.constant 0 : i32
    %c0_i32_1 = arith.constant 0 : i32
    %c0_i32_2 = arith.constant 0 : i32
    return %c0_i32, %c0_i32_0, %c0_i32_1 : i32, i32, i32
  }
  func.func @transform_5(%arg0: i32) -> (i32, i32, i32) {
    %c0_i32 = arith.constant 0 : i32
    %c0_i32_0 = arith.constant 0 : i32
    %c0_i32_1 = arith.constant 0 : i32
    %c0_i32_2 = arith.constant 0 : i32
    return %c0_i32, %c0_i32_0, %c0_i32_1 : i32, i32, i32
  }
  func.func @transform_6(%arg0: i32) -> (i32, i32, i32) {
    %c0_i32 = arith.constant 0 : i32
    %c0_i32_0 = arith.constant 0 : i32
    %c0_i32_1 = arith.constant 0 : i32
    %c0_i32_2 = arith.constant 0 : i32
    return %c0_i32, %c0_i32_0, %c0_i32_1 : i32, i32, i32
  }
  func.func @transform_7(%arg0: i32) -> (i32, i32, i32) {
    %c0_i32 = arith.constant 0 : i32
    %c0_i32_0 = arith.constant 0 : i32
    %c0_i32_1 = arith.constant 0 : i32
    %c0_i32_2 = arith.constant 0 : i32
    return %c0_i32, %c0_i32_0, %c0_i32_1 : i32, i32, i32
  }
  func.func @transform_8(%arg0: i32) -> (i32, i32, i32) {
    %c0_i32 = arith.constant 0 : i32
    %c0_i32_0 = arith.constant 0 : i32
    %c0_i32_1 = arith.constant 0 : i32
    %c0_i32_2 = arith.constant 0 : i32
    return %c0_i32, %c0_i32_0, %c0_i32_1 : i32, i32, i32
  }
  func.func @transform_9(%arg0: i32) -> (i32, i32, i32) {
    %c0_i32 = arith.constant 0 : i32
    %c0_i32_0 = arith.constant 0 : i32
    %c0_i32_1 = arith.constant 0 : i32
    %c0_i32_2 = arith.constant 0 : i32
    return %c0_i32, %c0_i32_0, %c0_i32_1 : i32, i32, i32
  }
  func.func @transform_10(%arg0: i32) -> (i32, i32, i32) {
    %c0_i32 = arith.constant 0 : i32
    %c0_i32_0 = arith.constant 0 : i32
    %c0_i32_1 = arith.constant 0 : i32
    %c0_i32_2 = arith.constant 0 : i32
    return %c0_i32, %c0_i32_0, %c0_i32_1 : i32, i32, i32
  }
  func.func @transform_11(%arg0: i32) -> (i32, i32, i32) {
    %c0_i32 = arith.constant 0 : i32
    %c0_i32_0 = arith.constant 0 : i32
    %c0_i32_1 = arith.constant 0 : i32
    %c0_i32_2 = arith.constant 0 : i32
    return %c0_i32, %c0_i32_0, %c0_i32_1 : i32, i32, i32
  }
  func.func @transform_12(%arg0: i32) -> (i32, i32, i32) {
    %c0_i32 = arith.constant 0 : i32
    %c0_i32_0 = arith.constant 0 : i32
    %c0_i32_1 = arith.constant 0 : i32
    %c0_i32_2 = arith.constant 0 : i32
    return %c0_i32, %c0_i32_0, %c0_i32_1 : i32, i32, i32
  }
  func.func @transform_13(%arg0: i32) -> (i32, i32, i32) {
    %c0_i32 = arith.constant 0 : i32
    %c0_i32_0 = arith.constant 0 : i32
    %c0_i32_1 = arith.constant 0 : i32
    %c0_i32_2 = arith.constant 0 : i32
    return %c0_i32, %c0_i32_0, %c0_i32_1 : i32, i32, i32
  }
  func.func @transform_14(%arg0: i32) -> (i32, i32, i32) {
    %c0_i32 = arith.constant 0 : i32
    %c0_i32_0 = arith.constant 0 : i32
    %c0_i32_1 = arith.constant 0 : i32
    %c0_i32_2 = arith.constant 0 : i32
    return %c0_i32, %c0_i32_0, %c0_i32_1 : i32, i32, i32
  }
  func.func @transform_15(%arg0: i32) -> (i32, i32, i32) {
    %c0_i32 = arith.constant 0 : i32
    %c0_i32_0 = arith.constant 0 : i32
    %c0_i32_1 = arith.constant 0 : i32
    %c0_i32_2 = arith.constant 0 : i32
    return %c0_i32, %c0_i32_0, %c0_i32_1 : i32, i32, i32
  }
  func.func @transform_16(%arg0: i32) -> (i32, i32) {
    %c0_i32 = arith.constant 0 : i32
    %c0_i32_0 = arith.constant 0 : i32
    %c0_i32_1 = arith.constant 0 : i32
    return %c0_i32, %c0_i32_0 : i32, i32
  }
  func.func @transform_17(%arg0: i32) -> (i32, i32) {
    %c0_i32 = arith.constant 0 : i32
    %c0_i32_0 = arith.constant 0 : i32
    %c0_i32_1 = arith.constant 0 : i32
    return %c0_i32, %c0_i32_0 : i32, i32
  }
  func.func @transform_18(%arg0: i32) -> (i32, i32) {
    %c0_i32 = arith.constant 0 : i32
    %c0_i32_0 = arith.constant 0 : i32
    %c0_i32_1 = arith.constant 0 : i32
    return %c0_i32, %c0_i32_0 : i32, i32
  }
  func.func @transform_19(%arg0: i32) -> (i32, i32) {
    %c0_i32 = arith.constant 0 : i32
    %c0_i32_0 = arith.constant 0 : i32
    %c0_i32_1 = arith.constant 0 : i32
    return %c0_i32, %c0_i32_0 : i32, i32
  }
  func.func @transform_20(%arg0: i32) -> (i32, i32) {
    %c0_i32 = arith.constant 0 : i32
    %c0_i32_0 = arith.constant 0 : i32
    %c0_i32_1 = arith.constant 0 : i32
    return %c0_i32, %c0_i32_0 : i32, i32
  }
  func.func @transform_21(%arg0: i32) -> (i32, i32) {
    %c0_i32 = arith.constant 0 : i32
    %c0_i32_0 = arith.constant 0 : i32
    %c0_i32_1 = arith.constant 0 : i32
    return %c0_i32, %c0_i32_0 : i32, i32
  }
  func.func @transform_22(%arg0: i32) -> (i32, i32) {
    %c0_i32 = arith.constant 0 : i32
    %c0_i32_0 = arith.constant 0 : i32
    %c0_i32_1 = arith.constant 0 : i32
    return %c0_i32, %c0_i32_0 : i32, i32
  }
}

</mosaic_0001>

<llo_original>
// kernel: joint_forward.1
$region0: #{joint_forward.1}
  #allocation0 [shape = 'u32[]', space=smem, size = 0x4, offset = 0x4, fixed_abs, tag = 'smem constant byte address 0x4 - core index']
  #allocation1 [shape = 'u32[144,128]{1,0:T(1,128)}', space=vmem, size = 0x12000, scoped, tag = 'internal scratch']
  %s0 = inlined_call_operand.vmem [shape: f32[2,1,8], index: 0, kind: input, shape index: {}]
  %s1 = inlined_call_operand.vmem [shape: f32[2,8,32], index: 1, kind: input, shape index: {}]
  %s2 = inlined_call_operand.vmem [shape: f32[1,32], index: 2, kind: input, shape index: {}]
  %s3 = inlined_call_operand.vmem [shape: f32[1,32], index: 3, kind: input, shape index: {}]
  %s4 = inlined_call_operand.vmem [shape: f32[2,32,96], index: 4, kind: input, shape index: {}]
  %s5 = inlined_call_operand.vmem [shape: f32[2,1,96], index: 5, kind: input, shape index: {}]
  %s6 = inlined_call_operand.vmem [shape: f32[2,32,32], index: 6, kind: input, shape index: {}]
  %s7 = inlined_call_operand.vmem [shape: f32[2,1,32], index: 7, kind: input, shape index: {}]
  %s8 = inlined_call_operand.vmem [shape: f32[2,1,32], index: 8, kind: input, shape index: {}]
  %s9 = inlined_call_operand.vmem [shape: f32[2,1,32], index: 9, kind: input, shape index: {}]
  %s10 = inlined_call_operand.vmem [shape: f32[2,32,64], index: 10, kind: input, shape index: {}]
  %s11 = inlined_call_operand.vmem [shape: f32[2,1,64], index: 11, kind: input, shape index: {}]
  %s12 = inlined_call_operand.vmem [shape: f32[2,64,32], index: 12, kind: input, shape index: {}]
  %s13 = inlined_call_operand.vmem [shape: f32[2,1,32], index: 13, kind: input, shape index: {}]
  %s14 = inlined_call_operand.vmem [shape: f32[2,1,32], index: 14, kind: input, shape index: {}]
  %s15 = inlined_call_operand.vmem [shape: f32[2,1,32], index: 15, kind: input, shape index: {}]
  %s16 = inlined_call_operand.vmem [shape: f32[32,1536], index: 16, kind: input, shape index: {}]
  %s17 = inlined_call_operand.vmem [shape: f32[512,32], index: 17, kind: input, shape index: {}]
  %s18 = inlined_call_operand.vmem [shape: f32[1,32], index: 18, kind: input, shape index: {}]
  %s19 = inlined_call_operand.vmem [shape: f32[1,32], index: 19, kind: input, shape index: {}]
  %s20 = inlined_call_operand.vmem [shape: f32[32,128], index: 20, kind: input, shape index: {}]
  %s21 = inlined_call_operand.vmem [shape: f32[1,128], index: 21, kind: input, shape index: {}]
  %s22 = inlined_call_operand.hbm [shape: f32[2,128], index: 22, kind: output, shape index: {}]
  %s23 = sld [smem:[#allocation0]]
  $region98: #{joint_forward.1} parent=0
    _
  %s25 = ssub.s32 1, %s23
  %s26 = scalar_select 0, %s25, %s23
  $region1: #{joint_forward.1} parent=0
    #allocation2 [shape = 'u8[1024]{0}', space=vmem, size = 0x400, scoped, tag = 'output window, operand 0, single buffered']
    #allocation3 [shape = 's32[1]{0}', space=sflag, size = 0x4, scoped, tag = 'scoped memory for joint_forward.1']
    %27 = vsyncpa [#allocation3], 0
    // Predicated region
    $region2: #{joint_forward.1} parent=1 // pred_check
      _
    $region3: #{joint_forward.1} parent=1 // pred_check_branch
      %29 = sbr.rel (0) target = $region5
    $region4: #{joint_forward.1} parent=1 // pred_region
      _
    $region5: #{joint_forward.1} parent=1 // pred_fallthru
      _
    // Predicated region
    $region6: #{joint_forward.1} parent=1 // pred_check
      _
    $region7: #{joint_forward.1} parent=1 // pred_check_branch
      %31 = sbr.rel (0) target = $region9
    $region8: #{joint_forward.1} parent=1 // pred_region
      _
    $region9: #{joint_forward.1} parent=1 // pred_fallthru
      _
    // Predicated region
    $region10: #{joint_forward.1} parent=1 // pred_check
      _
    $region11: #{joint_forward.1} parent=1 // pred_check_branch
      %33 = sbr.rel (0) target = $region13
    $region12: #{joint_forward.1} parent=1 // pred_region
      _
    $region13: #{joint_forward.1} parent=1 // pred_fallthru
      _
    // Predicated region
    $region14: #{joint_forward.1} parent=1 // pred_check
      _
    $region15: #{joint_forward.1} parent=1 // pred_check_branch
      %35 = sbr.rel (0) target = $region17
    $region16: #{joint_forward.1} parent=1 // pred_region
      _
    $region17: #{joint_forward.1} parent=1 // pred_fallthru
      _
    // Predicated region
    $region18: #{joint_forward.1} parent=1 // pred_check
      _
    $region19: #{joint_forward.1} parent=1 // pred_check_branch
      %37 = sbr.rel (0) target = $region21
    $region20: #{joint_forward.1} parent=1 // pred_region
      _
    $region21: #{joint_forward.1} parent=1 // pred_fallthru
      _
    // Predicated region
    $region22: #{joint_forward.1} parent=1 // pred_check
      _
    $region23: #{joint_forward.1} parent=1 // pred_check_branch
      %39 = sbr.rel (0) target = $region25
    $region24: #{joint_forward.1} parent=1 // pred_region
      _
    $region25: #{joint_forward.1} parent=1 // pred_fallthru
      _
    // Predicated region
    $region26: #{joint_forward.1} parent=1 // pred_check
      _
    $region27: #{joint_forward.1} parent=1 // pred_check_branch
      %41 = sbr.rel (0) target = $region29
    $region28: #{joint_forward.1} parent=1 // pred_region
      _
    $region29: #{joint_forward.1} parent=1 // pred_fallthru
      _
    // Predicated region
    $region30: #{joint_forward.1} parent=1 // pred_check
      _
    $region31: #{joint_forward.1} parent=1 // pred_check_branch
      %43 = sbr.rel (0) target = $region33
    $region32: #{joint_forward.1} parent=1 // pred_region
      _
    $region33: #{joint_forward.1} parent=1 // pred_fallthru
      _
    // Predicated region
    $region34: #{joint_forward.1} parent=1 // pred_check
      _
    $region35: #{joint_forward.1} parent=1 // pred_check_branch
      %45 = sbr.rel (0) target = $region37
    $region36: #{joint_forward.1} parent=1 // pred_region
      _
    $region37: #{joint_forward.1} parent=1 // pred_fallthru
      _
    // Predicated region
    $region38: #{joint_forward.1} parent=1 // pred_check
      _
    $region39: #{joint_forward.1} parent=1 // pred_check_branch
      %47 = sbr.rel (0) target = $region41
    $region40: #{joint_forward.1} parent=1 // pred_region
      _
    $region41: #{joint_forward.1} parent=1 // pred_fallthru
      _
    // Predicated region
    $region42: #{joint_forward.1} parent=1 // pred_check
      _
    $region43: #{joint_forward.1} parent=1 // pred_check_branch
      %49 = sbr.rel (0) target = $region45
    $region44: #{joint_forward.1} parent=1 // pred_region
      _
    $region45: #{joint_forward.1} parent=1 // pred_fallthru
      _
    // Predicated region
    $region46: #{joint_forward.1} parent=1 // pred_check
      _
    $region47: #{joint_forward.1} parent=1 // pred_check_branch
      %51 = sbr.rel (0) target = $region49
    $region48: #{joint_forward.1} parent=1 // pred_region
      _
    $region49: #{joint_forward.1} parent=1 // pred_fallthru
      _
    // Predicated region
    $region50: #{joint_forward.1} parent=1 // pred_check
      _
    $region51: #{joint_forward.1} parent=1 // pred_check_branch
      %53 = sbr.rel (0) target = $region53
    $region52: #{joint_forward.1} parent=1 // pred_region
      _
    $region53: #{joint_forward.1} parent=1 // pred_fallthru
      _
    // Predicated region
    $region54: #{joint_forward.1} parent=1 // pred_check
      _
    $region55: #{joint_forward.1} parent=1 // pred_check_branch
      %55 = sbr.rel (0) target = $region57
    $region56: #{joint_forward.1} parent=1 // pred_region
      _
    $region57: #{joint_forward.1} parent=1 // pred_fallthru
      _
    // Predicated region
    $region58: #{joint_forward.1} parent=1 // pred_check
      _
    $region59: #{joint_forward.1} parent=1 // pred_check_branch
      %57 = sbr.rel (0) target = $region61
    $region60: #{joint_forward.1} parent=1 // pred_region
      _
    $region61: #{joint_forward.1} parent=1 // pred_fallthru
      _
    // Predicated region
    $region62: #{joint_forward.1} parent=1 // pred_check
      _
    $region63: #{joint_forward.1} parent=1 // pred_check_branch
      %59 = sbr.rel (0) target = $region65
    $region64: #{joint_forward.1} parent=1 // pred_region
      _
    $region65: #{joint_forward.1} parent=1 // pred_fallthru
      _
    // Predicated region
    $region66: #{joint_forward.1} parent=1 // pred_check
      _
    $region67: #{joint_forward.1} parent=1 // pred_check_branch
      %61 = sbr.rel (0) target = $region69
    $region68: #{joint_forward.1} parent=1 // pred_region
      _
    $region69: #{joint_forward.1} parent=1 // pred_fallthru
      _
    // Predicated region
    $region70: #{joint_forward.1} parent=1 // pred_check
      _
    $region71: #{joint_forward.1} parent=1 // pred_check_branch
      %63 = sbr.rel (0) target = $region73
    $region72: #{joint_forward.1} parent=1 // pred_region
      _
    $region73: #{joint_forward.1} parent=1 // pred_fallthru
      _
    // Predicated region
    $region74: #{joint_forward.1} parent=1 // pred_check
      _
    $region75: #{joint_forward.1} parent=1 // pred_check_branch
      %65 = sbr.rel (0) target = $region77
    $region76: #{joint_forward.1} parent=1 // pred_region
      _
    $region77: #{joint_forward.1} parent=1 // pred_fallthru
      _
    // Predicated region
    $region78: #{joint_forward.1} parent=1 // pred_check
      _
    $region79: #{joint_forward.1} parent=1 // pred_check_branch
      %67 = sbr.rel (0) target = $region81
    $region80: #{joint_forward.1} parent=1 // pred_region
      _
    $region81: #{joint_forward.1} parent=1 // pred_fallthru
      _
    // Predicated region
    $region82: #{joint_forward.1} parent=1 // pred_check
      _
    $region83: #{joint_forward.1} parent=1 // pred_check_branch
      %69 = sbr.rel (0) target = $region85
    $region84: #{joint_forward.1} parent=1 // pred_region
      _
    $region85: #{joint_forward.1} parent=1 // pred_fallthru
      _
    // Predicated region
    $region86: #{joint_forward.1} parent=1 // pred_check
      _
    $region87: #{joint_forward.1} parent=1 // pred_check_branch
      %71 = sbr.rel (0) target = $region89
    $region88: #{joint_forward.1} parent=1 // pred_region
      _
    $region89: #{joint_forward.1} parent=1 // pred_fallthru
      _
    %v72 = vld [vmem:[%s0] sm:$0x1]
    %v73 = vld [vmem:[%s0 + $0x1] sm:$0x1]
    %v74 = vld [vmem:[%s1] sm:$0xff]
    %v75 = vld [vmem:[%s1 + $0x8] sm:$0xff]
    %v76 = vld [vmem:[%s2] sm:$0x1]
    %v77 = vld [vmem:[%s3] sm:$0x1]
    %vm78 = vcmask 261120
    %v79 = vsel %vm78, %v74, 0.0
    %80 = vadd.xlane.f32.xlu0 %v79
    %v81 = vpop.xlane.xlu0 %80
    %v82 = vsel %vm78, %v75, 0.0
    %83 = vadd.xlane.f32.xlu0 %v82
    %v84 = vpop.xlane.xlu0 %83
    %v85 = vrcp.pop 32.0
    %v86 = vmul.f32 %v81, %v85
    %v87 = vmul.f32 %v84, %v85
    %v88 = vsub.f32 %v74, %v86
    %v89 = vsub.f32 %v75, %v87
    %v90 = vmul.f32 %v88, %v88
    %v91 = vmul.f32 %v89, %v89
    %v92 = vsel %vm78, %v90, 0.0
    %93 = vadd.xlane.f32.xlu0 %v92
    %v94 = vpop.xlane.xlu0 %93
    %v95 = vsel %vm78, %v91, 0.0
    %96 = vadd.xlane.f32.xlu0 %v95
    %v97 = vpop.xlane.xlu0 %96
    %v98 = vmul.f32 %v94, %v85
    %v99 = vmul.f32 %v97, %v85
    %v100 = vadd.f32 %v98, 1e-12
    %v101 = vadd.f32 %v99, 1e-12
    %v102 = vrsqrt.pop %v100
    %v103 = vrsqrt.pop %v101
    %v104 = vmul.f32 %v88, %v102
    %v105 = vmul.f32 %v89, %v103
    %v107 = vlaneseq
    %v108 = vshrl.u32 %v107, 7
    %v109 = vsub.s32 0, %v108
    %v110 = vrot.slane %v76, %v109
    %v112 = vmul.f32 %v104, %v110
    %v113 = vmul.f32 %v105, %v110
    %v115 = vlaneseq
    %v116 = vshrl.u32 %v115, 7
    %v117 = vsub.s32 0, %v116
    %v118 = vrot.slane %v77, %v117
    %v120 = vadd.f32 %v112, %v118
    %v121 = vadd.f32 %v113, %v118
    %v122 = vld [vmem:[%s4] sm:$0xff]
    %v123 = vld [vmem:[%s4 + $0x8] sm:$0xff]
    %v124 = vld [vmem:[%s4 + $0x10] sm:$0xff]
    %v125 = vld [vmem:[%s4 + $0x18] sm:$0xff]
    %v126 = vld [vmem:[%s6] sm:$0xff]
    %v127 = vld [vmem:[%s6 + $0x8] sm:$0xff]
    %v128 = vld [vmem:[%s6 + $0x10] sm:$0xff]
    %v129 = vld [vmem:[%s6 + $0x18] sm:$0xff]
    %v130 = vld [vmem:[%s5] sm:$0x1]
    %v132 = vlaneseq
    %v133 = vshrl.u32 %v132, 7
    %v134 = vsub.s32 0, %v133
    %v135 = vrot.slane %v130, %v134
    %v138 = vsel %vm78, %v120, 0
    %v141 = vsel %vm78, %v121, 0
    %143 = vmatprep.subr.mxu0 0.0
    %144 = vmatpush1.msra.mxu0 %v122
    %145 = vmatprep.subr.mxu0 0.0
    %146 = vmatpush1.msra.mxu0 %v123
    %147 = vmatprep.subr.mxu0 0.0
    %148 = vmatpush1.msra.mxu0 %v124
    %149 = vmatprep.subr.mxu0 0.0
    %150 = vmatpush1.msra.mxu0 %v125
    %151 = vmatprep.subr.mxu0 0.0
    %152 = vmatpush1.msra.mxu0 0.0
    %153 = vmatprep.subr.mxu0 0.0
    %154 = vmatpush1.msra.mxu0 0.0
    %155 = vmatprep.subr.mxu0 0.0
    %156 = vmatpush1.msra.mxu0 0.0
    %157 = vmatprep.subr.mxu0 0.0
    %158 = vmatpush1.msra.mxu0 0.0
    %159 = vmatprep.subr.mxu0 0.0
    %160 = vmatpush1.msra.mxu0 0.0
    %161 = vmatprep.subr.mxu0 0.0
    %162 = vmatpush1.msra.mxu0 0.0
    %163 = vmatprep.subr.mxu0 0.0
    %164 = vmatpush1.msra.mxu0 0.0
    %165 = vmatprep.subr.mxu0 0.0
    %166 = vmatpush1.msra.mxu0 0.0
    %167 = vmatprep.subr.mxu0 0.0
    %168 = vmatpush1.msra.mxu0 0.0
    %169 = vmatprep.subr.mxu0 0.0
    %170 = vmatpush1.msra.mxu0 0.0
    %171 = vmatprep.subr.mxu0 0.0
    %172 = vmatpush1.msra.mxu0 0.0
    %173 = vmatprep.subr.mxu0 0.0
    %174 = vmatpush1.msra.mxu0 0.0
    %175 = vmatprep.subr.mxu0 0.0
    %176 = vmatpush1.msra.mxu0 0.0
    %177 = vmatprep.subr.mxu0 0.0
    %178 = vmatpush1.msra.mxu0 0.0
    %179 = vmatprep.subr.mxu0 0.0
    %180 = vmatpush1.msra.mxu0 0.0
    %181 = vmatprep.subr.mxu0 0.0
    %182 = vmatpush1.msra.mxu0 0.0
    %183 = vmatprep.subr.mxu0 0.0
    %184 = vmatpush1.msra.mxu0 0.0
    %185 = vmatprep.subr.mxu0 0.0
    %186 = vmatpush1.msra.mxu0 0.0
    %187 = vmatprep.subr.mxu0 0.0
    %188 = vmatpush1.msra.mxu0 0.0
    %189 = vmatprep.subr.mxu0 0.0
    %190 = vmatpush1.msra.mxu0 0.0
    %191 = vmatprep.subr.mxu0 0.0
    %192 = vmatpush1.msra.mxu0 0.0
    %193 = vmatprep.subr.mxu0 0.0
    %194 = vmatpush1.msra.mxu0 0.0
    %195 = vmatprep.subr.mxu0 0.0
    %196 = vmatpush1.msra.mxu0 0.0
    %197 = vmatprep.subr.mxu0 0.0
    %198 = vmatpush1.msra.mxu0 0.0
    %199 = vmatprep.subr.mxu0 0.0
    %200 = vmatpush1.msra.mxu0 0.0
    %201 = vmatprep.subr.mxu0 0.0
    %202 = vmatpush1.msra.mxu0 0.0
    %203 = vmatprep.subr.mxu0 0.0
    %204 = vmatpush1.msra.mxu0 0.0
    %205 = vmatprep.subr.mxu0 0.0
    %206 = vmatpush1.msra.mxu0 0.0
    %207 = vmatprep.mubr.f32.mxu0 0.0
    %208 = vmatmul.mubr.f32.gmra.mrb[0].mxu0 %v138
    %v209 = vpop.f32.mrb[0].mxu0
    %v210 = vadd.f32 %v135, %v209
    %v211 = vpop.f32.mrb[0].mxu0
    %212 = vmatprep.mubr.f32.mxu0 0.0
    %213 = vmatmul.mubr.f32.gmra.mrb[0].mxu0 %v141
    %v214 = vpop.f32.mrb[0].mxu0
    %v215 = vadd.f32 %v135, %v214
    %v216 = vpop.f32.mrb[0].mxu0
    %217 = vdwg.mxu0
    %219 = vrot.lane.b32.xlu0 %v210, 96
    %v220 = vpop.permute.xlu0 %219
    %vm221 = vcmask 64512
    %v222 = vsel %vm221, %v210, 0
    %v224 = vsel %vm221, %v220, 0
    %226 = vmatprep.subr.mxu0 0.0
    %227 = vmatpush1.xpose.msra.mxu0 %v224
    %228 = vmatprep.subr.mxu0 0.0
    %229 = vmatpush1.xpose.msra.mxu0 0.0
    %230 = vmatprep.subr.mxu0 0.0
    %231 = vmatpush1.xpose.msra.mxu0 0.0
    %232 = vmatprep.subr.mxu0 0.0
    %233 = vmatpush1.xpose.msra.mxu0 0.0
    %234 = vmatprep.subr.mxu0 0.0
    %235 = vmatpush1.xpose.msra.mxu0 0.0
    %236 = vmatprep.subr.mxu0 0.0
    %237 = vmatpush1.xpose.msra.mxu0 0.0
    %238 = vmatprep.subr.mxu0 0.0
    %239 = vmatpush1.xpose.msra.mxu0 0.0
    %240 = vmatprep.subr.mxu0 0.0
    %241 = vmatpush1.xpose.msra.mxu0 0.0
    %242 = vmatprep.subr.mxu0 0.0
    %243 = vmatpush1.xpose.msra.mxu0 0.0
    %244 = vmatprep.subr.mxu0 0.0
    %245 = vmatpush1.xpose.msra.mxu0 0.0
    %246 = vmatprep.subr.mxu0 0.0
    %247 = vmatpush1.xpose.msra.mxu0 0.0
    %248 = vmatprep.subr.mxu0 0.0
    %249 = vmatpush1.xpose.msra.mxu0 0.0
    %250 = vmatprep.subr.mxu0 0.0
    %251 = vmatpush1.xpose.msra.mxu0 0.0
    %252 = vmatprep.subr.mxu0 0.0
    %253 = vmatpush1.xpose.msra.mxu0 0.0
    %254 = vmatprep.subr.mxu0 0.0
    %255 = vmatpush1.xpose.msra.mxu0 0.0
    %256 = vmatprep.subr.mxu0 0.0
    %257 = vmatpush1.xpose.msra.mxu0 0.0
    %258 = vmatprep.subr.mxu0 0.0
    %259 = vmatpush1.xpose.msra.mxu0 0.0
    %260 = vmatprep.subr.mxu0 0.0
    %261 = vmatpush1.xpose.msra.mxu0 0.0
    %262 = vmatprep.subr.mxu0 0.0
    %263 = vmatpush1.xpose.msra.mxu0 0.0
    %264 = vmatprep.subr.mxu0 0.0
    %265 = vmatpush1.xpose.msra.mxu0 0.0
    %266 = vmatprep.subr.mxu0 0.0
    %267 = vmatpush1.xpose.msra.mxu0 0.0
    %268 = vmatprep.subr.mxu0 0.0
    %269 = vmatpush1.xpose.msra.mxu0 0.0
    %270 = vmatprep.subr.mxu0 0.0
    %271 = vmatpush1.xpose.msra.mxu0 0.0
    %272 = vmatprep.subr.mxu0 0.0
    %273 = vmatpush1.xpose.msra.mxu0 0.0
    %274 = vmatprep.subr.mxu0 0.0
    %275 = vmatpush1.xpose.msra.mxu0 0.0
    %276 = vmatprep.subr.mxu0 0.0
    %277 = vmatpush1.xpose.msra.mxu0 0.0
    %278 = vmatprep.subr.mxu0 0.0
    %279 = vmatpush1.xpose.msra.mxu0 0.0
    %280 = vmatprep.subr.mxu0 0.0
    %281 = vmatpush1.xpose.msra.mxu0 0.0
    %282 = vmatprep.subr.mxu0 0.0
    %283 = vmatpush1.xpose.msra.mxu0 0.0
    %284 = vmatprep.subr.mxu0 0.0
    %285 = vmatpush1.xpose.msra.mxu0 0.0
    %286 = vmatprep.subr.mxu0 0.0
    %287 = vmatpush1.xpose.msra.mxu0 0.0
    %288 = vmatprep.subr.mxu0 0.0
    %289 = vmatpush1.xpose.msra.mxu0 0.0
    %290 = vmatprep.mubr.f32.mxu0 0.0
    %291 = vmatmul.mubr.f32.gmra.mrb[0].mxu0 %v222
    %v292 = vpop.f32.mrb[0].mxu0
    %v293 = vadd.f32 0.0, %v292
    %v294 = vpop.f32.mrb[0].mxu0
    %295 = vdwg.mxu0
    %297 = vrot.lane.b32.xlu0 %v215, 96
    %v298 = vpop.permute.xlu0 %297
    %v299 = vsel %vm221, %v215, 0
    %v301 = vsel %vm221, %v298, 0
    %303 = vmatprep.subr.mxu0 0.0
    %304 = vmatpush1.xpose.msra.mxu0 %v301
    %305 = vmatprep.subr.mxu0 0.0
    %306 = vmatpush1.xpose.msra.mxu0 0.0
    %307 = vmatprep.subr.mxu0 0.0
    %308 = vmatpush1.xpose.msra.mxu0 0.0
    %309 = vmatprep.subr.mxu0 0.0
    %310 = vmatpush1.xpose.msra.mxu0 0.0
    %311 = vmatprep.subr.mxu0 0.0
    %312 = vmatpush1.xpose.msra.mxu0 0.0
    %313 = vmatprep.subr.mxu0 0.0
    %314 = vmatpush1.xpose.msra.mxu0 0.0
    %315 = vmatprep.subr.mxu0 0.0
    %316 = vmatpush1.xpose.msra.mxu0 0.0
    %317 = vmatprep.subr.mxu0 0.0
    %318 = vmatpush1.xpose.msra.mxu0 0.0
    %319 = vmatprep.subr.mxu0 0.0
    %320 = vmatpush1.xpose.msra.mxu0 0.0
    %321 = vmatprep.subr.mxu0 0.0
    %322 = vmatpush1.xpose.msra.mxu0 0.0
    %323 = vmatprep.subr.mxu0 0.0
    %324 = vmatpush1.xpose.msra.mxu0 0.0
    %325 = vmatprep.subr.mxu0 0.0
    %326 = vmatpush1.xpose.msra.mxu0 0.0
    %327 = vmatprep.subr.mxu0 0.0
    %328 = vmatpush1.xpose.msra.mxu0 0.0
    %329 = vmatprep.subr.mxu0 0.0
    %330 = vmatpush1.xpose.msra.mxu0 0.0
    %331 = vmatprep.subr.mxu0 0.0
    %332 = vmatpush1.xpose.msra.mxu0 0.0
    %333 = vmatprep.subr.mxu0 0.0
    %334 = vmatpush1.xpose.msra.mxu0 0.0
    %335 = vmatprep.subr.mxu0 0.0
    %336 = vmatpush1.xpose.msra.mxu0 0.0
    %337 = vmatprep.subr.mxu0 0.0
    %338 = vmatpush1.xpose.msra.mxu0 0.0
    %339 = vmatprep.subr.mxu0 0.0
    %340 = vmatpush1.xpose.msra.mxu0 0.0
    %341 = vmatprep.subr.mxu0 0.0
    %342 = vmatpush1.xpose.msra.mxu0 0.0
    %343 = vmatprep.subr.mxu0 0.0
    %344 = vmatpush1.xpose.msra.mxu0 0.0
    %345 = vmatprep.subr.mxu0 0.0
    %346 = vmatpush1.xpose.msra.mxu0 0.0
    %347 = vmatprep.subr.mxu0 0.0
    %348 = vmatpush1.xpose.msra.mxu0 0.0
    %349 = vmatprep.subr.mxu0 0.0
    %350 = vmatpush1.xpose.msra.mxu0 0.0
    %351 = vmatprep.subr.mxu0 0.0
    %352 = vmatpush1.xpose.msra.mxu0 0.0
    %353 = vmatprep.subr.mxu0 0.0
    %354 = vmatpush1.xpose.msra.mxu0 0.0
    %355 = vmatprep.subr.mxu0 0.0
    %356 = vmatpush1.xpose.msra.mxu0 0.0
    %357 = vmatprep.subr.mxu0 0.0
    %358 = vmatpush1.xpose.msra.mxu0 0.0
    %359 = vmatprep.subr.mxu0 0.0
    %360 = vmatpush1.xpose.msra.mxu0 0.0
    %361 = vmatprep.subr.mxu0 0.0
    %362 = vmatpush1.xpose.msra.mxu0 0.0
    %363 = vmatprep.subr.mxu0 0.0
    %364 = vmatpush1.xpose.msra.mxu0 0.0
    %365 = vmatprep.subr.mxu0 0.0
    %366 = vmatpush1.xpose.msra.mxu0 0.0
    %367 = vmatprep.mubr.f32.mxu0 0.0
    %368 = vmatmul.mubr.f32.gmra.mrb[0].mxu0 %v299
    %v369 = vpop.f32.mrb[0].mxu0
    %v370 = vadd.f32 0.0, %v369
    %v371 = vpop.f32.mrb[0].mxu0
    %372 = vdwg.mxu0
    %v373 = vmul.f32 %v293, 0.35355338
    %v374 = vmul.f32 %v370, 0.35355338
    %v377 = vlaneseq
    %v378 = vshrl.u32 %v377, 7
    %v379 = vsub.s32 0, %v378
    %v380 = vrot.slane %v72, %v379
    %v381 = vlaneseq
    %v382 = vshrl.u32 %v381, 7
    %v383 = vsub.s32 0, %v382
    %v384 = vrot.slane %v73, %v383
    %v387 = vadd.f32 %v373, %v380
    %v388 = vadd.f32 %v374, %v384
    %v389 = vsel %vm221, %v387, -inf
    %390 = vmax.xlane.f32.xlu0 %v389
    %v391 = vpop.xlane.xlu0 %390
    %v392 = vsel %vm221, %v388, -inf
    %393 = vmax.xlane.f32.xlu0 %v392
    %v394 = vpop.xlane.xlu0 %393
    %v395 = vsub.f32 %v387, %v391
    %v396 = vsub.f32 %v388, %v394
    %v397 = vmul.f32 %v395, 1.442695
    %v398 = vpow.pop %v397
    %v399 = vmul.f32 %v396, 1.442695
    %v400 = vpow.pop %v399
    %v401 = vsel %vm221, %v398, 0.0
    %402 = vadd.xlane.f32.xlu0 %v401
    %v403 = vpop.xlane.xlu0 %402
    %v404 = vsel %vm221, %v400, 0.0
    %405 = vadd.xlane.f32.xlu0 %v404
    %v406 = vpop.xlane.xlu0 %405
    %v407 = vrcp.pop %v403
    %v408 = vrcp.pop %v406
    %v409 = vmul.f32 %v398, %v407
    %v410 = vmul.f32 %v400, %v408
    %411 = vrot.lane.b32.xlu0 %v210, 64
    %v412 = vpop.permute.xlu0 %411
    %v415 = vsel %vm221, %v409, 0
    %417 = vmatprep.subr.mxu0 0.0
    %418 = vmatpush1.msra.mxu0 %v412
    %419 = vmatprep.subr.mxu0 0.0
    %420 = vmatpush1.msra.mxu0 0.0
    %421 = vmatprep.subr.mxu0 0.0
    %422 = vmatpush1.msra.mxu0 0.0
    %423 = vmatprep.subr.mxu0 0.0
    %424 = vmatpush1.msra.mxu0 0.0
    %425 = vmatprep.subr.mxu0 0.0
    %426 = vmatpush1.msra.mxu0 0.0
    %427 = vmatprep.subr.mxu0 0.0
    %428 = vmatpush1.msra.mxu0 0.0
    %429 = vmatprep.subr.mxu0 0.0
    %430 = vmatpush1.msra.mxu0 0.0
    %431 = vmatprep.subr.mxu0 0.0
    %432 = vmatpush1.msra.mxu0 0.0
    %433 = vmatprep.subr.mxu0 0.0
    %434 = vmatpush1.msra.mxu0 0.0
    %435 = vmatprep.subr.mxu0 0.0
    %436 = vmatpush1.msra.mxu0 0.0
    %437 = vmatprep.subr.mxu0 0.0
    %438 = vmatpush1.msra.mxu0 0.0
    %439 = vmatprep.subr.mxu0 0.0
    %440 = vmatpush1.msra.mxu0 0.0
    %441 = vmatprep.subr.mxu0 0.0
    %442 = vmatpush1.msra.mxu0 0.0
    %443 = vmatprep.subr.mxu0 0.0
    %444 = vmatpush1.msra.mxu0 0.0
    %445 = vmatprep.subr.mxu0 0.0
    %446 = vmatpush1.msra.mxu0 0.0
    %447 = vmatprep.subr.mxu0 0.0
    %448 = vmatpush1.msra.mxu0 0.0
    %449 = vmatprep.subr.mxu0 0.0
    %450 = vmatpush1.msra.mxu0 0.0
    %451 = vmatprep.subr.mxu0 0.0
    %452 = vmatpush1.msra.mxu0 0.0
    %453 = vmatprep.subr.mxu0 0.0
    %454 = vmatpush1.msra.mxu0 0.0
    %455 = vmatprep.subr.mxu0 0.0
    %456 = vmatpush1.msra.mxu0 0.0
    %457 = vmatprep.subr.mxu0 0.0
    %458 = vmatpush1.msra.mxu0 0.0
    %459 = vmatprep.subr.mxu0 0.0
    %460 = vmatpush1.msra.mxu0 0.0
    %461 = vmatprep.subr.mxu0 0.0
    %462 = vmatpush1.msra.mxu0 0.0
    %463 = vmatprep.subr.mxu0 0.0
    %464 = vmatpush1.msra.mxu0 0.0
    %465 = vmatprep.subr.mxu0 0.0
    %466 = vmatpush1.msra.mxu0 0.0
    %467 = vmatprep.subr.mxu0 0.0
    %468 = vmatpush1.msra.mxu0 0.0
    %469 = vmatprep.subr.mxu0 0.0
    %470 = vmatpush1.msra.mxu0 0.0
    %471 = vmatprep.subr.mxu0 0.0
    %472 = vmatpush1.msra.mxu0 0.0
    %473 = vmatprep.subr.mxu0 0.0
    %474 = vmatpush1.msra.mxu0 0.0
    %475 = vmatprep.subr.mxu0 0.0
    %476 = vmatpush1.msra.mxu0 0.0
    %477 = vmatprep.subr.mxu0 0.0
    %478 = vmatpush1.msra.mxu0 0.0
    %479 = vmatprep.subr.mxu0 0.0
    %480 = vmatpush1.msra.mxu0 0.0
    %481 = vmatprep.mubr.f32.mxu0 0.0
    %482 = vmatmul.mubr.f32.gmra.mrb[0].mxu0 %v415
    %v483 = vpop.f32.mrb[0].mxu0
    %v484 = vadd.f32 0.0, %v483
    %v485 = vpop.f32.mrb[0].mxu0
    %486 = vdwg.mxu0
    %487 = vrot.lane.b32.xlu0 %v215, 64
    %v488 = vpop.permute.xlu0 %487
    %v491 = vsel %vm221, %v410, 0
    %493 = vmatprep.subr.mxu0 0.0
    %494 = vmatpush1.msra.mxu0 %v488
    %495 = vmatprep.subr.mxu0 0.0
    %496 = vmatpush1.msra.mxu0 0.0
    %497 = vmatprep.subr.mxu0 0.0
    %498 = vmatpush1.msra.mxu0 0.0
    %499 = vmatprep.subr.mxu0 0.0
    %500 = vmatpush1.msra.mxu0 0.0
    %501 = vmatprep.subr.mxu0 0.0
    %502 = vmatpush1.msra.mxu0 0.0
    %503 = vmatprep.subr.mxu0 0.0
    %504 = vmatpush1.msra.mxu0 0.0
    %505 = vmatprep.subr.mxu0 0.0
    %506 = vmatpush1.msra.mxu0 0.0
    %507 = vmatprep.subr.mxu0 0.0
    %508 = vmatpush1.msra.mxu0 0.0
    %509 = vmatprep.subr.mxu0 0.0
    %510 = vmatpush1.msra.mxu0 0.0
    %511 = vmatprep.subr.mxu0 0.0
    %512 = vmatpush1.msra.mxu0 0.0
    %513 = vmatprep.subr.mxu0 0.0
    %514 = vmatpush1.msra.mxu0 0.0
    %515 = vmatprep.subr.mxu0 0.0
    %516 = vmatpush1.msra.mxu0 0.0
    %517 = vmatprep.subr.mxu0 0.0
    %518 = vmatpush1.msra.mxu0 0.0
    %519 = vmatprep.subr.mxu0 0.0
    %520 = vmatpush1.msra.mxu0 0.0
    %521 = vmatprep.subr.mxu0 0.0
    %522 = vmatpush1.msra.mxu0 0.0
    %523 = vmatprep.subr.mxu0 0.0
    %524 = vmatpush1.msra.mxu0 0.0
    %525 = vmatprep.subr.mxu0 0.0
    %526 = vmatpush1.msra.mxu0 0.0
    %527 = vmatprep.subr.mxu0 0.0
    %528 = vmatpush1.msra.mxu0 0.0
    %529 = vmatprep.subr.mxu0 0.0
    %530 = vmatpush1.msra.mxu0 0.0
    %531 = vmatprep.subr.mxu0 0.0
    %532 = vmatpush1.msra.mxu0 0.0
    %533 = vmatprep.subr.mxu0 0.0
    %534 = vmatpush1.msra.mxu0 0.0
    %535 = vmatprep.subr.mxu0 0.0
    %536 = vmatpush1.msra.mxu0 0.0
    %537 = vmatprep.subr.mxu0 0.0
    %538 = vmatpush1.msra.mxu0 0.0
    %539 = vmatprep.subr.mxu0 0.0
    %540 = vmatpush1.msra.mxu0 0.0
    %541 = vmatprep.subr.mxu0 0.0
    %542 = vmatpush1.msra.mxu0 0.0
    %543 = vmatprep.subr.mxu0 0.0
    %544 = vmatpush1.msra.mxu0 0.0
    %545 = vmatprep.subr.mxu0 0.0
    %546 = vmatpush1.msra.mxu0 0.0
    %547 = vmatprep.subr.mxu0 0.0
    %548 = vmatpush1.msra.mxu0 0.0
    %549 = vmatprep.subr.mxu0 0.0
    %550 = vmatpush1.msra.mxu0 0.0
    %551 = vmatprep.subr.mxu0 0.0
    %552 = vmatpush1.msra.mxu0 0.0
    %553 = vmatprep.subr.mxu0 0.0
    %554 = vmatpush1.msra.mxu0 0.0
    %555 = vmatprep.subr.mxu0 0.0
    %556 = vmatpush1.msra.mxu0 0.0
    %557 = vmatprep.mubr.f32.mxu0 0.0
    %558 = vmatmul.mubr.f32.gmra.mrb[0].mxu0 %v491
    %v559 = vpop.f32.mrb[0].mxu0
    %v560 = vadd.f32 0.0, %v559
    %v561 = vpop.f32.mrb[0].mxu0
    %562 = vdwg.mxu0
    %563 = vrot.lane.b32.xlu0 %v210, 120
    %v564 = vpop.permute.xlu0 %563
    %565 = vrot.lane.b32.xlu0 %v210, 88
    %v566 = vpop.permute.xlu0 %565
    %v567 = vsel %vm221, %v564, 0
    %v569 = vsel %vm221, %v566, 0
    %571 = vmatprep.subr.mxu0 0.0
    %572 = vmatpush1.xpose.msra.mxu0 %v569
    %573 = vmatprep.subr.mxu0 0.0
    %574 = vmatpush1.xpose.msra.mxu0 0.0
    %575 = vmatprep.subr.mxu0 0.0
    %576 = vmatpush1.xpose.msra.mxu0 0.0
    %577 = vmatprep.subr.mxu0 0.0
    %578 = vmatpush1.xpose.msra.mxu0 0.0
    %579 = vmatprep.subr.mxu0 0.0
    %580 = vmatpush1.xpose.msra.mxu0 0.0
    %581 = vmatprep.subr.mxu0 0.0
    %582 = vmatpush1.xpose.msra.mxu0 0.0
    %583 = vmatprep.subr.mxu0 0.0
    %584 = vmatpush1.xpose.msra.mxu0 0.0
    %585 = vmatprep.subr.mxu0 0.0
    %586 = vmatpush1.xpose.msra.mxu0 0.0
    %587 = vmatprep.subr.mxu0 0.0
    %588 = vmatpush1.xpose.msra.mxu0 0.0
    %589 = vmatprep.subr.mxu0 0.0
    %590 = vmatpush1.xpose.msra.mxu0 0.0
    %591 = vmatprep.subr.mxu0 0.0
    %592 = vmatpush1.xpose.msra.mxu0 0.0
    %593 = vmatprep.subr.mxu0 0.0
    %594 = vmatpush1.xpose.msra.mxu0 0.0
    %595 = vmatprep.subr.mxu0 0.0
    %596 = vmatpush1.xpose.msra.mxu0 0.0
    %597 = vmatprep.subr.mxu0 0.0
    %598 = vmatpush1.xpose.msra.mxu0 0.0
    %599 = vmatprep.subr.mxu0 0.0
    %600 = vmatpush1.xpose.msra.mxu0 0.0
    %601 = vmatprep.subr.mxu0 0.0
    %602 = vmatpush1.xpose.msra.mxu0 0.0
    %603 = vmatprep.subr.mxu0 0.0
    %604 = vmatpush1.xpose.msra.mxu0 0.0
    %605 = vmatprep.subr.mxu0 0.0
    %606 = vmatpush1.xpose.msra.mxu0 0.0
    %607 = vmatprep.subr.mxu0 0.0
    %608 = vmatpush1.xpose.msra.mxu0 0.0
    %609 = vmatprep.subr.mxu0 0.0
    %610 = vmatpush1.xpose.msra.mxu0 0.0
    %611 = vmatprep.subr.mxu0 0.0
    %612 = vmatpush1.xpose.msra.mxu0 0.0
    %613 = vmatprep.subr.mxu0 0.0
    %614 = vmatpush1.xpose.msra.mxu0 0.0
    %615 = vmatprep.subr.mxu0 0.0
    %616 = vmatpush1.xpose.msra.mxu0 0.0
    %617 = vmatprep.subr.mxu0 0.0
    %618 = vmatpush1.xpose.msra.mxu0 0.0
    %619 = vmatprep.subr.mxu0 0.0
    %620 = vmatpush1.xpose.msra.mxu0 0.0
    %621 = vmatprep.subr.mxu0 0.0
    %622 = vmatpush1.xpose.msra.mxu0 0.0
    %623 = vmatprep.subr.mxu0 0.0
    %624 = vmatpush1.xpose.msra.mxu0 0.0
    %625 = vmatprep.subr.mxu0 0.0
    %626 = vmatpush1.xpose.msra.mxu0 0.0
    %627 = vmatprep.subr.mxu0 0.0
    %628 = vmatpush1.xpose.msra.mxu0 0.0
    %629 = vmatprep.subr.mxu0 0.0
    %630 = vmatpush1.xpose.msra.mxu0 0.0
    %631 = vmatprep.subr.mxu0 0.0
    %632 = vmatpush1.xpose.msra.mxu0 0.0
    %633 = vmatprep.subr.mxu0 0.0
    %634 = vmatpush1.xpose.msra.mxu0 0.0
    %635 = vmatprep.mubr.f32.mxu0 0.0
    %636 = vmatmul.mubr.f32.gmra.mrb[0].mxu0 %v567
    %v637 = vpop.f32.mrb[0].mxu0
    %v638 = vadd.f32 0.0, %v637
    %v639 = vpop.f32.mrb[0].mxu0
    %640 = vdwg.mxu0
    %641 = vrot.lane.b32.xlu0 %v215, 120
    %v642 = vpop.permute.xlu0 %641
    %643 = vrot.lane.b32.xlu0 %v215, 88
    %v644 = vpop.permute.xlu0 %643
    %v645 = vsel %vm221, %v642, 0
    %v647 = vsel %vm221, %v644, 0
    %649 = vmatprep.subr.mxu0 0.0
    %650 = vmatpush1.xpose.msra.mxu0 %v647
    %651 = vmatprep.subr.mxu0 0.0
    %652 = vmatpush1.xpose.msra.mxu0 0.0
    %653 = vmatprep.subr.mxu0 0.0
    %654 = vmatpush1.xpose.msra.mxu0 0.0
    %655 = vmatprep.subr.mxu0 0.0
    %656 = vmatpush1.xpose.msra.mxu0 0.0
    %657 = vmatprep.subr.mxu0 0.0
    %658 = vmatpush1.xpose.msra.mxu0 0.0
    %659 = vmatprep.subr.mxu0 0.0
    %660 = vmatpush1.xpose.msra.mxu0 0.0
    %661 = vmatprep.subr.mxu0 0.0
    %662 = vmatpush1.xpose.msra.mxu0 0.0
    %663 = vmatprep.subr.mxu0 0.0
    %664 = vmatpush1.xpose.msra.mxu0 0.0
    %665 = vmatprep.subr.mxu0 0.0
    %666 = vmatpush1.xpose.msra.mxu0 0.0
    %667 = vmatprep.subr.mxu0 0.0
    %668 = vmatpush1.xpose.msra.mxu0 0.0
    %669 = vmatprep.subr.mxu0 0.0
    %670 = vmatpush1.xpose.msra.mxu0 0.0
    %671 = vmatprep.subr.mxu0 0.0
    %672 = vmatpush1.xpose.msra.mxu0 0.0
    %673 = vmatprep.subr.mxu0 0.0
    %674 = vmatpush1.xpose.msra.mxu0 0.0
    %675 = vmatprep.subr.mxu0 0.0
    %676 = vmatpush1.xpose.msra.mxu0 0.0
    %677 = vmatprep.subr.mxu0 0.0
    %678 = vmatpush1.xpose.msra.mxu0 0.0
    %679 = vmatprep.subr.mxu0 0.0
    %680 = vmatpush1.xpose.msra.mxu0 0.0
    %681 = vmatprep.subr.mxu0 0.0
    %682 = vmatpush1.xpose.msra.mxu0 0.0
    %683 = vmatprep.subr.mxu0 0.0
    %684 = vmatpush1.xpose.msra.mxu0 0.0
    %685 = vmatprep.subr.mxu0 0.0
    %686 = vmatpush1.xpose.msra.mxu0 0.0
    %687 = vmatprep.subr.mxu0 0.0
    %688 = vmatpush1.xpose.msra.mxu0 0.0
    %689 = vmatprep.subr.mxu0 0.0
    %690 = vmatpush1.xpose.msra.mxu0 0.0
    %691 = vmatprep.subr.mxu0 0.0
    %692 = vmatpush1.xpose.msra.mxu0 0.0
    %693 = vmatprep.subr.mxu0 0.0
    %694 = vmatpush1.xpose.msra.mxu0 0.0
    %695 = vmatprep.subr.mxu0 0.0
    %696 = vmatpush1.xpose.msra.mxu0 0.0
    %697 = vmatprep.subr.mxu0 0.0
    %698 = vmatpush1.xpose.msra.mxu0 0.0
    %699 = vmatprep.subr.mxu0 0.0
    %700 = vmatpush1.xpose.msra.mxu0 0.0
    %701 = vmatprep.subr.mxu0 0.0
    %702 = vmatpush1.xpose.msra.mxu0 0.0
    %703 = vmatprep.subr.mxu0 0.0
    %704 = vmatpush1.xpose.msra.mxu0 0.0
    %705 = vmatprep.subr.mxu0 0.0
    %706 = vmatpush1.xpose.msra.mxu0 0.0
    %707 = vmatprep.subr.mxu0 0.0
    %708 = vmatpush1.xpose.msra.mxu0 0.0
    %709 = vmatprep.subr.mxu0 0.0
    %710 = vmatpush1.xpose.msra.mxu0 0.0
    %711 = vmatprep.subr.mxu0 0.0
    %712 = vmatpush1.xpose.msra.mxu0 0.0
    %713 = vmatprep.mubr.f32.mxu0 0.0
    %714 = vmatmul.mubr.f32.gmra.mrb[0].mxu0 %v645
    %v715 = vpop.f32.mrb[0].mxu0
    %v716 = vadd.f32 0.0, %v715
    %v717 = vpop.f32.mrb[0].mxu0
    %718 = vdwg.mxu0
    %v719 = vmul.f32 %v638, 0.35355338
    %v720 = vmul.f32 %v716, 0.35355338
    %v721 = vadd.f32 %v719, %v380
    %v722 = vadd.f32 %v720, %v384
    %v723 = vsel %vm221, %v721, -inf
    %724 = vmax.xlane.f32.xlu0 %v723
    %v725 = vpop.xlane.xlu0 %724
    %v726 = vsel %vm221, %v722, -inf
    %727 = vmax.xlane.f32.xlu0 %v726
    %v728 = vpop.xlane.xlu0 %727
    %v729 = vsub.f32 %v721, %v725
    %v730 = vsub.f32 %v722, %v728
    %v731 = vmul.f32 %v729, 1.442695
    %v732 = vpow.pop %v731
    %v733 = vmul.f32 %v730, 1.442695
    %v734 = vpow.pop %v733
    %v735 = vsel %vm221, %v732, 0.0
    %736 = vadd.xlane.f32.xlu0 %v735
    %v737 = vpop.xlane.xlu0 %736
    %v738 = vsel %vm221, %v734, 0.0
    %739 = vadd.xlane.f32.xlu0 %v738
    %v740 = vpop.xlane.xlu0 %739
    %v741 = vrcp.pop %v737
    %v742 = vrcp.pop %v740
    %v743 = vmul.f32 %v732, %v741
    %v744 = vmul.f32 %v734, %v742
    %745 = vrot.lane.b32.xlu0 %v210, 56
    %v746 = vpop.permute.xlu0 %745
    %v749 = vsel %vm221, %v743, 0
    %751 = vmatprep.subr.mxu0 0.0
    %752 = vmatpush1.msra.mxu0 %v746
    %753 = vmatprep.subr.mxu0 0.0
    %754 = vmatpush1.msra.mxu0 0.0
    %755 = vmatprep.subr.mxu0 0.0
    %756 = vmatpush1.msra.mxu0 0.0
    %757 = vmatprep.subr.mxu0 0.0
    %758 = vmatpush1.msra.mxu0 0.0
    %759 = vmatprep.subr.mxu0 0.0
    %760 = vmatpush1.msra.mxu0 0.0
    %761 = vmatprep.subr.mxu0 0.0
    %762 = vmatpush1.msra.mxu0 0.0
    %763 = vmatprep.subr.mxu0 0.0
    %764 = vmatpush1.msra.mxu0 0.0
    %765 = vmatprep.subr.mxu0 0.0
    %766 = vmatpush1.msra.mxu0 0.0
    %767 = vmatprep.subr.mxu0 0.0
    %768 = vmatpush1.msra.mxu0 0.0
    %769 = vmatprep.subr.mxu0 0.0
    %770 = vmatpush1.msra.mxu0 0.0
    %771 = vmatprep.subr.mxu0 0.0
    %772 = vmatpush1.msra.mxu0 0.0
    %773 = vmatprep.subr.mxu0 0.0
    %774 = vmatpush1.msra.mxu0 0.0
    %775 = vmatprep.subr.mxu0 0.0
    %776 = vmatpush1.msra.mxu0 0.0
    %777 = vmatprep.subr.mxu0 0.0
    %778 = vmatpush1.msra.mxu0 0.0
    %779 = vmatprep.subr.mxu0 0.0
    %780 = vmatpush1.msra.mxu0 0.0
    %781 = vmatprep.subr.mxu0 0.0
    %782 = vmatpush1.msra.mxu0 0.0
    %783 = vmatprep.subr.mxu0 0.0
    %784 = vmatpush1.msra.mxu0 0.0
    %785 = vmatprep.subr.mxu0 0.0
    %786 = vmatpush1.msra.mxu0 0.0
    %787 = vmatprep.subr.mxu0 0.0
    %788 = vmatpush1.msra.mxu0 0.0
    %789 = vmatprep.subr.mxu0 0.0
    %790 = vmatpush1.msra.mxu0 0.0
    %791 = vmatprep.subr.mxu0 0.0
    %792 = vmatpush1.msra.mxu0 0.0
    %793 = vmatprep.subr.mxu0 0.0
    %794 = vmatpush1.msra.mxu0 0.0
    %795 = vmatprep.subr.mxu0 0.0
    %796 = vmatpush1.msra.mxu0 0.0
    %797 = vmatprep.subr.mxu0 0.0
    %798 = vmatpush1.msra.mxu0 0.0
    %799 = vmatprep.subr.mxu0 0.0
    %800 = vmatpush1.msra.mxu0 0.0
    %801 = vmatprep.subr.mxu0 0.0
    %802 = vmatpush1.msra.mxu0 0.0
    %803 = vmatprep.subr.mxu0 0.0
    %804 = vmatpush1.msra.mxu0 0.0
    %805 = vmatprep.subr.mxu0 0.0
    %806 = vmatpush1.msra.mxu0 0.0
    %807 = vmatprep.subr.mxu0 0.0
    %808 = vmatpush1.msra.mxu0 0.0
    %809 = vmatprep.subr.mxu0 0.0
    %810 = vmatpush1.msra.mxu0 0.0
    %811 = vmatprep.subr.mxu0 0.0
    %812 = vmatpush1.msra.mxu0 0.0
    %813 = vmatprep.subr.mxu0 0.0
    %814 = vmatpush1.msra.mxu0 0.0
    %815 = vmatprep.mubr.f32.mxu0 0.0
    %816 = vmatmul.mubr.f32.gmra.mrb[0].mxu0 %v749
    %v817 = vpop.f32.mrb[0].mxu0
    %v818 = vadd.f32 0.0, %v817
    %v819 = vpop.f32.mrb[0].mxu0
    %820 = vdwg.mxu0
    %821 = vrot.lane.b32.xlu0 %v215, 56
    %v822 = vpop.permute.xlu0 %821
    %v825 = vsel %vm221, %v744, 0
    %827 = vmatprep.subr.mxu0 0.0
    %828 = vmatpush1.msra.mxu0 %v822
    %829 = vmatprep.subr.mxu0 0.0
    %830 = vmatpush1.msra.mxu0 0.0
    %831 = vmatprep.subr.mxu0 0.0
    %832 = vmatpush1.msra.mxu0 0.0
    %833 = vmatprep.subr.mxu0 0.0
    %834 = vmatpush1.msra.mxu0 0.0
    %835 = vmatprep.subr.mxu0 0.0
    %836 = vmatpush1.msra.mxu0 0.0
    %837 = vmatprep.subr.mxu0 0.0
    %838 = vmatpush1.msra.mxu0 0.0
    %839 = vmatprep.subr.mxu0 0.0
    %840 = vmatpush1.msra.mxu0 0.0
    %841 = vmatprep.subr.mxu0 0.0
    %842 = vmatpush1.msra.mxu0 0.0
    %843 = vmatprep.subr.mxu0 0.0
    %844 = vmatpush1.msra.mxu0 0.0
    %845 = vmatprep.subr.mxu0 0.0
    %846 = vmatpush1.msra.mxu0 0.0
    %847 = vmatprep.subr.mxu0 0.0
    %848 = vmatpush1.msra.mxu0 0.0
    %849 = vmatprep.subr.mxu0 0.0
    %850 = vmatpush1.msra.mxu0 0.0
    %851 = vmatprep.subr.mxu0 0.0
    %852 = vmatpush1.msra.mxu0 0.0
    %853 = vmatprep.subr.mxu0 0.0
    %854 = vmatpush1.msra.mxu0 0.0
    %855 = vmatprep.subr.mxu0 0.0
    %856 = vmatpush1.msra.mxu0 0.0
    %857 = vmatprep.subr.mxu0 0.0
    %858 = vmatpush1.msra.mxu0 0.0
    %859 = vmatprep.subr.mxu0 0.0
    %860 = vmatpush1.msra.mxu0 0.0
    %861 = vmatprep.subr.mxu0 0.0
    %862 = vmatpush1.msra.mxu0 0.0
    %863 = vmatprep.subr.mxu0 0.0
    %864 = vmatpush1.msra.mxu0 0.0
    %865 = vmatprep.subr.mxu0 0.0
    %866 = vmatpush1.msra.mxu0 0.0
    %867 = vmatprep.subr.mxu0 0.0
    %868 = vmatpush1.msra.mxu0 0.0
    %869 = vmatprep.subr.mxu0 0.0
    %870 = vmatpush1.msra.mxu0 0.0
    %871 = vmatprep.subr.mxu0 0.0
    %872 = vmatpush1.msra.mxu0 0.0
    %873 = vmatprep.subr.mxu0 0.0
    %874 = vmatpush1.msra.mxu0 0.0
    %875 = vmatprep.subr.mxu0 0.0
    %876 = vmatpush1.msra.mxu0 0.0
    %877 = vmatprep.subr.mxu0 0.0
    %878 = vmatpush1.msra.mxu0 0.0
    %879 = vmatprep.subr.mxu0 0.0
    %880 = vmatpush1.msra.mxu0 0.0
    %881 = vmatprep.subr.mxu0 0.0
    %882 = vmatpush1.msra.mxu0 0.0
    %883 = vmatprep.subr.mxu0 0.0
    %884 = vmatpush1.msra.mxu0 0.0
    %885 = vmatprep.subr.mxu0 0.0
    %886 = vmatpush1.msra.mxu0 0.0
    %887 = vmatprep.subr.mxu0 0.0
    %888 = vmatpush1.msra.mxu0 0.0
    %889 = vmatprep.subr.mxu0 0.0
    %890 = vmatpush1.msra.mxu0 0.0
    %891 = vmatprep.mubr.f32.mxu0 0.0
    %892 = vmatmul.mubr.f32.gmra.mrb[0].mxu0 %v825
    %v893 = vpop.f32.mrb[0].mxu0
    %v894 = vadd.f32 0.0, %v893
    %v895 = vpop.f32.mrb[0].mxu0
    %896 = vdwg.mxu0
    %v898 = vsel %vm221, %v818, 0
    %v901 = vsel %vm221, %v894, 0
    %903 = vmatprep.subr.mxu0 0.0
    %904 = vmatpush1.msra.mxu0 %v127
    %905 = vmatprep.subr.mxu0 0.0
    %906 = vmatpush1.msra.mxu0 0.0
    %907 = vmatprep.subr.mxu0 0.0
    %908 = vmatpush1.msra.mxu0 0.0
    %909 = vmatprep.subr.mxu0 0.0
    %910 = vmatpush1.msra.mxu0 0.0
    %911 = vmatprep.subr.mxu0 0.0
    %912 = vmatpush1.msra.mxu0 0.0
    %913 = vmatprep.subr.mxu0 0.0
    %914 = vmatpush1.msra.mxu0 0.0
    %915 = vmatprep.subr.mxu0 0.0
    %916 = vmatpush1.msra.mxu0 0.0
    %917 = vmatprep.subr.mxu0 0.0
    %918 = vmatpush1.msra.mxu0 0.0
    %919 = vmatprep.subr.mxu0 0.0
    %920 = vmatpush1.msra.mxu0 0.0
    %921 = vmatprep.subr.mxu0 0.0
    %922 = vmatpush1.msra.mxu0 0.0
    %923 = vmatprep.subr.mxu0 0.0
    %924 = vmatpush1.msra.mxu0 0.0
    %925 = vmatprep.subr.mxu0 0.0
    %926 = vmatpush1.msra.mxu0 0.0
    %927 = vmatprep.subr.mxu0 0.0
    %928 = vmatpush1.msra.mxu0 0.0
    %929 = vmatprep.subr.mxu0 0.0
    %930 = vmatpush1.msra.mxu0 0.0
    %931 = vmatprep.subr.mxu0 0.0
    %932 = vmatpush1.msra.mxu0 0.0
    %933 = vmatprep.subr.mxu0 0.0
    %934 = vmatpush1.msra.mxu0 0.0
    %935 = vmatprep.subr.mxu0 0.0
    %936 = vmatpush1.msra.mxu0 0.0
    %937 = vmatprep.subr.mxu0 0.0
    %938 = vmatpush1.msra.mxu0 0.0
    %939 = vmatprep.subr.mxu0 0.0
    %940 = vmatpush1.msra.mxu0 0.0
    %941 = vmatprep.subr.mxu0 0.0
    %942 = vmatpush1.msra.mxu0 0.0
    %943 = vmatprep.subr.mxu0 0.0
    %944 = vmatpush1.msra.mxu0 0.0
    %945 = vmatprep.subr.mxu0 0.0
    %946 = vmatpush1.msra.mxu0 0.0
    %947 = vmatprep.subr.mxu0 0.0
    %948 = vmatpush1.msra.mxu0 0.0
    %949 = vmatprep.subr.mxu0 0.0
    %950 = vmatpush1.msra.mxu0 0.0
    %951 = vmatprep.subr.mxu0 0.0
    %952 = vmatpush1.msra.mxu0 0.0
    %953 = vmatprep.subr.mxu0 0.0
    %954 = vmatpush1.msra.mxu0 0.0
    %955 = vmatprep.subr.mxu0 0.0
    %956 = vmatpush1.msra.mxu0 0.0
    %957 = vmatprep.subr.mxu0 0.0
    %958 = vmatpush1.msra.mxu0 0.0
    %959 = vmatprep.subr.mxu0 0.0
    %960 = vmatpush1.msra.mxu0 0.0
    %961 = vmatprep.subr.mxu0 0.0
    %962 = vmatpush1.msra.mxu0 0.0
    %963 = vmatprep.subr.mxu0 0.0
    %964 = vmatpush1.msra.mxu0 0.0
    %965 = vmatprep.subr.mxu0 0.0
    %966 = vmatpush1.msra.mxu0 0.0
    %967 = vmatprep.mubr.f32.mxu0 0.0
    %968 = vmatmul.mubr.f32.gmra.mrb[0].mxu0 %v898
    %v969 = vpop.f32.mrb[0].mxu0
    %v970 = vadd.f32 0.0, %v969
    %v971 = vpop.f32.mrb[0].mxu0
    %972 = vmatprep.mubr.f32.mxu0 0.0
    %973 = vmatmul.mubr.f32.gmra.mrb[0].mxu0 %v901
    %v974 = vpop.f32.mrb[0].mxu0
    %v975 = vadd.f32 0.0, %v974
    %v976 = vpop.f32.mrb[0].mxu0
    %977 = vdwg.mxu0
    %v979 = vsel %vm221, %v484, 0
    %v982 = vsel %vm221, %v560, 0
    %984 = vmatprep.subr.mxu0 0.0
    %985 = vmatpush1.msra.mxu0 %v126
    %986 = vmatprep.subr.mxu0 0.0
    %987 = vmatpush1.msra.mxu0 0.0
    %988 = vmatprep.subr.mxu0 0.0
    %989 = vmatpush1.msra.mxu0 0.0
    %990 = vmatprep.subr.mxu0 0.0
    %991 = vmatpush1.msra.mxu0 0.0
    %992 = vmatprep.subr.mxu0 0.0
    %993 = vmatpush1.msra.mxu0 0.0
    %994 = vmatprep.subr.mxu0 0.0
    %995 = vmatpush1.msra.mxu0 0.0
    %996 = vmatprep.subr.mxu0 0.0
    %997 = vmatpush1.msra.mxu0 0.0
    %998 = vmatprep.subr.mxu0 0.0
    %999 = vmatpush1.msra.mxu0 0.0
    %1000 = vmatprep.subr.mxu0 0.0
    %1001 = vmatpush1.msra.mxu0 0.0
    %1002 = vmatprep.subr.mxu0 0.0
    %1003 = vmatpush1.msra.mxu0 0.0
    %1004 = vmatprep.subr.mxu0 0.0
    %1005 = vmatpush1.msra.mxu0 0.0
    %1006 = vmatprep.subr.mxu0 0.0
    %1007 = vmatpush1.msra.mxu0 0.0
    %1008 = vmatprep.subr.mxu0 0.0
    %1009 = vmatpush1.msra.mxu0 0.0
    %1010 = vmatprep.subr.mxu0 0.0
    %1011 = vmatpush1.msra.mxu0 0.0
    %1012 = vmatprep.subr.mxu0 0.0
    %1013 = vmatpush1.msra.mxu0 0.0
    %1014 = vmatprep.subr.mxu0 0.0
    %1015 = vmatpush1.msra.mxu0 0.0
    %1016 = vmatprep.subr.mxu0 0.0
    %1017 = vmatpush1.msra.mxu0 0.0
    %1018 = vmatprep.subr.mxu0 0.0
    %1019 = vmatpush1.msra.mxu0 0.0
    %1020 = vmatprep.subr.mxu0 0.0
    %1021 = vmatpush1.msra.mxu0 0.0
    %1022 = vmatprep.subr.mxu0 0.0
    %1023 = vmatpush1.msra.mxu0 0.0
    %1024 = vmatprep.subr.mxu0 0.0
    %1025 = vmatpush1.msra.mxu0 0.0
    %1026 = vmatprep.subr.mxu0 0.0
    %1027 = vmatpush1.msra.mxu0 0.0
    %1028 = vmatprep.subr.mxu0 0.0
    %1029 = vmatpush1.msra.mxu0 0.0
    %1030 = vmatprep.subr.mxu0 0.0
    %1031 = vmatpush1.msra.mxu0 0.0
    %1032 = vmatprep.subr.mxu0 0.0
    %1033 = vmatpush1.msra.mxu0 0.0
    %1034 = vmatprep.subr.mxu0 0.0
    %1035 = vmatpush1.msra.mxu0 0.0
    %1036 = vmatprep.subr.mxu0 0.0
    %1037 = vmatpush1.msra.mxu0 0.0
    %1038 = vmatprep.subr.mxu0 0.0
    %1039 = vmatpush1.msra.mxu0 0.0
    %1040 = vmatprep.subr.mxu0 0.0
    %1041 = vmatpush1.msra.mxu0 0.0
    %1042 = vmatprep.subr.mxu0 0.0
    %1043 = vmatpush1.msra.mxu0 0.0
    %1044 = vmatprep.subr.mxu0 0.0
    %1045 = vmatpush1.msra.mxu0 0.0
    %1046 = vmatprep.subr.mxu0 0.0
    %1047 = vmatpush1.msra.mxu0 0.0
    %1048 = vmatprep.mubr.f32.mxu0 0.0
    %1049 = vmatmul.mubr.f32.gmra.mrb[0].mxu0 %v979
    %v1050 = vpop.f32.mrb[0].mxu0
    %v1051 = vadd.f32 %v970, %v1050
    %v1052 = vpop.f32.mrb[0].mxu0
    %1053 = vmatprep.mubr.f32.mxu0 0.0
    %1054 = vmatmul.mubr.f32.gmra.mrb[0].mxu0 %v982
    %v1055 = vpop.f32.mrb[0].mxu0
    %v1056 = vadd.f32 %v975, %v1055
    %v1057 = vpop.f32.mrb[0].mxu0
    %1058 = vdwg.mxu0
    %1059 = vrot.lane.b32.xlu0 %v210, 112
    %v1060 = vpop.permute.xlu0 %1059
    %1061 = vrot.lane.b32.xlu0 %v210, 80
    %v1062 = vpop.permute.xlu0 %1061
    %v1063 = vsel %vm221, %v1060, 0
    %v1065 = vsel %vm221, %v1062, 0
    %1067 = vmatprep.subr.mxu0 0.0
    %1068 = vmatpush1.xpose.msra.mxu0 %v1065
    %1069 = vmatprep.subr.mxu0 0.0
    %1070 = vmatpush1.xpose.msra.mxu0 0.0
    %1071 = vmatprep.subr.mxu0 0.0
    %1072 = vmatpush1.xpose.msra.mxu0 0.0
    %1073 = vmatprep.subr.mxu0 0.0
    %1074 = vmatpush1.xpose.msra.mxu0 0.0
    %1075 = vmatprep.subr.mxu0 0.0
    %1076 = vmatpush1.xpose.msra.mxu0 0.0
    %1077 = vmatprep.subr.mxu0 0.0
    %1078 = vmatpush1.xpose.msra.mxu0 0.0
    %1079 = vmatprep.subr.mxu0 0.0
    %1080 = vmatpush1.xpose.msra.mxu0 0.0
    %1081 = vmatprep.subr.mxu0 0.0
    %1082 = vmatpush1.xpose.msra.mxu0 0.0
    %1083 = vmatprep.subr.mxu0 0.0
    %1084 = vmatpush1.xpose.msra.mxu0 0.0
    %1085 = vmatprep.subr.mxu0 0.0
    %1086 = vmatpush1.xpose.msra.mxu0 0.0
    %1087 = vmatprep.subr.mxu0 0.0
    %1088 = vmatpush1.xpose.msra.mxu0 0.0
    %1089 = vmatprep.subr.mxu0 0.0
    %1090 = vmatpush1.xpose.msra.mxu0 0.0
    %1091 = vmatprep.subr.mxu0 0.0
    %1092 = vmatpush1.xpose.msra.mxu0 0.0
    %1093 = vmatprep.subr.mxu0 0.0
    %1094 = vmatpush1.xpose.msra.mxu0 0.0
    %1095 = vmatprep.subr.mxu0 0.0
    %1096 = vmatpush1.xpose.msra.mxu0 0.0
    %1097 = vmatprep.subr.mxu0 0.0
    %1098 = vmatpush1.xpose.msra.mxu0 0.0
    %1099 = vmatprep.subr.mxu0 0.0
    %1100 = vmatpush1.xpose.msra.mxu0 0.0
    %1101 = vmatprep.subr.mxu0 0.0
    %1102 = vmatpush1.xpose.msra.mxu0 0.0
    %1103 = vmatprep.subr.mxu0 0.0
    %1104 = vmatpush1.xpose.msra.mxu0 0.0
    %1105 = vmatprep.subr.mxu0 0.0
    %1106 = vmatpush1.xpose.msra.mxu0 0.0
    %1107 = vmatprep.subr.mxu0 0.0
    %1108 = vmatpush1.xpose.msra.mxu0 0.0
    %1109 = vmatprep.subr.mxu0 0.0
    %1110 = vmatpush1.xpose.msra.mxu0 0.0
    %1111 = vmatprep.subr.mxu0 0.0
    %1112 = vmatpush1.xpose.msra.mxu0 0.0
    %1113 = vmatprep.subr.mxu0 0.0
    %1114 = vmatpush1.xpose.msra.mxu0 0.0
    %1115 = vmatprep.subr.mxu0 0.0
    %1116 = vmatpush1.xpose.msra.mxu0 0.0
    %1117 = vmatprep.subr.mxu0 0.0
    %1118 = vmatpush1.xpose.msra.mxu0 0.0
    %1119 = vmatprep.subr.mxu0 0.0
    %1120 = vmatpush1.xpose.msra.mxu0 0.0
    %1121 = vmatprep.subr.mxu0 0.0
    %1122 = vmatpush1.xpose.msra.mxu0 0.0
    %1123 = vmatprep.subr.mxu0 0.0
    %1124 = vmatpush1.xpose.msra.mxu0 0.0
    %1125 = vmatprep.subr.mxu0 0.0
    %1126 = vmatpush1.xpose.msra.mxu0 0.0
    %1127 = vmatprep.subr.mxu0 0.0
    %1128 = vmatpush1.xpose.msra.mxu0 0.0
    %1129 = vmatprep.subr.mxu0 0.0
    %1130 = vmatpush1.xpose.msra.mxu0 0.0
    %1131 = vmatprep.mubr.f32.mxu0 0.0
    %1132 = vmatmul.mubr.f32.gmra.mrb[0].mxu0 %v1063
    %v1133 = vpop.f32.mrb[0].mxu0
    %v1134 = vadd.f32 0.0, %v1133
    %v1135 = vpop.f32.mrb[0].mxu0
    %1136 = vdwg.mxu0
    %1137 = vrot.lane.b32.xlu0 %v215, 112
    %v1138 = vpop.permute.xlu0 %1137
    %1139 = vrot.lane.b32.xlu0 %v215, 80
    %v1140 = vpop.permute.xlu0 %1139
    %v1141 = vsel %vm221, %v1138, 0
    %v1143 = vsel %vm221, %v1140, 0
    %1145 = vmatprep.subr.mxu0 0.0
    %1146 = vmatpush1.xpose.msra.mxu0 %v1143
    %1147 = vmatprep.subr.mxu0 0.0
    %1148 = vmatpush1.xpose.msra.mxu0 0.0
    %1149 = vmatprep.subr.mxu0 0.0
    %1150 = vmatpush1.xpose.msra.mxu0 0.0
    %1151 = vmatprep.subr.mxu0 0.0
    %1152 = vmatpush1.xpose.msra.mxu0 0.0
    %1153 = vmatprep.subr.mxu0 0.0
    %1154 = vmatpush1.xpose.msra.mxu0 0.0
    %1155 = vmatprep.subr.mxu0 0.0
    %1156 = vmatpush1.xpose.msra.mxu0 0.0
    %1157 = vmatprep.subr.mxu0 0.0
    %1158 = vmatpush1.xpose.msra.mxu0 0.0
    %1159 = vmatprep.subr.mxu0 0.0
    %1160 = vmatpush1.xpose.msra.mxu0 0.0
    %1161 = vmatprep.subr.mxu0 0.0
    %1162 = vmatpush1.xpose.msra.mxu0 0.0
    %1163 = vmatprep.subr.mxu0 0.0
    %1164 = vmatpush1.xpose.msra.mxu0 0.0
    %1165 = vmatprep.subr.mxu0 0.0
    %1166 = vmatpush1.xpose.msra.mxu0 0.0
    %1167 = vmatprep.subr.mxu0 0.0
    %1168 = vmatpush1.xpose.msra.mxu0 0.0
    %1169 = vmatprep.subr.mxu0 0.0
    %1170 = vmatpush1.xpose.msra.mxu0 0.0
    %1171 = vmatprep.subr.mxu0 0.0
    %1172 = vmatpush1.xpose.msra.mxu0 0.0
    %1173 = vmatprep.subr.mxu0 0.0
    %1174 = vmatpush1.xpose.msra.mxu0 0.0
    %1175 = vmatprep.subr.mxu0 0.0
    %1176 = vmatpush1.xpose.msra.mxu0 0.0
    %1177 = vmatprep.subr.mxu0 0.0
    %1178 = vmatpush1.xpose.msra.mxu0 0.0
    %1179 = vmatprep.subr.mxu0 0.0
    %1180 = vmatpush1.xpose.msra.mxu0 0.0
    %1181 = vmatprep.subr.mxu0 0.0
    %1182 = vmatpush1.xpose.msra.mxu0 0.0
    %1183 = vmatprep.subr.mxu0 0.0
    %1184 = vmatpush1.xpose.msra.mxu0 0.0
    %1185 = vmatprep.subr.mxu0 0.0
    %1186 = vmatpush1.xpose.msra.mxu0 0.0
    %1187 = vmatprep.subr.mxu0 0.0
    %1188 = vmatpush1.xpose.msra.mxu0 0.0
    %1189 = vmatprep.subr.mxu0 0.0
    %1190 = vmatpush1.xpose.msra.mxu0 0.0
    %1191 = vmatprep.subr.mxu0 0.0
    %1192 = vmatpush1.xpose.msra.mxu0 0.0
    %1193 = vmatprep.subr.mxu0 0.0
    %1194 = vmatpush1.xpose.msra.mxu0 0.0
    %1195 = vmatprep.subr.mxu0 0.0
    %1196 = vmatpush1.xpose.msra.mxu0 0.0
    %1197 = vmatprep.subr.mxu0 0.0
    %1198 = vmatpush1.xpose.msra.mxu0 0.0
    %1199 = vmatprep.subr.mxu0 0.0
    %1200 = vmatpush1.xpose.msra.mxu0 0.0
    %1201 = vmatprep.subr.mxu0 0.0
    %1202 = vmatpush1.xpose.msra.mxu0 0.0
    %1203 = vmatprep.subr.mxu0 0.0
    %1204 = vmatpush1.xpose.msra.mxu0 0.0
    %1205 = vmatprep.subr.mxu0 0.0
    %1206 = vmatpush1.xpose.msra.mxu0 0.0
    %1207 = vmatprep.subr.mxu0 0.0
    %1208 = vmatpush1.xpose.msra.mxu0 0.0
    %1209 = vmatprep.mubr.f32.mxu0 0.0
    %1210 = vmatmul.mubr.f32.gmra.mrb[0].mxu0 %v1141
    %v1211 = vpop.f32.mrb[0].mxu0
    %v1212 = vadd.f32 0.0, %v1211
    %v1213 = vpop.f32.mrb[0].mxu0
    %1214 = vdwg.mxu0
    %v1215 = vmul.f32 %v1134, 0.35355338
    %v1216 = vmul.f32 %v1212, 0.35355338
    %v1217 = vadd.f32 %v1215, %v380
    %v1218 = vadd.f32 %v1216, %v384
    %v1219 = vsel %vm221, %v1217, -inf
    %1220 = vmax.xlane.f32.xlu0 %v1219
    %v1221 = vpop.xlane.xlu0 %1220
    %v1222 = vsel %vm221, %v1218, -inf
    %1223 = vmax.xlane.f32.xlu0 %v1222
    %v1224 = vpop.xlane.xlu0 %1223
    %v1225 = vsub.f32 %v1217, %v1221
    %v1226 = vsub.f32 %v1218, %v1224
    %v1227 = vmul.f32 %v1225, 1.442695
    %v1228 = vpow.pop %v1227
    %v1229 = vmul.f32 %v1226, 1.442695
    %v1230 = vpow.pop %v1229
    %v1231 = vsel %vm221, %v1228, 0.0
    %1232 = vadd.xlane.f32.xlu0 %v1231
    %v1233 = vpop.xlane.xlu0 %1232
    %v1234 = vsel %vm221, %v1230, 0.0
    %1235 = vadd.xlane.f32.xlu0 %v1234
    %v1236 = vpop.xlane.xlu0 %1235
    %v1237 = vrcp.pop %v1233
    %v1238 = vrcp.pop %v1236
    %v1239 = vmul.f32 %v1228, %v1237
    %v1240 = vmul.f32 %v1230, %v1238
    %1241 = vrot.lane.b32.xlu0 %v210, 48
    %v1242 = vpop.permute.xlu0 %1241
    %v1245 = vsel %vm221, %v1239, 0
    %1247 = vmatprep.subr.mxu0 0.0
    %1248 = vmatpush1.msra.mxu0 %v1242
    %1249 = vmatprep.subr.mxu0 0.0
    %1250 = vmatpush1.msra.mxu0 0.0
    %1251 = vmatprep.subr.mxu0 0.0
    %1252 = vmatpush1.msra.mxu0 0.0
    %1253 = vmatprep.subr.mxu0 0.0
    %1254 = vmatpush1.msra.mxu0 0.0
    %1255 = vmatprep.subr.mxu0 0.0
    %1256 = vmatpush1.msra.mxu0 0.0
    %1257 = vmatprep.subr.mxu0 0.0
    %1258 = vmatpush1.msra.mxu0 0.0
    %1259 = vmatprep.subr.mxu0 0.0
    %1260 = vmatpush1.msra.mxu0 0.0
    %1261 = vmatprep.subr.mxu0 0.0
    %1262 = vmatpush1.msra.mxu0 0.0
    %1263 = vmatprep.subr.mxu0 0.0
    %1264 = vmatpush1.msra.mxu0 0.0
    %1265 = vmatprep.subr.mxu0 0.0
    %1266 = vmatpush1.msra.mxu0 0.0
    %1267 = vmatprep.subr.mxu0 0.0
    %1268 = vmatpush1.msra.mxu0 0.0
    %1269 = vmatprep.subr.mxu0 0.0
    %1270 = vmatpush1.msra.mxu0 0.0
    %1271 = vmatprep.subr.mxu0 0.0
    %1272 = vmatpush1.msra.mxu0 0.0
    %1273 = vmatprep.subr.mxu0 0.0
    %1274 = vmatpush1.msra.mxu0 0.0
    %1275 = vmatprep.subr.mxu0 0.0
    %1276 = vmatpush1.msra.mxu0 0.0
    %1277 = vmatprep.subr.mxu0 0.0
    %1278 = vmatpush1.msra.mxu0 0.0
    %1279 = vmatprep.subr.mxu0 0.0
    %1280 = vmatpush1.msra.mxu0 0.0
    %1281 = vmatprep.subr.mxu0 0.0
    %1282 = vmatpush1.msra.mxu0 0.0
    %1283 = vmatprep.subr.mxu0 0.0
    %1284 = vmatpush1.msra.mxu0 0.0
    %1285 = vmatprep.subr.mxu0 0.0
    %1286 = vmatpush1.msra.mxu0 0.0
    %1287 = vmatprep.subr.mxu0 0.0
    %1288 = vmatpush1.msra.mxu0 0.0
    %1289 = vmatprep.subr.mxu0 0.0
    %1290 = vmatpush1.msra.mxu0 0.0
    %1291 = vmatprep.subr.mxu0 0.0
    %1292 = vmatpush1.msra.mxu0 0.0
    %1293 = vmatprep.subr.mxu0 0.0
    %1294 = vmatpush1.msra.mxu0 0.0
    %1295 = vmatprep.subr.mxu0 0.0
    %1296 = vmatpush1.msra.mxu0 0.0
    %1297 = vmatprep.subr.mxu0 0.0
    %1298 = vmatpush1.msra.mxu0 0.0
    %1299 = vmatprep.subr.mxu0 0.0
    %1300 = vmatpush1.msra.mxu0 0.0
    %1301 = vmatprep.subr.mxu0 0.0
    %1302 = vmatpush1.msra.mxu0 0.0
    %1303 = vmatprep.subr.mxu0 0.0
    %1304 = vmatpush1.msra.mxu0 0.0
    %1305 = vmatprep.subr.mxu0 0.0
    %1306 = vmatpush1.msra.mxu0 0.0
    %1307 = vmatprep.subr.mxu0 0.0
    %1308 = vmatpush1.msra.mxu0 0.0
    %1309 = vmatprep.subr.mxu0 0.0
    %1310 = vmatpush1.msra.mxu0 0.0
    %1311 = vmatprep.mubr.f32.mxu0 0.0
    %1312 = vmatmul.mubr.f32.gmra.mrb[0].mxu0 %v1245
    %v1313 = vpop.f32.mrb[0].mxu0
    %v1314 = vadd.f32 0.0, %v1313
    %v1315 = vpop.f32.mrb[0].mxu0
    %1316 = vdwg.mxu0
    %1317 = vrot.lane.b32.xlu0 %v215, 48
    %v1318 = vpop.permute.xlu0 %1317
    %v1321 = vsel %vm221, %v1240, 0
    %1323 = vmatprep.subr.mxu0 0.0
    %1324 = vmatpush1.msra.mxu0 %v1318
    %1325 = vmatprep.subr.mxu0 0.0
    %1326 = vmatpush1.msra.mxu0 0.0
    %1327 = vmatprep.subr.mxu0 0.0
    %1328 = vmatpush1.msra.mxu0 0.0
    %1329 = vmatprep.subr.mxu0 0.0
    %1330 = vmatpush1.msra.mxu0 0.0
    %1331 = vmatprep.subr.mxu0 0.0
    %1332 = vmatpush1.msra.mxu0 0.0
    %1333 = vmatprep.subr.mxu0 0.0
    %1334 = vmatpush1.msra.mxu0 0.0
    %1335 = vmatprep.subr.mxu0 0.0
    %1336 = vmatpush1.msra.mxu0 0.0
    %1337 = vmatprep.subr.mxu0 0.0
    %1338 = vmatpush1.msra.mxu0 0.0
    %1339 = vmatprep.subr.mxu0 0.0
    %1340 = vmatpush1.msra.mxu0 0.0
    %1341 = vmatprep.subr.mxu0 0.0
    %1342 = vmatpush1.msra.mxu0 0.0
    %1343 = vmatprep.subr.mxu0 0.0
    %1344 = vmatpush1.msra.mxu0 0.0
    %1345 = vmatprep.subr.mxu0 0.0
    %1346 = vmatpush1.msra.mxu0 0.0
    %1347 = vmatprep.subr.mxu0 0.0
    %1348 = vmatpush1.msra.mxu0 0.0
    %1349 = vmatprep.subr.mxu0 0.0
    %1350 = vmatpush1.msra.mxu0 0.0
    %1351 = vmatprep.subr.mxu0 0.0
    %1352 = vmatpush1.msra.mxu0 0.0
    %1353 = vmatprep.subr.mxu0 0.0
    %1354 = vmatpush1.msra.mxu0 0.0
    %1355 = vmatprep.subr.mxu0 0.0
    %1356 = vmatpush1.msra.mxu0 0.0
    %1357 = vmatprep.subr.mxu0 0.0
    %1358 = vmatpush1.msra.mxu0 0.0
    %1359 = vmatprep.subr.mxu0 0.0
    %1360 = vmatpush1.msra.mxu0 0.0
    %1361 = vmatprep.subr.mxu0 0.0
    %1362 = vmatpush1.msra.mxu0 0.0
    %1363 = vmatprep.subr.mxu0 0.0
    %1364 = vmatpush1.msra.mxu0 0.0
    %1365 = vmatprep.subr.mxu0 0.0
    %1366 = vmatpush1.msra.mxu0 0.0
    %1367 = vmatprep.subr.mxu0 0.0
    %1368 = vmatpush1.msra.mxu0 0.0
    %1369 = vmatprep.subr.mxu0 0.0
    %1370 = vmatpush1.msra.mxu0 0.0
    %1371 = vmatprep.subr.mxu0 0.0
    %1372 = vmatpush1.msra.mxu0 0.0
    %1373 = vmatprep.subr.mxu0 0.0
    %1374 = vmatpush1.msra.mxu0 0.0
    %1375 = vmatprep.subr.mxu0 0.0
    %1376 = vmatpush1.msra.mxu0 0.0
    %1377 = vmatprep.subr.mxu0 0.0
    %1378 = vmatpush1.msra.mxu0 0.0
    %1379 = vmatprep.subr.mxu0 0.0
    %1380 = vmatpush1.msra.mxu0 0.0
    %1381 = vmatprep.subr.mxu0 0.0
    %1382 = vmatpush1.msra.mxu0 0.0
    %1383 = vmatprep.subr.mxu0 0.0
    %1384 = vmatpush1.msra.mxu0 0.0
    %1385 = vmatprep.subr.mxu0 0.0
    %1386 = vmatpush1.msra.mxu0 0.0
    %1387 = vmatprep.mubr.f32.mxu0 0.0
    %1388 = vmatmul.mubr.f32.gmra.mrb[0].mxu0 %v1321
    %v1389 = vpop.f32.mrb[0].mxu0
    %v1390 = vadd.f32 0.0, %v1389
    %v1391 = vpop.f32.mrb[0].mxu0
    %1392 = vdwg.mxu0
    %v1394 = vsel %vm221, %v1314, 0
    %v1397 = vsel %vm221, %v1390, 0
    %1399 = vmatprep.subr.mxu0 0.0
    %1400 = vmatpush1.msra.mxu0 %v128
    %1401 = vmatprep.subr.mxu0 0.0
    %1402 = vmatpush1.msra.mxu0 0.0
    %1403 = vmatprep.subr.mxu0 0.0
    %1404 = vmatpush1.msra.mxu0 0.0
    %1405 = vmatprep.subr.mxu0 0.0
    %1406 = vmatpush1.msra.mxu0 0.0
    %1407 = vmatprep.subr.mxu0 0.0
    %1408 = vmatpush1.msra.mxu0 0.0
    %1409 = vmatprep.subr.mxu0 0.0
    %1410 = vmatpush1.msra.mxu0 0.0
    %1411 = vmatprep.subr.mxu0 0.0
    %1412 = vmatpush1.msra.mxu0 0.0
    %1413 = vmatprep.subr.mxu0 0.0
    %1414 = vmatpush1.msra.mxu0 0.0
    %1415 = vmatprep.subr.mxu0 0.0
    %1416 = vmatpush1.msra.mxu0 0.0
    %1417 = vmatprep.subr.mxu0 0.0
    %1418 = vmatpush1.msra.mxu0 0.0
    %1419 = vmatprep.subr.mxu0 0.0
    %1420 = vmatpush1.msra.mxu0 0.0
    %1421 = vmatprep.subr.mxu0 0.0
    %1422 = vmatpush1.msra.mxu0 0.0
    %1423 = vmatprep.subr.mxu0 0.0
    %1424 = vmatpush1.msra.mxu0 0.0
    %1425 = vmatprep.subr.mxu0 0.0
    %1426 = vmatpush1.msra.mxu0 0.0
    %1427 = vmatprep.subr.mxu0 0.0
    %1428 = vmatpush1.msra.mxu0 0.0
    %1429 = vmatprep.subr.mxu0 0.0
    %1430 = vmatpush1.msra.mxu0 0.0
    %1431 = vmatprep.subr.mxu0 0.0
    %1432 = vmatpush1.msra.mxu0 0.0
    %1433 = vmatprep.subr.mxu0 0.0
    %1434 = vmatpush1.msra.mxu0 0.0
    %1435 = vmatprep.subr.mxu0 0.0
    %1436 = vmatpush1.msra.mxu0 0.0
    %1437 = vmatprep.subr.mxu0 0.0
    %1438 = vmatpush1.msra.mxu0 0.0
    %1439 = vmatprep.subr.mxu0 0.0
    %1440 = vmatpush1.msra.mxu0 0.0
    %1441 = vmatprep.subr.mxu0 0.0
    %1442 = vmatpush1.msra.mxu0 0.0
    %1443 = vmatprep.subr.mxu0 0.0
    %1444 = vmatpush1.msra.mxu0 0.0
    %1445 = vmatprep.subr.mxu0 0.0
    %1446 = vmatpush1.msra.mxu0 0.0
    %1447 = vmatprep.subr.mxu0 0.0
    %1448 = vmatpush1.msra.mxu0 0.0
    %1449 = vmatprep.subr.mxu0 0.0
    %1450 = vmatpush1.msra.mxu0 0.0
    %1451 = vmatprep.subr.mxu0 0.0
    %1452 = vmatpush1.msra.mxu0 0.0
    %1453 = vmatprep.subr.mxu0 0.0
    %1454 = vmatpush1.msra.mxu0 0.0
    %1455 = vmatprep.subr.mxu0 0.0
    %1456 = vmatpush1.msra.mxu0 0.0
    %1457 = vmatprep.subr.mxu0 0.0
    %1458 = vmatpush1.msra.mxu0 0.0
    %1459 = vmatprep.subr.mxu0 0.0
    %1460 = vmatpush1.msra.mxu0 0.0
    %1461 = vmatprep.subr.mxu0 0.0
    %1462 = vmatpush1.msra.mxu0 0.0
    %1463 = vmatprep.mubr.f32.mxu0 0.0
    %1464 = vmatmul.mubr.f32.gmra.mrb[0].mxu0 %v1394
    %v1465 = vpop.f32.mrb[0].mxu0
    %v1466 = vadd.f32 0.0, %v1465
    %v1467 = vpop.f32.mrb[0].mxu0
    %1468 = vmatprep.mubr.f32.mxu0 0.0
    %1469 = vmatmul.mubr.f32.gmra.mrb[0].mxu0 %v1397
    %v1470 = vpop.f32.mrb[0].mxu0
    %v1471 = vadd.f32 0.0, %v1470
    %v1472 = vpop.f32.mrb[0].mxu0
    %1473 = vdwg.mxu0
    %v1474 = vadd.f32 %v1051, %v1466
    %v1475 = vadd.f32 %v1056, %v1471
    %1476 = vrot.lane.b32.xlu0 %v210, 104
    %v1477 = vpop.permute.xlu0 %1476
    %1478 = vrot.lane.b32.xlu0 %v210, 72
    %v1479 = vpop.permute.xlu0 %1478
    %v1480 = vsel %vm221, %v1477, 0
    %v1482 = vsel %vm221, %v1479, 0
    %1484 = vmatprep.subr.mxu0 0.0
    %1485 = vmatpush1.xpose.msra.mxu0 %v1482
    %1486 = vmatprep.subr.mxu0 0.0
    %1487 = vmatpush1.xpose.msra.mxu0 0.0
    %1488 = vmatprep.subr.mxu0 0.0
    %1489 = vmatpush1.xpose.msra.mxu0 0.0
    %1490 = vmatprep.subr.mxu0 0.0
    %1491 = vmatpush1.xpose.msra.mxu0 0.0
    %1492 = vmatprep.subr.mxu0 0.0
    %1493 = vmatpush1.xpose.msra.mxu0 0.0
    %1494 = vmatprep.subr.mxu0 0.0
    %1495 = vmatpush1.xpose.msra.mxu0 0.0
    %1496 = vmatprep.subr.mxu0 0.0
    %1497 = vmatpush1.xpose.msra.mxu0 0.0
    %1498 = vmatprep.subr.mxu0 0.0
    %1499 = vmatpush1.xpose.msra.mxu0 0.0
    %1500 = vmatprep.subr.mxu0 0.0
    %1501 = vmatpush1.xpose.msra.mxu0 0.0
    %1502 = vmatprep.subr.mxu0 0.0
    %1503 = vmatpush1.xpose.msra.mxu0 0.0
    %1504 = vmatprep.subr.mxu0 0.0
    %1505 = vmatpush1.xpose.msra.mxu0 0.0
    %1506 = vmatprep.subr.mxu0 0.0
    %1507 = vmatpush1.xpose.msra.mxu0 0.0
    %1508 = vmatprep.subr.mxu0 0.0
    %1509 = vmatpush1.xpose.msra.mxu0 0.0
    %1510 = vmatprep.subr.mxu0 0.0
    %1511 = vmatpush1.xpose.msra.mxu0 0.0
    %1512 = vmatprep.subr.mxu0 0.0
    %1513 = vmatpush1.xpose.msra.mxu0 0.0
    %1514 = vmatprep.subr.mxu0 0.0
    %1515 = vmatpush1.xpose.msra.mxu0 0.0
    %1516 = vmatprep.subr.mxu0 0.0
    %1517 = vmatpush1.xpose.msra.mxu0 0.0
    %1518 = vmatprep.subr.mxu0 0.0
    %1519 = vmatpush1.xpose.msra.mxu0 0.0
    %1520 = vmatprep.subr.mxu0 0.0
    %1521 = vmatpush1.xpose.msra.mxu0 0.0
    %1522 = vmatprep.subr.mxu0 0.0
    %1523 = vmatpush1.xpose.msra.mxu0 0.0
    %1524 = vmatprep.subr.mxu0 0.0
    %1525 = vmatpush1.xpose.msra.mxu0 0.0
    %1526 = vmatprep.subr.mxu0 0.0
    %1527 = vmatpush1.xpose.msra.mxu0 0.0
    %1528 = vmatprep.subr.mxu0 0.0
    %1529 = vmatpush1.xpose.msra.mxu0 0.0
    %1530 = vmatprep.subr.mxu0 0.0
    %1531 = vmatpush1.xpose.msra.mxu0 0.0
    %1532 = vmatprep.subr.mxu0 0.0
    %1533 = vmatpush1.xpose.msra.mxu0 0.0
    %1534 = vmatprep.subr.mxu0 0.0
    %1535 = vmatpush1.xpose.msra.mxu0 0.0
    %1536 = vmatprep.subr.mxu0 0.0
    %1537 = vmatpush1.xpose.msra.mxu0 0.0
    %1538 = vmatprep.subr.mxu0 0.0
    %1539 = vmatpush1.xpose.msra.mxu0 0.0
    %1540 = vmatprep.subr.mxu0 0.0
    %1541 = vmatpush1.xpose.msra.mxu0 0.0
    %1542 = vmatprep.subr.mxu0 0.0
    %1543 = vmatpush1.xpose.msra.mxu0 0.0
    %1544 = vmatprep.subr.mxu0 0.0
    %1545 = vmatpush1.xpose.msra.mxu0 0.0
    %1546 = vmatprep.subr.mxu0 0.0
    %1547 = vmatpush1.xpose.msra.mxu0 0.0
    %1548 = vmatprep.mubr.f32.mxu0 0.0
    %1549 = vmatmul.mubr.f32.gmra.mrb[0].mxu0 %v1480
    %v1550 = vpop.f32.mrb[0].mxu0
    %v1551 = vadd.f32 0.0, %v1550
    %v1552 = vpop.f32.mrb[0].mxu0
    %1553 = vdwg.mxu0
    %1554 = vrot.lane.b32.xlu0 %v215, 104
    %v1555 = vpop.permute.xlu0 %1554
    %1556 = vrot.lane.b32.xlu0 %v215, 72
    %v1557 = vpop.permute.xlu0 %1556
    %v1558 = vsel %vm221, %v1555, 0
    %v1560 = vsel %vm221, %v1557, 0
    %1562 = vmatprep.subr.mxu0 0.0
    %1563 = vmatpush1.xpose.msra.mxu0 %v1560
    %1564 = vmatprep.subr.mxu0 0.0
    %1565 = vmatpush1.xpose.msra.mxu0 0.0
    %1566 = vmatprep.subr.mxu0 0.0
    %1567 = vmatpush1.xpose.msra.mxu0 0.0
    %1568 = vmatprep.subr.mxu0 0.0
    %1569 = vmatpush1.xpose.msra.mxu0 0.0
    %1570 = vmatprep.subr.mxu0 0.0
    %1571 = vmatpush1.xpose.msra.mxu0 0.0
    %1572 = vmatprep.subr.mxu0 0.0
    %1573 = vmatpush1.xpose.msra.mxu0 0.0
    %1574 = vmatprep.subr.mxu0 0.0
    %1575 = vmatpush1.xpose.msra.mxu0 0.0
    %1576 = vmatprep.subr.mxu0 0.0
    %1577 = vmatpush1.xpose.msra.mxu0 0.0
    %1578 = vmatprep.subr.mxu0 0.0
    %1579 = vmatpush1.xpose.msra.mxu0 0.0
    %1580 = vmatprep.subr.mxu0 0.0
    %1581 = vmatpush1.xpose.msra.mxu0 0.0
    %1582 = vmatprep.subr.mxu0 0.0
    %1583 = vmatpush1.xpose.msra.mxu0 0.0
    %1584 = vmatprep.subr.mxu0 0.0
    %1585 = vmatpush1.xpose.msra.mxu0 0.0
    %1586 = vmatprep.subr.mxu0 0.0
    %1587 = vmatpush1.xpose.msra.mxu0 0.0
    %1588 = vmatprep.subr.mxu0 0.0
    %1589 = vmatpush1.xpose.msra.mxu0 0.0
    %1590 = vmatprep.subr.mxu0 0.0
    %1591 = vmatpush1.xpose.msra.mxu0 0.0
    %1592 = vmatprep.subr.mxu0 0.0
    %1593 = vmatpush1.xpose.msra.mxu0 0.0
    %1594 = vmatprep.subr.mxu0 0.0
    %1595 = vmatpush1.xpose.msra.mxu0 0.0
    %1596 = vmatprep.subr.mxu0 0.0
    %1597 = vmatpush1.xpose.msra.mxu0 0.0
    %1598 = vmatprep.subr.mxu0 0.0
    %1599 = vmatpush1.xpose.msra.mxu0 0.0
    %1600 = vmatprep.subr.mxu0 0.0
    %1601 = vmatpush1.xpose.msra.mxu0 0.0
    %1602 = vmatprep.subr.mxu0 0.0
    %1603 = vmatpush1.xpose.msra.mxu0 0.0
    %1604 = vmatprep.subr.mxu0 0.0
    %1605 = vmatpush1.xpose.msra.mxu0 0.0
    %1606 = vmatprep.subr.mxu0 0.0
    %1607 = vmatpush1.xpose.msra.mxu0 0.0
    %1608 = vmatprep.subr.mxu0 0.0
    %1609 = vmatpush1.xpose.msra.mxu0 0.0
    %1610 = vmatprep.subr.mxu0 0.0
    %1611 = vmatpush1.xpose.msra.mxu0 0.0
    %1612 = vmatprep.subr.mxu0 0.0
    %1613 = vmatpush1.xpose.msra.mxu0 0.0
    %1614 = vmatprep.subr.mxu0 0.0
    %1615 = vmatpush1.xpose.msra.mxu0 0.0
    %1616 = vmatprep.subr.mxu0 0.0
    %1617 = vmatpush1.xpose.msra.mxu0 0.0
    %1618 = vmatprep.subr.mxu0 0.0
    %1619 = vmatpush1.xpose.msra.mxu0 0.0
    %1620 = vmatprep.subr.mxu0 0.0
    %1621 = vmatpush1.xpose.msra.mxu0 0.0
    %1622 = vmatprep.subr.mxu0 0.0
    %1623 = vmatpush1.xpose.msra.mxu0 0.0
    %1624 = vmatprep.subr.mxu0 0.0
    %1625 = vmatpush1.xpose.msra.mxu0 0.0
    %1626 = vmatprep.mubr.f32.mxu0 0.0
    %1627 = vmatmul.mubr.f32.gmra.mrb[0].mxu0 %v1558
    %v1628 = vpop.f32.mrb[0].mxu0
    %v1629 = vadd.f32 0.0, %v1628
    %v1630 = vpop.f32.mrb[0].mxu0
    %1631 = vdwg.mxu0
    %v1632 = vmul.f32 %v1551, 0.35355338
    %v1633 = vmul.f32 %v1629, 0.35355338
    %v1634 = vadd.f32 %v1632, %v380
    %v1635 = vadd.f32 %v1633, %v384
    %v1636 = vsel %vm221, %v1634, -inf
    %1637 = vmax.xlane.f32.xlu0 %v1636
    %v1638 = vpop.xlane.xlu0 %1637
    %v1639 = vsel %vm221, %v1635, -inf
    %1640 = vmax.xlane.f32.xlu0 %v1639
    %v1641 = vpop.xlane.xlu0 %1640
    %v1642 = vsub.f32 %v1634, %v1638
    %v1643 = vsub.f32 %v1635, %v1641
    %v1644 = vmul.f32 %v1642, 1.442695
    %v1645 = vpow.pop %v1644
    %v1646 = vmul.f32 %v1643, 1.442695
    %v1647 = vpow.pop %v1646
    %v1648 = vsel %vm221, %v1645, 0.0
    %1649 = vadd.xlane.f32.xlu0 %v1648
    %v1650 = vpop.xlane.xlu0 %1649
    %v1651 = vsel %vm221, %v1647, 0.0
    %1652 = vadd.xlane.f32.xlu0 %v1651
    %v1653 = vpop.xlane.xlu0 %1652
    %v1654 = vrcp.pop %v1650
    %v1655 = vrcp.pop %v1653
    %v1656 = vmul.f32 %v1645, %v1654
    %v1657 = vmul.f32 %v1647, %v1655
    %1658 = vrot.lane.b32.xlu0 %v210, 40
    %v1659 = vpop.permute.xlu0 %1658
    %v1662 = vsel %vm221, %v1656, 0
    %1664 = vmatprep.subr.mxu0 0.0
    %1665 = vmatpush1.msra.mxu0 %v1659
    %1666 = vmatprep.subr.mxu0 0.0
    %1667 = vmatpush1.msra.mxu0 0.0
    %1668 = vmatprep.subr.mxu0 0.0
    %1669 = vmatpush1.msra.mxu0 0.0
    %1670 = vmatprep.subr.mxu0 0.0
    %1671 = vmatpush1.msra.mxu0 0.0
    %1672 = vmatprep.subr.mxu0 0.0
    %1673 = vmatpush1.msra.mxu0 0.0
    %1674 = vmatprep.subr.mxu0 0.0
    %1675 = vmatpush1.msra.mxu0 0.0
    %1676 = vmatprep.subr.mxu0 0.0
    %1677 = vmatpush1.msra.mxu0 0.0
    %1678 = vmatprep.subr.mxu0 0.0
    %1679 = vmatpush1.msra.mxu0 0.0
    %1680 = vmatprep.subr.mxu0 0.0
    %1681 = vmatpush1.msra.mxu0 0.0
    %1682 = vmatprep.subr.mxu0 0.0
    %1683 = vmatpush1.msra.mxu0 0.0
    %1684 = vmatprep.subr.mxu0 0.0
    %1685 = vmatpush1.msra.mxu0 0.0
    %1686 = vmatprep.subr.mxu0 0.0
    %1687 = vmatpush1.msra.mxu0 0.0
    %1688 = vmatprep.subr.mxu0 0.0
    %1689 = vmatpush1.msra.mxu0 0.0
    %1690 = vmatprep.subr.mxu0 0.0
    %1691 = vmatpush1.msra.mxu0 0.0
    %1692 = vmatprep.subr.mxu0 0.0
    %1693 = vmatpush1.msra.mxu0 0.0
    %1694 = vmatprep.subr.mxu0 0.0
    %1695 = vmatpush1.msra.mxu0 0.0
    %1696 = vmatprep.subr.mxu0 0.0
    %1697 = vmatpush1.msra.mxu0 0.0
    %1698 = vmatprep.subr.mxu0 0.0
    %1699 = vmatpush1.msra.mxu0 0.0
    %1700 = vmatprep.subr.mxu0 0.0
    %1701 = vmatpush1.msra.mxu0 0.0
    %1702 = vmatprep.subr.mxu0 0.0
    %1703 = vmatpush1.msra.mxu0 0.0
    %1704 = vmatprep.subr.mxu0 0.0
    %1705 = vmatpush1.msra.mxu0 0.0
    %1706 = vmatprep.subr.mxu0 0.0
    %1707 = vmatpush1.msra.mxu0 0.0
    %1708 = vmatprep.subr.mxu0 0.0
    %1709 = vmatpush1.msra.mxu0 0.0
    %1710 = vmatprep.subr.mxu0 0.0
    %1711 = vmatpush1.msra.mxu0 0.0
    %1712 = vmatprep.subr.mxu0 0.0
    %1713 = vmatpush1.msra.mxu0 0.0
    %1714 = vmatprep.subr.mxu0 0.0
    %1715 = vmatpush1.msra.mxu0 0.0
    %1716 = vmatprep.subr.mxu0 0.0
    %1717 = vmatpush1.msra.mxu0 0.0
    %1718 = vmatprep.subr.mxu0 0.0
    %1719 = vmatpush1.msra.mxu0 0.0
    %1720 = vmatprep.subr.mxu0 0.0
    %1721 = vmatpush1.msra.mxu0 0.0
    %1722 = vmatprep.subr.mxu0 0.0
    %1723 = vmatpush1.msra.mxu0 0.0
    %1724 = vmatprep.subr.mxu0 0.0
    %1725 = vmatpush1.msra.mxu0 0.0
    %1726 = vmatprep.subr.mxu0 0.0
    %1727 = vmatpush1.msra.mxu0 0.0
    %1728 = vmatprep.mubr.f32.mxu0 0.0
    %1729 = vmatmul.mubr.f32.gmra.mrb[0].mxu0 %v1662
    %v1730 = vpop.f32.mrb[0].mxu0
    %v1731 = vadd.f32 0.0, %v1730
    %v1732 = vpop.f32.mrb[0].mxu0
    %1733 = vdwg.mxu0
    %1734 = vrot.lane.b32.xlu0 %v215, 40
    %v1735 = vpop.permute.xlu0 %1734
    %v1738 = vsel %vm221, %v1657, 0
    %1740 = vmatprep.subr.mxu0 0.0
    %1741 = vmatpush1.msra.mxu0 %v1735
    %1742 = vmatprep.subr.mxu0 0.0
    %1743 = vmatpush1.msra.mxu0 0.0
    %1744 = vmatprep.subr.mxu0 0.0
    %1745 = vmatpush1.msra.mxu0 0.0
    %1746 = vmatprep.subr.mxu0 0.0
    %1747 = vmatpush1.msra.mxu0 0.0
    %1748 = vmatprep.subr.mxu0 0.0
    %1749 = vmatpush1.msra.mxu0 0.0
    %1750 = vmatprep.subr.mxu0 0.0
    %1751 = vmatpush1.msra.mxu0 0.0
    %1752 = vmatprep.subr.mxu0 0.0
    %1753 = vmatpush1.msra.mxu0 0.0
    %1754 = vmatprep.subr.mxu0 0.0
    %1755 = vmatpush1.msra.mxu0 0.0
    %1756 = vmatprep.subr.mxu0 0.0
    %1757 = vmatpush1.msra.mxu0 0.0
    %1758 = vmatprep.subr.mxu0 0.0
    %1759 = vmatpush1.msra.mxu0 0.0
    %1760 = vmatprep.subr.mxu0 0.0
    %1761 = vmatpush1.msra.mxu0 0.0
    %1762 = vmatprep.subr.mxu0 0.0
    %1763 = vmatpush1.msra.mxu0 0.0
    %1764 = vmatprep.subr.mxu0 0.0
    %1765 = vmatpush1.msra.mxu0 0.0
    %1766 = vmatprep.subr.mxu0 0.0
    %1767 = vmatpush1.msra.mxu0 0.0
    %1768 = vmatprep.subr.mxu0 0.0
    %1769 = vmatpush1.msra.mxu0 0.0
    %1770 = vmatprep.subr.mxu0 0.0
    %1771 = vmatpush1.msra.mxu0 0.0
    %1772 = vmatprep.subr.mxu0 0.0
    %1773 = vmatpush1.msra.mxu0 0.0
    %1774 = vmatprep.subr.mxu0 0.0
    %1775 = vmatpush1.msra.mxu0 0.0
    %1776 = vmatprep.subr.mxu0 0.0
    %1777 = vmatpush1.msra.mxu0 0.0
    %1778 = vmatprep.subr.mxu0 0.0
    %1779 = vmatpush1.msra.mxu0 0.0
    %1780 = vmatprep.subr.mxu0 0.0
    %1781 = vmatpush1.msra.mxu0 0.0
    %1782 = vmatprep.subr.mxu0 0.0
    %1783 = vmatpush1.msra.mxu0 0.0
    %1784 = vmatprep.subr.mxu0 0.0
    %1785 = vmatpush1.msra.mxu0 0.0
    %1786 = vmatprep.subr.mxu0 0.0
    %1787 = vmatpush1.msra.mxu0 0.0
    %1788 = vmatprep.subr.mxu0 0.0
    %1789 = vmatpush1.msra.mxu0 0.0
    %1790 = vmatprep.subr.mxu0 0.0
    %1791 = vmatpush1.msra.mxu0 0.0
    %1792 = vmatprep.subr.mxu0 0.0
    %1793 = vmatpush1.msra.mxu0 0.0
    %1794 = vmatprep.subr.mxu0 0.0
    %1795 = vmatpush1.msra.mxu0 0.0
    %1796 = vmatprep.subr.mxu0 0.0
    %1797 = vmatpush1.msra.mxu0 0.0
    %1798 = vmatprep.subr.mxu0 0.0
    %1799 = vmatpush1.msra.mxu0 0.0
    %1800 = vmatprep.subr.mxu0 0.0
    %1801 = vmatpush1.msra.mxu0 0.0
    %1802 = vmatprep.subr.mxu0 0.0
    %1803 = vmatpush1.msra.mxu0 0.0
    %1804 = vmatprep.mubr.f32.mxu0 0.0
    %1805 = vmatmul.mubr.f32.gmra.mrb[0].mxu0 %v1738
    %v1806 = vpop.f32.mrb[0].mxu0
    %v1807 = vadd.f32 0.0, %v1806
    %v1808 = vpop.f32.mrb[0].mxu0
    %1809 = vdwg.mxu0
    %v1811 = vsel %vm221, %v1731, 0
    %v1814 = vsel %vm221, %v1807, 0
    %1816 = vmatprep.subr.mxu0 0.0
    %1817 = vmatpush1.msra.mxu0 %v129
    %1818 = vmatprep.subr.mxu0 0.0
    %1819 = vmatpush1.msra.mxu0 0.0
    %1820 = vmatprep.subr.mxu0 0.0
    %1821 = vmatpush1.msra.mxu0 0.0
    %1822 = vmatprep.subr.mxu0 0.0
    %1823 = vmatpush1.msra.mxu0 0.0
    %1824 = vmatprep.subr.mxu0 0.0
    %1825 = vmatpush1.msra.mxu0 0.0
    %1826 = vmatprep.subr.mxu0 0.0
    %1827 = vmatpush1.msra.mxu0 0.0
    %1828 = vmatprep.subr.mxu0 0.0
    %1829 = vmatpush1.msra.mxu0 0.0
    %1830 = vmatprep.subr.mxu0 0.0
    %1831 = vmatpush1.msra.mxu0 0.0
    %1832 = vmatprep.subr.mxu0 0.0
    %1833 = vmatpush1.msra.mxu0 0.0
    %1834 = vmatprep.subr.mxu0 0.0
    %1835 = vmatpush1.msra.mxu0 0.0
    %1836 = vmatprep.subr.mxu0 0.0
    %1837 = vmatpush1.msra.mxu0 0.0
    %1838 = vmatprep.subr.mxu0 0.0
    %1839 = vmatpush1.msra.mxu0 0.0
    %1840 = vmatprep.subr.mxu0 0.0
    %1841 = vmatpush1.msra.mxu0 0.0
    %1842 = vmatprep.subr.mxu0 0.0
    %1843 = vmatpush1.msra.mxu0 0.0
    %1844 = vmatprep.subr.mxu0 0.0
    %1845 = vmatpush1.msra.mxu0 0.0
    %1846 = vmatprep.subr.mxu0 0.0
    %1847 = vmatpush1.msra.mxu0 0.0
    %1848 = vmatprep.subr.mxu0 0.0
    %1849 = vmatpush1.msra.mxu0 0.0
    %1850 = vmatprep.subr.mxu0 0.0
    %1851 = vmatpush1.msra.mxu0 0.0
    %1852 = vmatprep.subr.mxu0 0.0
    %1853 = vmatpush1.msra.mxu0 0.0
    %1854 = vmatprep.subr.mxu0 0.0
    %1855 = vmatpush1.msra.mxu0 0.0
    %1856 = vmatprep.subr.mxu0 0.0
    %1857 = vmatpush1.msra.mxu0 0.0
    %1858 = vmatprep.subr.mxu0 0.0
    %1859 = vmatpush1.msra.mxu0 0.0
    %1860 = vmatprep.subr.mxu0 0.0
    %1861 = vmatpush1.msra.mxu0 0.0
    %1862 = vmatprep.subr.mxu0 0.0
    %1863 = vmatpush1.msra.mxu0 0.0
    %1864 = vmatprep.subr.mxu0 0.0
    %1865 = vmatpush1.msra.mxu0 0.0
    %1866 = vmatprep.subr.mxu0 0.0
    %1867 = vmatpush1.msra.mxu0 0.0
    %1868 = vmatprep.subr.mxu0 0.0
    %1869 = vmatpush1.msra.mxu0 0.0
    %1870 = vmatprep.subr.mxu0 0.0
    %1871 = vmatpush1.msra.mxu0 0.0
    %1872 = vmatprep.subr.mxu0 0.0
    %1873 = vmatpush1.msra.mxu0 0.0
    %1874 = vmatprep.subr.mxu0 0.0
    %1875 = vmatpush1.msra.mxu0 0.0
    %1876 = vmatprep.subr.mxu0 0.0
    %1877 = vmatpush1.msra.mxu0 0.0
    %1878 = vmatprep.subr.mxu0 0.0
    %1879 = vmatpush1.msra.mxu0 0.0
    %1880 = vmatprep.mubr.f32.mxu0 0.0
    %1881 = vmatmul.mubr.f32.gmra.mrb[0].mxu0 %v1811
    %v1882 = vpop.f32.mrb[0].mxu0
    %v1883 = vadd.f32 0.0, %v1882
    %v1884 = vpop.f32.mrb[0].mxu0
    %1885 = vmatprep.mubr.f32.mxu0 0.0
    %1886 = vmatmul.mubr.f32.gmra.mrb[0].mxu0 %v1814
    %v1887 = vpop.f32.mrb[0].mxu0
    %v1888 = vadd.f32 0.0, %v1887
    %v1889 = vpop.f32.mrb[0].mxu0
    %1890 = vdwg.mxu0
    %v1891 = vadd.f32 %v1474, %v1883
    %v1892 = vadd.f32 %v1475, %v1888
    %v1893 = vld [vmem:[%s7] sm:$0x1]
    %v1895 = vlaneseq
    %v1896 = vshrl.u32 %v1895, 7
    %v1897 = vsub.s32 0, %v1896
    %v1898 = vrot.slane %v1893, %v1897
    %v1900 = vadd.f32 %v1891, %v1898
    %v1901 = vadd.f32 %v1892, %v1898
    %v1902 = vadd.f32 %v1900, %v120
    %v1903 = vadd.f32 %v1901, %v121
    %v1904 = vld [vmem:[%s8] sm:$0x1]
    %v1905 = vld [vmem:[%s9] sm:$0x1]
    %v1906 = vsel %vm78, %v1902, 0.0
    %1907 = vadd.xlane.f32.xlu0 %v1906
    %v1908 = vpop.xlane.xlu0 %1907
    %v1909 = vsel %vm78, %v1903, 0.0
    %1910 = vadd.xlane.f32.xlu0 %v1909
    %v1911 = vpop.xlane.xlu0 %1910
    %v1912 = vmul.f32 %v1908, %v85
    %v1913 = vmul.f32 %v1911, %v85
    %v1914 = vsub.f32 %v1902, %v1912
    %v1915 = vsub.f32 %v1903, %v1913
    %v1916 = vmul.f32 %v1914, %v1914
    %v1917 = vmul.f32 %v1915, %v1915
    %v1918 = vsel %vm78, %v1916, 0.0
    %1919 = vadd.xlane.f32.xlu0 %v1918
    %v1920 = vpop.xlane.xlu0 %1919
    %v1921 = vsel %vm78, %v1917, 0.0
    %1922 = vadd.xlane.f32.xlu0 %v1921
    %v1923 = vpop.xlane.xlu0 %1922
    %v1924 = vmul.f32 %v1920, %v85
    %v1925 = vmul.f32 %v1923, %v85
    %v1926 = vadd.f32 %v1924, 1e-12
    %v1927 = vadd.f32 %v1925, 1e-12
    %v1928 = vrsqrt.pop %v1926
    %v1929 = vrsqrt.pop %v1927
    %v1930 = vmul.f32 %v1914, %v1928
    %v1931 = vmul.f32 %v1915, %v1929
    %v1933 = vlaneseq
    %v1934 = vshrl.u32 %v1933, 7
    %v1935 = vsub.s32 0, %v1934
    %v1936 = vrot.slane %v1904, %v1935
    %v1938 = vmul.f32 %v1930, %v1936
    %v1939 = vmul.f32 %v1931, %v1936
    %v1941 = vlaneseq
    %v1942 = vshrl.u32 %v1941, 7
    %v1943 = vsub.s32 0, %v1942
    %v1944 = vrot.slane %v1905, %v1943
    %v1946 = vadd.f32 %v1938, %v1944
    %v1947 = vadd.f32 %v1939, %v1944
    %v1948 = vld [vmem:[%s10] sm:$0xff]
    %v1949 = vld [vmem:[%s10 + $0x8] sm:$0xff]
    %v1950 = vld [vmem:[%s10 + $0x10] sm:$0xff]
    %v1951 = vld [vmem:[%s10 + $0x18] sm:$0xff]
    %v1952 = vld [vmem:[%s11] sm:$0x1]
    %v1954 = vlaneseq
    %v1955 = vshrl.u32 %v1954, 7
    %v1956 = vsub.s32 0, %v1955
    %v1957 = vrot.slane %v1952, %v1956
    %v1960 = vsel %vm78, %v1946, 0
    %v1963 = vsel %vm78, %v1947, 0
    %1965 = vmatprep.subr.mxu0 0.0
    %1966 = vmatpush1.msra.mxu0 %v1948
    %1967 = vmatprep.subr.mxu0 0.0
    %1968 = vmatpush1.msra.mxu0 %v1949
    %1969 = vmatprep.subr.mxu0 0.0
    %1970 = vmatpush1.msra.mxu0 %v1950
    %1971 = vmatprep.subr.mxu0 0.0
    %1972 = vmatpush1.msra.mxu0 %v1951
    %1973 = vmatprep.subr.mxu0 0.0
    %1974 = vmatpush1.msra.mxu0 0.0
    %1975 = vmatprep.subr.mxu0 0.0
    %1976 = vmatpush1.msra.mxu0 0.0
    %1977 = vmatprep.subr.mxu0 0.0
    %1978 = vmatpush1.msra.mxu0 0.0
    %1979 = vmatprep.subr.mxu0 0.0
    %1980 = vmatpush1.msra.mxu0 0.0
    %1981 = vmatprep.subr.mxu0 0.0
    %1982 = vmatpush1.msra.mxu0 0.0
    %1983 = vmatprep.subr.mxu0 0.0
    %1984 = vmatpush1.msra.mxu0 0.0
    %1985 = vmatprep.subr.mxu0 0.0
    %1986 = vmatpush1.msra.mxu0 0.0
    %1987 = vmatprep.subr.mxu0 0.0
    %1988 = vmatpush1.msra.mxu0 0.0
    %1989 = vmatprep.subr.mxu0 0.0
    %1990 = vmatpush1.msra.mxu0 0.0
    %1991 = vmatprep.subr.mxu0 0.0
    %1992 = vmatpush1.msra.mxu0 0.0
    %1993 = vmatprep.subr.mxu0 0.0
    %1994 = vmatpush1.msra.mxu0 0.0
    %1995 = vmatprep.subr.mxu0 0.0
    %1996 = vmatpush1.msra.mxu0 0.0
    %1997 = vmatprep.subr.mxu0 0.0
    %1998 = vmatpush1.msra.mxu0 0.0
    %1999 = vmatprep.subr.mxu0 0.0
    %2000 = vmatpush1.msra.mxu0 0.0
    %2001 = vmatprep.subr.mxu0 0.0
    %2002 = vmatpush1.msra.mxu0 0.0
    %2003 = vmatprep.subr.mxu0 0.0
    %2004 = vmatpush1.msra.mxu0 0.0
    %2005 = vmatprep.subr.mxu0 0.0
    %2006 = vmatpush1.msra.mxu0 0.0
    %2007 = vmatprep.subr.mxu0 0.0
    %2008 = vmatpush1.msra.mxu0 0.0
    %2009 = vmatprep.subr.mxu0 0.0
    %2010 = vmatpush1.msra.mxu0 0.0
    %2011 = vmatprep.subr.mxu0 0.0
    %2012 = vmatpush1.msra.mxu0 0.0
    %2013 = vmatprep.subr.mxu0 0.0
    %2014 = vmatpush1.msra.mxu0 0.0
    %2015 = vmatprep.subr.mxu0 0.0
    %2016 = vmatpush1.msra.mxu0 0.0
    %2017 = vmatprep.subr.mxu0 0.0
    %2018 = vmatpush1.msra.mxu0 0.0
    %2019 = vmatprep.subr.mxu0 0.0
    %2020 = vmatpush1.msra.mxu0 0.0
    %2021 = vmatprep.subr.mxu0 0.0
    %2022 = vmatpush1.msra.mxu0 0.0
    %2023 = vmatprep.subr.mxu0 0.0
    %2024 = vmatpush1.msra.mxu0 0.0
    %2025 = vmatprep.subr.mxu0 0.0
    %2026 = vmatpush1.msra.mxu0 0.0
    %2027 = vmatprep.subr.mxu0 0.0
    %2028 = vmatpush1.msra.mxu0 0.0
    %2029 = vmatprep.mubr.f32.mxu0 0.0
    %2030 = vmatmul.mubr.f32.gmra.mrb[0].mxu0 %v1960
    %v2031 = vpop.f32.mrb[0].mxu0
    %v2032 = vadd.f32 %v1957, %v2031
    %v2033 = vpop.f32.mrb[0].mxu0
    %2034 = vmatprep.mubr.f32.mxu0 0.0
    %2035 = vmatmul.mubr.f32.gmra.mrb[0].mxu0 %v1963
    %v2036 = vpop.f32.mrb[0].mxu0
    %v2037 = vadd.f32 %v1957, %v2036
    %v2038 = vpop.f32.mrb[0].mxu0
    %2039 = vdwg.mxu0
    %v2040 = vmul.f32 %v2032, 0.5
    %v2041 = vmul.f32 %v2037, 0.5
    %v2042 = vmul.f32 %v2032, 0.70710677
    %v2043 = vmul.f32 %v2037, 0.70710677
    %v2044 = verf.f32.pop %v2042
    %v2045 = verf.f32.pop %v2043
    %v2046 = vadd.f32 %v2044, 1.0
    %v2047 = vadd.f32 %v2045, 1.0
    %v2048 = vmul.f32 %v2040, %v2046
    %v2049 = vmul.f32 %v2041, %v2047
    %v2050 = vld [vmem:[%s12] sm:$0xff]
    %v2051 = vld [vmem:[%s12 + $0x8] sm:$0xff]
    %v2052 = vld [vmem:[%s12 + $0x10] sm:$0xff]
    %v2053 = vld [vmem:[%s12 + $0x18] sm:$0xff]
    %v2054 = vld [vmem:[%s12 + $0x20] sm:$0xff]
    %v2055 = vld [vmem:[%s12 + $0x28] sm:$0xff]
    %v2056 = vld [vmem:[%s12 + $0x30] sm:$0xff]
    %v2057 = vld [vmem:[%s12 + $0x38] sm:$0xff]
    %v2058 = vld [vmem:[%s13] sm:$0x1]
    %v2060 = vlaneseq
    %v2061 = vshrl.u32 %v2060, 7
    %v2062 = vsub.s32 0, %v2061
    %v2063 = vrot.slane %v2058, %v2062
    %vm2065 = vcmask 523264
    %v2067 = vsel %vm2065, %v2048, 0
    %v2070 = vsel %vm2065, %v2049, 0
    %2072 = vmatprep.subr.mxu0 0.0
    %2073 = vmatpush1.msra.mxu0 %v2050
    %2074 = vmatprep.subr.mxu0 0.0
    %2075 = vmatpush1.msra.mxu0 %v2051
    %2076 = vmatprep.subr.mxu0 0.0
    %2077 = vmatpush1.msra.mxu0 %v2052
    %2078 = vmatprep.subr.mxu0 0.0
    %2079 = vmatpush1.msra.mxu0 %v2053
    %2080 = vmatprep.subr.mxu0 0.0
    %2081 = vmatpush1.msra.mxu0 %v2054
    %2082 = vmatprep.subr.mxu0 0.0
    %2083 = vmatpush1.msra.mxu0 %v2055
    %2084 = vmatprep.subr.mxu0 0.0
    %2085 = vmatpush1.msra.mxu0 %v2056
    %2086 = vmatprep.subr.mxu0 0.0
    %2087 = vmatpush1.msra.mxu0 %v2057
    %2088 = vmatprep.subr.mxu0 0.0
    %2089 = vmatpush1.msra.mxu0 0.0
    %2090 = vmatprep.subr.mxu0 0.0
    %2091 = vmatpush1.msra.mxu0 0.0
    %2092 = vmatprep.subr.mxu0 0.0
    %2093 = vmatpush1.msra.mxu0 0.0
    %2094 = vmatprep.subr.mxu0 0.0
    %2095 = vmatpush1.msra.mxu0 0.0
    %2096 = vmatprep.subr.mxu0 0.0
    %2097 = vmatpush1.msra.mxu0 0.0
    %2098 = vmatprep.subr.mxu0 0.0
    %2099 = vmatpush1.msra.mxu0 0.0
    %2100 = vmatprep.subr.mxu0 0.0
    %2101 = vmatpush1.msra.mxu0 0.0
    %2102 = vmatprep.subr.mxu0 0.0
    %2103 = vmatpush1.msra.mxu0 0.0
    %2104 = vmatprep.subr.mxu0 0.0
    %2105 = vmatpush1.msra.mxu0 0.0
    %2106 = vmatprep.subr.mxu0 0.0
    %2107 = vmatpush1.msra.mxu0 0.0
    %2108 = vmatprep.subr.mxu0 0.0
    %2109 = vmatpush1.msra.mxu0 0.0
    %2110 = vmatprep.subr.mxu0 0.0
    %2111 = vmatpush1.msra.mxu0 0.0
    %2112 = vmatprep.subr.mxu0 0.0
    %2113 = vmatpush1.msra.mxu0 0.0
    %2114 = vmatprep.subr.mxu0 0.0
    %2115 = vmatpush1.msra.mxu0 0.0
    %2116 = vmatprep.subr.mxu0 0.0
    %2117 = vmatpush1.msra.mxu0 0.0
    %2118 = vmatprep.subr.mxu0 0.0
    %2119 = vmatpush1.msra.mxu0 0.0
    %2120 = vmatprep.subr.mxu0 0.0
    %2121 = vmatpush1.msra.mxu0 0.0
    %2122 = vmatprep.subr.mxu0 0.0
    %2123 = vmatpush1.msra.mxu0 0.0
    %2124 = vmatprep.subr.mxu0 0.0
    %2125 = vmatpush1.msra.mxu0 0.0
    %2126 = vmatprep.subr.mxu0 0.0
    %2127 = vmatpush1.msra.mxu0 0.0
    %2128 = vmatprep.subr.mxu0 0.0
    %2129 = vmatpush1.msra.mxu0 0.0
    %2130 = vmatprep.subr.mxu0 0.0
    %2131 = vmatpush1.msra.mxu0 0.0
    %2132 = vmatprep.subr.mxu0 0.0
    %2133 = vmatpush1.msra.mxu0 0.0
    %2134 = vmatprep.subr.mxu0 0.0
    %2135 = vmatpush1.msra.mxu0 0.0
    %2136 = vmatprep.mubr.f32.mxu0 0.0
    %2137 = vmatmul.mubr.f32.gmra.mrb[0].mxu0 %v2067
    %v2138 = vpop.f32.mrb[0].mxu0
    %v2139 = vadd.f32 %v2063, %v2138
    %v2140 = vpop.f32.mrb[0].mxu0
    %2141 = vmatprep.mubr.f32.mxu0 0.0
    %2142 = vmatmul.mubr.f32.gmra.mrb[0].mxu0 %v2070
    %v2143 = vpop.f32.mrb[0].mxu0
    %v2144 = vadd.f32 %v2063, %v2143
    %v2145 = vpop.f32.mrb[0].mxu0
    %2146 = vdwg.mxu0
    %v2147 = vadd.f32 %v2139, %v1946
    %v2148 = vadd.f32 %v2144, %v1947
    %v2149 = vld [vmem:[%s14] sm:$0x1]
    %v2150 = vld [vmem:[%s15] sm:$0x1]
    %v2151 = vsel %vm78, %v2147, 0.0
    %2152 = vadd.xlane.f32.xlu0 %v2151
    %v2153 = vpop.xlane.xlu0 %2152
    %v2154 = vsel %vm78, %v2148, 0.0
    %2155 = vadd.xlane.f32.xlu0 %v2154
    %v2156 = vpop.xlane.xlu0 %2155
    %v2157 = vmul.f32 %v2153, %v85
    %v2158 = vmul.f32 %v2156, %v85
    %v2159 = vsub.f32 %v2147, %v2157
    %v2160 = vsub.f32 %v2148, %v2158
    %v2161 = vmul.f32 %v2159, %v2159
    %v2162 = vmul.f32 %v2160, %v2160
    %v2163 = vsel %vm78, %v2161, 0.0
    %2164 = vadd.xlane.f32.xlu0 %v2163
    %v2165 = vpop.xlane.xlu0 %2164
    %v2166 = vsel %vm78, %v2162, 0.0
    %2167 = vadd.xlane.f32.xlu0 %v2166
    %v2168 = vpop.xlane.xlu0 %2167
    %v2169 = vmul.f32 %v2165, %v85
    %v2170 = vmul.f32 %v2168, %v85
    %v2171 = vadd.f32 %v2169, 1e-12
    %v2172 = vadd.f32 %v2170, 1e-12
    %v2173 = vrsqrt.pop %v2171
    %v2174 = vrsqrt.pop %v2172
    %v2175 = vmul.f32 %v2159, %v2173
    %v2176 = vmul.f32 %v2160, %v2174
    %v2178 = vlaneseq
    %v2179 = vshrl.u32 %v2178, 7
    %v2180 = vsub.s32 0, %v2179
    %v2181 = vrot.slane %v2149, %v2180
    %v2183 = vmul.f32 %v2175, %v2181
    %v2184 = vmul.f32 %v2176, %v2181
    %v2186 = vlaneseq
    %v2187 = vshrl.u32 %v2186, 7
    %v2188 = vsub.s32 0, %v2187
    %v2189 = vrot.slane %v2150, %v2188
    %v2191 = vadd.f32 %v2183, %v2189
    %v2192 = vadd.f32 %v2184, %v2189
    %s2193 = scalar_lea.vmem %s4, 32
    %v2194 = vld [vmem:[%s2193] sm:$0xff]
    %v2195 = vld [vmem:[%s2193 + $0x8] sm:$0xff]
    %v2196 = vld [vmem:[%s2193 + $0x10] sm:$0xff]
    %v2197 = vld [vmem:[%s2193 + $0x18] sm:$0xff]
    %s2198 = scalar_lea.vmem %s6, 32
    %v2199 = vld [vmem:[%s2198] sm:$0xff]
    %v2200 = vld [vmem:[%s2198 + $0x8] sm:$0xff]
    %v2201 = vld [vmem:[%s2198 + $0x10] sm:$0xff]
    %v2202 = vld [vmem:[%s2198 + $0x18] sm:$0xff]
    %s2203 = scalar_lea.vmem %s5, 1
    %v2204 = vld [vmem:[%s2203] sm:$0x1]
    %v2206 = vlaneseq
    %v2207 = vshrl.u32 %v2206, 7
    %v2208 = vsub.s32 0, %v2207
    %v2209 = vrot.slane %v2204, %v2208
    %v2212 = vsel %vm78, %v2191, 0
    %v2215 = vsel %vm78, %v2192, 0
    %2217 = vmatprep.subr.mxu0 0.0
    %2218 = vmatpush1.msra.mxu0 %v2194
    %2219 = vmatprep.subr.mxu0 0.0
    %2220 = vmatpush1.msra.mxu0 %v2195
    %2221 = vmatprep.subr.mxu0 0.0
    %2222 = vmatpush1.msra.mxu0 %v2196
    %2223 = vmatprep.subr.mxu0 0.0
    %2224 = vmatpush1.msra.mxu0 %v2197
    %2225 = vmatprep.subr.mxu0 0.0
    %2226 = vmatpush1.msra.mxu0 0.0
    %2227 = vmatprep.subr.mxu0 0.0
    %2228 = vmatpush1.msra.mxu0 0.0
    %2229 = vmatprep.subr.mxu0 0.0
    %2230 = vmatpush1.msra.mxu0 0.0
    %2231 = vmatprep.subr.mxu0 0.0
    %2232 = vmatpush1.msra.mxu0 0.0
    %2233 = vmatprep.subr.mxu0 0.0
    %2234 = vmatpush1.msra.mxu0 0.0
    %2235 = vmatprep.subr.mxu0 0.0
    %2236 = vmatpush1.msra.mxu0 0.0
    %2237 = vmatprep.subr.mxu0 0.0
    %2238 = vmatpush1.msra.mxu0 0.0
    %2239 = vmatprep.subr.mxu0 0.0
    %2240 = vmatpush1.msra.mxu0 0.0
    %2241 = vmatprep.subr.mxu0 0.0
    %2242 = vmatpush1.msra.mxu0 0.0
    %2243 = vmatprep.subr.mxu0 0.0
    %2244 = vmatpush1.msra.mxu0 0.0
    %2245 = vmatprep.subr.mxu0 0.0
    %2246 = vmatpush1.msra.mxu0 0.0
    %2247 = vmatprep.subr.mxu0 0.0
    %2248 = vmatpush1.msra.mxu0 0.0
    %2249 = vmatprep.subr.mxu0 0.0
    %2250 = vmatpush1.msra.mxu0 0.0
    %2251 = vmatprep.subr.mxu0 0.0
    %2252 = vmatpush1.msra.mxu0 0.0
    %2253 = vmatprep.subr.mxu0 0.0
    %2254 = vmatpush1.msra.mxu0 0.0
    %2255 = vmatprep.subr.mxu0 0.0
    %2256 = vmatpush1.msra.mxu0 0.0
    %2257 = vmatprep.subr.mxu0 0.0
    %2258 = vmatpush1.msra.mxu0 0.0
    %2259 = vmatprep.subr.mxu0 0.0
    %2260 = vmatpush1.msra.mxu0 0.0
    %2261 = vmatprep.subr.mxu0 0.0
    %2262 = vmatpush1.msra.mxu0 0.0
    %2263 = vmatprep.subr.mxu0 0.0
    %2264 = vmatpush1.msra.mxu0 0.0
    %2265 = vmatprep.subr.mxu0 0.0
    %2266 = vmatpush1.msra.mxu0 0.0
    %2267 = vmatprep.subr.mxu0 0.0
    %2268 = vmatpush1.msra.mxu0 0.0
    %2269 = vmatprep.subr.mxu0 0.0
    %2270 = vmatpush1.msra.mxu0 0.0
    %2271 = vmatprep.subr.mxu0 0.0
    %2272 = vmatpush1.msra.mxu0 0.0
    %2273 = vmatprep.subr.mxu0 0.0
    %2274 = vmatpush1.msra.mxu0 0.0
    %2275 = vmatprep.subr.mxu0 0.0
    %2276 = vmatpush1.msra.mxu0 0.0
    %2277 = vmatprep.subr.mxu0 0.0
    %2278 = vmatpush1.msra.mxu0 0.0
    %2279 = vmatprep.subr.mxu0 0.0
    %2280 = vmatpush1.msra.mxu0 0.0
    %2281 = vmatprep.mubr.f32.mxu0 0.0
    %2282 = vmatmul.mubr.f32.gmra.mrb[0].mxu0 %v2212
    %v2283 = vpop.f32.mrb[0].mxu0
    %v2284 = vadd.f32 %v2209, %v2283
    %v2285 = vpop.f32.mrb[0].mxu0
    %2286 = vmatprep.mubr.f32.mxu0 0.0
    %2287 = vmatmul.mubr.f32.gmra.mrb[0].mxu0 %v2215
    %v2288 = vpop.f32.mrb[0].mxu0
    %v2289 = vadd.f32 %v2209, %v2288
    %v2290 = vpop.f32.mrb[0].mxu0
    %2291 = vdwg.mxu0
    %2293 = vrot.lane.b32.xlu0 %v2284, 96
    %v2294 = vpop.permute.xlu0 %2293
    %v2295 = vsel %vm221, %v2284, 0
    %v2297 = vsel %vm221, %v2294, 0
    %2299 = vmatprep.subr.mxu0 0.0
    %2300 = vmatpush1.xpose.msra.mxu0 %v2297
    %2301 = vmatprep.subr.mxu0 0.0
    %2302 = vmatpush1.xpose.msra.mxu0 0.0
    %2303 = vmatprep.subr.mxu0 0.0
    %2304 = vmatpush1.xpose.msra.mxu0 0.0
    %2305 = vmatprep.subr.mxu0 0.0
    %2306 = vmatpush1.xpose.msra.mxu0 0.0
    %2307 = vmatprep.subr.mxu0 0.0
    %2308 = vmatpush1.xpose.msra.mxu0 0.0
    %2309 = vmatprep.subr.mxu0 0.0
    %2310 = vmatpush1.xpose.msra.mxu0 0.0
    %2311 = vmatprep.subr.mxu0 0.0
    %2312 = vmatpush1.xpose.msra.mxu0 0.0
    %2313 = vmatprep.subr.mxu0 0.0
    %2314 = vmatpush1.xpose.msra.mxu0 0.0
    %2315 = vmatprep.subr.mxu0 0.0
    %2316 = vmatpush1.xpose.msra.mxu0 0.0
    %2317 = vmatprep.subr.mxu0 0.0
    %2318 = vmatpush1.xpose.msra.mxu0 0.0
    %2319 = vmatprep.subr.mxu0 0.0
    %2320 = vmatpush1.xpose.msra.mxu0 0.0
    %2321 = vmatprep.subr.mxu0 0.0
    %2322 = vmatpush1.xpose.msra.mxu0 0.0
    %2323 = vmatprep.subr.mxu0 0.0
    %2324 = vmatpush1.xpose.msra.mxu0 0.0
    %2325 = vmatprep.subr.mxu0 0.0
    %2326 = vmatpush1.xpose.msra.mxu0 0.0
    %2327 = vmatprep.subr.mxu0 0.0
    %2328 = vmatpush1.xpose.msra.mxu0 0.0
    %2329 = vmatprep.subr.mxu0 0.0
    %2330 = vmatpush1.xpose.msra.mxu0 0.0
    %2331 = vmatprep.subr.mxu0 0.0
    %2332 = vmatpush1.xpose.msra.mxu0 0.0
    %2333 = vmatprep.subr.mxu0 0.0
    %2334 = vmatpush1.xpose.msra.mxu0 0.0
    %2335 = vmatprep.subr.mxu0 0.0
    %2336 = vmatpush1.xpose.msra.mxu0 0.0
    %2337 = vmatprep.subr.mxu0 0.0
    %2338 = vmatpush1.xpose.msra.mxu0 0.0
    %2339 = vmatprep.subr.mxu0 0.0
    %2340 = vmatpush1.xpose.msra.mxu0 0.0
    %2341 = vmatprep.subr.mxu0 0.0
    %2342 = vmatpush1.xpose.msra.mxu0 0.0
    %2343 = vmatprep.subr.mxu0 0.0
    %2344 = vmatpush1.xpose.msra.mxu0 0.0
    %2345 = vmatprep.subr.mxu0 0.0
    %2346 = vmatpush1.xpose.msra.mxu0 0.0
    %2347 = vmatprep.subr.mxu0 0.0
    %2348 = vmatpush1.xpose.msra.mxu0 0.0
    %2349 = vmatprep.subr.mxu0 0.0
    %2350 = vmatpush1.xpose.msra.mxu0 0.0
    %2351 = vmatprep.subr.mxu0 0.0
    %2352 = vmatpush1.xpose.msra.mxu0 0.0
    %2353 = vmatprep.subr.mxu0 0.0
    %2354 = vmatpush1.xpose.msra.mxu0 0.0
    %2355 = vmatprep.subr.mxu0 0.0
    %2356 = vmatpush1.xpose.msra.mxu0 0.0
    %2357 = vmatprep.subr.mxu0 0.0
    %2358 = vmatpush1.xpose.msra.mxu0 0.0
    %2359 = vmatprep.subr.mxu0 0.0
    %2360 = vmatpush1.xpose.msra.mxu0 0.0
    %2361 = vmatprep.subr.mxu0 0.0
    %2362 = vmatpush1.xpose.msra.mxu0 0.0
    %2363 = vmatprep.mubr.f32.mxu0 0.0
    %2364 = vmatmul.mubr.f32.gmra.mrb[0].mxu0 %v2295
    %v2365 = vpop.f32.mrb[0].mxu0
    %v2366 = vadd.f32 0.0, %v2365
    %v2367 = vpop.f32.mrb[0].mxu0
    %2368 = vdwg.mxu0
    %2370 = vrot.lane.b32.xlu0 %v2289, 96
    %v2371 = vpop.permute.xlu0 %2370
    %v2372 = vsel %vm221, %v2289, 0
    %v2374 = vsel %vm221, %v2371, 0
    %2376 = vmatprep.subr.mxu0 0.0
    %2377 = vmatpush1.xpose.msra.mxu0 %v2374
    %2378 = vmatprep.subr.mxu0 0.0
    %2379 = vmatpush1.xpose.msra.mxu0 0.0
    %2380 = vmatprep.subr.mxu0 0.0
    %2381 = vmatpush1.xpose.msra.mxu0 0.0
    %2382 = vmatprep.subr.mxu0 0.0
    %2383 = vmatpush1.xpose.msra.mxu0 0.0
    %2384 = vmatprep.subr.mxu0 0.0
    %2385 = vmatpush1.xpose.msra.mxu0 0.0
    %2386 = vmatprep.subr.mxu0 0.0
    %2387 = vmatpush1.xpose.msra.mxu0 0.0
    %2388 = vmatprep.subr.mxu0 0.0
    %2389 = vmatpush1.xpose.msra.mxu0 0.0
    %2390 = vmatprep.subr.mxu0 0.0
    %2391 = vmatpush1.xpose.msra.mxu0 0.0
    %2392 = vmatprep.subr.mxu0 0.0
    %2393 = vmatpush1.xpose.msra.mxu0 0.0
    %2394 = vmatprep.subr.mxu0 0.0
    %2395 = vmatpush1.xpose.msra.mxu0 0.0
    %2396 = vmatprep.subr.mxu0 0.0
    %2397 = vmatpush1.xpose.msra.mxu0 0.0
    %2398 = vmatprep.subr.mxu0 0.0
    %2399 = vmatpush1.xpose.msra.mxu0 0.0
    %2400 = vmatprep.subr.mxu0 0.0
    %2401 = vmatpush1.xpose.msra.mxu0 0.0
    %2402 = vmatprep.subr.mxu0 0.0
    %2403 = vmatpush1.xpose.msra.mxu0 0.0
    %2404 = vmatprep.subr.mxu0 0.0
    %2405 = vmatpush1.xpose.msra.mxu0 0.0
    %2406 = vmatprep.subr.mxu0 0.0
    %2407 = vmatpush1.xpose.msra.mxu0 0.0
    %2408 = vmatprep.subr.mxu0 0.0
    %2409 = vmatpush1.xpose.msra.mxu0 0.0
    %2410 = vmatprep.subr.mxu0 0.0
    %2411 = vmatpush1.xpose.msra.mxu0 0.0
    %2412 = vmatprep.subr.mxu0 0.0
    %2413 = vmatpush1.xpose.msra.mxu0 0.0
    %2414 = vmatprep.subr.mxu0 0.0
    %2415 = vmatpush1.xpose.msra.mxu0 0.0
    %2416 = vmatprep.subr.mxu0 0.0
    %2417 = vmatpush1.xpose.msra.mxu0 0.0
    %2418 = vmatprep.subr.mxu0 0.0
    %2419 = vmatpush1.xpose.msra.mxu0 0.0
    %2420 = vmatprep.subr.mxu0 0.0
    %2421 = vmatpush1.xpose.msra.mxu0 0.0
    %2422 = vmatprep.subr.mxu0 0.0
    %2423 = vmatpush1.xpose.msra.mxu0 0.0
    %2424 = vmatprep.subr.mxu0 0.0
    %2425 = vmatpush1.xpose.msra.mxu0 0.0
    %2426 = vmatprep.subr.mxu0 0.0
    %2427 = vmatpush1.xpose.msra.mxu0 0.0
    %2428 = vmatprep.subr.mxu0 0.0
    %2429 = vmatpush1.xpose.msra.mxu0 0.0
    %2430 = vmatprep.subr.mxu0 0.0
    %2431 = vmatpush1.xpose.msra.mxu0 0.0
    %2432 = vmatprep.subr.mxu0 0.0
    %2433 = vmatpush1.xpose.msra.mxu0 0.0
    %2434 = vmatprep.subr.mxu0 0.0
    %2435 = vmatpush1.xpose.msra.mxu0 0.0
    %2436 = vmatprep.subr.mxu0 0.0
    %2437 = vmatpush1.xpose.msra.mxu0 0.0
    %2438 = vmatprep.subr.mxu0 0.0
    %2439 = vmatpush1.xpose.msra.mxu0 0.0
    %2440 = vmatprep.mubr.f32.mxu0 0.0
    %2441 = vmatmul.mubr.f32.gmra.mrb[0].mxu0 %v2372
    %v2442 = vpop.f32.mrb[0].mxu0
    %v2443 = vadd.f32 0.0, %v2442
    %v2444 = vpop.f32.mrb[0].mxu0
    %2445 = vdwg.mxu0
    %v2446 = vmul.f32 %v2366, 0.35355338
    %v2447 = vmul.f32 %v2443, 0.35355338
    %v2448 = vadd.f32 %v2446, %v380
    %v2449 = vadd.f32 %v2447, %v384
    %v2450 = vsel %vm221, %v2448, -inf
    %2451 = vmax.xlane.f32.xlu0 %v2450
    %v2452 = vpop.xlane.xlu0 %2451
    %v2453 = vsel %vm221, %v2449, -inf
    %2454 = vmax.xlane.f32.xlu0 %v2453
    %v2455 = vpop.xlane.xlu0 %2454
    %v2456 = vsub.f32 %v2448, %v2452
    %v2457 = vsub.f32 %v2449, %v2455
    %v2458 = vmul.f32 %v2456, 1.442695
    %v2459 = vpow.pop %v2458
    %v2460 = vmul.f32 %v2457, 1.442695
    %v2461 = vpow.pop %v2460
    %v2462 = vsel %vm221, %v2459, 0.0
    %2463 = vadd.xlane.f32.xlu0 %v2462
    %v2464 = vpop.xlane.xlu0 %2463
    %v2465 = vsel %vm221, %v2461, 0.0
    %2466 = vadd.xlane.f32.xlu0 %v2465
    %v2467 = vpop.xlane.xlu0 %2466
    %v2468 = vrcp.pop %v2464
    %v2469 = vrcp.pop %v2467
    %v2470 = vmul.f32 %v2459, %v2468
    %v2471 = vmul.f32 %v2461, %v2469
    %2472 = vrot.lane.b32.xlu0 %v2284, 64
    %v2473 = vpop.permute.xlu0 %2472
    %v2476 = vsel %vm221, %v2470, 0
    %2478 = vmatprep.subr.mxu0 0.0
    %2479 = vmatpush1.msra.mxu0 %v2473
    %2480 = vmatprep.subr.mxu0 0.0
    %2481 = vmatpush1.msra.mxu0 0.0
    %2482 = vmatprep.subr.mxu0 0.0
    %2483 = vmatpush1.msra.mxu0 0.0
    %2484 = vmatprep.subr.mxu0 0.0
    %2485 = vmatpush1.msra.mxu0 0.0
    %2486 = vmatprep.subr.mxu0 0.0
    %2487 = vmatpush1.msra.mxu0 0.0
    %2488 = vmatprep.subr.mxu0 0.0
    %2489 = vmatpush1.msra.mxu0 0.0
    %2490 = vmatprep.subr.mxu0 0.0
    %2491 = vmatpush1.msra.mxu0 0.0
    %2492 = vmatprep.subr.mxu0 0.0
    %2493 = vmatpush1.msra.mxu0 0.0
    %2494 = vmatprep.subr.mxu0 0.0
    %2495 = vmatpush1.msra.mxu0 0.0
    %2496 = vmatprep.subr.mxu0 0.0
    %2497 = vmatpush1.msra.mxu0 0.0
    %2498 = vmatprep.subr.mxu0 0.0
    %2499 = vmatpush1.msra.mxu0 0.0
    %2500 = vmatprep.subr.mxu0 0.0
    %2501 = vmatpush1.msra.mxu0 0.0
    %2502 = vmatprep.subr.mxu0 0.0
    %2503 = vmatpush1.msra.mxu0 0.0
    %2504 = vmatprep.subr.mxu0 0.0
    %2505 = vmatpush1.msra.mxu0 0.0
    %2506 = vmatprep.subr.mxu0 0.0
    %2507 = vmatpush1.msra.mxu0 0.0
    %2508 = vmatprep.subr.mxu0 0.0
    %2509 = vmatpush1.msra.mxu0 0.0
    %2510 = vmatprep.subr.mxu0 0.0
    %2511 = vmatpush1.msra.mxu0 0.0
    %2512 = vmatprep.subr.mxu0 0.0
    %2513 = vmatpush1.msra.mxu0 0.0
    %2514 = vmatprep.subr.mxu0 0.0
    %2515 = vmatpush1.msra.mxu0 0.0
    %2516 = vmatprep.subr.mxu0 0.0
    %2517 = vmatpush1.msra.mxu0 0.0
    %2518 = vmatprep.subr.mxu0 0.0
    %2519 = vmatpush1.msra.mxu0 0.0
    %2520 = vmatprep.subr.mxu0 0.0
    %2521 = vmatpush1.msra.mxu0 0.0
    %2522 = vmatprep.subr.mxu0 0.0
    %2523 = vmatpush1.msra.mxu0 0.0
    %2524 = vmatprep.subr.mxu0 0.0
    %2525 = vmatpush1.msra.mxu0 0.0
    %2526 = vmatprep.subr.mxu0 0.0
    %2527 = vmatpush1.msra.mxu0 0.0
    %2528 = vmatprep.subr.mxu0 0.0
    %2529 = vmatpush1.msra.mxu0 0.0
    %2530 = vmatprep.subr.mxu0 0.0
    %2531 = vmatpush1.msra.mxu0 0.0
    %2532 = vmatprep.subr.mxu0 0.0
    %2533 = vmatpush1.msra.mxu0 0.0
    %2534 = vmatprep.subr.mxu0 0.0
    %2535 = vmatpush1.msra.mxu0 0.0
    %2536 = vmatprep.subr.mxu0 0.0
    %2537 = vmatpush1.msra.mxu0 0.0
    %2538 = vmatprep.subr.mxu0 0.0
    %2539 = vmatpush1.msra.mxu0 0.0
    %2540 = vmatprep.subr.mxu0 0.0
    %2541 = vmatpush1.msra.mxu0 0.0
    %2542 = vmatprep.mubr.f32.mxu0 0.0
    %2543 = vmatmul.mubr.f32.gmra.mrb[0].mxu0 %v2476
    %v2544 = vpop.f32.mrb[0].mxu0
    %v2545 = vadd.f32 0.0, %v2544
    %v2546 = vpop.f32.mrb[0].mxu0
    %2547 = vdwg.mxu0
    %2548 = vrot.lane.b32.xlu0 %v2289, 64
    %v2549 = vpop.permute.xlu0 %2548
    %v2552 = vsel %vm221, %v2471, 0
    %2554 = vmatprep.subr.mxu0 0.0
    %2555 = vmatpush1.msra.mxu0 %v2549
    %2556 = vmatprep.subr.mxu0 0.0
    %2557 = vmatpush1.msra.mxu0 0.0
    %2558 = vmatprep.subr.mxu0 0.0
    %2559 = vmatpush1.msra.mxu0 0.0
    %2560 = vmatprep.subr.mxu0 0.0
    %2561 = vmatpush1.msra.mxu0 0.0
    %2562 = vmatprep.subr.mxu0 0.0
    %2563 = vmatpush1.msra.mxu0 0.0
    %2564 = vmatprep.subr.mxu0 0.0
    %2565 = vmatpush1.msra.mxu0 0.0
    %2566 = vmatprep.subr.mxu0 0.0
    %2567 = vmatpush1.msra.mxu0 0.0
    %2568 = vmatprep.subr.mxu0 0.0
    %2569 = vmatpush1.msra.mxu0 0.0
    %2570 = vmatprep.subr.mxu0 0.0
    %2571 = vmatpush1.msra.mxu0 0.0
    %2572 = vmatprep.subr.mxu0 0.0
    %2573 = vmatpush1.msra.mxu0 0.0
    %2574 = vmatprep.subr.mxu0 0.0
    %2575 = vmatpush1.msra.mxu0 0.0
    %2576 = vmatprep.subr.mxu0 0.0
    %2577 = vmatpush1.msra.mxu0 0.0
    %2578 = vmatprep.subr.mxu0 0.0
    %2579 = vmatpush1.msra.mxu0 0.0
    %2580 = vmatprep.subr.mxu0 0.0
    %2581 = vmatpush1.msra.mxu0 0.0
    %2582 = vmatprep.subr.mxu0 0.0
    %2583 = vmatpush1.msra.mxu0 0.0
    %2584 = vmatprep.subr.mxu0 0.0
    %2585 = vmatpush1.msra.mxu0 0.0
    %2586 = vmatprep.subr.mxu0 0.0
    %2587 = vmatpush1.msra.mxu0 0.0
    %2588 = vmatprep.subr.mxu0 0.0
    %2589 = vmatpush1.msra.mxu0 0.0
    %2590 = vmatprep.subr.mxu0 0.0
    %2591 = vmatpush1.msra.mxu0 0.0
    %2592 = vmatprep.subr.mxu0 0.0
    %2593 = vmatpush1.msra.mxu0 0.0
    %2594 = vmatprep.subr.mxu0 0.0
    %2595 = vmatpush1.msra.mxu0 0.0
    %2596 = vmatprep.subr.mxu0 0.0
    %2597 = vmatpush1.msra.mxu0 0.0
    %2598 = vmatprep.subr.mxu0 0.0
    %2599 = vmatpush1.msra.mxu0 0.0
    %2600 = vmatprep.subr.mxu0 0.0
    %2601 = vmatpush1.msra.mxu0 0.0
    %2602 = vmatprep.subr.mxu0 0.0
    %2603 = vmatpush1.msra.mxu0 0.0
    %2604 = vmatprep.subr.mxu0 0.0
    %2605 = vmatpush1.msra.mxu0 0.0
    %2606 = vmatprep.subr.mxu0 0.0
    %2607 = vmatpush1.msra.mxu0 0.0
    %2608 = vmatprep.subr.mxu0 0.0
    %2609 = vmatpush1.msra.mxu0 0.0
    %2610 = vmatprep.subr.mxu0 0.0
    %2611 = vmatpush1.msra.mxu0 0.0
    %2612 = vmatprep.subr.mxu0 0.0
    %2613 = vmatpush1.msra.mxu0 0.0
    %2614 = vmatprep.subr.mxu0 0.0
    %2615 = vmatpush1.msra.mxu0 0.0
    %2616 = vmatprep.subr.mxu0 0.0
    %2617 = vmatpush1.msra.mxu0 0.0
    %2618 = vmatprep.mubr.f32.mxu0 0.0
    %2619 = vmatmul.mubr.f32.gmra.mrb[0].mxu0 %v2552
    %v2620 = vpop.f32.mrb[0].mxu0
    %v2621 = vadd.f32 0.0, %v2620
    %v2622 = vpop.f32.mrb[0].mxu0
    %2623 = vdwg.mxu0
    %2624 = vrot.lane.b32.xlu0 %v2284, 120
    %v2625 = vpop.permute.xlu0 %2624
    %2626 = vrot.lane.b32.xlu0 %v2284, 88
    %v2627 = vpop.permute.xlu0 %2626
    %v2628 = vsel %vm221, %v2625, 0
    %v2630 = vsel %vm221, %v2627, 0
    %2632 = vmatprep.subr.mxu0 0.0
    %2633 = vmatpush1.xpose.msra.mxu0 %v2630
    %2634 = vmatprep.subr.mxu0 0.0
    %2635 = vmatpush1.xpose.msra.mxu0 0.0
    %2636 = vmatprep.subr.mxu0 0.0
    %2637 = vmatpush1.xpose.msra.mxu0 0.0
    %2638 = vmatprep.subr.mxu0 0.0
    %2639 = vmatpush1.xpose.msra.mxu0 0.0
    %2640 = vmatprep.subr.mxu0 0.0
    %2641 = vmatpush1.xpose.msra.mxu0 0.0
    %2642 = vmatprep.subr.mxu0 0.0
    %2643 = vmatpush1.xpose.msra.mxu0 0.0
    %2644 = vmatprep.subr.mxu0 0.0
    %2645 = vmatpush1.xpose.msra.mxu0 0.0
    %2646 = vmatprep.subr.mxu0 0.0
    %2647 = vmatpush1.xpose.msra.mxu0 0.0
    %2648 = vmatprep.subr.mxu0 0.0
    %2649 = vmatpush1.xpose.msra.mxu0 0.0
    %2650 = vmatprep.subr.mxu0 0.0
    %2651 = vmatpush1.xpose.msra.mxu0 0.0
    %2652 = vmatprep.subr.mxu0 0.0
    %2653 = vmatpush1.xpose.msra.mxu0 0.0
    %2654 = vmatprep.subr.mxu0 0.0
    %2655 = vmatpush1.xpose.msra.mxu0 0.0
    %2656 = vmatprep.subr.mxu0 0.0
    %2657 = vmatpush1.xpose.msra.mxu0 0.0
    %2658 = vmatprep.subr.mxu0 0.0
    %2659 = vmatpush1.xpose.msra.mxu0 0.0
    %2660 = vmatprep.subr.mxu0 0.0
    %2661 = vmatpush1.xpose.msra.mxu0 0.0
    %2662 = vmatprep.subr.mxu0 0.0
    %2663 = vmatpush1.xpose.msra.mxu0 0.0
    %2664 = vmatprep.subr.mxu0 0.0
    %2665 = vmatpush1.xpose.msra.mxu0 0.0
    %2666 = vmatprep.subr.mxu0 0.0
    %2667 = vmatpush1.xpose.msra.mxu0 0.0
    %2668 = vmatprep.subr.mxu0 0.0
    %2669 = vmatpush1.xpose.msra.mxu0 0.0
    %2670 = vmatprep.subr.mxu0 0.0
    %2671 = vmatpush1.xpose.msra.mxu0 0.0
    %2672 = vmatprep.subr.mxu0 0.0
    %2673 = vmatpush1.xpose.msra.mxu0 0.0
    %2674 = vmatprep.subr.mxu0 0.0
    %2675 = vmatpush1.xpose.msra.mxu0 0.0
    %2676 = vmatprep.subr.mxu0 0.0
    %2677 = vmatpush1.xpose.msra.mxu0 0.0
    %2678 = vmatprep.subr.mxu0 0.0
    %2679 = vmatpush1.xpose.msra.mxu0 0.0
    %2680 = vmatprep.subr.mxu0 0.0
    %2681 = vmatpush1.xpose.msra.mxu0 0.0
    %2682 = vmatprep.subr.mxu0 0.0
    %2683 = vmatpush1.xpose.msra.mxu0 0.0
    %2684 = vmatprep.subr.mxu0 0.0
    %2685 = vmatpush1.xpose.msra.mxu0 0.0
    %2686 = vmatprep.subr.mxu0 0.0
    %2687 = vmatpush1.xpose.msra.mxu0 0.0
    %2688 = vmatprep.subr.mxu0 0.0
    %2689 = vmatpush1.xpose.msra.mxu0 0.0
    %2690 = vmatprep.subr.mxu0 0.0
    %2691 = vmatpush1.xpose.msra.mxu0 0.0
    %2692 = vmatprep.subr.mxu0 0.0
    %2693 = vmatpush1.xpose.msra.mxu0 0.0
    %2694 = vmatprep.subr.mxu0 0.0
    %2695 = vmatpush1.xpose.msra.mxu0 0.0
    %2696 = vmatprep.mubr.f32.mxu0 0.0
    %2697 = vmatmul.mubr.f32.gmra.mrb[0].mxu0 %v2628
    %v2698 = vpop.f32.mrb[0].mxu0
    %v2699 = vadd.f32 0.0, %v2698
    %v2700 = vpop.f32.mrb[0].mxu0
    %2701 = vdwg.mxu0
    %2702 = vrot.lane.b32.xlu0 %v2289, 120
    %v2703 = vpop.permute.xlu0 %2702
    %2704 = vrot.lane.b32.xlu0 %v2289, 88
    %v2705 = vpop.permute.xlu0 %2704
    %v2706 = vsel %vm221, %v2703, 0
    %v2708 = vsel %vm221, %v2705, 0
    %2710 = vmatprep.subr.mxu0 0.0
    %2711 = vmatpush1.xpose.msra.mxu0 %v2708
    %2712 = vmatprep.subr.mxu0 0.0
    %2713 = vmatpush1.xpose.msra.mxu0 0.0
    %2714 = vmatprep.subr.mxu0 0.0
    %2715 = vmatpush1.xpose.msra.mxu0 0.0
    %2716 = vmatprep.subr.mxu0 0.0
    %2717 = vmatpush1.xpose.msra.mxu0 0.0
    %2718 = vmatprep.subr.mxu0 0.0
    %2719 = vmatpush1.xpose.msra.mxu0 0.0
    %2720 = vmatprep.subr.mxu0 0.0
    %2721 = vmatpush1.xpose.msra.mxu0 0.0
    %2722 = vmatprep.subr.mxu0 0.0
    %2723 = vmatpush1.xpose.msra.mxu0 0.0
    %2724 = vmatprep.subr.mxu0 0.0
    %2725 = vmatpush1.xpose.msra.mxu0 0.0
    %2726 = vmatprep.subr.mxu0 0.0
    %2727 = vmatpush1.xpose.msra.mxu0 0.0
    %2728 = vmatprep.subr.mxu0 0.0
    %2729 = vmatpush1.xpose.msra.mxu0 0.0
    %2730 = vmatprep.subr.mxu0 0.0
    %2731 = vmatpush1.xpose.msra.mxu0 0.0
    %2732 = vmatprep.subr.mxu0 0.0
    %2733 = vmatpush1.xpose.msra.mxu0 0.0
    %2734 = vmatprep.subr.mxu0 0.0
    %2735 = vmatpush1.xpose.msra.mxu0 0.0
    %2736 = vmatprep.subr.mxu0 0.0
    %2737 = vmatpush1.xpose.msra.mxu0 0.0
    %2738 = vmatprep.subr.mxu0 0.0
    %2739 = vmatpush1.xpose.msra.mxu0 0.0
    %2740 = vmatprep.subr.mxu0 0.0
    %2741 = vmatpush1.xpose.msra.mxu0 0.0
    %2742 = vmatprep.subr.mxu0 0.0
    %2743 = vmatpush1.xpose.msra.mxu0 0.0
    %2744 = vmatprep.subr.mxu0 0.0
    %2745 = vmatpush1.xpose.msra.mxu0 0.0
    %2746 = vmatprep.subr.mxu0 0.0
    %2747 = vmatpush1.xpose.msra.mxu0 0.0
    %2748 = vmatprep.subr.mxu0 0.0
    %2749 = vmatpush1.xpose.msra.mxu0 0.0
    %2750 = vmatprep.subr.mxu0 0.0
    %2751 = vmatpush1.xpose.msra.mxu0 0.0
    %2752 = vmatprep.subr.mxu0 0.0
    %2753 = vmatpush1.xpose.msra.mxu0 0.0
    %2754 = vmatprep.subr.mxu0 0.0
    %2755 = vmatpush1.xpose.msra.mxu0 0.0
    %2756 = vmatprep.subr.mxu0 0.0
    %2757 = vmatpush1.xpose.msra.mxu0 0.0
    %2758 = vmatprep.subr.mxu0 0.0
    %2759 = vmatpush1.xpose.msra.mxu0 0.0
    %2760 = vmatprep.subr.mxu0 0.0
    %2761 = vmatpush1.xpose.msra.mxu0 0.0
    %2762 = vmatprep.subr.mxu0 0.0
    %2763 = vmatpush1.xpose.msra.mxu0 0.0
    %2764 = vmatprep.subr.mxu0 0.0
    %2765 = vmatpush1.xpose.msra.mxu0 0.0
    %2766 = vmatprep.subr.mxu0 0.0
    %2767 = vmatpush1.xpose.msra.mxu0 0.0
    %2768 = vmatprep.subr.mxu0 0.0
    %2769 = vmatpush1.xpose.msra.mxu0 0.0
    %2770 = vmatprep.subr.mxu0 0.0
    %2771 = vmatpush1.xpose.msra.mxu0 0.0
    %2772 = vmatprep.subr.mxu0 0.0
    %2773 = vmatpush1.xpose.msra.mxu0 0.0
    %2774 = vmatprep.mubr.f32.mxu0 0.0
    %2775 = vmatmul.mubr.f32.gmra.mrb[0].mxu0 %v2706
    %v2776 = vpop.f32.mrb[0].mxu0
    %v2777 = vadd.f32 0.0, %v2776
    %v2778 = vpop.f32.mrb[0].mxu0
    %2779 = vdwg.mxu0
    %v2780 = vmul.f32 %v2699, 0.35355338
    %v2781 = vmul.f32 %v2777, 0.35355338
    %v2782 = vadd.f32 %v2780, %v380
    %v2783 = vadd.f32 %v2781, %v384
    %v2784 = vsel %vm221, %v2782, -inf
    %2785 = vmax.xlane.f32.xlu0 %v2784
    %v2786 = vpop.xlane.xlu0 %2785
    %v2787 = vsel %vm221, %v2783, -inf
    %2788 = vmax.xlane.f32.xlu0 %v2787
    %v2789 = vpop.xlane.xlu0 %2788
    %v2790 = vsub.f32 %v2782, %v2786
    %v2791 = vsub.f32 %v2783, %v2789
    %v2792 = vmul.f32 %v2790, 1.442695
    %v2793 = vpow.pop %v2792
    %v2794 = vmul.f32 %v2791, 1.442695
    %v2795 = vpow.pop %v2794
    %v2796 = vsel %vm221, %v2793, 0.0
    %2797 = vadd.xlane.f32.xlu0 %v2796
    %v2798 = vpop.xlane.xlu0 %2797
    %v2799 = vsel %vm221, %v2795, 0.0
    %2800 = vadd.xlane.f32.xlu0 %v2799
    %v2801 = vpop.xlane.xlu0 %2800
    %v2802 = vrcp.pop %v2798
    %v2803 = vrcp.pop %v2801
    %v2804 = vmul.f32 %v2793, %v2802
    %v2805 = vmul.f32 %v2795, %v2803
    %2806 = vrot.lane.b32.xlu0 %v2284, 56
    %v2807 = vpop.permute.xlu0 %2806
    %v2810 = vsel %vm221, %v2804, 0
    %2812 = vmatprep.subr.mxu0 0.0
    %2813 = vmatpush1.msra.mxu0 %v2807
    %2814 = vmatprep.subr.mxu0 0.0
    %2815 = vmatpush1.msra.mxu0 0.0
    %2816 = vmatprep.subr.mxu0 0.0
    %2817 = vmatpush1.msra.mxu0 0.0
    %2818 = vmatprep.subr.mxu0 0.0
    %2819 = vmatpush1.msra.mxu0 0.0
    %2820 = vmatprep.subr.mxu0 0.0
    %2821 = vmatpush1.msra.mxu0 0.0
    %2822 = vmatprep.subr.mxu0 0.0
    %2823 = vmatpush1.msra.mxu0 0.0
    %2824 = vmatprep.subr.mxu0 0.0
    %2825 = vmatpush1.msra.mxu0 0.0
    %2826 = vmatprep.subr.mxu0 0.0
    %2827 = vmatpush1.msra.mxu0 0.0
    %2828 = vmatprep.subr.mxu0 0.0
    %2829 = vmatpush1.msra.mxu0 0.0
    %2830 = vmatprep.subr.mxu0 0.0
    %2831 = vmatpush1.msra.mxu0 0.0
    %2832 = vmatprep.subr.mxu0 0.0
    %2833 = vmatpush1.msra.mxu0 0.0
    %2834 = vmatprep.subr.mxu0 0.0
    %2835 = vmatpush1.msra.mxu0 0.0
    %2836 = vmatprep.subr.mxu0 0.0
    %2837 = vmatpush1.msra.mxu0 0.0
    %2838 = vmatprep.subr.mxu0 0.0
    %2839 = vmatpush1.msra.mxu0 0.0
    %2840 = vmatprep.subr.mxu0 0.0
    %2841 = vmatpush1.msra.mxu0 0.0
    %2842 = vmatprep.subr.mxu0 0.0
    %2843 = vmatpush1.msra.mxu0 0.0
    %2844 = vmatprep.subr.mxu0 0.0
    %2845 = vmatpush1.msra.mxu0 0.0
    %2846 = vmatprep.subr.mxu0 0.0
    %2847 = vmatpush1.msra.mxu0 0.0
    %2848 = vmatprep.subr.mxu0 0.0
    %2849 = vmatpush1.msra.mxu0 0.0
    %2850 = vmatprep.subr.mxu0 0.0
    %2851 = vmatpush1.msra.mxu0 0.0
    %2852 = vmatprep.subr.mxu0 0.0
    %2853 = vmatpush1.msra.mxu0 0.0
    %2854 = vmatprep.subr.mxu0 0.0
    %2855 = vmatpush1.msra.mxu0 0.0
    %2856 = vmatprep.subr.mxu0 0.0
    %2857 = vmatpush1.msra.mxu0 0.0
    %2858 = vmatprep.subr.mxu0 0.0
    %2859 = vmatpush1.msra.mxu0 0.0
    %2860 = vmatprep.subr.mxu0 0.0
    %2861 = vmatpush1.msra.mxu0 0.0
    %2862 = vmatprep.subr.mxu0 0.0
    %2863 = vmatpush1.msra.mxu0 0.0
    %2864 = vmatprep.subr.mxu0 0.0
    %2865 = vmatpush1.msra.mxu0 0.0
    %2866 = vmatprep.subr.mxu0 0.0
    %2867 = vmatpush1.msra.mxu0 0.0
    %2868 = vmatprep.subr.mxu0 0.0
    %2869 = vmatpush1.msra.mxu0 0.0
    %2870 = vmatprep.subr.mxu0 0.0
    %2871 = vmatpush1.msra.mxu0 0.0
    %2872 = vmatprep.subr.mxu0 0.0
    %2873 = vmatpush1.msra.mxu0 0.0
    %2874 = vmatprep.subr.mxu0 0.0
    %2875 = vmatpush1.msra.mxu0 0.0
    %2876 = vmatprep.mubr.f32.mxu0 0.0
    %2877 = vmatmul.mubr.f32.gmra.mrb[0].mxu0 %v2810
    %v2878 = vpop.f32.mrb[0].mxu0
    %v2879 = vadd.f32 0.0, %v2878
    %v2880 = vpop.f32.mrb[0].mxu0
    %2881 = vdwg.mxu0
    %2882 = vrot.lane.b32.xlu0 %v2289, 56
    %v2883 = vpop.permute.xlu0 %2882
    %v2886 = vsel %vm221, %v2805, 0
    %2888 = vmatprep.subr.mxu0 0.0
    %2889 = vmatpush1.msra.mxu0 %v2883
    %2890 = vmatprep.subr.mxu0 0.0
    %2891 = vmatpush1.msra.mxu0 0.0
    %2892 = vmatprep.subr.mxu0 0.0
    %2893 = vmatpush1.msra.mxu0 0.0
    %2894 = vmatprep.subr.mxu0 0.0
    %2895 = vmatpush1.msra.mxu0 0.0
    %2896 = vmatprep.subr.mxu0 0.0
    %2897 = vmatpush1.msra.mxu0 0.0
    %2898 = vmatprep.subr.mxu0 0.0
    %2899 = vmatpush1.msra.mxu0 0.0
    %2900 = vmatprep.subr.mxu0 0.0
    %2901 = vmatpush1.msra.mxu0 0.0
    %2902 = vmatprep.subr.mxu0 0.0
    %2903 = vmatpush1.msra.mxu0 0.0
    %2904 = vmatprep.subr.mxu0 0.0
    %2905 = vmatpush1.msra.mxu0 0.0
    %2906 = vmatprep.subr.mxu0 0.0
    %2907 = vmatpush1.msra.mxu0 0.0
    %2908 = vmatprep.subr.mxu0 0.0
    %2909 = vmatpush1.msra.mxu0 0.0
    %2910 = vmatprep.subr.mxu0 0.0
    %2911 = vmatpush1.msra.mxu0 0.0
    %2912 = vmatprep.subr.mxu0 0.0
    %2913 = vmatpush1.msra.mxu0 0.0
    %2914 = vmatprep.subr.mxu0 0.0
    %2915 = vmatpush1.msra.mxu0 0.0
    %2916 = vmatprep.subr.mxu0 0.0
    %2917 = vmatpush1.msra.mxu0 0.0
    %2918 = vmatprep.subr.mxu0 0.0
    %2919 = vmatpush1.msra.mxu0 0.0
    %2920 = vmatprep.subr.mxu0 0.0
    %2921 = vmatpush1.msra.mxu0 0.0
    %2922 = vmatprep.subr.mxu0 0.0
    %2923 = vmatpush1.msra.mxu0 0.0
    %2924 = vmatprep.subr.mxu0 0.0
    %2925 = vmatpush1.msra.mxu0 0.0
    %2926 = vmatprep.subr.mxu0 0.0
    %2927 = vmatpush1.msra.mxu0 0.0
    %2928 = vmatprep.subr.mxu0 0.0
    %2929 = vmatpush1.msra.mxu0 0.0
    %2930 = vmatprep.subr.mxu0 0.0
    %2931 = vmatpush1.msra.mxu0 0.0
    %2932 = vmatprep.subr.mxu0 0.0
    %2933 = vmatpush1.msra.mxu0 0.0
    %2934 = vmatprep.subr.mxu0 0.0
    %2935 = vmatpush1.msra.mxu0 0.0
    %2936 = vmatprep.subr.mxu0 0.0
    %2937 = vmatpush1.msra.mxu0 0.0
    %2938 = vmatprep.subr.mxu0 0.0
    %2939 = vmatpush1.msra.mxu0 0.0
    %2940 = vmatprep.subr.mxu0 0.0
    %2941 = vmatpush1.msra.mxu0 0.0
    %2942 = vmatprep.subr.mxu0 0.0
    %2943 = vmatpush1.msra.mxu0 0.0
    %2944 = vmatprep.subr.mxu0 0.0
    %2945 = vmatpush1.msra.mxu0 0.0
    %2946 = vmatprep.subr.mxu0 0.0
    %2947 = vmatpush1.msra.mxu0 0.0
    %2948 = vmatprep.subr.mxu0 0.0
    %2949 = vmatpush1.msra.mxu0 0.0
    %2950 = vmatprep.subr.mxu0 0.0
    %2951 = vmatpush1.msra.mxu0 0.0
    %2952 = vmatprep.mubr.f32.mxu0 0.0
    %2953 = vmatmul.mubr.f32.gmra.mrb[0].mxu0 %v2886
    %v2954 = vpop.f32.mrb[0].mxu0
    %v2955 = vadd.f32 0.0, %v2954
    %v2956 = vpop.f32.mrb[0].mxu0
    %2957 = vdwg.mxu0
    %v2959 = vsel %vm221, %v2879, 0
    %v2962 = vsel %vm221, %v2955, 0
    %2964 = vmatprep.subr.mxu0 0.0
    %2965 = vmatpush1.msra.mxu0 %v2200
    %2966 = vmatprep.subr.mxu0 0.0
    %2967 = vmatpush1.msra.mxu0 0.0
    %2968 = vmatprep.subr.mxu0 0.0
    %2969 = vmatpush1.msra.mxu0 0.0
    %2970 = vmatprep.subr.mxu0 0.0
    %2971 = vmatpush1.msra.mxu0 0.0
    %2972 = vmatprep.subr.mxu0 0.0
    %2973 = vmatpush1.msra.mxu0 0.0
    %2974 = vmatprep.subr.mxu0 0.0
    %2975 = vmatpush1.msra.mxu0 0.0
    %2976 = vmatprep.subr.mxu0 0.0
    %2977 = vmatpush1.msra.mxu0 0.0
    %2978 = vmatprep.subr.mxu0 0.0
    %2979 = vmatpush1.msra.mxu0 0.0
    %2980 = vmatprep.subr.mxu0 0.0
    %2981 = vmatpush1.msra.mxu0 0.0
    %2982 = vmatprep.subr.mxu0 0.0
    %2983 = vmatpush1.msra.mxu0 0.0
    %2984 = vmatprep.subr.mxu0 0.0
    %2985 = vmatpush1.msra.mxu0 0.0
    %2986 = vmatprep.subr.mxu0 0.0
    %2987 = vmatpush1.msra.mxu0 0.0
    %2988 = vmatprep.subr.mxu0 0.0
    %2989 = vmatpush1.msra.mxu0 0.0
    %2990 = vmatprep.subr.mxu0 0.0
    %2991 = vmatpush1.msra.mxu0 0.0
    %2992 = vmatprep.subr.mxu0 0.0
    %2993 = vmatpush1.msra.mxu0 0.0
    %2994 = vmatprep.subr.mxu0 0.0
    %2995 = vmatpush1.msra.mxu0 0.0
    %2996 = vmatprep.subr.mxu0 0.0
    %2997 = vmatpush1.msra.mxu0 0.0
    %2998 = vmatprep.subr.mxu0 0.0
    %2999 = vmatpush1.msra.mxu0 0.0
    %3000 = vmatprep.subr.mxu0 0.0
    %3001 = vmatpush1.msra.mxu0 0.0
    %3002 = vmatprep.subr.mxu0 0.0
    %3003 = vmatpush1.msra.mxu0 0.0
    %3004 = vmatprep.subr.mxu0 0.0
    %3005 = vmatpush1.msra.mxu0 0.0
    %3006 = vmatprep.subr.mxu0 0.0
    %3007 = vmatpush1.msra.mxu0 0.0
    %3008 = vmatprep.subr.mxu0 0.0
    %3009 = vmatpush1.msra.mxu0 0.0
    %3010 = vmatprep.subr.mxu0 0.0
    %3011 = vmatpush1.msra.mxu0 0.0
    %3012 = vmatprep.subr.mxu0 0.0
    %3013 = vmatpush1.msra.mxu0 0.0
    %3014 = vmatprep.subr.mxu0 0.0
    %3015 = vmatpush1.msra.mxu0 0.0
    %3016 = vmatprep.subr.mxu0 0.0
    %3017 = vmatpush1.msra.mxu0 0.0
    %3018 = vmatprep.subr.mxu0 0.0
    %3019 = vmatpush1.msra.mxu0 0.0
    %3020 = vmatprep.subr.mxu0 0.0
    %3021 = vmatpush1.msra.mxu0 0.0
    %3022 = vmatprep.subr.mxu0 0.0
    %3023 = vmatpush1.msra.mxu0 0.0
    %3024 = vmatprep.subr.mxu0 0.0
    %3025 = vmatpush1.msra.mxu0 0.0
    %3026 = vmatprep.subr.mxu0 0.0
    %3027 = vmatpush1.msra.mxu0 0.0
    %3028 = vmatprep.mubr.f32.mxu0 0.0
    %3029 = vmatmul.mubr.f32.gmra.mrb[0].mxu0 %v2959
    %v3030 = vpop.f32.mrb[0].mxu0
    %v3031 = vadd.f32 0.0, %v3030
    %v3032 = vpop.f32.mrb[0].mxu0
    %3033 = vmatprep.mubr.f32.mxu0 0.0
    %3034 = vmatmul.mubr.f32.gmra.mrb[0].mxu0 %v2962
    %v3035 = vpop.f32.mrb[0].mxu0
    %v3036 = vadd.f32 0.0, %v3035
    %v3037 = vpop.f32.mrb[0].mxu0
    %3038 = vdwg.mxu0
    %v3040 = vsel %vm221, %v2545, 0
    %v3043 = vsel %vm221, %v2621, 0
    %3045 = vmatprep.subr.mxu0 0.0
    %3046 = vmatpush1.msra.mxu0 %v2199
    %3047 = vmatprep.subr.mxu0 0.0
    %3048 = vmatpush1.msra.mxu0 0.0
    %3049 = vmatprep.subr.mxu0 0.0
    %3050 = vmatpush1.msra.mxu0 0.0
    %3051 = vmatprep.subr.mxu0 0.0
    %3052 = vmatpush1.msra.mxu0 0.0
    %3053 = vmatprep.subr.mxu0 0.0
    %3054 = vmatpush1.msra.mxu0 0.0
    %3055 = vmatprep.subr.mxu0 0.0
    %3056 = vmatpush1.msra.mxu0 0.0
    %3057 = vmatprep.subr.mxu0 0.0
    %3058 = vmatpush1.msra.mxu0 0.0
    %3059 = vmatprep.subr.mxu0 0.0
    %3060 = vmatpush1.msra.mxu0 0.0
    %3061 = vmatprep.subr.mxu0 0.0
    %3062 = vmatpush1.msra.mxu0 0.0
    %3063 = vmatprep.subr.mxu0 0.0
    %3064 = vmatpush1.msra.mxu0 0.0
    %3065 = vmatprep.subr.mxu0 0.0
    %3066 = vmatpush1.msra.mxu0 0.0
    %3067 = vmatprep.subr.mxu0 0.0
    %3068 = vmatpush1.msra.mxu0 0.0
    %3069 = vmatprep.subr.mxu0 0.0
    %3070 = vmatpush1.msra.mxu0 0.0
    %3071 = vmatprep.subr.mxu0 0.0
    %3072 = vmatpush1.msra.mxu0 0.0
    %3073 = vmatprep.subr.mxu0 0.0
    %3074 = vmatpush1.msra.mxu0 0.0
    %3075 = vmatprep.subr.mxu0 0.0
    %3076 = vmatpush1.msra.mxu0 0.0
    %3077 = vmatprep.subr.mxu0 0.0
    %3078 = vmatpush1.msra.mxu0 0.0
    %3079 = vmatprep.subr.mxu0 0.0
    %3080 = vmatpush1.msra.mxu0 0.0
    %3081 = vmatprep.subr.mxu0 0.0
    %3082 = vmatpush1.msra.mxu0 0.0
    %3083 = vmatprep.subr.mxu0 0.0
    %3084 = vmatpush1.msra.mxu0 0.0
    %3085 = vmatprep.subr.mxu0 0.0
    %3086 = vmatpush1.msra.mxu0 0.0
    %3087 = vmatprep.subr.mxu0 0.0
    %3088 = vmatpush1.msra.mxu0 0.0
    %3089 = vmatprep.subr.mxu0 0.0
    %3090 = vmatpush1.msra.mxu0 0.0
    %3091 = vmatprep.subr.mxu0 0.0
    %3092 = vmatpush1.msra.mxu0 0.0
    %3093 = vmatprep.subr.mxu0 0.0
    %3094 = vmatpush1.msra.mxu0 0.0
    %3095 = vmatprep.subr.mxu0 0.0
    %3096 = vmatpush1.msra.mxu0 0.0
    %3097 = vmatprep.subr.mxu0 0.0
    %3098 = vmatpush1.msra.mxu0 0.0
    %3099 = vmatprep.subr.mxu0 0.0
    %3100 = vmatpush1.msra.mxu0 0.0
    %3101 = vmatprep.subr.mxu0 0.0
    %3102 = vmatpush1.msra.mxu0 0.0
    %3103 = vmatprep.subr.mxu0 0.0
    %3104 = vmatpush1.msra.mxu0 0.0
    %3105 = vmatprep.subr.mxu0 0.0
    %3106 = vmatpush1.msra.mxu0 0.0
    %3107 = vmatprep.subr.mxu0 0.0
    %3108 = vmatpush1.msra.mxu0 0.0
    %3109 = vmatprep.mubr.f32.mxu0 0.0
    %3110 = vmatmul.mubr.f32.gmra.mrb[0].mxu0 %v3040
    %v3111 = vpop.f32.mrb[0].mxu0
    %v3112 = vadd.f32 %v3031, %v3111
    %v3113 = vpop.f32.mrb[0].mxu0
    %3114 = vmatprep.mubr.f32.mxu0 0.0
    %3115 = vmatmul.mubr.f32.gmra.mrb[0].mxu0 %v3043
    %v3116 = vpop.f32.mrb[0].mxu0
    %v3117 = vadd.f32 %v3036, %v3116
    %v3118 = vpop.f32.mrb[0].mxu0
    %3119 = vdwg.mxu0
    %3120 = vrot.lane.b32.xlu0 %v2284, 112
    %v3121 = vpop.permute.xlu0 %3120
    %3122 = vrot.lane.b32.xlu0 %v2284, 80
    %v3123 = vpop.permute.xlu0 %3122
    %v3124 = vsel %vm221, %v3121, 0
    %v3126 = vsel %vm221, %v3123, 0
    %3128 = vmatprep.subr.mxu0 0.0
    %3129 = vmatpush1.xpose.msra.mxu0 %v3126
    %3130 = vmatprep.subr.mxu0 0.0
    %3131 = vmatpush1.xpose.msra.mxu0 0.0
    %3132 = vmatprep.subr.mxu0 0.0
    %3133 = vmatpush1.xpose.msra.mxu0 0.0
    %3134 = vmatprep.subr.mxu0 0.0
    %3135 = vmatpush1.xpose.msra.mxu0 0.0
    %3136 = vmatprep.subr.mxu0 0.0
    %3137 = vmatpush1.xpose.msra.mxu0 0.0
    %3138 = vmatprep.subr.mxu0 0.0
    %3139 = vmatpush1.xpose.msra.mxu0 0.0
    %3140 = vmatprep.subr.mxu0 0.0
    %3141 = vmatpush1.xpose.msra.mxu0 0.0
    %3142 = vmatprep.subr.mxu0 0.0
    %3143 = vmatpush1.xpose.msra.mxu0 0.0
    %3144 = vmatprep.subr.mxu0 0.0
    %3145 = vmatpush1.xpose.msra.mxu0 0.0
    %3146 = vmatprep.subr.mxu0 0.0
    %3147 = vmatpush1.xpose.msra.mxu0 0.0
    %3148 = vmatprep.subr.mxu0 0.0
    %3149 = vmatpush1.xpose.msra.mxu0 0.0
    %3150 = vmatprep.subr.mxu0 0.0
    %3151 = vmatpush1.xpose.msra.mxu0 0.0
    %3152 = vmatprep.subr.mxu0 0.0
    %3153 = vmatpush1.xpose.msra.mxu0 0.0
    %3154 = vmatprep.subr.mxu0 0.0
    %3155 = vmatpush1.xpose.msra.mxu0 0.0
    %3156 = vmatprep.subr.mxu0 0.0
    %3157 = vmatpush1.xpose.msra.mxu0 0.0
    %3158 = vmatprep.subr.mxu0 0.0
    %3159 = vmatpush1.xpose.msra.mxu0 0.0
    %3160 = vmatprep.subr.mxu0 0.0
    %3161 = vmatpush1.xpose.msra.mxu0 0.0
    %3162 = vmatprep.subr.mxu0 0.0
    %3163 = vmatpush1.xpose.msra.mxu0 0.0
    %3164 = vmatprep.subr.mxu0 0.0
    %3165 = vmatpush1.xpose.msra.mxu0 0.0
    %3166 = vmatprep.subr.mxu0 0.0
    %3167 = vmatpush1.xpose.msra.mxu0 0.0
    %3168 = vmatprep.subr.mxu0 0.0
    %3169 = vmatpush1.xpose.msra.mxu0 0.0
    %3170 = vmatprep.subr.mxu0 0.0
    %3171 = vmatpush1.xpose.msra.mxu0 0.0
    %3172 = vmatprep.subr.mxu0 0.0
    %3173 = vmatpush1.xpose.msra.mxu0 0.0
    %3174 = vmatprep.subr.mxu0 0.0
    %3175 = vmatpush1.xpose.msra.mxu0 0.0
    %3176 = vmatprep.subr.mxu0 0.0
    %3177 = vmatpush1.xpose.msra.mxu0 0.0
    %3178 = vmatprep.subr.mxu0 0.0
    %3179 = vmatpush1.xpose.msra.mxu0 0.0
    %3180 = vmatprep.subr.mxu0 0.0
    %3181 = vmatpush1.xpose.msra.mxu0 0.0
    %3182 = vmatprep.subr.mxu0 0.0
    %3183 = vmatpush1.xpose.msra.mxu0 0.0
    %3184 = vmatprep.subr.mxu0 0.0
    %3185 = vmatpush1.xpose.msra.mxu0 0.0
    %3186 = vmatprep.subr.mxu0 0.0
    %3187 = vmatpush1.xpose.msra.mxu0 0.0
    %3188 = vmatprep.subr.mxu0 0.0
    %3189 = vmatpush1.xpose.msra.mxu0 0.0
    %3190 = vmatprep.subr.mxu0 0.0
    %3191 = vmatpush1.xpose.msra.mxu0 0.0
    %3192 = vmatprep.mubr.f32.mxu0 0.0
    %3193 = vmatmul.mubr.f32.gmra.mrb[0].mxu0 %v3124
    %v3194 = vpop.f32.mrb[0].mxu0
    %v3195 = vadd.f32 0.0, %v3194
    %v3196 = vpop.f32.mrb[0].mxu0
    %3197 = vdwg.mxu0
    %3198 = vrot.lane.b32.xlu0 %v2289, 112
    %v3199 = vpop.permute.xlu0 %3198
    %3200 = vrot.lane.b32.xlu0 %v2289, 80
    %v3201 = vpop.permute.xlu0 %3200
    %v3202 = vsel %vm221, %v3199, 0
    %v3204 = vsel %vm221, %v3201, 0
    %3206 = vmatprep.subr.mxu0 0.0
    %3207 = vmatpush1.xpose.msra.mxu0 %v3204
    %3208 = vmatprep.subr.mxu0 0.0
    %3209 = vmatpush1.xpose.msra.mxu0 0.0
    %3210 = vmatprep.subr.mxu0 0.0
    %3211 = vmatpush1.xpose.msra.mxu0 0.0
    %3212 = vmatprep.subr.mxu0 0.0
    %3213 = vmatpush1.xpose.msra.mxu0 0.0
    %3214 = vmatprep.subr.mxu0 0.0
    %3215 = vmatpush1.xpose.msra.mxu0 0.0
    %3216 = vmatprep.subr.mxu0 0.0
    %3217 = vmatpush1.xpose.msra.mxu0 0.0
    %3218 = vmatprep.subr.mxu0 0.0
    %3219 = vmatpush1.xpose.msra.mxu0 0.0
    %3220 = vmatprep.subr.mxu0 0.0
    %3221 = vmatpush1.xpose.msra.mxu0 0.0
    %3222 = vmatprep.subr.mxu0 0.0
    %3223 = vmatpush1.xpose.msra.mxu0 0.0
    %3224 = vmatprep.subr.mxu0 0.0
    %3225 = vmatpush1.xpose.msra.mxu0 0.0
    %3226 = vmatprep.subr.mxu0 0.0
    %3227 = vmatpush1.xpose.msra.mxu0 0.0
    %3228 = vmatprep.subr.mxu0 0.0
    %3229 = vmatpush1.xpose.msra.mxu0 0.0
    %3230 = vmatprep.subr.mxu0 0.0
    %3231 = vmatpush1.xpose.msra.mxu0 0.0
    %3232 = vmatprep.subr.mxu0 0.0
    %3233 = vmatpush1.xpose.msra.mxu0 0.0
    %3234 = vmatprep.subr.mxu0 0.0
    %3235 = vmatpush1.xpose.msra.mxu0 0.0
    %3236 = vmatprep.subr.mxu0 0.0
    %3237 = vmatpush1.xpose.msra.mxu0 0.0
    %3238 = vmatprep.subr.mxu0 0.0
    %3239 = vmatpush1.xpose.msra.mxu0 0.0
    %3240 = vmatprep.subr.mxu0 0.0
    %3241 = vmatpush1.xpose.msra.mxu0 0.0
    %3242 = vmatprep.subr.mxu0 0.0
    %3243 = vmatpush1.xpose.msra.mxu0 0.0
    %3244 = vmatprep.subr.mxu0 0.0
    %3245 = vmatpush1.xpose.msra.mxu0 0.0
    %3246 = vmatprep.subr.mxu0 0.0
    %3247 = vmatpush1.xpose.msra.mxu0 0.0
    %3248 = vmatprep.subr.mxu0 0.0
    %3249 = vmatpush1.xpose.msra.mxu0 0.0
    %3250 = vmatprep.subr.mxu0 0.0
    %3251 = vmatpush1.xpose.msra.mxu0 0.0
    %3252 = vmatprep.subr.mxu0 0.0
    %3253 = vmatpush1.xpose.msra.mxu0 0.0
    %3254 = vmatprep.subr.mxu0 0.0
    %3255 = vmatpush1.xpose.msra.mxu0 0.0
    %3256 = vmatprep.subr.mxu0 0.0
    %3257 = vmatpush1.xpose.msra.mxu0 0.0
    %3258 = vmatprep.subr.mxu0 0.0
    %3259 = vmatpush1.xpose.msra.mxu0 0.0
    %3260 = vmatprep.subr.mxu0 0.0
    %3261 = vmatpush1.xpose.msra.mxu0 0.0
    %3262 = vmatprep.subr.mxu0 0.0
    %3263 = vmatpush1.xpose.msra.mxu0 0.0
    %3264 = vmatprep.subr.mxu0 0.0
    %3265 = vmatpush1.xpose.msra.mxu0 0.0
    %3266 = vmatprep.subr.mxu0 0.0
    %3267 = vmatpush1.xpose.msra.mxu0 0.0
    %3268 = vmatprep.subr.mxu0 0.0
    %3269 = vmatpush1.xpose.msra.mxu0 0.0
    %3270 = vmatprep.mubr.f32.mxu0 0.0
    %3271 = vmatmul.mubr.f32.gmra.mrb[0].mxu0 %v3202
    %v3272 = vpop.f32.mrb[0].mxu0
    %v3273 = vadd.f32 0.0, %v3272
    %v3274 = vpop.f32.mrb[0].mxu0
    %3275 = vdwg.mxu0
    %v3276 = vmul.f32 %v3195, 0.35355338
    %v3277 = vmul.f32 %v3273, 0.35355338
    %v3278 = vadd.f32 %v3276, %v380
    %v3279 = vadd.f32 %v3277, %v384
    %v3280 = vsel %vm221, %v3278, -inf
    %3281 = vmax.xlane.f32.xlu0 %v3280
    %v3282 = vpop.xlane.xlu0 %3281
    %v3283 = vsel %vm221, %v3279, -inf
    %3284 = vmax.xlane.f32.xlu0 %v3283
    %v3285 = vpop.xlane.xlu0 %3284
    %v3286 = vsub.f32 %v3278, %v3282
    %v3287 = vsub.f32 %v3279, %v3285
    %v3288 = vmul.f32 %v3286, 1.442695
    %v3289 = vpow.pop %v3288
    %v3290 = vmul.f32 %v3287, 1.442695
    %v3291 = vpow.pop %v3290
    %v3292 = vsel %vm221, %v3289, 0.0
    %3293 = vadd.xlane.f32.xlu0 %v3292
    %v3294 = vpop.xlane.xlu0 %3293
    %v3295 = vsel %vm221, %v3291, 0.0
    %3296 = vadd.xlane.f32.xlu0 %v3295
    %v3297 = vpop.xlane.xlu0 %3296
    %v3298 = vrcp.pop %v3294
    %v3299 = vrcp.pop %v3297
    %v3300 = vmul.f32 %v3289, %v3298
    %v3301 = vmul.f32 %v3291, %v3299
    %3302 = vrot.lane.b32.xlu0 %v2284, 48
    %v3303 = vpop.permute.xlu0 %3302
    %v3306 = vsel %vm221, %v3300, 0
    %3308 = vmatprep.subr.mxu0 0.0
    %3309 = vmatpush1.msra.mxu0 %v3303
    %3310 = vmatprep.subr.mxu0 0.0
    %3311 = vmatpush1.msra.mxu0 0.0
    %3312 = vmatprep.subr.mxu0 0.0
    %3313 = vmatpush1.msra.mxu0 0.0
    %3314 = vmatprep.subr.mxu0 0.0
    %3315 = vmatpush1.msra.mxu0 0.0
    %3316 = vmatprep.subr.mxu0 0.0
    %3317 = vmatpush1.msra.mxu0 0.0
    %3318 = vmatprep.subr.mxu0 0.0
    %3319 = vmatpush1.msra.mxu0 0.0
    %3320 = vmatprep.subr.mxu0 0.0
    %3321 = vmatpush1.msra.mxu0 0.0
    %3322 = vmatprep.subr.mxu0 0.0
    %3323 = vmatpush1.msra.mxu0 0.0
    %3324 = vmatprep.subr.mxu0 0.0
    %3325 = vmatpush1.msra.mxu0 0.0
    %3326 = vmatprep.subr.mxu0 0.0
    %3327 = vmatpush1.msra.mxu0 0.0
    %3328 = vmatprep.subr.mxu0 0.0
    %3329 = vmatpush1.msra.mxu0 0.0
    %3330 = vmatprep.subr.mxu0 0.0
    %3331 = vmatpush1.msra.mxu0 0.0
    %3332 = vmatprep.subr.mxu0 0.0
    %3333 = vmatpush1.msra.mxu0 0.0
    %3334 = vmatprep.subr.mxu0 0.0
    %3335 = vmatpush1.msra.mxu0 0.0
    %3336 = vmatprep.subr.mxu0 0.0
    %3337 = vmatpush1.msra.mxu0 0.0
    %3338 = vmatprep.subr.mxu0 0.0
    %3339 = vmatpush1.msra.mxu0 0.0
    %3340 = vmatprep.subr.mxu0 0.0
    %3341 = vmatpush1.msra.mxu0 0.0
    %3342 = vmatprep.subr.mxu0 0.0
    %3343 = vmatpush1.msra.mxu0 0.0
    %3344 = vmatprep.subr.mxu0 0.0
    %3345 = vmatpush1.msra.mxu0 0.0
    %3346 = vmatprep.subr.mxu0 0.0
    %3347 = vmatpush1.msra.mxu0 0.0
    %3348 = vmatprep.subr.mxu0 0.0
    %3349 = vmatpush1.msra.mxu0 0.0
    %3350 = vmatprep.subr.mxu0 0.0
    %3351 = vmatpush1.msra.mxu0 0.0
    %3352 = vmatprep.subr.mxu0 0.0
    %3353 = vmatpush1.msra.mxu0 0.0
    %3354 = vmatprep.subr.mxu0 0.0
    %3355 = vmatpush1.msra.mxu0 0.0
    %3356 = vmatprep.subr.mxu0 0.0
    %3357 = vmatpush1.msra.mxu0 0.0
    %3358 = vmatprep.subr.mxu0 0.0
    %3359 = vmatpush1.msra.mxu0 0.0
    %3360 = vmatprep.subr.mxu0 0.0
    %3361 = vmatpush1.msra.mxu0 0.0
    %3362 = vmatprep.subr.mxu0 0.0
    %3363 = vmatpush1.msra.mxu0 0.0
    %3364 = vmatprep.subr.mxu0 0.0
    %3365 = vmatpush1.msra.mxu0 0.0
    %3366 = vmatprep.subr.mxu0 0.0
    %3367 = vmatpush1.msra.mxu0 0.0
    %3368 = vmatprep.subr.mxu0 0.0
    %3369 = vmatpush1.msra.mxu0 0.0
    %3370 = vmatprep.subr.mxu0 0.0
    %3371 = vmatpush1.msra.mxu0 0.0
    %3372 = vmatprep.mubr.f32.mxu0 0.0
    %3373 = vmatmul.mubr.f32.gmra.mrb[0].mxu0 %v3306
    %v3374 = vpop.f32.mrb[0].mxu0
    %v3375 = vadd.f32 0.0, %v3374
    %v3376 = vpop.f32.mrb[0].mxu0
    %3377 = vdwg.mxu0
    %3378 = vrot.lane.b32.xlu0 %v2289, 48
    %v3379 = vpop.permute.xlu0 %3378
    %v3382 = vsel %vm221, %v3301, 0
    %3384 = vmatprep.subr.mxu0 0.0
    %3385 = vmatpush1.msra.mxu0 %v3379
    %3386 = vmatprep.subr.mxu0 0.0
    %3387 = vmatpush1.msra.mxu0 0.0
    %3388 = vmatprep.subr.mxu0 0.0
    %3389 = vmatpush1.msra.mxu0 0.0
    %3390 = vmatprep.subr.mxu0 0.0
    %3391 = vmatpush1.msra.mxu0 0.0
    %3392 = vmatprep.subr.mxu0 0.0
    %3393 = vmatpush1.msra.mxu0 0.0
    %3394 = vmatprep.subr.mxu0 0.0
    %3395 = vmatpush1.msra.mxu0 0.0
    %3396 = vmatprep.subr.mxu0 0.0
    %3397 = vmatpush1.msra.mxu0 0.0
    %3398 = vmatprep.subr.mxu0 0.0
    %3399 = vmatpush1.msra.mxu0 0.0
    %3400 = vmatprep.subr.mxu0 0.0
    %3401 = vmatpush1.msra.mxu0 0.0
    %3402 = vmatprep.subr.mxu0 0.0
    %3403 = vmatpush1.msra.mxu0 0.0
    %3404 = vmatprep.subr.mxu0 0.0
    %3405 = vmatpush1.msra.mxu0 0.0
    %3406 = vmatprep.subr.mxu0 0.0
    %3407 = vmatpush1.msra.mxu0 0.0
    %3408 = vmatprep.subr.mxu0 0.0
    %3409 = vmatpush1.msra.mxu0 0.0
    %3410 = vmatprep.subr.mxu0 0.0
    %3411 = vmatpush1.msra.mxu0 0.0
    %3412 = vmatprep.subr.mxu0 0.0
    %3413 = vmatpush1.msra.mxu0 0.0
    %3414 = vmatprep.subr.mxu0 0.0
    %3415 = vmatpush1.msra.mxu0 0.0
    %3416 = vmatprep.subr.mxu0 0.0
    %3417 = vmatpush1.msra.mxu0 0.0
    %3418 = vmatprep.subr.mxu0 0.0
    %3419 = vmatpush1.msra.mxu0 0.0
    %3420 = vmatprep.subr.mxu0 0.0
    %3421 = vmatpush1.msra.mxu0 0.0
    %3422 = vmatprep.subr.mxu0 0.0
    %3423 = vmatpush1.msra.mxu0 0.0
    %3424 = vmatprep.subr.mxu0 0.0
    %3425 = vmatpush1.msra.mxu0 0.0
    %3426 = vmatprep.subr.mxu0 0.0
    %3427 = vmatpush1.msra.mxu0 0.0
    %3428 = vmatprep.subr.mxu0 0.0
    %3429 = vmatpush1.msra.mxu0 0.0
    %3430 = vmatprep.subr.mxu0 0.0
    %3431 = vmatpush1.msra.mxu0 0.0
    %3432 = vmatprep.subr.mxu0 0.0
    %3433 = vmatpush1.msra.mxu0 0.0
    %3434 = vmatprep.subr.mxu0 0.0
    %3435 = vmatpush1.msra.mxu0 0.0
    %3436 = vmatprep.subr.mxu0 0.0
    %3437 = vmatpush1.msra.mxu0 0.0
    %3438 = vmatprep.subr.mxu0 0.0
    %3439 = vmatpush1.msra.mxu0 0.0
    %3440 = vmatprep.subr.mxu0 0.0
    %3441 = vmatpush1.msra.mxu0 0.0
    %3442 = vmatprep.subr.mxu0 0.0
    %3443 = vmatpush1.msra.mxu0 0.0
    %3444 = vmatprep.subr.mxu0 0.0
    %3445 = vmatpush1.msra.mxu0 0.0
    %3446 = vmatprep.subr.mxu0 0.0
    %3447 = vmatpush1.msra.mxu0 0.0
    %3448 = vmatprep.mubr.f32.mxu0 0.0
    %3449 = vmatmul.mubr.f32.gmra.mrb[0].mxu0 %v3382
    %v3450 = vpop.f32.mrb[0].mxu0
    %v3451 = vadd.f32 0.0, %v3450
    %v3452 = vpop.f32.mrb[0].mxu0
    %3453 = vdwg.mxu0
    %v3455 = vsel %vm221, %v3375, 0
    %v3458 = vsel %vm221, %v3451, 0
    %3460 = vmatprep.subr.mxu0 0.0
    %3461 = vmatpush1.msra.mxu0 %v2201
    %3462 = vmatprep.subr.mxu0 0.0
    %3463 = vmatpush1.msra.mxu0 0.0
    %3464 = vmatprep.subr.mxu0 0.0
    %3465 = vmatpush1.msra.mxu0 0.0
    %3466 = vmatprep.subr.mxu0 0.0
    %3467 = vmatpush1.msra.mxu0 0.0
    %3468 = vmatprep.subr.mxu0 0.0
    %3469 = vmatpush1.msra.mxu0 0.0
    %3470 = vmatprep.subr.mxu0 0.0
    %3471 = vmatpush1.msra.mxu0 0.0
    %3472 = vmatprep.subr.mxu0 0.0
    %3473 = vmatpush1.msra.mxu0 0.0
    %3474 = vmatprep.subr.mxu0 0.0
    %3475 = vmatpush1.msra.mxu0 0.0
    %3476 = vmatprep.subr.mxu0 0.0
    %3477 = vmatpush1.msra.mxu0 0.0
    %3478 = vmatprep.subr.mxu0 0.0
    %3479 = vmatpush1.msra.mxu0 0.0
    %3480 = vmatprep.subr.mxu0 0.0
    %3481 = vmatpush1.msra.mxu0 0.0
    %3482 = vmatprep.subr.mxu0 0.0
    %3483 = vmatpush1.msra.mxu0 0.0
    %3484 = vmatprep.subr.mxu0 0.0
    %3485 = vmatpush1.msra.mxu0 0.0
    %3486 = vmatprep.subr.mxu0 0.0
    %3487 = vmatpush1.msra.mxu0 0.0
    %3488 = vmatprep.subr.mxu0 0.0
    %3489 = vmatpush1.msra.mxu0 0.0
    %3490 = vmatprep.subr.mxu0 0.0
    %3491 = vmatpush1.msra.mxu0 0.0
    %3492 = vmatprep.subr.mxu0 0.0
    %3493 = vmatpush1.msra.mxu0 0.0
    %3494 = vmatprep.subr.mxu0 0.0
    %3495 = vmatpush1.msra.mxu0 0.0
    %3496 = vmatprep.subr.mxu0 0.0
    %3497 = vmatpush1.msra.mxu0 0.0
    %3498 = vmatprep.subr.mxu0 0.0
    %3499 = vmatpush1.msra.mxu0 0.0
    %3500 = vmatprep.subr.mxu0 0.0
    %3501 = vmatpush1.msra.mxu0 0.0
    %3502 = vmatprep.subr.mxu0 0.0
    %3503 = vmatpush1.msra.mxu0 0.0
    %3504 = vmatprep.subr.mxu0 0.0
    %3505 = vmatpush1.msra.mxu0 0.0
    %3506 = vmatprep.subr.mxu0 0.0
    %3507 = vmatpush1.msra.mxu0 0.0
    %3508 = vmatprep.subr.mxu0 0.0
    %3509 = vmatpush1.msra.mxu0 0.0
    %3510 = vmatprep.subr.mxu0 0.0
    %3511 = vmatpush1.msra.mxu0 0.0
    %3512 = vmatprep.subr.mxu0 0.0
    %3513 = vmatpush1.msra.mxu0 0.0
    %3514 = vmatprep.subr.mxu0 0.0
    %3515 = vmatpush1.msra.mxu0 0.0
    %3516 = vmatprep.subr.mxu0 0.0
    %3517 = vmatpush1.msra.mxu0 0.0
    %3518 = vmatprep.subr.mxu0 0.0
    %3519 = vmatpush1.msra.mxu0 0.0
    %3520 = vmatprep.subr.mxu0 0.0
    %3521 = vmatpush1.msra.mxu0 0.0
    %3522 = vmatprep.subr.mxu0 0.0
    %3523 = vmatpush1.msra.mxu0 0.0
    %3524 = vmatprep.mubr.f32.mxu0 0.0
    %3525 = vmatmul.mubr.f32.gmra.mrb[0].mxu0 %v3455
    %v3526 = vpop.f32.mrb[0].mxu0
    %v3527 = vadd.f32 0.0, %v3526
    %v3528 = vpop.f32.mrb[0].mxu0
    %3529 = vmatprep.mubr.f32.mxu0 0.0
    %3530 = vmatmul.mubr.f32.gmra.mrb[0].mxu0 %v3458
    %v3531 = vpop.f32.mrb[0].mxu0
    %v3532 = vadd.f32 0.0, %v3531
    %v3533 = vpop.f32.mrb[0].mxu0
    %3534 = vdwg.mxu0
    %v3535 = vadd.f32 %v3112, %v3527
    %v3536 = vadd.f32 %v3117, %v3532
    %3537 = vrot.lane.b32.xlu0 %v2284, 104
    %v3538 = vpop.permute.xlu0 %3537
    %3539 = vrot.lane.b32.xlu0 %v2284, 72
    %v3540 = vpop.permute.xlu0 %3539
    %v3541 = vsel %vm221, %v3538, 0
    %v3543 = vsel %vm221, %v3540, 0
    %3545 = vmatprep.subr.mxu0 0.0
    %3546 = vmatpush1.xpose.msra.mxu0 %v3543
    %3547 = vmatprep.subr.mxu0 0.0
    %3548 = vmatpush1.xpose.msra.mxu0 0.0
    %3549 = vmatprep.subr.mxu0 0.0
    %3550 = vmatpush1.xpose.msra.mxu0 0.0
    %3551 = vmatprep.subr.mxu0 0.0
    %3552 = vmatpush1.xpose.msra.mxu0 0.0
    %3553 = vmatprep.subr.mxu0 0.0
    %3554 = vmatpush1.xpose.msra.mxu0 0.0
    %3555 = vmatprep.subr.mxu0 0.0
    %3556 = vmatpush1.xpose.msra.mxu0 0.0
    %3557 = vmatprep.subr.mxu0 0.0
    %3558 = vmatpush1.xpose.msra.mxu0 0.0
    %3559 = vmatprep.subr.mxu0 0.0
    %3560 = vmatpush1.xpose.msra.mxu0 0.0
    %3561 = vmatprep.subr.mxu0 0.0
    %3562 = vmatpush1.xpose.msra.mxu0 0.0
    %3563 = vmatprep.subr.mxu0 0.0
    %3564 = vmatpush1.xpose.msra.mxu0 0.0
    %3565 = vmatprep.subr.mxu0 0.0
    %3566 = vmatpush1.xpose.msra.mxu0 0.0
    %3567 = vmatprep.subr.mxu0 0.0
    %3568 = vmatpush1.xpose.msra.mxu0 0.0
    %3569 = vmatprep.subr.mxu0 0.0
    %3570 = vmatpush1.xpose.msra.mxu0 0.0
    %3571 = vmatprep.subr.mxu0 0.0
    %3572 = vmatpush1.xpose.msra.mxu0 0.0
    %3573 = vmatprep.subr.mxu0 0.0
    %3574 = vmatpush1.xpose.msra.mxu0 0.0
    %3575 = vmatprep.subr.mxu0 0.0
    %3576 = vmatpush1.xpose.msra.mxu0 0.0
    %3577 = vmatprep.subr.mxu0 0.0
    %3578 = vmatpush1.xpose.msra.mxu0 0.0
    %3579 = vmatprep.subr.mxu0 0.0
    %3580 = vmatpush1.xpose.msra.mxu0 0.0
    %3581 = vmatprep.subr.mxu0 0.0
    %3582 = vmatpush1.xpose.msra.mxu0 0.0
    %3583 = vmatprep.subr.mxu0 0.0
    %3584 = vmatpush1.xpose.msra.mxu0 0.0
    %3585 = vmatprep.subr.mxu0 0.0
    %3586 = vmatpush1.xpose.msra.mxu0 0.0
    %3587 = vmatprep.subr.mxu0 0.0
    %3588 = vmatpush1.xpose.msra.mxu0 0.0
    %3589 = vmatprep.subr.mxu0 0.0
    %3590 = vmatpush1.xpose.msra.mxu0 0.0
    %3591 = vmatprep.subr.mxu0 0.0
    %3592 = vmatpush1.xpose.msra.mxu0 0.0
    %3593 = vmatprep.subr.mxu0 0.0
    %3594 = vmatpush1.xpose.msra.mxu0 0.0
    %3595 = vmatprep.subr.mxu0 0.0
    %3596 = vmatpush1.xpose.msra.mxu0 0.0
    %3597 = vmatprep.subr.mxu0 0.0
    %3598 = vmatpush1.xpose.msra.mxu0 0.0
    %3599 = vmatprep.subr.mxu0 0.0
    %3600 = vmatpush1.xpose.msra.mxu0 0.0
    %3601 = vmatprep.subr.mxu0 0.0
    %3602 = vmatpush1.xpose.msra.mxu0 0.0
    %3603 = vmatprep.subr.mxu0 0.0
    %3604 = vmatpush1.xpose.msra.mxu0 0.0
    %3605 = vmatprep.subr.mxu0 0.0
    %3606 = vmatpush1.xpose.msra.mxu0 0.0
    %3607 = vmatprep.subr.mxu0 0.0
    %3608 = vmatpush1.xpose.msra.mxu0 0.0
    %3609 = vmatprep.mubr.f32.mxu0 0.0
    %3610 = vmatmul.mubr.f32.gmra.mrb[0].mxu0 %v3541
    %v3611 = vpop.f32.mrb[0].mxu0
    %v3612 = vadd.f32 0.0, %v3611
    %v3613 = vpop.f32.mrb[0].mxu0
    %3614 = vdwg.mxu0
    %3615 = vrot.lane.b32.xlu0 %v2289, 104
    %v3616 = vpop.permute.xlu0 %3615
    %3617 = vrot.lane.b32.xlu0 %v2289, 72
    %v3618 = vpop.permute.xlu0 %3617
    %v3619 = vsel %vm221, %v3616, 0
    %v3621 = vsel %vm221, %v3618, 0
    %3623 = vmatprep.subr.mxu0 0.0
    %3624 = vmatpush1.xpose.msra.mxu0 %v3621
    %3625 = vmatprep.subr.mxu0 0.0
    %3626 = vmatpush1.xpose.msra.mxu0 0.0
    %3627 = vmatprep.subr.mxu0 0.0
    %3628 = vmatpush1.xpose.msra.mxu0 0.0
    %3629 = vmatprep.subr.mxu0 0.0
    %3630 = vmatpush1.xpose.msra.mxu0 0.0
    %3631 = vmatprep.subr.mxu0 0.0
    %3632 = vmatpush1.xpose.msra.mxu0 0.0
    %3633 = vmatprep.subr.mxu0 0.0
    %3634 = vmatpush1.xpose.msra.mxu0 0.0
    %3635 = vmatprep.subr.mxu0 0.0
    %3636 = vmatpush1.xpose.msra.mxu0 0.0
    %3637 = vmatprep.subr.mxu0 0.0
    %3638 = vmatpush1.xpose.msra.mxu0 0.0
    %3639 = vmatprep.subr.mxu0 0.0
    %3640 = vmatpush1.xpose.msra.mxu0 0.0
    %3641 = vmatprep.subr.mxu0 0.0
    %3642 = vmatpush1.xpose.msra.mxu0 0.0
    %3643 = vmatprep.subr.mxu0 0.0
    %3644 = vmatpush1.xpose.msra.mxu0 0.0
    %3645 = vmatprep.subr.mxu0 0.0
    %3646 = vmatpush1.xpose.msra.mxu0 0.0
    %3647 = vmatprep.subr.mxu0 0.0
    %3648 = vmatpush1.xpose.msra.mxu0 0.0
    %3649 = vmatprep.subr.mxu0 0.0
    %3650 = vmatpush1.xpose.msra.mxu0 0.0
    %3651 = vmatprep.subr.mxu0 0.0
    %3652 = vmatpush1.xpose.msra.mxu0 0.0
    %3653 = vmatprep.subr.mxu0 0.0
    %3654 = vmatpush1.xpose.msra.mxu0 0.0
    %3655 = vmatprep.subr.mxu0 0.0
    %3656 = vmatpush1.xpose.msra.mxu0 0.0
    %3657 = vmatprep.subr.mxu0 0.0
    %3658 = vmatpush1.xpose.msra.mxu0 0.0
    %3659 = vmatprep.subr.mxu0 0.0
    %3660 = vmatpush1.xpose.msra.mxu0 0.0
    %3661 = vmatprep.subr.mxu0 0.0
    %3662 = vmatpush1.xpose.msra.mxu0 0.0
    %3663 = vmatprep.subr.mxu0 0.0
    %3664 = vmatpush1.xpose.msra.mxu0 0.0
    %3665 = vmatprep.subr.mxu0 0.0
    %3666 = vmatpush1.xpose.msra.mxu0 0.0
    %3667 = vmatprep.subr.mxu0 0.0
    %3668 = vmatpush1.xpose.msra.mxu0 0.0
    %3669 = vmatprep.subr.mxu0 0.0
    %3670 = vmatpush1.xpose.msra.mxu0 0.0
    %3671 = vmatprep.subr.mxu0 0.0
    %3672 = vmatpush1.xpose.msra.mxu0 0.0
    %3673 = vmatprep.subr.mxu0 0.0
    %3674 = vmatpush1.xpose.msra.mxu0 0.0
    %3675 = vmatprep.subr.mxu0 0.0
    %3676 = vmatpush1.xpose.msra.mxu0 0.0
    %3677 = vmatprep.subr.mxu0 0.0
    %3678 = vmatpush1.xpose.msra.mxu0 0.0
    %3679 = vmatprep.subr.mxu0 0.0
    %3680 = vmatpush1.xpose.msra.mxu0 0.0
    %3681 = vmatprep.subr.mxu0 0.0
    %3682 = vmatpush1.xpose.msra.mxu0 0.0
    %3683 = vmatprep.subr.mxu0 0.0
    %3684 = vmatpush1.xpose.msra.mxu0 0.0
    %3685 = vmatprep.subr.mxu0 0.0
    %3686 = vmatpush1.xpose.msra.mxu0 0.0
    %3687 = vmatprep.mubr.f32.mxu0 0.0
    %3688 = vmatmul.mubr.f32.gmra.mrb[0].mxu0 %v3619
    %v3689 = vpop.f32.mrb[0].mxu0
    %v3690 = vadd.f32 0.0, %v3689
    %v3691 = vpop.f32.mrb[0].mxu0
    %3692 = vdwg.mxu0
    %v3693 = vmul.f32 %v3612, 0.35355338
    %v3694 = vmul.f32 %v3690, 0.35355338
    %v3695 = vadd.f32 %v3693, %v380
    %v3696 = vadd.f32 %v3694, %v384
    %v3697 = vsel %vm221, %v3695, -inf
    %3698 = vmax.xlane.f32.xlu0 %v3697
    %v3699 = vpop.xlane.xlu0 %3698
    %v3700 = vsel %vm221, %v3696, -inf
    %3701 = vmax.xlane.f32.xlu0 %v3700
    %v3702 = vpop.xlane.xlu0 %3701
    %v3703 = vsub.f32 %v3695, %v3699
    %v3704 = vsub.f32 %v3696, %v3702
    %v3705 = vmul.f32 %v3703, 1.442695
    %v3706 = vpow.pop %v3705
    %v3707 = vmul.f32 %v3704, 1.442695
    %v3708 = vpow.pop %v3707
    %v3709 = vsel %vm221, %v3706, 0.0
    %3710 = vadd.xlane.f32.xlu0 %v3709
    %v3711 = vpop.xlane.xlu0 %3710
    %v3712 = vsel %vm221, %v3708, 0.0
    %3713 = vadd.xlane.f32.xlu0 %v3712
    %v3714 = vpop.xlane.xlu0 %3713
    %v3715 = vrcp.pop %v3711
    %v3716 = vrcp.pop %v3714
    %v3717 = vmul.f32 %v3706, %v3715
    %v3718 = vmul.f32 %v3708, %v3716
    %3719 = vrot.lane.b32.xlu0 %v2284, 40
    %v3720 = vpop.permute.xlu0 %3719
    %v3723 = vsel %vm221, %v3717, 0
    %3725 = vmatprep.subr.mxu0 0.0
    %3726 = vmatpush1.msra.mxu0 %v3720
    %3727 = vmatprep.subr.mxu0 0.0
    %3728 = vmatpush1.msra.mxu0 0.0
    %3729 = vmatprep.subr.mxu0 0.0
    %3730 = vmatpush1.msra.mxu0 0.0
    %3731 = vmatprep.subr.mxu0 0.0
    %3732 = vmatpush1.msra.mxu0 0.0
    %3733 = vmatprep.subr.mxu0 0.0
    %3734 = vmatpush1.msra.mxu0 0.0
    %3735 = vmatprep.subr.mxu0 0.0
    %3736 = vmatpush1.msra.mxu0 0.0
    %3737 = vmatprep.subr.mxu0 0.0
    %3738 = vmatpush1.msra.mxu0 0.0
    %3739 = vmatprep.subr.mxu0 0.0
    %3740 = vmatpush1.msra.mxu0 0.0
    %3741 = vmatprep.subr.mxu0 0.0
    %3742 = vmatpush1.msra.mxu0 0.0
    %3743 = vmatprep.subr.mxu0 0.0
    %3744 = vmatpush1.msra.mxu0 0.0
    %3745 = vmatprep.subr.mxu0 0.0
    %3746 = vmatpush1.msra.mxu0 0.0
    %3747 = vmatprep.subr.mxu0 0.0
    %3748 = vmatpush1.msra.mxu0 0.0
    %3749 = vmatprep.subr.mxu0 0.0
    %3750 = vmatpush1.msra.mxu0 0.0
    %3751 = vmatprep.subr.mxu0 0.0
    %3752 = vmatpush1.msra.mxu0 0.0
    %3753 = vmatprep.subr.mxu0 0.0
    %3754 = vmatpush1.msra.mxu0 0.0
    %3755 = vmatprep.subr.mxu0 0.0
    %3756 = vmatpush1.msra.mxu0 0.0
    %3757 = vmatprep.subr.mxu0 0.0
    %3758 = vmatpush1.msra.mxu0 0.0
    %3759 = vmatprep.subr.mxu0 0.0
    %3760 = vmatpush1.msra.mxu0 0.0
    %3761 = vmatprep.subr.mxu0 0.0
    %3762 = vmatpush1.msra.mxu0 0.0
    %3763 = vmatprep.subr.mxu0 0.0
    %3764 = vmatpush1.msra.mxu0 0.0
    %3765 = vmatprep.subr.mxu0 0.0
    %3766 = vmatpush1.msra.mxu0 0.0
    %3767 = vmatprep.subr.mxu0 0.0
    %3768 = vmatpush1.msra.mxu0 0.0
    %3769 = vmatprep.subr.mxu0 0.0
    %3770 = vmatpush1.msra.mxu0 0.0
    %3771 = vmatprep.subr.mxu0 0.0
    %3772 = vmatpush1.msra.mxu0 0.0
    %3773 = vmatprep.subr.mxu0 0.0
    %3774 = vmatpush1.msra.mxu0 0.0
    %3775 = vmatprep.subr.mxu0 0.0
    %3776 = vmatpush1.msra.mxu0 0.0
    %3777 = vmatprep.subr.mxu0 0.0
    %3778 = vmatpush1.msra.mxu0 0.0
    %3779 = vmatprep.subr.mxu0 0.0
    %3780 = vmatpush1.msra.mxu0 0.0
    %3781 = vmatprep.subr.mxu0 0.0
    %3782 = vmatpush1.msra.mxu0 0.0
    %3783 = vmatprep.subr.mxu0 0.0
    %3784 = vmatpush1.msra.mxu0 0.0
    %3785 = vmatprep.subr.mxu0 0.0
    %3786 = vmatpush1.msra.mxu0 0.0
    %3787 = vmatprep.subr.mxu0 0.0
    %3788 = vmatpush1.msra.mxu0 0.0
    %3789 = vmatprep.mubr.f32.mxu0 0.0
    %3790 = vmatmul.mubr.f32.gmra.mrb[0].mxu0 %v3723
    %v3791 = vpop.f32.mrb[0].mxu0
    %v3792 = vadd.f32 0.0, %v3791
    %v3793 = vpop.f32.mrb[0].mxu0
    %3794 = vdwg.mxu0
    %3795 = vrot.lane.b32.xlu0 %v2289, 40
    %v3796 = vpop.permute.xlu0 %3795
    %v3799 = vsel %vm221, %v3718, 0
    %3801 = vmatprep.subr.mxu0 0.0
    %3802 = vmatpush1.msra.mxu0 %v3796
    %3803 = vmatprep.subr.mxu0 0.0
    %3804 = vmatpush1.msra.mxu0 0.0
    %3805 = vmatprep.subr.mxu0 0.0
    %3806 = vmatpush1.msra.mxu0 0.0
    %3807 = vmatprep.subr.mxu0 0.0
    %3808 = vmatpush1.msra.mxu0 0.0
    %3809 = vmatprep.subr.mxu0 0.0
    %3810 = vmatpush1.msra.mxu0 0.0
    %3811 = vmatprep.subr.mxu0 0.0
    %3812 = vmatpush1.msra.mxu0 0.0
    %3813 = vmatprep.subr.mxu0 0.0
    %3814 = vmatpush1.msra.mxu0 0.0
    %3815 = vmatprep.subr.mxu0 0.0
    %3816 = vmatpush1.msra.mxu0 0.0
    %3817 = vmatprep.subr.mxu0 0.0
    %3818 = vmatpush1.msra.mxu0 0.0
    %3819 = vmatprep.subr.mxu0 0.0
    %3820 = vmatpush1.msra.mxu0 0.0
    %3821 = vmatprep.subr.mxu0 0.0
    %3822 = vmatpush1.msra.mxu0 0.0
    %3823 = vmatprep.subr.mxu0 0.0
    %3824 = vmatpush1.msra.mxu0 0.0
    %3825 = vmatprep.subr.mxu0 0.0
    %3826 = vmatpush1.msra.mxu0 0.0
    %3827 = vmatprep.subr.mxu0 0.0
    %3828 = vmatpush1.msra.mxu0 0.0
    %3829 = vmatprep.subr.mxu0 0.0
    %3830 = vmatpush1.msra.mxu0 0.0
    %3831 = vmatprep.subr.mxu0 0.0
    %3832 = vmatpush1.msra.mxu0 0.0
    %3833 = vmatprep.subr.mxu0 0.0
    %3834 = vmatpush1.msra.mxu0 0.0
    %3835 = vmatprep.subr.mxu0 0.0
    %3836 = vmatpush1.msra.mxu0 0.0
    %3837 = vmatprep.subr.mxu0 0.0
    %3838 = vmatpush1.msra.mxu0 0.0
    %3839 = vmatprep.subr.mxu0 0.0
    %3840 = vmatpush1.msra.mxu0 0.0
    %3841 = vmatprep.subr.mxu0 0.0
    %3842 = vmatpush1.msra.mxu0 0.0
    %3843 = vmatprep.subr.mxu0 0.0
    %3844 = vmatpush1.msra.mxu0 0.0
    %3845 = vmatprep.subr.mxu0 0.0
    %3846 = vmatpush1.msra.mxu0 0.0
    %3847 = vmatprep.subr.mxu0 0.0
    %3848 = vmatpush1.msra.mxu0 0.0
    %3849 = vmatprep.subr.mxu0 0.0
    %3850 = vmatpush1.msra.mxu0 0.0
    %3851 = vmatprep.subr.mxu0 0.0
    %3852 = vmatpush1.msra.mxu0 0.0
    %3853 = vmatprep.subr.mxu0 0.0
    %3854 = vmatpush1.msra.mxu0 0.0
    %3855 = vmatprep.subr.mxu0 0.0
    %3856 = vmatpush1.msra.mxu0 0.0
    %3857 = vmatprep.subr.mxu0 0.0
    %3858 = vmatpush1.msra.mxu0 0.0
    %3859 = vmatprep.subr.mxu0 0.0
    %3860 = vmatpush1.msra.mxu0 0.0
    %3861 = vmatprep.subr.mxu0 0.0
    %3862 = vmatpush1.msra.mxu0 0.0
    %3863 = vmatprep.subr.mxu0 0.0
    %3864 = vmatpush1.msra.mxu0 0.0
    %3865 = vmatprep.mubr.f32.mxu0 0.0
    %3866 = vmatmul.mubr.f32.gmra.mrb[0].mxu0 %v3799
    %v3867 = vpop.f32.mrb[0].mxu0
    %v3868 = vadd.f32 0.0, %v3867
    %v3869 = vpop.f32.mrb[0].mxu0
    %3870 = vdwg.mxu0
    %v3872 = vsel %vm221, %v3792, 0
    %v3875 = vsel %vm221, %v3868, 0
    %3877 = vmatprep.subr.mxu0 0.0
    %3878 = vmatpush1.msra.mxu0 %v2202
    %3879 = vmatprep.subr.mxu0 0.0
    %3880 = vmatpush1.msra.mxu0 0.0
    %3881 = vmatprep.subr.mxu0 0.0
    %3882 = vmatpush1.msra.mxu0 0.0
    %3883 = vmatprep.subr.mxu0 0.0
    %3884 = vmatpush1.msra.mxu0 0.0
    %3885 = vmatprep.subr.mxu0 0.0
    %3886 = vmatpush1.msra.mxu0 0.0
    %3887 = vmatprep.subr.mxu0 0.0
    %3888 = vmatpush1.msra.mxu0 0.0
    %3889 = vmatprep.subr.mxu0 0.0
    %3890 = vmatpush1.msra.mxu0 0.0
    %3891 = vmatprep.subr.mxu0 0.0
    %3892 = vmatpush1.msra.mxu0 0.0
    %3893 = vmatprep.subr.mxu0 0.0
    %3894 = vmatpush1.msra.mxu0 0.0
    %3895 = vmatprep.subr.mxu0 0.0
    %3896 = vmatpush1.msra.mxu0 0.0
    %3897 = vmatprep.subr.mxu0 0.0
    %3898 = vmatpush1.msra.mxu0 0.0
    %3899 = vmatprep.subr.mxu0 0.0
    %3900 = vmatpush1.msra.mxu0 0.0
    %3901 = vmatprep.subr.mxu0 0.0
    %3902 = vmatpush1.msra.mxu0 0.0
    %3903 = vmatprep.subr.mxu0 0.0
    %3904 = vmatpush1.msra.mxu0 0.0
    %3905 = vmatprep.subr.mxu0 0.0
    %3906 = vmatpush1.msra.mxu0 0.0
    %3907 = vmatprep.subr.mxu0 0.0
    %3908 = vmatpush1.msra.mxu0 0.0
    %3909 = vmatprep.subr.mxu0 0.0
    %3910 = vmatpush1.msra.mxu0 0.0
    %3911 = vmatprep.subr.mxu0 0.0
    %3912 = vmatpush1.msra.mxu0 0.0
    %3913 = vmatprep.subr.mxu0 0.0
    %3914 = vmatpush1.msra.mxu0 0.0
    %3915 = vmatprep.subr.mxu0 0.0
    %3916 = vmatpush1.msra.mxu0 0.0
    %3917 = vmatprep.subr.mxu0 0.0
    %3918 = vmatpush1.msra.mxu0 0.0
    %3919 = vmatprep.subr.mxu0 0.0
    %3920 = vmatpush1.msra.mxu0 0.0
    %3921 = vmatprep.subr.mxu0 0.0
    %3922 = vmatpush1.msra.mxu0 0.0
    %3923 = vmatprep.subr.mxu0 0.0
    %3924 = vmatpush1.msra.mxu0 0.0
    %3925 = vmatprep.subr.mxu0 0.0
    %3926 = vmatpush1.msra.mxu0 0.0
    %3927 = vmatprep.subr.mxu0 0.0
    %3928 = vmatpush1.msra.mxu0 0.0
    %3929 = vmatprep.subr.mxu0 0.0
    %3930 = vmatpush1.msra.mxu0 0.0
    %3931 = vmatprep.subr.mxu0 0.0
    %3932 = vmatpush1.msra.mxu0 0.0
    %3933 = vmatprep.subr.mxu0 0.0
    %3934 = vmatpush1.msra.mxu0 0.0
    %3935 = vmatprep.subr.mxu0 0.0
    %3936 = vmatpush1.msra.mxu0 0.0
    %3937 = vmatprep.subr.mxu0 0.0
    %3938 = vmatpush1.msra.mxu0 0.0
    %3939 = vmatprep.subr.mxu0 0.0
    %3940 = vmatpush1.msra.mxu0 0.0
    %3941 = vmatprep.mubr.f32.mxu0 0.0
    %3942 = vmatmul.mubr.f32.gmra.mrb[0].mxu0 %v3872
    %v3943 = vpop.f32.mrb[0].mxu0
    %v3944 = vadd.f32 0.0, %v3943
    %v3945 = vpop.f32.mrb[0].mxu0
    %3946 = vmatprep.mubr.f32.mxu0 0.0
    %3947 = vmatmul.mubr.f32.gmra.mrb[0].mxu0 %v3875
    %v3948 = vpop.f32.mrb[0].mxu0
    %v3949 = vadd.f32 0.0, %v3948
    %v3950 = vpop.f32.mrb[0].mxu0
    %3951 = vdwg.mxu0
    %v3952 = vadd.f32 %v3535, %v3944
    %v3953 = vadd.f32 %v3536, %v3949
    %s3954 = scalar_lea.vmem %s7, 1
    %v3955 = vld [vmem:[%s3954] sm:$0x1]
    %v3957 = vlaneseq
    %v3958 = vshrl.u32 %v3957, 7
    %v3959 = vsub.s32 0, %v3958
    %v3960 = vrot.slane %v3955, %v3959
    %v3962 = vadd.f32 %v3952, %v3960
    %v3963 = vadd.f32 %v3953, %v3960
    %v3964 = vadd.f32 %v3962, %v2191
    %v3965 = vadd.f32 %v3963, %v2192
    %s3966 = scalar_lea.vmem %s8, 1
    %v3967 = vld [vmem:[%s3966] sm:$0x1]
    %s3968 = scalar_lea.vmem %s9, 1
    %v3969 = vld [vmem:[%s3968] sm:$0x1]
    %v3970 = vsel %vm78, %v3964, 0.0
    %3971 = vadd.xlane.f32.xlu0 %v3970
    %v3972 = vpop.xlane.xlu0 %3971
    %v3973 = vsel %vm78, %v3965, 0.0
    %3974 = vadd.xlane.f32.xlu0 %v3973
    %v3975 = vpop.xlane.xlu0 %3974
    %v3976 = vmul.f32 %v3972, %v85
    %v3977 = vmul.f32 %v3975, %v85
    %v3978 = vsub.f32 %v3964, %v3976
    %v3979 = vsub.f32 %v3965, %v3977
    %v3980 = vmul.f32 %v3978, %v3978
    %v3981 = vmul.f32 %v3979, %v3979
    %v3982 = vsel %vm78, %v3980, 0.0
    %3983 = vadd.xlane.f32.xlu0 %v3982
    %v3984 = vpop.xlane.xlu0 %3983
    %v3985 = vsel %vm78, %v3981, 0.0
    %3986 = vadd.xlane.f32.xlu0 %v3985
    %v3987 = vpop.xlane.xlu0 %3986
    %v3988 = vmul.f32 %v3984, %v85
    %v3989 = vmul.f32 %v3987, %v85
    %v3990 = vadd.f32 %v3988, 1e-12
    %v3991 = vadd.f32 %v3989, 1e-12
    %v3992 = vrsqrt.pop %v3990
    %v3993 = vrsqrt.pop %v3991
    %v3994 = vmul.f32 %v3978, %v3992
    %v3995 = vmul.f32 %v3979, %v3993
    %v3997 = vlaneseq
    %v3998 = vshrl.u32 %v3997, 7
    %v3999 = vsub.s32 0, %v3998
    %v4000 = vrot.slane %v3967, %v3999
    %v4002 = vmul.f32 %v3994, %v4000
    %v4003 = vmul.f32 %v3995, %v4000
    %v4005 = vlaneseq
    %v4006 = vshrl.u32 %v4005, 7
    %v4007 = vsub.s32 0, %v4006
    %v4008 = vrot.slane %v3969, %v4007
    %v4010 = vadd.f32 %v4002, %v4008
    %v4011 = vadd.f32 %v4003, %v4008
    %s4012 = scalar_lea.vmem %s10, 32
    %v4013 = vld [vmem:[%s4012] sm:$0xff]
    %v4014 = vld [vmem:[%s4012 + $0x8] sm:$0xff]
    %v4015 = vld [vmem:[%s4012 + $0x10] sm:$0xff]
    %v4016 = vld [vmem:[%s4012 + $0x18] sm:$0xff]
    %s4017 = scalar_lea.vmem %s11, 1
    %v4018 = vld [vmem:[%s4017] sm:$0x1]
    %v4020 = vlaneseq
    %v4021 = vshrl.u32 %v4020, 7
    %v4022 = vsub.s32 0, %v4021
    %v4023 = vrot.slane %v4018, %v4022
    %v4026 = vsel %vm78, %v4010, 0
    %v4029 = vsel %vm78, %v4011, 0
    %4031 = vmatprep.subr.mxu0 0.0
    %4032 = vmatpush1.msra.mxu0 %v4013
    %4033 = vmatprep.subr.mxu0 0.0
    %4034 = vmatpush1.msra.mxu0 %v4014
    %4035 = vmatprep.subr.mxu0 0.0
    %4036 = vmatpush1.msra.mxu0 %v4015
    %4037 = vmatprep.subr.mxu0 0.0
    %4038 = vmatpush1.msra.mxu0 %v4016
    %4039 = vmatprep.subr.mxu0 0.0
    %4040 = vmatpush1.msra.mxu0 0.0
    %4041 = vmatprep.subr.mxu0 0.0
    %4042 = vmatpush1.msra.mxu0 0.0
    %4043 = vmatprep.subr.mxu0 0.0
    %4044 = vmatpush1.msra.mxu0 0.0
    %4045 = vmatprep.subr.mxu0 0.0
    %4046 = vmatpush1.msra.mxu0 0.0
    %4047 = vmatprep.subr.mxu0 0.0
    %4048 = vmatpush1.msra.mxu0 0.0
    %4049 = vmatprep.subr.mxu0 0.0
    %4050 = vmatpush1.msra.mxu0 0.0
    %4051 = vmatprep.subr.mxu0 0.0
    %4052 = vmatpush1.msra.mxu0 0.0
    %4053 = vmatprep.subr.mxu0 0.0
    %4054 = vmatpush1.msra.mxu0 0.0
    %4055 = vmatprep.subr.mxu0 0.0
    %4056 = vmatpush1.msra.mxu0 0.0
    %4057 = vmatprep.subr.mxu0 0.0
    %4058 = vmatpush1.msra.mxu0 0.0
    %4059 = vmatprep.subr.mxu0 0.0
    %4060 = vmatpush1.msra.mxu0 0.0
    %4061 = vmatprep.subr.mxu0 0.0
    %4062 = vmatpush1.msra.mxu0 0.0
    %4063 = vmatprep.subr.mxu0 0.0
    %4064 = vmatpush1.msra.mxu0 0.0
    %4065 = vmatprep.subr.mxu0 0.0
    %4066 = vmatpush1.msra.mxu0 0.0
    %4067 = vmatprep.subr.mxu0 0.0
    %4068 = vmatpush1.msra.mxu0 0.0
    %4069 = vmatprep.subr.mxu0 0.0
    %4070 = vmatpush1.msra.mxu0 0.0
    %4071 = vmatprep.subr.mxu0 0.0
    %4072 = vmatpush1.msra.mxu0 0.0
    %4073 = vmatprep.subr.mxu0 0.0
    %4074 = vmatpush1.msra.mxu0 0.0
    %4075 = vmatprep.subr.mxu0 0.0
    %4076 = vmatpush1.msra.mxu0 0.0
    %4077 = vmatprep.subr.mxu0 0.0
    %4078 = vmatpush1.msra.mxu0 0.0
    %4079 = vmatprep.subr.mxu0 0.0
    %4080 = vmatpush1.msra.mxu0 0.0
    %4081 = vmatprep.subr.mxu0 0.0
    %4082 = vmatpush1.msra.mxu0 0.0
    %4083 = vmatprep.subr.mxu0 0.0
    %4084 = vmatpush1.msra.mxu0 0.0
    %4085 = vmatprep.subr.mxu0 0.0
    %4086 = vmatpush1.msra.mxu0 0.0
    %4087 = vmatprep.subr.mxu0 0.0
    %4088 = vmatpush1.msra.mxu0 0.0
    %4089 = vmatprep.subr.mxu0 0.0
    %4090 = vmatpush1.msra.mxu0 0.0
    %4091 = vmatprep.subr.mxu0 0.0
    %4092 = vmatpush1.msra.mxu0 0.0
    %4093 = vmatprep.subr.mxu0 0.0
    %4094 = vmatpush1.msra.mxu0 0.0
    %4095 = vmatprep.mubr.f32.mxu0 0.0
    %4096 = vmatmul.mubr.f32.gmra.mrb[0].mxu0 %v4026
    %v4097 = vpop.f32.mrb[0].mxu0
    %v4098 = vadd.f32 %v4023, %v4097
    %v4099 = vpop.f32.mrb[0].mxu0
    %4100 = vmatprep.mubr.f32.mxu0 0.0
    %4101 = vmatmul.mubr.f32.gmra.mrb[0].mxu0 %v4029
    %v4102 = vpop.f32.mrb[0].mxu0
    %v4103 = vadd.f32 %v4023, %v4102
    %v4104 = vpop.f32.mrb[0].mxu0
    %4105 = vdwg.mxu0
    %v4106 = vmul.f32 %v4098, 0.5
    %v4107 = vmul.f32 %v4103, 0.5
    %v4108 = vmul.f32 %v4098, 0.70710677
    %v4109 = vmul.f32 %v4103, 0.70710677
    %v4110 = verf.f32.pop %v4108
    %v4111 = verf.f32.pop %v4109
    %v4112 = vadd.f32 %v4110, 1.0
    %v4113 = vadd.f32 %v4111, 1.0
    %v4114 = vmul.f32 %v4106, %v4112
    %v4115 = vmul.f32 %v4107, %v4113
    %s4116 = scalar_lea.vmem %s12, 64
    %v4117 = vld [vmem:[%s4116] sm:$0xff]
    %v4118 = vld [vmem:[%s4116 + $0x8] sm:$0xff]
    %v4119 = vld [vmem:[%s4116 + $0x10] sm:$0xff]
    %v4120 = vld [vmem:[%s4116 + $0x18] sm:$0xff]
    %v4121 = vld [vmem:[%s4116 + $0x20] sm:$0xff]
    %v4122 = vld [vmem:[%s4116 + $0x28] sm:$0xff]
    %v4123 = vld [vmem:[%s4116 + $0x30] sm:$0xff]
    %v4124 = vld [vmem:[%s4116 + $0x38] sm:$0xff]
    %s4125 = scalar_lea.vmem %s13, 1
    %v4126 = vld [vmem:[%s4125] sm:$0x1]
    %v4128 = vlaneseq
    %v4129 = vshrl.u32 %v4128, 7
    %v4130 = vsub.s32 0, %v4129
    %v4131 = vrot.slane %v4126, %v4130
    %v4134 = vsel %vm2065, %v4114, 0
    %v4137 = vsel %vm2065, %v4115, 0
    %4139 = vmatprep.subr.mxu0 0.0
    %4140 = vmatpush1.msra.mxu0 %v4117
    %4141 = vmatprep.subr.mxu0 0.0
    %4142 = vmatpush1.msra.mxu0 %v4118
    %4143 = vmatprep.subr.mxu0 0.0
    %4144 = vmatpush1.msra.mxu0 %v4119
    %4145 = vmatprep.subr.mxu0 0.0
    %4146 = vmatpush1.msra.mxu0 %v4120
    %4147 = vmatprep.subr.mxu0 0.0
    %4148 = vmatpush1.msra.mxu0 %v4121
    %4149 = vmatprep.subr.mxu0 0.0
    %4150 = vmatpush1.msra.mxu0 %v4122
    %4151 = vmatprep.subr.mxu0 0.0
    %4152 = vmatpush1.msra.mxu0 %v4123
    %4153 = vmatprep.subr.mxu0 0.0
    %4154 = vmatpush1.msra.mxu0 %v4124
    %4155 = vmatprep.subr.mxu0 0.0
    %4156 = vmatpush1.msra.mxu0 0.0
    %4157 = vmatprep.subr.mxu0 0.0
    %4158 = vmatpush1.msra.mxu0 0.0
    %4159 = vmatprep.subr.mxu0 0.0
    %4160 = vmatpush1.msra.mxu0 0.0
    %4161 = vmatprep.subr.mxu0 0.0
    %4162 = vmatpush1.msra.mxu0 0.0
    %4163 = vmatprep.subr.mxu0 0.0
    %4164 = vmatpush1.msra.mxu0 0.0
    %4165 = vmatprep.subr.mxu0 0.0
    %4166 = vmatpush1.msra.mxu0 0.0
    %4167 = vmatprep.subr.mxu0 0.0
    %4168 = vmatpush1.msra.mxu0 0.0
    %4169 = vmatprep.subr.mxu0 0.0
    %4170 = vmatpush1.msra.mxu0 0.0
    %4171 = vmatprep.subr.mxu0 0.0
    %4172 = vmatpush1.msra.mxu0 0.0
    %4173 = vmatprep.subr.mxu0 0.0
    %4174 = vmatpush1.msra.mxu0 0.0
    %4175 = vmatprep.subr.mxu0 0.0
    %4176 = vmatpush1.msra.mxu0 0.0
    %4177 = vmatprep.subr.mxu0 0.0
    %4178 = vmatpush1.msra.mxu0 0.0
    %4179 = vmatprep.subr.mxu0 0.0
    %4180 = vmatpush1.msra.mxu0 0.0
    %4181 = vmatprep.subr.mxu0 0.0
    %4182 = vmatpush1.msra.mxu0 0.0
    %4183 = vmatprep.subr.mxu0 0.0
    %4184 = vmatpush1.msra.mxu0 0.0
    %4185 = vmatprep.subr.mxu0 0.0
    %4186 = vmatpush1.msra.mxu0 0.0
    %4187 = vmatprep.subr.mxu0 0.0
    %4188 = vmatpush1.msra.mxu0 0.0
    %4189 = vmatprep.subr.mxu0 0.0
    %4190 = vmatpush1.msra.mxu0 0.0
    %4191 = vmatprep.subr.mxu0 0.0
    %4192 = vmatpush1.msra.mxu0 0.0
    %4193 = vmatprep.subr.mxu0 0.0
    %4194 = vmatpush1.msra.mxu0 0.0
    %4195 = vmatprep.subr.mxu0 0.0
    %4196 = vmatpush1.msra.mxu0 0.0
    %4197 = vmatprep.subr.mxu0 0.0
    %4198 = vmatpush1.msra.mxu0 0.0
    %4199 = vmatprep.subr.mxu0 0.0
    %4200 = vmatpush1.msra.mxu0 0.0
    %4201 = vmatprep.subr.mxu0 0.0
    %4202 = vmatpush1.msra.mxu0 0.0
    %4203 = vmatprep.mubr.f32.mxu0 0.0
    %4204 = vmatmul.mubr.f32.gmra.mrb[0].mxu0 %v4134
    %v4205 = vpop.f32.mrb[0].mxu0
    %v4206 = vadd.f32 %v4131, %v4205
    %v4207 = vpop.f32.mrb[0].mxu0
    %4208 = vmatprep.mubr.f32.mxu0 0.0
    %4209 = vmatmul.mubr.f32.gmra.mrb[0].mxu0 %v4137
    %v4210 = vpop.f32.mrb[0].mxu0
    %v4211 = vadd.f32 %v4131, %v4210
    %v4212 = vpop.f32.mrb[0].mxu0
    %4213 = vdwg.mxu0
    %v4214 = vadd.f32 %v4206, %v4010
    %v4215 = vadd.f32 %v4211, %v4011
    %s4216 = scalar_lea.vmem %s14, 1
    %v4217 = vld [vmem:[%s4216] sm:$0x1]
    %s4218 = scalar_lea.vmem %s15, 1
    %v4219 = vld [vmem:[%s4218] sm:$0x1]
    %v4220 = vsel %vm78, %v4214, 0.0
    %4221 = vadd.xlane.f32.xlu0 %v4220
    %v4222 = vpop.xlane.xlu0 %4221
    %v4223 = vsel %vm78, %v4215, 0.0
    %4224 = vadd.xlane.f32.xlu0 %v4223
    %v4225 = vpop.xlane.xlu0 %4224
    %v4226 = vmul.f32 %v4222, %v85
    %v4227 = vmul.f32 %v4225, %v85
    %v4228 = vsub.f32 %v4214, %v4226
    %v4229 = vsub.f32 %v4215, %v4227
    %v4230 = vmul.f32 %v4228, %v4228
    %v4231 = vmul.f32 %v4229, %v4229
    %v4232 = vsel %vm78, %v4230, 0.0
    %4233 = vadd.xlane.f32.xlu0 %v4232
    %v4234 = vpop.xlane.xlu0 %4233
    %v4235 = vsel %vm78, %v4231, 0.0
    %4236 = vadd.xlane.f32.xlu0 %v4235
    %v4237 = vpop.xlane.xlu0 %4236
    %v4238 = vmul.f32 %v4234, %v85
    %v4239 = vmul.f32 %v4237, %v85
    %v4240 = vadd.f32 %v4238, 1e-12
    %v4241 = vadd.f32 %v4239, 1e-12
    %v4242 = vrsqrt.pop %v4240
    %v4243 = vrsqrt.pop %v4241
    %v4244 = vmul.f32 %v4228, %v4242
    %v4245 = vmul.f32 %v4229, %v4243
    %v4247 = vlaneseq
    %v4248 = vshrl.u32 %v4247, 7
    %v4249 = vsub.s32 0, %v4248
    %v4250 = vrot.slane %v4217, %v4249
    %v4252 = vmul.f32 %v4244, %v4250
    %v4253 = vmul.f32 %v4245, %v4250
    %v4255 = vlaneseq
    %v4256 = vshrl.u32 %v4255, 7
    %v4257 = vsub.s32 0, %v4256
    %v4258 = vrot.slane %v4219, %v4257
    %v4260 = vadd.f32 %v4252, %v4258
    %v4261 = vadd.f32 %v4253, %v4258
    %v4262 = vld [vmem:[%s16] sm:$0xff]
    %v4263 = vld [vmem:[%s16 + $0x8] sm:$0xff]
    %v4264 = vld [vmem:[%s16 + $0x10] sm:$0xff]
    %v4265 = vld [vmem:[%s16 + $0x18] sm:$0xff]
    %v4266 = vld [vmem:[%s16 + $0x20] sm:$0xff]
    %v4267 = vld [vmem:[%s16 + $0x28] sm:$0xff]
    %v4268 = vld [vmem:[%s16 + $0x30] sm:$0xff]
    %v4269 = vld [vmem:[%s16 + $0x38] sm:$0xff]
    %v4270 = vld [vmem:[%s16 + $0x40] sm:$0xff]
    %v4271 = vld [vmem:[%s16 + $0x48] sm:$0xff]
    %v4272 = vld [vmem:[%s16 + $0x50] sm:$0xff]
    %v4273 = vld [vmem:[%s16 + $0x58] sm:$0xff]
    %v4274 = vld [vmem:[%s16 + $0x60] sm:$0xff]
    %v4275 = vld [vmem:[%s16 + $0x68] sm:$0xff]
    %v4276 = vld [vmem:[%s16 + $0x70] sm:$0xff]
    %v4277 = vld [vmem:[%s16 + $0x78] sm:$0xff]
    %v4278 = vld [vmem:[%s16 + $0x80] sm:$0xff]
    %v4279 = vld [vmem:[%s16 + $0x88] sm:$0xff]
    %v4280 = vld [vmem:[%s16 + $0x90] sm:$0xff]
    %v4281 = vld [vmem:[%s16 + $0x98] sm:$0xff]
    %v4282 = vld [vmem:[%s16 + $0xa0] sm:$0xff]
    %v4283 = vld [vmem:[%s16 + $0xa8] sm:$0xff]
    %v4284 = vld [vmem:[%s16 + $0xb0] sm:$0xff]
    %v4285 = vld [vmem:[%s16 + $0xb8] sm:$0xff]
    %v4286 = vld [vmem:[%s16 + $0xc0] sm:$0xff]
    %v4287 = vld [vmem:[%s16 + $0xc8] sm:$0xff]
    %v4288 = vld [vmem:[%s16 + $0xd0] sm:$0xff]
    %v4289 = vld [vmem:[%s16 + $0xd8] sm:$0xff]
    %v4290 = vld [vmem:[%s16 + $0xe0] sm:$0xff]
    %v4291 = vld [vmem:[%s16 + $0xe8] sm:$0xff]
    %v4292 = vld [vmem:[%s16 + $0xf0] sm:$0xff]
    %v4293 = vld [vmem:[%s16 + $0xf8] sm:$0xff]
    %v4294 = vld [vmem:[%s16 + $0x100] sm:$0xff]
    %v4295 = vld [vmem:[%s16 + $0x108] sm:$0xff]
    %v4296 = vld [vmem:[%s16 + $0x110] sm:$0xff]
    %v4297 = vld [vmem:[%s16 + $0x118] sm:$0xff]
    %v4298 = vld [vmem:[%s16 + $0x120] sm:$0xff]
    %v4299 = vld [vmem:[%s16 + $0x128] sm:$0xff]
    %v4300 = vld [vmem:[%s16 + $0x130] sm:$0xff]
    %v4301 = vld [vmem:[%s16 + $0x138] sm:$0xff]
    %v4302 = vld [vmem:[%s16 + $0x140] sm:$0xff]
    %v4303 = vld [vmem:[%s16 + $0x148] sm:$0xff]
    %v4304 = vld [vmem:[%s16 + $0x150] sm:$0xff]
    %v4305 = vld [vmem:[%s16 + $0x158] sm:$0xff]
    %v4306 = vld [vmem:[%s16 + $0x160] sm:$0xff]
    %v4307 = vld [vmem:[%s16 + $0x168] sm:$0xff]
    %v4308 = vld [vmem:[%s16 + $0x170] sm:$0xff]
    %v4309 = vld [vmem:[%s16 + $0x178] sm:$0xff]
    %v4310 = vld [vmem:[%s17] sm:$0xff]
    %v4311 = vld [vmem:[%s17 + $0x8] sm:$0xff]
    %v4312 = vld [vmem:[%s17 + $0x10] sm:$0xff]
    %v4313 = vld [vmem:[%s17 + $0x18] sm:$0xff]
    %v4314 = vld [vmem:[%s17 + $0x20] sm:$0xff]
    %v4315 = vld [vmem:[%s17 + $0x28] sm:$0xff]
    %v4316 = vld [vmem:[%s17 + $0x30] sm:$0xff]
    %v4317 = vld [vmem:[%s17 + $0x38] sm:$0xff]
    %v4318 = vld [vmem:[%s17 + $0x40] sm:$0xff]
    %v4319 = vld [vmem:[%s17 + $0x48] sm:$0xff]
    %v4320 = vld [vmem:[%s17 + $0x50] sm:$0xff]
    %v4321 = vld [vmem:[%s17 + $0x58] sm:$0xff]
    %v4322 = vld [vmem:[%s17 + $0x60] sm:$0xff]
    %v4323 = vld [vmem:[%s17 + $0x68] sm:$0xff]
    %v4324 = vld [vmem:[%s17 + $0x70] sm:$0xff]
    %v4325 = vld [vmem:[%s17 + $0x78] sm:$0xff]
    %v4326 = vld [vmem:[%s17 + $0x80] sm:$0xff]
    %v4327 = vld [vmem:[%s17 + $0x88] sm:$0xff]
    %v4328 = vld [vmem:[%s17 + $0x90] sm:$0xff]
    %v4329 = vld [vmem:[%s17 + $0x98] sm:$0xff]
    %v4330 = vld [vmem:[%s17 + $0xa0] sm:$0xff]
    %v4331 = vld [vmem:[%s17 + $0xa8] sm:$0xff]
    %v4332 = vld [vmem:[%s17 + $0xb0] sm:$0xff]
    %v4333 = vld [vmem:[%s17 + $0xb8] sm:$0xff]
    %v4334 = vld [vmem:[%s17 + $0xc0] sm:$0xff]
    %v4335 = vld [vmem:[%s17 + $0xc8] sm:$0xff]
    %v4336 = vld [vmem:[%s17 + $0xd0] sm:$0xff]
    %v4337 = vld [vmem:[%s17 + $0xd8] sm:$0xff]
    %v4338 = vld [vmem:[%s17 + $0xe0] sm:$0xff]
    %v4339 = vld [vmem:[%s17 + $0xe8] sm:$0xff]
    %v4340 = vld [vmem:[%s17 + $0xf0] sm:$0xff]
    %v4341 = vld [vmem:[%s17 + $0xf8] sm:$0xff]
    %v4342 = vld [vmem:[%s17 + $0x100] sm:$0xff]
    %v4343 = vld [vmem:[%s17 + $0x108] sm:$0xff]
    %v4344 = vld [vmem:[%s17 + $0x110] sm:$0xff]
    %v4345 = vld [vmem:[%s17 + $0x118] sm:$0xff]
    %v4346 = vld [vmem:[%s17 + $0x120] sm:$0xff]
    %v4347 = vld [vmem:[%s17 + $0x128] sm:$0xff]
    %v4348 = vld [vmem:[%s17 + $0x130] sm:$0xff]
    %v4349 = vld [vmem:[%s17 + $0x138] sm:$0xff]
    %v4350 = vld [vmem:[%s17 + $0x140] sm:$0xff]
    %v4351 = vld [vmem:[%s17 + $0x148] sm:$0xff]
    %v4352 = vld [vmem:[%s17 + $0x150] sm:$0xff]
    %v4353 = vld [vmem:[%s17 + $0x158] sm:$0xff]
    %v4354 = vld [vmem:[%s17 + $0x160] sm:$0xff]
    %v4355 = vld [vmem:[%s17 + $0x168] sm:$0xff]
    %v4356 = vld [vmem:[%s17 + $0x170] sm:$0xff]
    %v4357 = vld [vmem:[%s17 + $0x178] sm:$0xff]
    %v4358 = vld [vmem:[%s17 + $0x180] sm:$0xff]
    %v4359 = vld [vmem:[%s17 + $0x188] sm:$0xff]
    %v4360 = vld [vmem:[%s17 + $0x190] sm:$0xff]
    %v4361 = vld [vmem:[%s17 + $0x198] sm:$0xff]
    %v4362 = vld [vmem:[%s17 + $0x1a0] sm:$0xff]
    %v4363 = vld [vmem:[%s17 + $0x1a8] sm:$0xff]
    %v4364 = vld [vmem:[%s17 + $0x1b0] sm:$0xff]
    %v4365 = vld [vmem:[%s17 + $0x1b8] sm:$0xff]
    %v4366 = vld [vmem:[%s17 + $0x1c0] sm:$0xff]
    %v4367 = vld [vmem:[%s17 + $0x1c8] sm:$0xff]
    %v4368 = vld [vmem:[%s17 + $0x1d0] sm:$0xff]
    %v4369 = vld [vmem:[%s17 + $0x1d8] sm:$0xff]
    %v4370 = vld [vmem:[%s17 + $0x1e0] sm:$0xff]
    %v4371 = vld [vmem:[%s17 + $0x1e8] sm:$0xff]
    %v4372 = vld [vmem:[%s17 + $0x1f0] sm:$0xff]
    %v4373 = vld [vmem:[%s17 + $0x1f8] sm:$0xff]
    %v4375 = vsel %vm78, %v4260, 0
    %v4378 = vsel %vm78, %v4261, 0
    %4380 = vmatprep.subr.mxu0 %v4263
    %4381 = vmatpush1.msra.mxu0 %v4262
    %4382 = vmatprep.subr.mxu0 %v4275
    %4383 = vmatpush1.msra.mxu0 %v4274
    %4384 = vmatprep.subr.mxu0 %v4287
    %4385 = vmatpush1.msra.mxu0 %v4286
    %4386 = vmatprep.subr.mxu0 %v4299
    %4387 = vmatpush1.msra.mxu0 %v4298
    %4388 = vmatprep.subr.mxu0 0.0
    %4389 = vmatpush1.msra.mxu0 0.0
    %4390 = vmatprep.subr.mxu0 0.0
    %4391 = vmatpush1.msra.mxu0 0.0
    %4392 = vmatprep.subr.mxu0 0.0
    %4393 = vmatpush1.msra.mxu0 0.0
    %4394 = vmatprep.subr.mxu0 0.0
    %4395 = vmatpush1.msra.mxu0 0.0
    %4396 = vmatprep.subr.mxu0 0.0
    %4397 = vmatpush1.msra.mxu0 0.0
    %4398 = vmatprep.subr.mxu0 0.0
    %4399 = vmatpush1.msra.mxu0 0.0
    %4400 = vmatprep.subr.mxu0 0.0
    %4401 = vmatpush1.msra.mxu0 0.0
    %4402 = vmatprep.subr.mxu0 0.0
    %4403 = vmatpush1.msra.mxu0 0.0
    %4404 = vmatprep.subr.mxu0 0.0
    %4405 = vmatpush1.msra.mxu0 0.0
    %4406 = vmatprep.subr.mxu0 0.0
    %4407 = vmatpush1.msra.mxu0 0.0
    %4408 = vmatprep.subr.mxu0 0.0
    %4409 = vmatpush1.msra.mxu0 0.0
    %4410 = vmatprep.subr.mxu0 0.0
    %4411 = vmatpush1.msra.mxu0 0.0
    %4412 = vmatprep.subr.mxu0 0.0
    %4413 = vmatpush1.msra.mxu0 0.0
    %4414 = vmatprep.subr.mxu0 0.0
    %4415 = vmatpush1.msra.mxu0 0.0
    %4416 = vmatprep.subr.mxu0 0.0
    %4417 = vmatpush1.msra.mxu0 0.0
    %4418 = vmatprep.subr.mxu0 0.0
    %4419 = vmatpush1.msra.mxu0 0.0
    %4420 = vmatprep.subr.mxu0 0.0
    %4421 = vmatpush1.msra.mxu0 0.0
    %4422 = vmatprep.subr.mxu0 0.0
    %4423 = vmatpush1.msra.mxu0 0.0
    %4424 = vmatprep.subr.mxu0 0.0
    %4425 = vmatpush1.msra.mxu0 0.0
    %4426 = vmatprep.subr.mxu0 0.0
    %4427 = vmatpush1.msra.mxu0 0.0
    %4428 = vmatprep.subr.mxu0 0.0
    %4429 = vmatpush1.msra.mxu0 0.0
    %4430 = vmatprep.subr.mxu0 0.0
    %4431 = vmatpush1.msra.mxu0 0.0
    %4432 = vmatprep.subr.mxu0 0.0
    %4433 = vmatpush1.msra.mxu0 0.0
    %4434 = vmatprep.subr.mxu0 0.0
    %4435 = vmatpush1.msra.mxu0 0.0
    %4436 = vmatprep.subr.mxu0 0.0
    %4437 = vmatpush1.msra.mxu0 0.0
    %4438 = vmatprep.subr.mxu0 0.0
    %4439 = vmatpush1.msra.mxu0 0.0
    %4440 = vmatprep.subr.mxu0 0.0
    %4441 = vmatpush1.msra.mxu0 0.0
    %4442 = vmatprep.subr.mxu0 0.0
    %4443 = vmatpush1.msra.mxu0 0.0
    %4444 = vmatprep.mubr.f32.mxu0 0.0
    %4445 = vmatmul.mubr.f32.gmra.mrb[0].mxu0 %v4375
    %v4446 = vpop.f32.mrb[0].mxu0
    %v4447 = vadd.f32 0.0, %v4446
    %v4448 = vpop.f32.mrb[0].mxu0
    %v4449 = vadd.f32 0.0, %v4448
    %4450 = vmatprep.mubr.f32.mxu0 0.0
    %4451 = vmatmul.mubr.f32.gmra.mrb[0].mxu0 %v4378
    %v4452 = vpop.f32.mrb[0].mxu0
    %v4453 = vadd.f32 0.0, %v4452
    %v4454 = vpop.f32.mrb[0].mxu0
    %v4455 = vadd.f32 0.0, %v4454
    %4456 = vdwg.mxu0
    %4457 = vmatprep.subr.mxu0 %v4265
    %4458 = vmatpush1.msra.mxu0 %v4264
    %4459 = vmatprep.subr.mxu0 %v4277
    %4460 = vmatpush1.msra.mxu0 %v4276
    %4461 = vmatprep.subr.mxu0 %v4289
    %4462 = vmatpush1.msra.mxu0 %v4288
    %4463 = vmatprep.subr.mxu0 %v4301
    %4464 = vmatpush1.msra.mxu0 %v4300
    %4465 = vmatprep.subr.mxu0 0.0
    %4466 = vmatpush1.msra.mxu0 0.0
    %4467 = vmatprep.subr.mxu0 0.0
    %4468 = vmatpush1.msra.mxu0 0.0
    %4469 = vmatprep.subr.mxu0 0.0
    %4470 = vmatpush1.msra.mxu0 0.0
    %4471 = vmatprep.subr.mxu0 0.0
    %4472 = vmatpush1.msra.mxu0 0.0
    %4473 = vmatprep.subr.mxu0 0.0
    %4474 = vmatpush1.msra.mxu0 0.0
    %4475 = vmatprep.subr.mxu0 0.0
    %4476 = vmatpush1.msra.mxu0 0.0
    %4477 = vmatprep.subr.mxu0 0.0
    %4478 = vmatpush1.msra.mxu0 0.0
    %4479 = vmatprep.subr.mxu0 0.0
    %4480 = vmatpush1.msra.mxu0 0.0
    %4481 = vmatprep.subr.mxu0 0.0
    %4482 = vmatpush1.msra.mxu0 0.0
    %4483 = vmatprep.subr.mxu0 0.0
    %4484 = vmatpush1.msra.mxu0 0.0
    %4485 = vmatprep.subr.mxu0 0.0
    %4486 = vmatpush1.msra.mxu0 0.0
    %4487 = vmatprep.subr.mxu0 0.0
    %4488 = vmatpush1.msra.mxu0 0.0
    %4489 = vmatprep.subr.mxu0 0.0
    %4490 = vmatpush1.msra.mxu0 0.0
    %4491 = vmatprep.subr.mxu0 0.0
    %4492 = vmatpush1.msra.mxu0 0.0
    %4493 = vmatprep.subr.mxu0 0.0
    %4494 = vmatpush1.msra.mxu0 0.0
    %4495 = vmatprep.subr.mxu0 0.0
    %4496 = vmatpush1.msra.mxu0 0.0
    %4497 = vmatprep.subr.mxu0 0.0
    %4498 = vmatpush1.msra.mxu0 0.0
    %4499 = vmatprep.subr.mxu0 0.0
    %4500 = vmatpush1.msra.mxu0 0.0
    %4501 = vmatprep.subr.mxu0 0.0
    %4502 = vmatpush1.msra.mxu0 0.0
    %4503 = vmatprep.subr.mxu0 0.0
    %4504 = vmatpush1.msra.mxu0 0.0
    %4505 = vmatprep.subr.mxu0 0.0
    %4506 = vmatpush1.msra.mxu0 0.0
    %4507 = vmatprep.subr.mxu0 0.0
    %4508 = vmatpush1.msra.mxu0 0.0
    %4509 = vmatprep.subr.mxu0 0.0
    %4510 = vmatpush1.msra.mxu0 0.0
    %4511 = vmatprep.subr.mxu0 0.0
    %4512 = vmatpush1.msra.mxu0 0.0
    %4513 = vmatprep.subr.mxu0 0.0
    %4514 = vmatpush1.msra.mxu0 0.0
    %4515 = vmatprep.subr.mxu0 0.0
    %4516 = vmatpush1.msra.mxu0 0.0
    %4517 = vmatprep.subr.mxu0 0.0
    %4518 = vmatpush1.msra.mxu0 0.0
    %4519 = vmatprep.subr.mxu0 0.0
    %4520 = vmatpush1.msra.mxu0 0.0
    %4521 = vmatprep.mubr.f32.mxu0 0.0
    %4522 = vmatmul.mubr.f32.gmra.mrb[0].mxu0 %v4375
    %v4523 = vpop.f32.mrb[0].mxu0
    %v4524 = vadd.f32 0.0, %v4523
    %v4525 = vpop.f32.mrb[0].mxu0
    %v4526 = vadd.f32 0.0, %v4525
    %4527 = vmatprep.mubr.f32.mxu0 0.0
    %4528 = vmatmul.mubr.f32.gmra.mrb[0].mxu0 %v4378
    %v4529 = vpop.f32.mrb[0].mxu0
    %v4530 = vadd.f32 0.0, %v4529
    %v4531 = vpop.f32.mrb[0].mxu0
    %v4532 = vadd.f32 0.0, %v4531
    %4533 = vdwg.mxu0
    %4534 = vmatprep.subr.mxu0 %v4267
    %4535 = vmatpush1.msra.mxu0 %v4266
    %4536 = vmatprep.subr.mxu0 %v4279
    %4537 = vmatpush1.msra.mxu0 %v4278
    %4538 = vmatprep.subr.mxu0 %v4291
    %4539 = vmatpush1.msra.mxu0 %v4290
    %4540 = vmatprep.subr.mxu0 %v4303
    %4541 = vmatpush1.msra.mxu0 %v4302
    %4542 = vmatprep.subr.mxu0 0.0
    %4543 = vmatpush1.msra.mxu0 0.0
    %4544 = vmatprep.subr.mxu0 0.0
    %4545 = vmatpush1.msra.mxu0 0.0
    %4546 = vmatprep.subr.mxu0 0.0
    %4547 = vmatpush1.msra.mxu0 0.0
    %4548 = vmatprep.subr.mxu0 0.0
    %4549 = vmatpush1.msra.mxu0 0.0
    %4550 = vmatprep.subr.mxu0 0.0
    %4551 = vmatpush1.msra.mxu0 0.0
    %4552 = vmatprep.subr.mxu0 0.0
    %4553 = vmatpush1.msra.mxu0 0.0
    %4554 = vmatprep.subr.mxu0 0.0
    %4555 = vmatpush1.msra.mxu0 0.0
    %4556 = vmatprep.subr.mxu0 0.0
    %4557 = vmatpush1.msra.mxu0 0.0
    %4558 = vmatprep.subr.mxu0 0.0
    %4559 = vmatpush1.msra.mxu0 0.0
    %4560 = vmatprep.subr.mxu0 0.0
    %4561 = vmatpush1.msra.mxu0 0.0
    %4562 = vmatprep.subr.mxu0 0.0
    %4563 = vmatpush1.msra.mxu0 0.0
    %4564 = vmatprep.subr.mxu0 0.0
    %4565 = vmatpush1.msra.mxu0 0.0
    %4566 = vmatprep.subr.mxu0 0.0
    %4567 = vmatpush1.msra.mxu0 0.0
    %4568 = vmatprep.subr.mxu0 0.0
    %4569 = vmatpush1.msra.mxu0 0.0
    %4570 = vmatprep.subr.mxu0 0.0
    %4571 = vmatpush1.msra.mxu0 0.0
    %4572 = vmatprep.subr.mxu0 0.0
    %4573 = vmatpush1.msra.mxu0 0.0
    %4574 = vmatprep.subr.mxu0 0.0
    %4575 = vmatpush1.msra.mxu0 0.0
    %4576 = vmatprep.subr.mxu0 0.0
    %4577 = vmatpush1.msra.mxu0 0.0
    %4578 = vmatprep.subr.mxu0 0.0
    %4579 = vmatpush1.msra.mxu0 0.0
    %4580 = vmatprep.subr.mxu0 0.0
    %4581 = vmatpush1.msra.mxu0 0.0
    %4582 = vmatprep.subr.mxu0 0.0
    %4583 = vmatpush1.msra.mxu0 0.0
    %4584 = vmatprep.subr.mxu0 0.0
    %4585 = vmatpush1.msra.mxu0 0.0
    %4586 = vmatprep.subr.mxu0 0.0
    %4587 = vmatpush1.msra.mxu0 0.0
    %4588 = vmatprep.subr.mxu0 0.0
    %4589 = vmatpush1.msra.mxu0 0.0
    %4590 = vmatprep.subr.mxu0 0.0
    %4591 = vmatpush1.msra.mxu0 0.0
    %4592 = vmatprep.subr.mxu0 0.0
    %4593 = vmatpush1.msra.mxu0 0.0
    %4594 = vmatprep.subr.mxu0 0.0
    %4595 = vmatpush1.msra.mxu0 0.0
    %4596 = vmatprep.subr.mxu0 0.0
    %4597 = vmatpush1.msra.mxu0 0.0
    %4598 = vmatprep.mubr.f32.mxu0 0.0
    %4599 = vmatmul.mubr.f32.gmra.mrb[0].mxu0 %v4375
    %v4600 = vpop.f32.mrb[0].mxu0
    %v4601 = vadd.f32 0.0, %v4600
    %v4602 = vpop.f32.mrb[0].mxu0
    %v4603 = vadd.f32 0.0, %v4602
    %4604 = vmatprep.mubr.f32.mxu0 0.0
    %4605 = vmatmul.mubr.f32.gmra.mrb[0].mxu0 %v4378
    %v4606 = vpop.f32.mrb[0].mxu0
    %v4607 = vadd.f32 0.0, %v4606
    %v4608 = vpop.f32.mrb[0].mxu0
    %v4609 = vadd.f32 0.0, %v4608
    %4610 = vdwg.mxu0
    %4611 = vmatprep.subr.mxu0 %v4269
    %4612 = vmatpush1.msra.mxu0 %v4268
    %4613 = vmatprep.subr.mxu0 %v4281
    %4614 = vmatpush1.msra.mxu0 %v4280
    %4615 = vmatprep.subr.mxu0 %v4293
    %4616 = vmatpush1.msra.mxu0 %v4292
    %4617 = vmatprep.subr.mxu0 %v4305
    %4618 = vmatpush1.msra.mxu0 %v4304
    %4619 = vmatprep.subr.mxu0 0.0
    %4620 = vmatpush1.msra.mxu0 0.0
    %4621 = vmatprep.subr.mxu0 0.0
    %4622 = vmatpush1.msra.mxu0 0.0
    %4623 = vmatprep.subr.mxu0 0.0
    %4624 = vmatpush1.msra.mxu0 0.0
    %4625 = vmatprep.subr.mxu0 0.0
    %4626 = vmatpush1.msra.mxu0 0.0
    %4627 = vmatprep.subr.mxu0 0.0
    %4628 = vmatpush1.msra.mxu0 0.0
    %4629 = vmatprep.subr.mxu0 0.0
    %4630 = vmatpush1.msra.mxu0 0.0
    %4631 = vmatprep.subr.mxu0 0.0
    %4632 = vmatpush1.msra.mxu0 0.0
    %4633 = vmatprep.subr.mxu0 0.0
    %4634 = vmatpush1.msra.mxu0 0.0
    %4635 = vmatprep.subr.mxu0 0.0
    %4636 = vmatpush1.msra.mxu0 0.0
    %4637 = vmatprep.subr.mxu0 0.0
    %4638 = vmatpush1.msra.mxu0 0.0
    %4639 = vmatprep.subr.mxu0 0.0
    %4640 = vmatpush1.msra.mxu0 0.0
    %4641 = vmatprep.subr.mxu0 0.0
    %4642 = vmatpush1.msra.mxu0 0.0
    %4643 = vmatprep.subr.mxu0 0.0
    %4644 = vmatpush1.msra.mxu0 0.0
    %4645 = vmatprep.subr.mxu0 0.0
    %4646 = vmatpush1.msra.mxu0 0.0
    %4647 = vmatprep.subr.mxu0 0.0
    %4648 = vmatpush1.msra.mxu0 0.0
    %4649 = vmatprep.subr.mxu0 0.0
    %4650 = vmatpush1.msra.mxu0 0.0
    %4651 = vmatprep.subr.mxu0 0.0
    %4652 = vmatpush1.msra.mxu0 0.0
    %4653 = vmatprep.subr.mxu0 0.0
    %4654 = vmatpush1.msra.mxu0 0.0
    %4655 = vmatprep.subr.mxu0 0.0
    %4656 = vmatpush1.msra.mxu0 0.0
    %4657 = vmatprep.subr.mxu0 0.0
    %4658 = vmatpush1.msra.mxu0 0.0
    %4659 = vmatprep.subr.mxu0 0.0
    %4660 = vmatpush1.msra.mxu0 0.0
    %4661 = vmatprep.subr.mxu0 0.0
    %4662 = vmatpush1.msra.mxu0 0.0
    %4663 = vmatprep.subr.mxu0 0.0
    %4664 = vmatpush1.msra.mxu0 0.0
    %4665 = vmatprep.subr.mxu0 0.0
    %4666 = vmatpush1.msra.mxu0 0.0
    %4667 = vmatprep.subr.mxu0 0.0
    %4668 = vmatpush1.msra.mxu0 0.0
    %4669 = vmatprep.subr.mxu0 0.0
    %4670 = vmatpush1.msra.mxu0 0.0
    %4671 = vmatprep.subr.mxu0 0.0
    %4672 = vmatpush1.msra.mxu0 0.0
    %4673 = vmatprep.subr.mxu0 0.0
    %4674 = vmatpush1.msra.mxu0 0.0
    %4675 = vmatprep.mubr.f32.mxu0 0.0
    %4676 = vmatmul.mubr.f32.gmra.mrb[0].mxu0 %v4375
    %v4677 = vpop.f32.mrb[0].mxu0
    %v4678 = vadd.f32 0.0, %v4677
    %v4679 = vpop.f32.mrb[0].mxu0
    %v4680 = vadd.f32 0.0, %v4679
    %4681 = vmatprep.mubr.f32.mxu0 0.0
    %4682 = vmatmul.mubr.f32.gmra.mrb[0].mxu0 %v4378
    %v4683 = vpop.f32.mrb[0].mxu0
    %v4684 = vadd.f32 0.0, %v4683
    %v4685 = vpop.f32.mrb[0].mxu0
    %v4686 = vadd.f32 0.0, %v4685
    %4687 = vdwg.mxu0
    %4688 = vmatprep.subr.mxu0 %v4271
    %4689 = vmatpush1.msra.mxu0 %v4270
    %4690 = vmatprep.subr.mxu0 %v4283
    %4691 = vmatpush1.msra.mxu0 %v4282
    %4692 = vmatprep.subr.mxu0 %v4295
    %4693 = vmatpush1.msra.mxu0 %v4294
    %4694 = vmatprep.subr.mxu0 %v4307
    %4695 = vmatpush1.msra.mxu0 %v4306
    %4696 = vmatprep.subr.mxu0 0.0
    %4697 = vmatpush1.msra.mxu0 0.0
    %4698 = vmatprep.subr.mxu0 0.0
    %4699 = vmatpush1.msra.mxu0 0.0
    %4700 = vmatprep.subr.mxu0 0.0
    %4701 = vmatpush1.msra.mxu0 0.0
    %4702 = vmatprep.subr.mxu0 0.0
    %4703 = vmatpush1.msra.mxu0 0.0
    %4704 = vmatprep.subr.mxu0 0.0
    %4705 = vmatpush1.msra.mxu0 0.0
    %4706 = vmatprep.subr.mxu0 0.0
    %4707 = vmatpush1.msra.mxu0 0.0
    %4708 = vmatprep.subr.mxu0 0.0
    %4709 = vmatpush1.msra.mxu0 0.0
    %4710 = vmatprep.subr.mxu0 0.0
    %4711 = vmatpush1.msra.mxu0 0.0
    %4712 = vmatprep.subr.mxu0 0.0
    %4713 = vmatpush1.msra.mxu0 0.0
    %4714 = vmatprep.subr.mxu0 0.0
    %4715 = vmatpush1.msra.mxu0 0.0
    %4716 = vmatprep.subr.mxu0 0.0
    %4717 = vmatpush1.msra.mxu0 0.0
    %4718 = vmatprep.subr.mxu0 0.0
    %4719 = vmatpush1.msra.mxu0 0.0
    %4720 = vmatprep.subr.mxu0 0.0
    %4721 = vmatpush1.msra.mxu0 0.0
    %4722 = vmatprep.subr.mxu0 0.0
    %4723 = vmatpush1.msra.mxu0 0.0
    %4724 = vmatprep.subr.mxu0 0.0
    %4725 = vmatpush1.msra.mxu0 0.0
    %4726 = vmatprep.subr.mxu0 0.0
    %4727 = vmatpush1.msra.mxu0 0.0
    %4728 = vmatprep.subr.mxu0 0.0
    %4729 = vmatpush1.msra.mxu0 0.0
    %4730 = vmatprep.subr.mxu0 0.0
    %4731 = vmatpush1.msra.mxu0 0.0
    %4732 = vmatprep.subr.mxu0 0.0
    %4733 = vmatpush1.msra.mxu0 0.0
    %4734 = vmatprep.subr.mxu0 0.0
    %4735 = vmatpush1.msra.mxu0 0.0
    %4736 = vmatprep.subr.mxu0 0.0
    %4737 = vmatpush1.msra.mxu0 0.0
    %4738 = vmatprep.subr.mxu0 0.0
    %4739 = vmatpush1.msra.mxu0 0.0
    %4740 = vmatprep.subr.mxu0 0.0
    %4741 = vmatpush1.msra.mxu0 0.0
    %4742 = vmatprep.subr.mxu0 0.0
    %4743 = vmatpush1.msra.mxu0 0.0
    %4744 = vmatprep.subr.mxu0 0.0
    %4745 = vmatpush1.msra.mxu0 0.0
    %4746 = vmatprep.subr.mxu0 0.0
    %4747 = vmatpush1.msra.mxu0 0.0
    %4748 = vmatprep.subr.mxu0 0.0
    %4749 = vmatpush1.msra.mxu0 0.0
    %4750 = vmatprep.subr.mxu0 0.0
    %4751 = vmatpush1.msra.mxu0 0.0
    %4752 = vmatprep.mubr.f32.mxu0 0.0
    %4753 = vmatmul.mubr.f32.gmra.mrb[0].mxu0 %v4375
    %v4754 = vpop.f32.mrb[0].mxu0
    %v4755 = vadd.f32 0.0, %v4754
    %v4756 = vpop.f32.mrb[0].mxu0
    %v4757 = vadd.f32 0.0, %v4756
    %4758 = vmatprep.mubr.f32.mxu0 0.0
    %4759 = vmatmul.mubr.f32.gmra.mrb[0].mxu0 %v4378
    %v4760 = vpop.f32.mrb[0].mxu0
    %v4761 = vadd.f32 0.0, %v4760
    %v4762 = vpop.f32.mrb[0].mxu0
    %v4763 = vadd.f32 0.0, %v4762
    %4764 = vdwg.mxu0
    %4765 = vmatprep.subr.mxu0 %v4273
    %4766 = vmatpush1.msra.mxu0 %v4272
    %4767 = vmatprep.subr.mxu0 %v4285
    %4768 = vmatpush1.msra.mxu0 %v4284
    %4769 = vmatprep.subr.mxu0 %v4297
    %4770 = vmatpush1.msra.mxu0 %v4296
    %4771 = vmatprep.subr.mxu0 %v4309
    %4772 = vmatpush1.msra.mxu0 %v4308
    %4773 = vmatprep.subr.mxu0 0.0
    %4774 = vmatpush1.msra.mxu0 0.0
    %4775 = vmatprep.subr.mxu0 0.0
    %4776 = vmatpush1.msra.mxu0 0.0
    %4777 = vmatprep.subr.mxu0 0.0
    %4778 = vmatpush1.msra.mxu0 0.0
    %4779 = vmatprep.subr.mxu0 0.0
    %4780 = vmatpush1.msra.mxu0 0.0
    %4781 = vmatprep.subr.mxu0 0.0
    %4782 = vmatpush1.msra.mxu0 0.0
    %4783 = vmatprep.subr.mxu0 0.0
    %4784 = vmatpush1.msra.mxu0 0.0
    %4785 = vmatprep.subr.mxu0 0.0
    %4786 = vmatpush1.msra.mxu0 0.0
    %4787 = vmatprep.subr.mxu0 0.0
    %4788 = vmatpush1.msra.mxu0 0.0
    %4789 = vmatprep.subr.mxu0 0.0
    %4790 = vmatpush1.msra.mxu0 0.0
    %4791 = vmatprep.subr.mxu0 0.0
    %4792 = vmatpush1.msra.mxu0 0.0
    %4793 = vmatprep.subr.mxu0 0.0
    %4794 = vmatpush1.msra.mxu0 0.0
    %4795 = vmatprep.subr.mxu0 0.0
    %4796 = vmatpush1.msra.mxu0 0.0
    %4797 = vmatprep.subr.mxu0 0.0
    %4798 = vmatpush1.msra.mxu0 0.0
    %4799 = vmatprep.subr.mxu0 0.0
    %4800 = vmatpush1.msra.mxu0 0.0
    %4801 = vmatprep.subr.mxu0 0.0
    %4802 = vmatpush1.msra.mxu0 0.0
    %4803 = vmatprep.subr.mxu0 0.0
    %4804 = vmatpush1.msra.mxu0 0.0
    %4805 = vmatprep.subr.mxu0 0.0
    %4806 = vmatpush1.msra.mxu0 0.0
    %4807 = vmatprep.subr.mxu0 0.0
    %4808 = vmatpush1.msra.mxu0 0.0
    %4809 = vmatprep.subr.mxu0 0.0
    %4810 = vmatpush1.msra.mxu0 0.0
    %4811 = vmatprep.subr.mxu0 0.0
    %4812 = vmatpush1.msra.mxu0 0.0
    %4813 = vmatprep.subr.mxu0 0.0
    %4814 = vmatpush1.msra.mxu0 0.0
    %4815 = vmatprep.subr.mxu0 0.0
    %4816 = vmatpush1.msra.mxu0 0.0
    %4817 = vmatprep.subr.mxu0 0.0
    %4818 = vmatpush1.msra.mxu0 0.0
    %4819 = vmatprep.subr.mxu0 0.0
    %4820 = vmatpush1.msra.mxu0 0.0
    %4821 = vmatprep.subr.mxu0 0.0
    %4822 = vmatpush1.msra.mxu0 0.0
    %4823 = vmatprep.subr.mxu0 0.0
    %4824 = vmatpush1.msra.mxu0 0.0
    %4825 = vmatprep.subr.mxu0 0.0
    %4826 = vmatpush1.msra.mxu0 0.0
    %4827 = vmatprep.subr.mxu0 0.0
    %4828 = vmatpush1.msra.mxu0 0.0
    %4829 = vmatprep.mubr.f32.mxu0 0.0
    %4830 = vmatmul.mubr.f32.gmra.mrb[0].mxu0 %v4375
    %v4831 = vpop.f32.mrb[0].mxu0
    %v4832 = vadd.f32 0.0, %v4831
    %v4833 = vpop.f32.mrb[0].mxu0
    %v4834 = vadd.f32 0.0, %v4833
    %4835 = vmatprep.mubr.f32.mxu0 0.0
    %4836 = vmatmul.mubr.f32.gmra.mrb[0].mxu0 %v4378
    %v4837 = vpop.f32.mrb[0].mxu0
    %v4838 = vadd.f32 0.0, %v4837
    %v4839 = vpop.f32.mrb[0].mxu0
    %v4840 = vadd.f32 0.0, %v4839
    %4841 = vdwg.mxu0
    %v4843 = vsel %vm2065, %v4447, 0
    %v4846 = vsel %vm2065, %v4601, 0
    %4848 = vmatprep.subr.mxu0 0.0
    %4849 = vmatpush1.xpose.msra.mxu0 %v4846
    %4850 = vmatprep.subr.mxu0 0.0
    %4851 = vmatpush1.xpose.msra.mxu0 0.0
    %4852 = vmatprep.subr.mxu0 0.0
    %4853 = vmatpush1.xpose.msra.mxu0 0.0
    %4854 = vmatprep.subr.mxu0 0.0
    %4855 = vmatpush1.xpose.msra.mxu0 0.0
    %4856 = vmatprep.subr.mxu0 0.0
    %4857 = vmatpush1.xpose.msra.mxu0 0.0
    %4858 = vmatprep.subr.mxu0 0.0
    %4859 = vmatpush1.xpose.msra.mxu0 0.0
    %4860 = vmatprep.subr.mxu0 0.0
    %4861 = vmatpush1.xpose.msra.mxu0 0.0
    %4862 = vmatprep.subr.mxu0 0.0
    %4863 = vmatpush1.xpose.msra.mxu0 0.0
    %4864 = vmatprep.subr.mxu0 0.0
    %4865 = vmatpush1.xpose.msra.mxu0 0.0
    %4866 = vmatprep.subr.mxu0 0.0
    %4867 = vmatpush1.xpose.msra.mxu0 0.0
    %4868 = vmatprep.subr.mxu0 0.0
    %4869 = vmatpush1.xpose.msra.mxu0 0.0
    %4870 = vmatprep.subr.mxu0 0.0
    %4871 = vmatpush1.xpose.msra.mxu0 0.0
    %4872 = vmatprep.subr.mxu0 0.0
    %4873 = vmatpush1.xpose.msra.mxu0 0.0
    %4874 = vmatprep.subr.mxu0 0.0
    %4875 = vmatpush1.xpose.msra.mxu0 0.0
    %4876 = vmatprep.subr.mxu0 0.0
    %4877 = vmatpush1.xpose.msra.mxu0 0.0
    %4878 = vmatprep.subr.mxu0 0.0
    %4879 = vmatpush1.xpose.msra.mxu0 0.0
    %4880 = vmatprep.subr.mxu0 0.0
    %4881 = vmatpush1.xpose.msra.mxu0 0.0
    %4882 = vmatprep.subr.mxu0 0.0
    %4883 = vmatpush1.xpose.msra.mxu0 0.0
    %4884 = vmatprep.subr.mxu0 0.0
    %4885 = vmatpush1.xpose.msra.mxu0 0.0
    %4886 = vmatprep.subr.mxu0 0.0
    %4887 = vmatpush1.xpose.msra.mxu0 0.0
    %4888 = vmatprep.subr.mxu0 0.0
    %4889 = vmatpush1.xpose.msra.mxu0 0.0
    %4890 = vmatprep.subr.mxu0 0.0
    %4891 = vmatpush1.xpose.msra.mxu0 0.0
    %4892 = vmatprep.subr.mxu0 0.0
    %4893 = vmatpush1.xpose.msra.mxu0 0.0
    %4894 = vmatprep.subr.mxu0 0.0
    %4895 = vmatpush1.xpose.msra.mxu0 0.0
    %4896 = vmatprep.subr.mxu0 0.0
    %4897 = vmatpush1.xpose.msra.mxu0 0.0
    %4898 = vmatprep.subr.mxu0 0.0
    %4899 = vmatpush1.xpose.msra.mxu0 0.0
    %4900 = vmatprep.subr.mxu0 0.0
    %4901 = vmatpush1.xpose.msra.mxu0 0.0
    %4902 = vmatprep.subr.mxu0 0.0
    %4903 = vmatpush1.xpose.msra.mxu0 0.0
    %4904 = vmatprep.subr.mxu0 0.0
    %4905 = vmatpush1.xpose.msra.mxu0 0.0
    %4906 = vmatprep.subr.mxu0 0.0
    %4907 = vmatpush1.xpose.msra.mxu0 0.0
    %4908 = vmatprep.subr.mxu0 0.0
    %4909 = vmatpush1.xpose.msra.mxu0 0.0
    %4910 = vmatprep.subr.mxu0 0.0
    %4911 = vmatpush1.xpose.msra.mxu0 0.0
    %4912 = vmatprep.mubr.f32.mxu0 0.0
    %4913 = vmatmul.mubr.f32.gmra.mrb[0].mxu0 %v4843
    %v4914 = vpop.f32.mrb[0].mxu0
    %v4915 = vadd.f32 0.0, %v4914
    %v4916 = vpop.f32.mrb[0].mxu0
    %4917 = vdwg.mxu0
    %v4919 = vsel %vm2065, %v4453, 0
    %v4922 = vsel %vm2065, %v4607, 0
    %4924 = vmatprep.subr.mxu0 0.0
    %4925 = vmatpush1.xpose.msra.mxu0 %v4922
    %4926 = vmatprep.subr.mxu0 0.0
    %4927 = vmatpush1.xpose.msra.mxu0 0.0
    %4928 = vmatprep.subr.mxu0 0.0
    %4929 = vmatpush1.xpose.msra.mxu0 0.0
    %4930 = vmatprep.subr.mxu0 0.0
    %4931 = vmatpush1.xpose.msra.mxu0 0.0
    %4932 = vmatprep.subr.mxu0 0.0
    %4933 = vmatpush1.xpose.msra.mxu0 0.0
    %4934 = vmatprep.subr.mxu0 0.0
    %4935 = vmatpush1.xpose.msra.mxu0 0.0
    %4936 = vmatprep.subr.mxu0 0.0
    %4937 = vmatpush1.xpose.msra.mxu0 0.0
    %4938 = vmatprep.subr.mxu0 0.0
    %4939 = vmatpush1.xpose.msra.mxu0 0.0
    %4940 = vmatprep.subr.mxu0 0.0
    %4941 = vmatpush1.xpose.msra.mxu0 0.0
    %4942 = vmatprep.subr.mxu0 0.0
    %4943 = vmatpush1.xpose.msra.mxu0 0.0
    %4944 = vmatprep.subr.mxu0 0.0
    %4945 = vmatpush1.xpose.msra.mxu0 0.0
    %4946 = vmatprep.subr.mxu0 0.0
    %4947 = vmatpush1.xpose.msra.mxu0 0.0
    %4948 = vmatprep.subr.mxu0 0.0
    %4949 = vmatpush1.xpose.msra.mxu0 0.0
    %4950 = vmatprep.subr.mxu0 0.0
    %4951 = vmatpush1.xpose.msra.mxu0 0.0
    %4952 = vmatprep.subr.mxu0 0.0
    %4953 = vmatpush1.xpose.msra.mxu0 0.0
    %4954 = vmatprep.subr.mxu0 0.0
    %4955 = vmatpush1.xpose.msra.mxu0 0.0
    %4956 = vmatprep.subr.mxu0 0.0
    %4957 = vmatpush1.xpose.msra.mxu0 0.0
    %4958 = vmatprep.subr.mxu0 0.0
    %4959 = vmatpush1.xpose.msra.mxu0 0.0
    %4960 = vmatprep.subr.mxu0 0.0
    %4961 = vmatpush1.xpose.msra.mxu0 0.0
    %4962 = vmatprep.subr.mxu0 0.0
    %4963 = vmatpush1.xpose.msra.mxu0 0.0
    %4964 = vmatprep.subr.mxu0 0.0
    %4965 = vmatpush1.xpose.msra.mxu0 0.0
    %4966 = vmatprep.subr.mxu0 0.0
    %4967 = vmatpush1.xpose.msra.mxu0 0.0
    %4968 = vmatprep.subr.mxu0 0.0
    %4969 = vmatpush1.xpose.msra.mxu0 0.0
    %4970 = vmatprep.subr.mxu0 0.0
    %4971 = vmatpush1.xpose.msra.mxu0 0.0
    %4972 = vmatprep.subr.mxu0 0.0
    %4973 = vmatpush1.xpose.msra.mxu0 0.0
    %4974 = vmatprep.subr.mxu0 0.0
    %4975 = vmatpush1.xpose.msra.mxu0 0.0
    %4976 = vmatprep.subr.mxu0 0.0
    %4977 = vmatpush1.xpose.msra.mxu0 0.0
    %4978 = vmatprep.subr.mxu0 0.0
    %4979 = vmatpush1.xpose.msra.mxu0 0.0
    %4980 = vmatprep.subr.mxu0 0.0
    %4981 = vmatpush1.xpose.msra.mxu0 0.0
    %4982 = vmatprep.subr.mxu0 0.0
    %4983 = vmatpush1.xpose.msra.mxu0 0.0
    %4984 = vmatprep.subr.mxu0 0.0
    %4985 = vmatpush1.xpose.msra.mxu0 0.0
    %4986 = vmatprep.subr.mxu0 0.0
    %4987 = vmatpush1.xpose.msra.mxu0 0.0
    %4988 = vmatprep.mubr.f32.mxu0 0.0
    %4989 = vmatmul.mubr.f32.gmra.mrb[0].mxu0 %v4919
    %v4990 = vpop.f32.mrb[0].mxu0
    %v4991 = vadd.f32 0.0, %v4990
    %v4992 = vpop.f32.mrb[0].mxu0
    %4993 = vdwg.mxu0
    %v4994 = vmul.f32 %v4915, 0.125
    %v4995 = vmul.f32 %v4991, 0.125
    %v4996 = vsel %vm221, %v4994, -inf
    %4997 = vmax.xlane.f32.xlu0 %v4996
    %v4998 = vpop.xlane.xlu0 %4997
    %v4999 = vsel %vm221, %v4995, -inf
    %5000 = vmax.xlane.f32.xlu0 %v4999
    %v5001 = vpop.xlane.xlu0 %5000
    %v5002 = vsub.f32 %v4994, %v4998
    %v5003 = vsub.f32 %v4995, %v5001
    %v5004 = vmul.f32 %v5002, 1.442695
    %v5005 = vpow.pop %v5004
    %v5006 = vmul.f32 %v5003, 1.442695
    %v5007 = vpow.pop %v5006
    %v5008 = vsel %vm221, %v5005, 0.0
    %5009 = vadd.xlane.f32.xlu0 %v5008
    %v5010 = vpop.xlane.xlu0 %5009
    %v5011 = vsel %vm221, %v5007, 0.0
    %5012 = vadd.xlane.f32.xlu0 %v5011
    %v5013 = vpop.xlane.xlu0 %5012
    %v5014 = vrcp.pop %v5010
    %v5015 = vrcp.pop %v5013
    %v5016 = vmul.f32 %v5005, %v5014
    %v5017 = vmul.f32 %v5007, %v5015
    %v5019 = vsel %vm221, %v5016, 0
    %5021 = vmatprep.subr.mxu0 0.0
    %5022 = vmatpush1.msra.mxu0 %v4755
    %5023 = vmatprep.subr.mxu0 0.0
    %5024 = vmatpush1.msra.mxu0 0.0
    %5025 = vmatprep.subr.mxu0 0.0
    %5026 = vmatpush1.msra.mxu0 0.0
    %5027 = vmatprep.subr.mxu0 0.0
    %5028 = vmatpush1.msra.mxu0 0.0
    %5029 = vmatprep.subr.mxu0 0.0
    %5030 = vmatpush1.msra.mxu0 0.0
    %5031 = vmatprep.subr.mxu0 0.0
    %5032 = vmatpush1.msra.mxu0 0.0
    %5033 = vmatprep.subr.mxu0 0.0
    %5034 = vmatpush1.msra.mxu0 0.0
    %5035 = vmatprep.subr.mxu0 0.0
    %5036 = vmatpush1.msra.mxu0 0.0
    %5037 = vmatprep.subr.mxu0 0.0
    %5038 = vmatpush1.msra.mxu0 0.0
    %5039 = vmatprep.subr.mxu0 0.0
    %5040 = vmatpush1.msra.mxu0 0.0
    %5041 = vmatprep.subr.mxu0 0.0
    %5042 = vmatpush1.msra.mxu0 0.0
    %5043 = vmatprep.subr.mxu0 0.0
    %5044 = vmatpush1.msra.mxu0 0.0
    %5045 = vmatprep.subr.mxu0 0.0
    %5046 = vmatpush1.msra.mxu0 0.0
    %5047 = vmatprep.subr.mxu0 0.0
    %5048 = vmatpush1.msra.mxu0 0.0
    %5049 = vmatprep.subr.mxu0 0.0
    %5050 = vmatpush1.msra.mxu0 0.0
    %5051 = vmatprep.subr.mxu0 0.0
    %5052 = vmatpush1.msra.mxu0 0.0
    %5053 = vmatprep.subr.mxu0 0.0
    %5054 = vmatpush1.msra.mxu0 0.0
    %5055 = vmatprep.subr.mxu0 0.0
    %5056 = vmatpush1.msra.mxu0 0.0
    %5057 = vmatprep.subr.mxu0 0.0
    %5058 = vmatpush1.msra.mxu0 0.0
    %5059 = vmatprep.subr.mxu0 0.0
    %5060 = vmatpush1.msra.mxu0 0.0
    %5061 = vmatprep.subr.mxu0 0.0
    %5062 = vmatpush1.msra.mxu0 0.0
    %5063 = vmatprep.subr.mxu0 0.0
    %5064 = vmatpush1.msra.mxu0 0.0
    %5065 = vmatprep.subr.mxu0 0.0
    %5066 = vmatpush1.msra.mxu0 0.0
    %5067 = vmatprep.subr.mxu0 0.0
    %5068 = vmatpush1.msra.mxu0 0.0
    %5069 = vmatprep.subr.mxu0 0.0
    %5070 = vmatpush1.msra.mxu0 0.0
    %5071 = vmatprep.subr.mxu0 0.0
    %5072 = vmatpush1.msra.mxu0 0.0
    %5073 = vmatprep.subr.mxu0 0.0
    %5074 = vmatpush1.msra.mxu0 0.0
    %5075 = vmatprep.subr.mxu0 0.0
    %5076 = vmatpush1.msra.mxu0 0.0
    %5077 = vmatprep.subr.mxu0 0.0
    %5078 = vmatpush1.msra.mxu0 0.0
    %5079 = vmatprep.subr.mxu0 0.0
    %5080 = vmatpush1.msra.mxu0 0.0
    %5081 = vmatprep.subr.mxu0 0.0
    %5082 = vmatpush1.msra.mxu0 0.0
    %5083 = vmatprep.subr.mxu0 0.0
    %5084 = vmatpush1.msra.mxu0 0.0
    %5085 = vmatprep.mubr.f32.mxu0 0.0
    %5086 = vmatmul.mubr.f32.gmra.mrb[0].mxu0 %v5019
    %v5087 = vpop.f32.mrb[0].mxu0
    %v5088 = vadd.f32 0.0, %v5087
    %v5089 = vpop.f32.mrb[0].mxu0
    %5090 = vdwg.mxu0
    %v5092 = vsel %vm221, %v5017, 0
    %5094 = vmatprep.subr.mxu0 0.0
    %5095 = vmatpush1.msra.mxu0 %v4761
    %5096 = vmatprep.subr.mxu0 0.0
    %5097 = vmatpush1.msra.mxu0 0.0
    %5098 = vmatprep.subr.mxu0 0.0
    %5099 = vmatpush1.msra.mxu0 0.0
    %5100 = vmatprep.subr.mxu0 0.0
    %5101 = vmatpush1.msra.mxu0 0.0
    %5102 = vmatprep.subr.mxu0 0.0
    %5103 = vmatpush1.msra.mxu0 0.0
    %5104 = vmatprep.subr.mxu0 0.0
    %5105 = vmatpush1.msra.mxu0 0.0
    %5106 = vmatprep.subr.mxu0 0.0
    %5107 = vmatpush1.msra.mxu0 0.0
    %5108 = vmatprep.subr.mxu0 0.0
    %5109 = vmatpush1.msra.mxu0 0.0
    %5110 = vmatprep.subr.mxu0 0.0
    %5111 = vmatpush1.msra.mxu0 0.0
    %5112 = vmatprep.subr.mxu0 0.0
    %5113 = vmatpush1.msra.mxu0 0.0
    %5114 = vmatprep.subr.mxu0 0.0
    %5115 = vmatpush1.msra.mxu0 0.0
    %5116 = vmatprep.subr.mxu0 0.0
    %5117 = vmatpush1.msra.mxu0 0.0
    %5118 = vmatprep.subr.mxu0 0.0
    %5119 = vmatpush1.msra.mxu0 0.0
    %5120 = vmatprep.subr.mxu0 0.0
    %5121 = vmatpush1.msra.mxu0 0.0
    %5122 = vmatprep.subr.mxu0 0.0
    %5123 = vmatpush1.msra.mxu0 0.0
    %5124 = vmatprep.subr.mxu0 0.0
    %5125 = vmatpush1.msra.mxu0 0.0
    %5126 = vmatprep.subr.mxu0 0.0
    %5127 = vmatpush1.msra.mxu0 0.0
    %5128 = vmatprep.subr.mxu0 0.0
    %5129 = vmatpush1.msra.mxu0 0.0
    %5130 = vmatprep.subr.mxu0 0.0
    %5131 = vmatpush1.msra.mxu0 0.0
    %5132 = vmatprep.subr.mxu0 0.0
    %5133 = vmatpush1.msra.mxu0 0.0
    %5134 = vmatprep.subr.mxu0 0.0
    %5135 = vmatpush1.msra.mxu0 0.0
    %5136 = vmatprep.subr.mxu0 0.0
    %5137 = vmatpush1.msra.mxu0 0.0
    %5138 = vmatprep.subr.mxu0 0.0
    %5139 = vmatpush1.msra.mxu0 0.0
    %5140 = vmatprep.subr.mxu0 0.0
    %5141 = vmatpush1.msra.mxu0 0.0
    %5142 = vmatprep.subr.mxu0 0.0
    %5143 = vmatpush1.msra.mxu0 0.0
    %5144 = vmatprep.subr.mxu0 0.0
    %5145 = vmatpush1.msra.mxu0 0.0
    %5146 = vmatprep.subr.mxu0 0.0
    %5147 = vmatpush1.msra.mxu0 0.0
    %5148 = vmatprep.subr.mxu0 0.0
    %5149 = vmatpush1.msra.mxu0 0.0
    %5150 = vmatprep.subr.mxu0 0.0
    %5151 = vmatpush1.msra.mxu0 0.0
    %5152 = vmatprep.subr.mxu0 0.0
    %5153 = vmatpush1.msra.mxu0 0.0
    %5154 = vmatprep.subr.mxu0 0.0
    %5155 = vmatpush1.msra.mxu0 0.0
    %5156 = vmatprep.subr.mxu0 0.0
    %5157 = vmatpush1.msra.mxu0 0.0
    %5158 = vmatprep.mubr.f32.mxu0 0.0
    %5159 = vmatmul.mubr.f32.gmra.mrb[0].mxu0 %v5092
    %v5160 = vpop.f32.mrb[0].mxu0
    %v5161 = vadd.f32 0.0, %v5160
    %v5162 = vpop.f32.mrb[0].mxu0
    %5163 = vdwg.mxu0
    %5164 = vrot.lane.b32.xlu0 %v4447, 64
    %v5165 = vpop.permute.xlu0 %5164
    %5166 = vrot.lane.b32.xlu0 %v4601, 64
    %v5167 = vpop.permute.xlu0 %5166
    %v5168 = vsel %vm2065, %v5165, 0
    %v5170 = vsel %vm2065, %v5167, 0
    %5172 = vmatprep.subr.mxu0 0.0
    %5173 = vmatpush1.xpose.msra.mxu0 %v5170
    %5174 = vmatprep.subr.mxu0 0.0
    %5175 = vmatpush1.xpose.msra.mxu0 0.0
    %5176 = vmatprep.subr.mxu0 0.0
    %5177 = vmatpush1.xpose.msra.mxu0 0.0
    %5178 = vmatprep.subr.mxu0 0.0
    %5179 = vmatpush1.xpose.msra.mxu0 0.0
    %5180 = vmatprep.subr.mxu0 0.0
    %5181 = vmatpush1.xpose.msra.mxu0 0.0
    %5182 = vmatprep.subr.mxu0 0.0
    %5183 = vmatpush1.xpose.msra.mxu0 0.0
    %5184 = vmatprep.subr.mxu0 0.0
    %5185 = vmatpush1.xpose.msra.mxu0 0.0
    %5186 = vmatprep.subr.mxu0 0.0
    %5187 = vmatpush1.xpose.msra.mxu0 0.0
    %5188 = vmatprep.subr.mxu0 0.0
    %5189 = vmatpush1.xpose.msra.mxu0 0.0
    %5190 = vmatprep.subr.mxu0 0.0
    %5191 = vmatpush1.xpose.msra.mxu0 0.0
    %5192 = vmatprep.subr.mxu0 0.0
    %5193 = vmatpush1.xpose.msra.mxu0 0.0
    %5194 = vmatprep.subr.mxu0 0.0
    %5195 = vmatpush1.xpose.msra.mxu0 0.0
    %5196 = vmatprep.subr.mxu0 0.0
    %5197 = vmatpush1.xpose.msra.mxu0 0.0
    %5198 = vmatprep.subr.mxu0 0.0
    %5199 = vmatpush1.xpose.msra.mxu0 0.0
    %5200 = vmatprep.subr.mxu0 0.0
    %5201 = vmatpush1.xpose.msra.mxu0 0.0
    %5202 = vmatprep.subr.mxu0 0.0
    %5203 = vmatpush1.xpose.msra.mxu0 0.0
    %5204 = vmatprep.subr.mxu0 0.0
    %5205 = vmatpush1.xpose.msra.mxu0 0.0
    %5206 = vmatprep.subr.mxu0 0.0
    %5207 = vmatpush1.xpose.msra.mxu0 0.0
    %5208 = vmatprep.subr.mxu0 0.0
    %5209 = vmatpush1.xpose.msra.mxu0 0.0
    %5210 = vmatprep.subr.mxu0 0.0
    %5211 = vmatpush1.xpose.msra.mxu0 0.0
    %5212 = vmatprep.subr.mxu0 0.0
    %5213 = vmatpush1.xpose.msra.mxu0 0.0
    %5214 = vmatprep.subr.mxu0 0.0
    %5215 = vmatpush1.xpose.msra.mxu0 0.0
    %5216 = vmatprep.subr.mxu0 0.0
    %5217 = vmatpush1.xpose.msra.mxu0 0.0
    %5218 = vmatprep.subr.mxu0 0.0
    %5219 = vmatpush1.xpose.msra.mxu0 0.0
    %5220 = vmatprep.subr.mxu0 0.0
    %5221 = vmatpush1.xpose.msra.mxu0 0.0
    %5222 = vmatprep.subr.mxu0 0.0
    %5223 = vmatpush1.xpose.msra.mxu0 0.0
    %5224 = vmatprep.subr.mxu0 0.0
    %5225 = vmatpush1.xpose.msra.mxu0 0.0
    %5226 = vmatprep.subr.mxu0 0.0
    %5227 = vmatpush1.xpose.msra.mxu0 0.0
    %5228 = vmatprep.subr.mxu0 0.0
    %5229 = vmatpush1.xpose.msra.mxu0 0.0
    %5230 = vmatprep.subr.mxu0 0.0
    %5231 = vmatpush1.xpose.msra.mxu0 0.0
    %5232 = vmatprep.subr.mxu0 0.0
    %5233 = vmatpush1.xpose.msra.mxu0 0.0
    %5234 = vmatprep.subr.mxu0 0.0
    %5235 = vmatpush1.xpose.msra.mxu0 0.0
    %5236 = vmatprep.mubr.f32.mxu0 0.0
    %5237 = vmatmul.mubr.f32.gmra.mrb[0].mxu0 %v5168
    %v5238 = vpop.f32.mrb[0].mxu0
    %v5239 = vadd.f32 0.0, %v5238
    %v5240 = vpop.f32.mrb[0].mxu0
    %5241 = vdwg.mxu0
    %5242 = vrot.lane.b32.xlu0 %v4453, 64
    %v5243 = vpop.permute.xlu0 %5242
    %5244 = vrot.lane.b32.xlu0 %v4607, 64
    %v5245 = vpop.permute.xlu0 %5244
    %v5246 = vsel %vm2065, %v5243, 0
    %v5248 = vsel %vm2065, %v5245, 0
    %5250 = vmatprep.subr.mxu0 0.0
    %5251 = vmatpush1.xpose.msra.mxu0 %v5248
    %5252 = vmatprep.subr.mxu0 0.0
    %5253 = vmatpush1.xpose.msra.mxu0 0.0
    %5254 = vmatprep.subr.mxu0 0.0
    %5255 = vmatpush1.xpose.msra.mxu0 0.0
    %5256 = vmatprep.subr.mxu0 0.0
    %5257 = vmatpush1.xpose.msra.mxu0 0.0
    %5258 = vmatprep.subr.mxu0 0.0
    %5259 = vmatpush1.xpose.msra.mxu0 0.0
    %5260 = vmatprep.subr.mxu0 0.0
    %5261 = vmatpush1.xpose.msra.mxu0 0.0
    %5262 = vmatprep.subr.mxu0 0.0
    %5263 = vmatpush1.xpose.msra.mxu0 0.0
    %5264 = vmatprep.subr.mxu0 0.0
    %5265 = vmatpush1.xpose.msra.mxu0 0.0
    %5266 = vmatprep.subr.mxu0 0.0
    %5267 = vmatpush1.xpose.msra.mxu0 0.0
    %5268 = vmatprep.subr.mxu0 0.0
    %5269 = vmatpush1.xpose.msra.mxu0 0.0
    %5270 = vmatprep.subr.mxu0 0.0
    %5271 = vmatpush1.xpose.msra.mxu0 0.0
    %5272 = vmatprep.subr.mxu0 0.0
    %5273 = vmatpush1.xpose.msra.mxu0 0.0
    %5274 = vmatprep.subr.mxu0 0.0
    %5275 = vmatpush1.xpose.msra.mxu0 0.0
    %5276 = vmatprep.subr.mxu0 0.0
    %5277 = vmatpush1.xpose.msra.mxu0 0.0
    %5278 = vmatprep.subr.mxu0 0.0
    %5279 = vmatpush1.xpose.msra.mxu0 0.0
    %5280 = vmatprep.subr.mxu0 0.0
    %5281 = vmatpush1.xpose.msra.mxu0 0.0
    %5282 = vmatprep.subr.mxu0 0.0
    %5283 = vmatpush1.xpose.msra.mxu0 0.0
    %5284 = vmatprep.subr.mxu0 0.0
    %5285 = vmatpush1.xpose.msra.mxu0 0.0
    %5286 = vmatprep.subr.mxu0 0.0
    %5287 = vmatpush1.xpose.msra.mxu0 0.0
    %5288 = vmatprep.subr.mxu0 0.0
    %5289 = vmatpush1.xpose.msra.mxu0 0.0
    %5290 = vmatprep.subr.mxu0 0.0
    %5291 = vmatpush1.xpose.msra.mxu0 0.0
    %5292 = vmatprep.subr.mxu0 0.0
    %5293 = vmatpush1.xpose.msra.mxu0 0.0
    %5294 = vmatprep.subr.mxu0 0.0
    %5295 = vmatpush1.xpose.msra.mxu0 0.0
    %5296 = vmatprep.subr.mxu0 0.0
    %5297 = vmatpush1.xpose.msra.mxu0 0.0
    %5298 = vmatprep.subr.mxu0 0.0
    %5299 = vmatpush1.xpose.msra.mxu0 0.0
    %5300 = vmatprep.subr.mxu0 0.0
    %5301 = vmatpush1.xpose.msra.mxu0 0.0
    %5302 = vmatprep.subr.mxu0 0.0
    %5303 = vmatpush1.xpose.msra.mxu0 0.0
    %5304 = vmatprep.subr.mxu0 0.0
    %5305 = vmatpush1.xpose.msra.mxu0 0.0
    %5306 = vmatprep.subr.mxu0 0.0
    %5307 = vmatpush1.xpose.msra.mxu0 0.0
    %5308 = vmatprep.subr.mxu0 0.0
    %5309 = vmatpush1.xpose.msra.mxu0 0.0
    %5310 = vmatprep.subr.mxu0 0.0
    %5311 = vmatpush1.xpose.msra.mxu0 0.0
    %5312 = vmatprep.subr.mxu0 0.0
    %5313 = vmatpush1.xpose.msra.mxu0 0.0
    %5314 = vmatprep.mubr.f32.mxu0 0.0
    %5315 = vmatmul.mubr.f32.gmra.mrb[0].mxu0 %v5246
    %v5316 = vpop.f32.mrb[0].mxu0
    %v5317 = vadd.f32 0.0, %v5316
    %v5318 = vpop.f32.mrb[0].mxu0
    %5319 = vdwg.mxu0
    %v5320 = vmul.f32 %v5239, 0.125
    %v5321 = vmul.f32 %v5317, 0.125
    %v5322 = vsel %vm221, %v5320, -inf
    %5323 = vmax.xlane.f32.xlu0 %v5322
    %v5324 = vpop.xlane.xlu0 %5323
    %v5325 = vsel %vm221, %v5321, -inf
    %5326 = vmax.xlane.f32.xlu0 %v5325
    %v5327 = vpop.xlane.xlu0 %5326
    %v5328 = vsub.f32 %v5320, %v5324
    %v5329 = vsub.f32 %v5321, %v5327
    %v5330 = vmul.f32 %v5328, 1.442695
    %v5331 = vpow.pop %v5330
    %v5332 = vmul.f32 %v5329, 1.442695
    %v5333 = vpow.pop %v5332
    %v5334 = vsel %vm221, %v5331, 0.0
    %5335 = vadd.xlane.f32.xlu0 %v5334
    %v5336 = vpop.xlane.xlu0 %5335
    %v5337 = vsel %vm221, %v5333, 0.0
    %5338 = vadd.xlane.f32.xlu0 %v5337
    %v5339 = vpop.xlane.xlu0 %5338
    %v5340 = vrcp.pop %v5336
    %v5341 = vrcp.pop %v5339
    %v5342 = vmul.f32 %v5331, %v5340
    %v5343 = vmul.f32 %v5333, %v5341
    %5345 = vrot.lane.b32.xlu0 %v4755, 64
    %v5346 = vpop.permute.xlu0 %5345
    %v5349 = vsel %vm221, %v5342, 0
    %5351 = vmatprep.subr.mxu0 0.0
    %5352 = vmatpush1.msra.mxu0 %v5346
    %5353 = vmatprep.subr.mxu0 0.0
    %5354 = vmatpush1.msra.mxu0 0.0
    %5355 = vmatprep.subr.mxu0 0.0
    %5356 = vmatpush1.msra.mxu0 0.0
    %5357 = vmatprep.subr.mxu0 0.0
    %5358 = vmatpush1.msra.mxu0 0.0
    %5359 = vmatprep.subr.mxu0 0.0
    %5360 = vmatpush1.msra.mxu0 0.0
    %5361 = vmatprep.subr.mxu0 0.0
    %5362 = vmatpush1.msra.mxu0 0.0
    %5363 = vmatprep.subr.mxu0 0.0
    %5364 = vmatpush1.msra.mxu0 0.0
    %5365 = vmatprep.subr.mxu0 0.0
    %5366 = vmatpush1.msra.mxu0 0.0
    %5367 = vmatprep.subr.mxu0 0.0
    %5368 = vmatpush1.msra.mxu0 0.0
    %5369 = vmatprep.subr.mxu0 0.0
    %5370 = vmatpush1.msra.mxu0 0.0
    %5371 = vmatprep.subr.mxu0 0.0
    %5372 = vmatpush1.msra.mxu0 0.0
    %5373 = vmatprep.subr.mxu0 0.0
    %5374 = vmatpush1.msra.mxu0 0.0
    %5375 = vmatprep.subr.mxu0 0.0
    %5376 = vmatpush1.msra.mxu0 0.0
    %5377 = vmatprep.subr.mxu0 0.0
    %5378 = vmatpush1.msra.mxu0 0.0
    %5379 = vmatprep.subr.mxu0 0.0
    %5380 = vmatpush1.msra.mxu0 0.0
    %5381 = vmatprep.subr.mxu0 0.0
    %5382 = vmatpush1.msra.mxu0 0.0
    %5383 = vmatprep.subr.mxu0 0.0
    %5384 = vmatpush1.msra.mxu0 0.0
    %5385 = vmatprep.subr.mxu0 0.0
    %5386 = vmatpush1.msra.mxu0 0.0
    %5387 = vmatprep.subr.mxu0 0.0
    %5388 = vmatpush1.msra.mxu0 0.0
    %5389 = vmatprep.subr.mxu0 0.0
    %5390 = vmatpush1.msra.mxu0 0.0
    %5391 = vmatprep.subr.mxu0 0.0
    %5392 = vmatpush1.msra.mxu0 0.0
    %5393 = vmatprep.subr.mxu0 0.0
    %5394 = vmatpush1.msra.mxu0 0.0
    %5395 = vmatprep.subr.mxu0 0.0
    %5396 = vmatpush1.msra.mxu0 0.0
    %5397 = vmatprep.subr.mxu0 0.0
    %5398 = vmatpush1.msra.mxu0 0.0
    %5399 = vmatprep.subr.mxu0 0.0
    %5400 = vmatpush1.msra.mxu0 0.0
    %5401 = vmatprep.subr.mxu0 0.0
    %5402 = vmatpush1.msra.mxu0 0.0
    %5403 = vmatprep.subr.mxu0 0.0
    %5404 = vmatpush1.msra.mxu0 0.0
    %5405 = vmatprep.subr.mxu0 0.0
    %5406 = vmatpush1.msra.mxu0 0.0
    %5407 = vmatprep.subr.mxu0 0.0
    %5408 = vmatpush1.msra.mxu0 0.0
    %5409 = vmatprep.subr.mxu0 0.0
    %5410 = vmatpush1.msra.mxu0 0.0
    %5411 = vmatprep.subr.mxu0 0.0
    %5412 = vmatpush1.msra.mxu0 0.0
    %5413 = vmatprep.subr.mxu0 0.0
    %5414 = vmatpush1.msra.mxu0 0.0
    %5415 = vmatprep.mubr.f32.mxu0 0.0
    %5416 = vmatmul.mubr.f32.gmra.mrb[0].mxu0 %v5349
    %v5417 = vpop.f32.mrb[0].mxu0
    %v5418 = vadd.f32 0.0, %v5417
    %v5419 = vpop.f32.mrb[0].mxu0
    %5420 = vdwg.mxu0
    %5422 = vrot.lane.b32.xlu0 %v4761, 64
    %v5423 = vpop.permute.xlu0 %5422
    %v5426 = vsel %vm221, %v5343, 0
    %5428 = vmatprep.subr.mxu0 0.0
    %5429 = vmatpush1.msra.mxu0 %v5423
    %5430 = vmatprep.subr.mxu0 0.0
    %5431 = vmatpush1.msra.mxu0 0.0
    %5432 = vmatprep.subr.mxu0 0.0
    %5433 = vmatpush1.msra.mxu0 0.0
    %5434 = vmatprep.subr.mxu0 0.0
    %5435 = vmatpush1.msra.mxu0 0.0
    %5436 = vmatprep.subr.mxu0 0.0
    %5437 = vmatpush1.msra.mxu0 0.0
    %5438 = vmatprep.subr.mxu0 0.0
    %5439 = vmatpush1.msra.mxu0 0.0
    %5440 = vmatprep.subr.mxu0 0.0
    %5441 = vmatpush1.msra.mxu0 0.0
    %5442 = vmatprep.subr.mxu0 0.0
    %5443 = vmatpush1.msra.mxu0 0.0
    %5444 = vmatprep.subr.mxu0 0.0
    %5445 = vmatpush1.msra.mxu0 0.0
    %5446 = vmatprep.subr.mxu0 0.0
    %5447 = vmatpush1.msra.mxu0 0.0
    %5448 = vmatprep.subr.mxu0 0.0
    %5449 = vmatpush1.msra.mxu0 0.0
    %5450 = vmatprep.subr.mxu0 0.0
    %5451 = vmatpush1.msra.mxu0 0.0
    %5452 = vmatprep.subr.mxu0 0.0
    %5453 = vmatpush1.msra.mxu0 0.0
    %5454 = vmatprep.subr.mxu0 0.0
    %5455 = vmatpush1.msra.mxu0 0.0
    %5456 = vmatprep.subr.mxu0 0.0
    %5457 = vmatpush1.msra.mxu0 0.0
    %5458 = vmatprep.subr.mxu0 0.0
    %5459 = vmatpush1.msra.mxu0 0.0
    %5460 = vmatprep.subr.mxu0 0.0
    %5461 = vmatpush1.msra.mxu0 0.0
    %5462 = vmatprep.subr.mxu0 0.0
    %5463 = vmatpush1.msra.mxu0 0.0
    %5464 = vmatprep.subr.mxu0 0.0
    %5465 = vmatpush1.msra.mxu0 0.0
    %5466 = vmatprep.subr.mxu0 0.0
    %5467 = vmatpush1.msra.mxu0 0.0
    %5468 = vmatprep.subr.mxu0 0.0
    %5469 = vmatpush1.msra.mxu0 0.0
    %5470 = vmatprep.subr.mxu0 0.0
    %5471 = vmatpush1.msra.mxu0 0.0
    %5472 = vmatprep.subr.mxu0 0.0
    %5473 = vmatpush1.msra.mxu0 0.0
    %5474 = vmatprep.subr.mxu0 0.0
    %5475 = vmatpush1.msra.mxu0 0.0
    %5476 = vmatprep.subr.mxu0 0.0
    %5477 = vmatpush1.msra.mxu0 0.0
    %5478 = vmatprep.subr.mxu0 0.0
    %5479 = vmatpush1.msra.mxu0 0.0
    %5480 = vmatprep.subr.mxu0 0.0
    %5481 = vmatpush1.msra.mxu0 0.0
    %5482 = vmatprep.subr.mxu0 0.0
    %5483 = vmatpush1.msra.mxu0 0.0
    %5484 = vmatprep.subr.mxu0 0.0
    %5485 = vmatpush1.msra.mxu0 0.0
    %5486 = vmatprep.subr.mxu0 0.0
    %5487 = vmatpush1.msra.mxu0 0.0
    %5488 = vmatprep.subr.mxu0 0.0
    %5489 = vmatpush1.msra.mxu0 0.0
    %5490 = vmatprep.subr.mxu0 0.0
    %5491 = vmatpush1.msra.mxu0 0.0
    %5492 = vmatprep.mubr.f32.mxu0 0.0
    %5493 = vmatmul.mubr.f32.gmra.mrb[0].mxu0 %v5426
    %v5494 = vpop.f32.mrb[0].mxu0
    %v5495 = vadd.f32 0.0, %v5494
    %v5496 = vpop.f32.mrb[0].mxu0
    %5497 = vdwg.mxu0
    %v5499 = vsel %vm2065, %v5418, 0
    %v5502 = vsel %vm2065, %v5495, 0
    %5504 = vmatprep.subr.mxu0 0.0
    %5505 = vmatpush1.msra.mxu0 %v4318
    %5506 = vmatprep.subr.mxu0 0.0
    %5507 = vmatpush1.msra.mxu0 %v4319
    %5508 = vmatprep.subr.mxu0 0.0
    %5509 = vmatpush1.msra.mxu0 %v4320
    %5510 = vmatprep.subr.mxu0 0.0
    %5511 = vmatpush1.msra.mxu0 %v4321
    %5512 = vmatprep.subr.mxu0 0.0
    %5513 = vmatpush1.msra.mxu0 %v4322
    %5514 = vmatprep.subr.mxu0 0.0
    %5515 = vmatpush1.msra.mxu0 %v4323
    %5516 = vmatprep.subr.mxu0 0.0
    %5517 = vmatpush1.msra.mxu0 %v4324
    %5518 = vmatprep.subr.mxu0 0.0
    %5519 = vmatpush1.msra.mxu0 %v4325
    %5520 = vmatprep.subr.mxu0 0.0
    %5521 = vmatpush1.msra.mxu0 0.0
    %5522 = vmatprep.subr.mxu0 0.0
    %5523 = vmatpush1.msra.mxu0 0.0
    %5524 = vmatprep.subr.mxu0 0.0
    %5525 = vmatpush1.msra.mxu0 0.0
    %5526 = vmatprep.subr.mxu0 0.0
    %5527 = vmatpush1.msra.mxu0 0.0
    %5528 = vmatprep.subr.mxu0 0.0
    %5529 = vmatpush1.msra.mxu0 0.0
    %5530 = vmatprep.subr.mxu0 0.0
    %5531 = vmatpush1.msra.mxu0 0.0
    %5532 = vmatprep.subr.mxu0 0.0
    %5533 = vmatpush1.msra.mxu0 0.0
    %5534 = vmatprep.subr.mxu0 0.0
    %5535 = vmatpush1.msra.mxu0 0.0
    %5536 = vmatprep.subr.mxu0 0.0
    %5537 = vmatpush1.msra.mxu0 0.0
    %5538 = vmatprep.subr.mxu0 0.0
    %5539 = vmatpush1.msra.mxu0 0.0
    %5540 = vmatprep.subr.mxu0 0.0
    %5541 = vmatpush1.msra.mxu0 0.0
    %5542 = vmatprep.subr.mxu0 0.0
    %5543 = vmatpush1.msra.mxu0 0.0
    %5544 = vmatprep.subr.mxu0 0.0
    %5545 = vmatpush1.msra.mxu0 0.0
    %5546 = vmatprep.subr.mxu0 0.0
    %5547 = vmatpush1.msra.mxu0 0.0
    %5548 = vmatprep.subr.mxu0 0.0
    %5549 = vmatpush1.msra.mxu0 0.0
    %5550 = vmatprep.subr.mxu0 0.0
    %5551 = vmatpush1.msra.mxu0 0.0
    %5552 = vmatprep.subr.mxu0 0.0
    %5553 = vmatpush1.msra.mxu0 0.0
    %5554 = vmatprep.subr.mxu0 0.0
    %5555 = vmatpush1.msra.mxu0 0.0
    %5556 = vmatprep.subr.mxu0 0.0
    %5557 = vmatpush1.msra.mxu0 0.0
    %5558 = vmatprep.subr.mxu0 0.0
    %5559 = vmatpush1.msra.mxu0 0.0
    %5560 = vmatprep.subr.mxu0 0.0
    %5561 = vmatpush1.msra.mxu0 0.0
    %5562 = vmatprep.subr.mxu0 0.0
    %5563 = vmatpush1.msra.mxu0 0.0
    %5564 = vmatprep.subr.mxu0 0.0
    %5565 = vmatpush1.msra.mxu0 0.0
    %5566 = vmatprep.subr.mxu0 0.0
    %5567 = vmatpush1.msra.mxu0 0.0
    %5568 = vmatprep.mubr.f32.mxu0 0.0
    %5569 = vmatmul.mubr.f32.gmra.mrb[0].mxu0 %v5499
    %v5570 = vpop.f32.mrb[0].mxu0
    %v5571 = vadd.f32 0.0, %v5570
    %v5572 = vpop.f32.mrb[0].mxu0
    %5573 = vmatprep.mubr.f32.mxu0 0.0
    %5574 = vmatmul.mubr.f32.gmra.mrb[0].mxu0 %v5502
    %v5575 = vpop.f32.mrb[0].mxu0
    %v5576 = vadd.f32 0.0, %v5575
    %v5577 = vpop.f32.mrb[0].mxu0
    %5578 = vdwg.mxu0
    %v5580 = vsel %vm2065, %v5088, 0
    %v5583 = vsel %vm2065, %v5161, 0
    %5585 = vmatprep.subr.mxu0 0.0
    %5586 = vmatpush1.msra.mxu0 %v4310
    %5587 = vmatprep.subr.mxu0 0.0
    %5588 = vmatpush1.msra.mxu0 %v4311
    %5589 = vmatprep.subr.mxu0 0.0
    %5590 = vmatpush1.msra.mxu0 %v4312
    %5591 = vmatprep.subr.mxu0 0.0
    %5592 = vmatpush1.msra.mxu0 %v4313
    %5593 = vmatprep.subr.mxu0 0.0
    %5594 = vmatpush1.msra.mxu0 %v4314
    %5595 = vmatprep.subr.mxu0 0.0
    %5596 = vmatpush1.msra.mxu0 %v4315
    %5597 = vmatprep.subr.mxu0 0.0
    %5598 = vmatpush1.msra.mxu0 %v4316
    %5599 = vmatprep.subr.mxu0 0.0
    %5600 = vmatpush1.msra.mxu0 %v4317
    %5601 = vmatprep.subr.mxu0 0.0
    %5602 = vmatpush1.msra.mxu0 0.0
    %5603 = vmatprep.subr.mxu0 0.0
    %5604 = vmatpush1.msra.mxu0 0.0
    %5605 = vmatprep.subr.mxu0 0.0
    %5606 = vmatpush1.msra.mxu0 0.0
    %5607 = vmatprep.subr.mxu0 0.0
    %5608 = vmatpush1.msra.mxu0 0.0
    %5609 = vmatprep.subr.mxu0 0.0
    %5610 = vmatpush1.msra.mxu0 0.0
    %5611 = vmatprep.subr.mxu0 0.0
    %5612 = vmatpush1.msra.mxu0 0.0
    %5613 = vmatprep.subr.mxu0 0.0
    %5614 = vmatpush1.msra.mxu0 0.0
    %5615 = vmatprep.subr.mxu0 0.0
    %5616 = vmatpush1.msra.mxu0 0.0
    %5617 = vmatprep.subr.mxu0 0.0
    %5618 = vmatpush1.msra.mxu0 0.0
    %5619 = vmatprep.subr.mxu0 0.0
    %5620 = vmatpush1.msra.mxu0 0.0
    %5621 = vmatprep.subr.mxu0 0.0
    %5622 = vmatpush1.msra.mxu0 0.0
    %5623 = vmatprep.subr.mxu0 0.0
    %5624 = vmatpush1.msra.mxu0 0.0
    %5625 = vmatprep.subr.mxu0 0.0
    %5626 = vmatpush1.msra.mxu0 0.0
    %5627 = vmatprep.subr.mxu0 0.0
    %5628 = vmatpush1.msra.mxu0 0.0
    %5629 = vmatprep.subr.mxu0 0.0
    %5630 = vmatpush1.msra.mxu0 0.0
    %5631 = vmatprep.subr.mxu0 0.0
    %5632 = vmatpush1.msra.mxu0 0.0
    %5633 = vmatprep.subr.mxu0 0.0
    %5634 = vmatpush1.msra.mxu0 0.0
    %5635 = vmatprep.subr.mxu0 0.0
    %5636 = vmatpush1.msra.mxu0 0.0
    %5637 = vmatprep.subr.mxu0 0.0
    %5638 = vmatpush1.msra.mxu0 0.0
    %5639 = vmatprep.subr.mxu0 0.0
    %5640 = vmatpush1.msra.mxu0 0.0
    %5641 = vmatprep.subr.mxu0 0.0
    %5642 = vmatpush1.msra.mxu0 0.0
    %5643 = vmatprep.subr.mxu0 0.0
    %5644 = vmatpush1.msra.mxu0 0.0
    %5645 = vmatprep.subr.mxu0 0.0
    %5646 = vmatpush1.msra.mxu0 0.0
    %5647 = vmatprep.subr.mxu0 0.0
    %5648 = vmatpush1.msra.mxu0 0.0
    %5649 = vmatprep.mubr.f32.mxu0 0.0
    %5650 = vmatmul.mubr.f32.gmra.mrb[0].mxu0 %v5580
    %v5651 = vpop.f32.mrb[0].mxu0
    %v5652 = vadd.f32 %v5571, %v5651
    %v5653 = vpop.f32.mrb[0].mxu0
    %5654 = vmatprep.mubr.f32.mxu0 0.0
    %5655 = vmatmul.mubr.f32.gmra.mrb[0].mxu0 %v5583
    %v5656 = vpop.f32.mrb[0].mxu0
    %v5657 = vadd.f32 %v5576, %v5656
    %v5658 = vpop.f32.mrb[0].mxu0
    %5659 = vdwg.mxu0
    %v5661 = vsel %vm2065, %v4449, 0
    %v5664 = vsel %vm2065, %v4603, 0
    %5666 = vmatprep.subr.mxu0 0.0
    %5667 = vmatpush1.xpose.msra.mxu0 %v5664
    %5668 = vmatprep.subr.mxu0 0.0
    %5669 = vmatpush1.xpose.msra.mxu0 0.0
    %5670 = vmatprep.subr.mxu0 0.0
    %5671 = vmatpush1.xpose.msra.mxu0 0.0
    %5672 = vmatprep.subr.mxu0 0.0
    %5673 = vmatpush1.xpose.msra.mxu0 0.0
    %5674 = vmatprep.subr.mxu0 0.0
    %5675 = vmatpush1.xpose.msra.mxu0 0.0
    %5676 = vmatprep.subr.mxu0 0.0
    %5677 = vmatpush1.xpose.msra.mxu0 0.0
    %5678 = vmatprep.subr.mxu0 0.0
    %5679 = vmatpush1.xpose.msra.mxu0 0.0
    %5680 = vmatprep.subr.mxu0 0.0
    %5681 = vmatpush1.xpose.msra.mxu0 0.0
    %5682 = vmatprep.subr.mxu0 0.0
    %5683 = vmatpush1.xpose.msra.mxu0 0.0
    %5684 = vmatprep.subr.mxu0 0.0
    %5685 = vmatpush1.xpose.msra.mxu0 0.0
    %5686 = vmatprep.subr.mxu0 0.0
    %5687 = vmatpush1.xpose.msra.mxu0 0.0
    %5688 = vmatprep.subr.mxu0 0.0
    %5689 = vmatpush1.xpose.msra.mxu0 0.0
    %5690 = vmatprep.subr.mxu0 0.0
    %5691 = vmatpush1.xpose.msra.mxu0 0.0
    %5692 = vmatprep.subr.mxu0 0.0
    %5693 = vmatpush1.xpose.msra.mxu0 0.0
    %5694 = vmatprep.subr.mxu0 0.0
    %5695 = vmatpush1.xpose.msra.mxu0 0.0
    %5696 = vmatprep.subr.mxu0 0.0
    %5697 = vmatpush1.xpose.msra.mxu0 0.0
    %5698 = vmatprep.subr.mxu0 0.0
    %5699 = vmatpush1.xpose.msra.mxu0 0.0
    %5700 = vmatprep.subr.mxu0 0.0
    %5701 = vmatpush1.xpose.msra.mxu0 0.0
    %5702 = vmatprep.subr.mxu0 0.0
    %5703 = vmatpush1.xpose.msra.mxu0 0.0
    %5704 = vmatprep.subr.mxu0 0.0
    %5705 = vmatpush1.xpose.msra.mxu0 0.0
    %5706 = vmatprep.subr.mxu0 0.0
    %5707 = vmatpush1.xpose.msra.mxu0 0.0
    %5708 = vmatprep.subr.mxu0 0.0
    %5709 = vmatpush1.xpose.msra.mxu0 0.0
    %5710 = vmatprep.subr.mxu0 0.0
    %5711 = vmatpush1.xpose.msra.mxu0 0.0
    %5712 = vmatprep.subr.mxu0 0.0
    %5713 = vmatpush1.xpose.msra.mxu0 0.0
    %5714 = vmatprep.subr.mxu0 0.0
    %5715 = vmatpush1.xpose.msra.mxu0 0.0
    %5716 = vmatprep.subr.mxu0 0.0
    %5717 = vmatpush1.xpose.msra.mxu0 0.0
    %5718 = vmatprep.subr.mxu0 0.0
    %5719 = vmatpush1.xpose.msra.mxu0 0.0
    %5720 = vmatprep.subr.mxu0 0.0
    %5721 = vmatpush1.xpose.msra.mxu0 0.0
    %5722 = vmatprep.subr.mxu0 0.0
    %5723 = vmatpush1.xpose.msra.mxu0 0.0
    %5724 = vmatprep.subr.mxu0 0.0
    %5725 = vmatpush1.xpose.msra.mxu0 0.0
    %5726 = vmatprep.subr.mxu0 0.0
    %5727 = vmatpush1.xpose.msra.mxu0 0.0
    %5728 = vmatprep.subr.mxu0 0.0
    %5729 = vmatpush1.xpose.msra.mxu0 0.0
    %5730 = vmatprep.mubr.f32.mxu0 0.0
    %5731 = vmatmul.mubr.f32.gmra.mrb[0].mxu0 %v5661
    %v5732 = vpop.f32.mrb[0].mxu0
    %v5733 = vadd.f32 0.0, %v5732
    %v5734 = vpop.f32.mrb[0].mxu0
    %5735 = vdwg.mxu0
    %v5737 = vsel %vm2065, %v4455, 0
    %v5740 = vsel %vm2065, %v4609, 0
    %5742 = vmatprep.subr.mxu0 0.0
    %5743 = vmatpush1.xpose.msra.mxu0 %v5740
    %5744 = vmatprep.subr.mxu0 0.0
    %5745 = vmatpush1.xpose.msra.mxu0 0.0
    %5746 = vmatprep.subr.mxu0 0.0
    %5747 = vmatpush1.xpose.msra.mxu0 0.0
    %5748 = vmatprep.subr.mxu0 0.0
    %5749 = vmatpush1.xpose.msra.mxu0 0.0
    %5750 = vmatprep.subr.mxu0 0.0
    %5751 = vmatpush1.xpose.msra.mxu0 0.0
    %5752 = vmatprep.subr.mxu0 0.0
    %5753 = vmatpush1.xpose.msra.mxu0 0.0
    %5754 = vmatprep.subr.mxu0 0.0
    %5755 = vmatpush1.xpose.msra.mxu0 0.0
    %5756 = vmatprep.subr.mxu0 0.0
    %5757 = vmatpush1.xpose.msra.mxu0 0.0
    %5758 = vmatprep.subr.mxu0 0.0
    %5759 = vmatpush1.xpose.msra.mxu0 0.0
    %5760 = vmatprep.subr.mxu0 0.0
    %5761 = vmatpush1.xpose.msra.mxu0 0.0
    %5762 = vmatprep.subr.mxu0 0.0
    %5763 = vmatpush1.xpose.msra.mxu0 0.0
    %5764 = vmatprep.subr.mxu0 0.0
    %5765 = vmatpush1.xpose.msra.mxu0 0.0
    %5766 = vmatprep.subr.mxu0 0.0
    %5767 = vmatpush1.xpose.msra.mxu0 0.0
    %5768 = vmatprep.subr.mxu0 0.0
    %5769 = vmatpush1.xpose.msra.mxu0 0.0
    %5770 = vmatprep.subr.mxu0 0.0
    %5771 = vmatpush1.xpose.msra.mxu0 0.0
    %5772 = vmatprep.subr.mxu0 0.0
    %5773 = vmatpush1.xpose.msra.mxu0 0.0
    %5774 = vmatprep.subr.mxu0 0.0
    %5775 = vmatpush1.xpose.msra.mxu0 0.0
    %5776 = vmatprep.subr.mxu0 0.0
    %5777 = vmatpush1.xpose.msra.mxu0 0.0
    %5778 = vmatprep.subr.mxu0 0.0
    %5779 = vmatpush1.xpose.msra.mxu0 0.0
    %5780 = vmatprep.subr.mxu0 0.0
    %5781 = vmatpush1.xpose.msra.mxu0 0.0
    %5782 = vmatprep.subr.mxu0 0.0
    %5783 = vmatpush1.xpose.msra.mxu0 0.0
    %5784 = vmatprep.subr.mxu0 0.0
    %5785 = vmatpush1.xpose.msra.mxu0 0.0
    %5786 = vmatprep.subr.mxu0 0.0
    %5787 = vmatpush1.xpose.msra.mxu0 0.0
    %5788 = vmatprep.subr.mxu0 0.0
    %5789 = vmatpush1.xpose.msra.mxu0 0.0
    %5790 = vmatprep.subr.mxu0 0.0
    %5791 = vmatpush1.xpose.msra.mxu0 0.0
    %5792 = vmatprep.subr.mxu0 0.0
    %5793 = vmatpush1.xpose.msra.mxu0 0.0
    %5794 = vmatprep.subr.mxu0 0.0
    %5795 = vmatpush1.xpose.msra.mxu0 0.0
    %5796 = vmatprep.subr.mxu0 0.0
    %5797 = vmatpush1.xpose.msra.mxu0 0.0
    %5798 = vmatprep.subr.mxu0 0.0
    %5799 = vmatpush1.xpose.msra.mxu0 0.0
    %5800 = vmatprep.subr.mxu0 0.0
    %5801 = vmatpush1.xpose.msra.mxu0 0.0
    %5802 = vmatprep.subr.mxu0 0.0
    %5803 = vmatpush1.xpose.msra.mxu0 0.0
    %5804 = vmatprep.subr.mxu0 0.0
    %5805 = vmatpush1.xpose.msra.mxu0 0.0
    %5806 = vmatprep.mubr.f32.mxu0 0.0
    %5807 = vmatmul.mubr.f32.gmra.mrb[0].mxu0 %v5737
    %v5808 = vpop.f32.mrb[0].mxu0
    %v5809 = vadd.f32 0.0, %v5808
    %v5810 = vpop.f32.mrb[0].mxu0
    %5811 = vdwg.mxu0
    %v5812 = vmul.f32 %v5733, 0.125
    %v5813 = vmul.f32 %v5809, 0.125
    %v5814 = vsel %vm221, %v5812, -inf
    %5815 = vmax.xlane.f32.xlu0 %v5814
    %v5816 = vpop.xlane.xlu0 %5815
    %v5817 = vsel %vm221, %v5813, -inf
    %5818 = vmax.xlane.f32.xlu0 %v5817
    %v5819 = vpop.xlane.xlu0 %5818
    %v5820 = vsub.f32 %v5812, %v5816
    %v5821 = vsub.f32 %v5813, %v5819
    %v5822 = vmul.f32 %v5820, 1.442695
    %v5823 = vpow.pop %v5822
    %v5824 = vmul.f32 %v5821, 1.442695
    %v5825 = vpow.pop %v5824
    %v5826 = vsel %vm221, %v5823, 0.0
    %5827 = vadd.xlane.f32.xlu0 %v5826
    %v5828 = vpop.xlane.xlu0 %5827
    %v5829 = vsel %vm221, %v5825, 0.0
    %5830 = vadd.xlane.f32.xlu0 %v5829
    %v5831 = vpop.xlane.xlu0 %5830
    %v5832 = vrcp.pop %v5828
    %v5833 = vrcp.pop %v5831
    %v5834 = vmul.f32 %v5823, %v5832
    %v5835 = vmul.f32 %v5825, %v5833
    %v5837 = vsel %vm221, %v5834, 0
    %5839 = vmatprep.subr.mxu0 0.0
    %5840 = vmatpush1.msra.mxu0 %v4757
    %5841 = vmatprep.subr.mxu0 0.0
    %5842 = vmatpush1.msra.mxu0 0.0
    %5843 = vmatprep.subr.mxu0 0.0
    %5844 = vmatpush1.msra.mxu0 0.0
    %5845 = vmatprep.subr.mxu0 0.0
    %5846 = vmatpush1.msra.mxu0 0.0
    %5847 = vmatprep.subr.mxu0 0.0
    %5848 = vmatpush1.msra.mxu0 0.0
    %5849 = vmatprep.subr.mxu0 0.0
    %5850 = vmatpush1.msra.mxu0 0.0
    %5851 = vmatprep.subr.mxu0 0.0
    %5852 = vmatpush1.msra.mxu0 0.0
    %5853 = vmatprep.subr.mxu0 0.0
    %5854 = vmatpush1.msra.mxu0 0.0
    %5855 = vmatprep.subr.mxu0 0.0
    %5856 = vmatpush1.msra.mxu0 0.0
    %5857 = vmatprep.subr.mxu0 0.0
    %5858 = vmatpush1.msra.mxu0 0.0
    %5859 = vmatprep.subr.mxu0 0.0
    %5860 = vmatpush1.msra.mxu0 0.0
    %5861 = vmatprep.subr.mxu0 0.0
    %5862 = vmatpush1.msra.mxu0 0.0
    %5863 = vmatprep.subr.mxu0 0.0
    %5864 = vmatpush1.msra.mxu0 0.0
    %5865 = vmatprep.subr.mxu0 0.0
    %5866 = vmatpush1.msra.mxu0 0.0
    %5867 = vmatprep.subr.mxu0 0.0
    %5868 = vmatpush1.msra.mxu0 0.0
    %5869 = vmatprep.subr.mxu0 0.0
    %5870 = vmatpush1.msra.mxu0 0.0
    %5871 = vmatprep.subr.mxu0 0.0
    %5872 = vmatpush1.msra.mxu0 0.0
    %5873 = vmatprep.subr.mxu0 0.0
    %5874 = vmatpush1.msra.mxu0 0.0
    %5875 = vmatprep.subr.mxu0 0.0
    %5876 = vmatpush1.msra.mxu0 0.0
    %5877 = vmatprep.subr.mxu0 0.0
    %5878 = vmatpush1.msra.mxu0 0.0
    %5879 = vmatprep.subr.mxu0 0.0
    %5880 = vmatpush1.msra.mxu0 0.0
    %5881 = vmatprep.subr.mxu0 0.0
    %5882 = vmatpush1.msra.mxu0 0.0
    %5883 = vmatprep.subr.mxu0 0.0
    %5884 = vmatpush1.msra.mxu0 0.0
    %5885 = vmatprep.subr.mxu0 0.0
    %5886 = vmatpush1.msra.mxu0 0.0
    %5887 = vmatprep.subr.mxu0 0.0
    %5888 = vmatpush1.msra.mxu0 0.0
    %5889 = vmatprep.subr.mxu0 0.0
    %5890 = vmatpush1.msra.mxu0 0.0
    %5891 = vmatprep.subr.mxu0 0.0
    %5892 = vmatpush1.msra.mxu0 0.0
    %5893 = vmatprep.subr.mxu0 0.0
    %5894 = vmatpush1.msra.mxu0 0.0
    %5895 = vmatprep.subr.mxu0 0.0
    %5896 = vmatpush1.msra.mxu0 0.0
    %5897 = vmatprep.subr.mxu0 0.0
    %5898 = vmatpush1.msra.mxu0 0.0
    %5899 = vmatprep.subr.mxu0 0.0
    %5900 = vmatpush1.msra.mxu0 0.0
    %5901 = vmatprep.subr.mxu0 0.0
    %5902 = vmatpush1.msra.mxu0 0.0
    %5903 = vmatprep.mubr.f32.mxu0 0.0
    %5904 = vmatmul.mubr.f32.gmra.mrb[0].mxu0 %v5837
    %v5905 = vpop.f32.mrb[0].mxu0
    %v5906 = vadd.f32 0.0, %v5905
    %v5907 = vpop.f32.mrb[0].mxu0
    %5908 = vdwg.mxu0
    %v5910 = vsel %vm221, %v5835, 0
    %5912 = vmatprep.subr.mxu0 0.0
    %5913 = vmatpush1.msra.mxu0 %v4763
    %5914 = vmatprep.subr.mxu0 0.0
    %5915 = vmatpush1.msra.mxu0 0.0
    %5916 = vmatprep.subr.mxu0 0.0
    %5917 = vmatpush1.msra.mxu0 0.0
    %5918 = vmatprep.subr.mxu0 0.0
    %5919 = vmatpush1.msra.mxu0 0.0
    %5920 = vmatprep.subr.mxu0 0.0
    %5921 = vmatpush1.msra.mxu0 0.0
    %5922 = vmatprep.subr.mxu0 0.0
    %5923 = vmatpush1.msra.mxu0 0.0
    %5924 = vmatprep.subr.mxu0 0.0
    %5925 = vmatpush1.msra.mxu0 0.0
    %5926 = vmatprep.subr.mxu0 0.0
    %5927 = vmatpush1.msra.mxu0 0.0
    %5928 = vmatprep.subr.mxu0 0.0
    %5929 = vmatpush1.msra.mxu0 0.0
    %5930 = vmatprep.subr.mxu0 0.0
    %5931 = vmatpush1.msra.mxu0 0.0
    %5932 = vmatprep.subr.mxu0 0.0
    %5933 = vmatpush1.msra.mxu0 0.0
    %5934 = vmatprep.subr.mxu0 0.0
    %5935 = vmatpush1.msra.mxu0 0.0
    %5936 = vmatprep.subr.mxu0 0.0
    %5937 = vmatpush1.msra.mxu0 0.0
    %5938 = vmatprep.subr.mxu0 0.0
    %5939 = vmatpush1.msra.mxu0 0.0
    %5940 = vmatprep.subr.mxu0 0.0
    %5941 = vmatpush1.msra.mxu0 0.0
    %5942 = vmatprep.subr.mxu0 0.0
    %5943 = vmatpush1.msra.mxu0 0.0
    %5944 = vmatprep.subr.mxu0 0.0
    %5945 = vmatpush1.msra.mxu0 0.0
    %5946 = vmatprep.subr.mxu0 0.0
    %5947 = vmatpush1.msra.mxu0 0.0
    %5948 = vmatprep.subr.mxu0 0.0
    %5949 = vmatpush1.msra.mxu0 0.0
    %5950 = vmatprep.subr.mxu0 0.0
    %5951 = vmatpush1.msra.mxu0 0.0
    %5952 = vmatprep.subr.mxu0 0.0
    %5953 = vmatpush1.msra.mxu0 0.0
    %5954 = vmatprep.subr.mxu0 0.0
    %5955 = vmatpush1.msra.mxu0 0.0
    %5956 = vmatprep.subr.mxu0 0.0
    %5957 = vmatpush1.msra.mxu0 0.0
    %5958 = vmatprep.subr.mxu0 0.0
    %5959 = vmatpush1.msra.mxu0 0.0
    %5960 = vmatprep.subr.mxu0 0.0
    %5961 = vmatpush1.msra.mxu0 0.0
    %5962 = vmatprep.subr.mxu0 0.0
    %5963 = vmatpush1.msra.mxu0 0.0
    %5964 = vmatprep.subr.mxu0 0.0
    %5965 = vmatpush1.msra.mxu0 0.0
    %5966 = vmatprep.subr.mxu0 0.0
    %5967 = vmatpush1.msra.mxu0 0.0
    %5968 = vmatprep.subr.mxu0 0.0
    %5969 = vmatpush1.msra.mxu0 0.0
    %5970 = vmatprep.subr.mxu0 0.0
    %5971 = vmatpush1.msra.mxu0 0.0
    %5972 = vmatprep.subr.mxu0 0.0
    %5973 = vmatpush1.msra.mxu0 0.0
    %5974 = vmatprep.subr.mxu0 0.0
    %5975 = vmatpush1.msra.mxu0 0.0
    %5976 = vmatprep.mubr.f32.mxu0 0.0
    %5977 = vmatmul.mubr.f32.gmra.mrb[0].mxu0 %v5910
    %v5978 = vpop.f32.mrb[0].mxu0
    %v5979 = vadd.f32 0.0, %v5978
    %v5980 = vpop.f32.mrb[0].mxu0
    %5981 = vdwg.mxu0
    %v5983 = vsel %vm2065, %v5906, 0
    %v5986 = vsel %vm2065, %v5979, 0
    %5988 = vmatprep.subr.mxu0 0.0
    %5989 = vmatpush1.msra.mxu0 %v4326
    %5990 = vmatprep.subr.mxu0 0.0
    %5991 = vmatpush1.msra.mxu0 %v4327
    %5992 = vmatprep.subr.mxu0 0.0
    %5993 = vmatpush1.msra.mxu0 %v4328
    %5994 = vmatprep.subr.mxu0 0.0
    %5995 = vmatpush1.msra.mxu0 %v4329
    %5996 = vmatprep.subr.mxu0 0.0
    %5997 = vmatpush1.msra.mxu0 %v4330
    %5998 = vmatprep.subr.mxu0 0.0
    %5999 = vmatpush1.msra.mxu0 %v4331
    %6000 = vmatprep.subr.mxu0 0.0
    %6001 = vmatpush1.msra.mxu0 %v4332
    %6002 = vmatprep.subr.mxu0 0.0
    %6003 = vmatpush1.msra.mxu0 %v4333
    %6004 = vmatprep.subr.mxu0 0.0
    %6005 = vmatpush1.msra.mxu0 0.0
    %6006 = vmatprep.subr.mxu0 0.0
    %6007 = vmatpush1.msra.mxu0 0.0
    %6008 = vmatprep.subr.mxu0 0.0
    %6009 = vmatpush1.msra.mxu0 0.0
    %6010 = vmatprep.subr.mxu0 0.0
    %6011 = vmatpush1.msra.mxu0 0.0
    %6012 = vmatprep.subr.mxu0 0.0
    %6013 = vmatpush1.msra.mxu0 0.0
    %6014 = vmatprep.subr.mxu0 0.0
    %6015 = vmatpush1.msra.mxu0 0.0
    %6016 = vmatprep.subr.mxu0 0.0
    %6017 = vmatpush1.msra.mxu0 0.0
    %6018 = vmatprep.subr.mxu0 0.0
    %6019 = vmatpush1.msra.mxu0 0.0
    %6020 = vmatprep.subr.mxu0 0.0
    %6021 = vmatpush1.msra.mxu0 0.0
    %6022 = vmatprep.subr.mxu0 0.0
    %6023 = vmatpush1.msra.mxu0 0.0
    %6024 = vmatprep.subr.mxu0 0.0
    %6025 = vmatpush1.msra.mxu0 0.0
    %6026 = vmatprep.subr.mxu0 0.0
    %6027 = vmatpush1.msra.mxu0 0.0
    %6028 = vmatprep.subr.mxu0 0.0
    %6029 = vmatpush1.msra.mxu0 0.0
    %6030 = vmatprep.subr.mxu0 0.0
    %6031 = vmatpush1.msra.mxu0 0.0
    %6032 = vmatprep.subr.mxu0 0.0
    %6033 = vmatpush1.msra.mxu0 0.0
    %6034 = vmatprep.subr.mxu0 0.0
    %6035 = vmatpush1.msra.mxu0 0.0
    %6036 = vmatprep.subr.mxu0 0.0
    %6037 = vmatpush1.msra.mxu0 0.0
    %6038 = vmatprep.subr.mxu0 0.0
    %6039 = vmatpush1.msra.mxu0 0.0
    %6040 = vmatprep.subr.mxu0 0.0
    %6041 = vmatpush1.msra.mxu0 0.0
    %6042 = vmatprep.subr.mxu0 0.0
    %6043 = vmatpush1.msra.mxu0 0.0
    %6044 = vmatprep.subr.mxu0 0.0
    %6045 = vmatpush1.msra.mxu0 0.0
    %6046 = vmatprep.subr.mxu0 0.0
    %6047 = vmatpush1.msra.mxu0 0.0
    %6048 = vmatprep.subr.mxu0 0.0
    %6049 = vmatpush1.msra.mxu0 0.0
    %6050 = vmatprep.subr.mxu0 0.0
    %6051 = vmatpush1.msra.mxu0 0.0
    %6052 = vmatprep.mubr.f32.mxu0 0.0
    %6053 = vmatmul.mubr.f32.gmra.mrb[0].mxu0 %v5983
    %v6054 = vpop.f32.mrb[0].mxu0
    %v6055 = vadd.f32 0.0, %v6054
    %v6056 = vpop.f32.mrb[0].mxu0
    %6057 = vmatprep.mubr.f32.mxu0 0.0
    %6058 = vmatmul.mubr.f32.gmra.mrb[0].mxu0 %v5986
    %v6059 = vpop.f32.mrb[0].mxu0
    %v6060 = vadd.f32 0.0, %v6059
    %v6061 = vpop.f32.mrb[0].mxu0
    %6062 = vdwg.mxu0
    %v6063 = vadd.f32 %v5652, %v6055
    %v6064 = vadd.f32 %v5657, %v6060
    %6065 = vrot.lane.b32.xlu0 %v4449, 64
    %v6066 = vpop.permute.xlu0 %6065
    %6067 = vrot.lane.b32.xlu0 %v4603, 64
    %v6068 = vpop.permute.xlu0 %6067
    %v6069 = vsel %vm2065, %v6066, 0
    %v6071 = vsel %vm2065, %v6068, 0
    %6073 = vmatprep.subr.mxu0 0.0
    %6074 = vmatpush1.xpose.msra.mxu0 %v6071
    %6075 = vmatprep.subr.mxu0 0.0
    %6076 = vmatpush1.xpose.msra.mxu0 0.0
    %6077 = vmatprep.subr.mxu0 0.0
    %6078 = vmatpush1.xpose.msra.mxu0 0.0
    %6079 = vmatprep.subr.mxu0 0.0
    %6080 = vmatpush1.xpose.msra.mxu0 0.0
    %6081 = vmatprep.subr.mxu0 0.0
    %6082 = vmatpush1.xpose.msra.mxu0 0.0
    %6083 = vmatprep.subr.mxu0 0.0
    %6084 = vmatpush1.xpose.msra.mxu0 0.0
    %6085 = vmatprep.subr.mxu0 0.0
    %6086 = vmatpush1.xpose.msra.mxu0 0.0
    %6087 = vmatprep.subr.mxu0 0.0
    %6088 = vmatpush1.xpose.msra.mxu0 0.0
    %6089 = vmatprep.subr.mxu0 0.0
    %6090 = vmatpush1.xpose.msra.mxu0 0.0
    %6091 = vmatprep.subr.mxu0 0.0
    %6092 = vmatpush1.xpose.msra.mxu0 0.0
    %6093 = vmatprep.subr.mxu0 0.0
    %6094 = vmatpush1.xpose.msra.mxu0 0.0
    %6095 = vmatprep.subr.mxu0 0.0
    %6096 = vmatpush1.xpose.msra.mxu0 0.0
    %6097 = vmatprep.subr.mxu0 0.0
    %6098 = vmatpush1.xpose.msra.mxu0 0.0
    %6099 = vmatprep.subr.mxu0 0.0
    %6100 = vmatpush1.xpose.msra.mxu0 0.0
    %6101 = vmatprep.subr.mxu0 0.0
    %6102 = vmatpush1.xpose.msra.mxu0 0.0
    %6103 = vmatprep.subr.mxu0 0.0
    %6104 = vmatpush1.xpose.msra.mxu0 0.0
    %6105 = vmatprep.subr.mxu0 0.0
    %6106 = vmatpush1.xpose.msra.mxu0 0.0
    %6107 = vmatprep.subr.mxu0 0.0
    %6108 = vmatpush1.xpose.msra.mxu0 0.0
    %6109 = vmatprep.subr.mxu0 0.0
    %6110 = vmatpush1.xpose.msra.mxu0 0.0
    %6111 = vmatprep.subr.mxu0 0.0
    %6112 = vmatpush1.xpose.msra.mxu0 0.0
    %6113 = vmatprep.subr.mxu0 0.0
    %6114 = vmatpush1.xpose.msra.mxu0 0.0
    %6115 = vmatprep.subr.mxu0 0.0
    %6116 = vmatpush1.xpose.msra.mxu0 0.0
    %6117 = vmatprep.subr.mxu0 0.0
    %6118 = vmatpush1.xpose.msra.mxu0 0.0
    %6119 = vmatprep.subr.mxu0 0.0
    %6120 = vmatpush1.xpose.msra.mxu0 0.0
    %6121 = vmatprep.subr.mxu0 0.0
    %6122 = vmatpush1.xpose.msra.mxu0 0.0
    %6123 = vmatprep.subr.mxu0 0.0
    %6124 = vmatpush1.xpose.msra.mxu0 0.0
    %6125 = vmatprep.subr.mxu0 0.0
    %6126 = vmatpush1.xpose.msra.mxu0 0.0
    %6127 = vmatprep.subr.mxu0 0.0
    %6128 = vmatpush1.xpose.msra.mxu0 0.0
    %6129 = vmatprep.subr.mxu0 0.0
    %6130 = vmatpush1.xpose.msra.mxu0 0.0
    %6131 = vmatprep.subr.mxu0 0.0
    %6132 = vmatpush1.xpose.msra.mxu0 0.0
    %6133 = vmatprep.subr.mxu0 0.0
    %6134 = vmatpush1.xpose.msra.mxu0 0.0
    %6135 = vmatprep.subr.mxu0 0.0
    %6136 = vmatpush1.xpose.msra.mxu0 0.0
    %6137 = vmatprep.mubr.f32.mxu0 0.0
    %6138 = vmatmul.mubr.f32.gmra.mrb[0].mxu0 %v6069
    %v6139 = vpop.f32.mrb[0].mxu0
    %v6140 = vadd.f32 0.0, %v6139
    %v6141 = vpop.f32.mrb[0].mxu0
    %6142 = vdwg.mxu0
    %6143 = vrot.lane.b32.xlu0 %v4455, 64
    %v6144 = vpop.permute.xlu0 %6143
    %6145 = vrot.lane.b32.xlu0 %v4609, 64
    %v6146 = vpop.permute.xlu0 %6145
    %v6147 = vsel %vm2065, %v6144, 0
    %v6149 = vsel %vm2065, %v6146, 0
    %6151 = vmatprep.subr.mxu0 0.0
    %6152 = vmatpush1.xpose.msra.mxu0 %v6149
    %6153 = vmatprep.subr.mxu0 0.0
    %6154 = vmatpush1.xpose.msra.mxu0 0.0
    %6155 = vmatprep.subr.mxu0 0.0
    %6156 = vmatpush1.xpose.msra.mxu0 0.0
    %6157 = vmatprep.subr.mxu0 0.0
    %6158 = vmatpush1.xpose.msra.mxu0 0.0
    %6159 = vmatprep.subr.mxu0 0.0
    %6160 = vmatpush1.xpose.msra.mxu0 0.0
    %6161 = vmatprep.subr.mxu0 0.0
    %6162 = vmatpush1.xpose.msra.mxu0 0.0
    %6163 = vmatprep.subr.mxu0 0.0
    %6164 = vmatpush1.xpose.msra.mxu0 0.0
    %6165 = vmatprep.subr.mxu0 0.0
    %6166 = vmatpush1.xpose.msra.mxu0 0.0
    %6167 = vmatprep.subr.mxu0 0.0
    %6168 = vmatpush1.xpose.msra.mxu0 0.0
    %6169 = vmatprep.subr.mxu0 0.0
    %6170 = vmatpush1.xpose.msra.mxu0 0.0
    %6171 = vmatprep.subr.mxu0 0.0
    %6172 = vmatpush1.xpose.msra.mxu0 0.0
    %6173 = vmatprep.subr.mxu0 0.0
    %6174 = vmatpush1.xpose.msra.mxu0 0.0
    %6175 = vmatprep.subr.mxu0 0.0
    %6176 = vmatpush1.xpose.msra.mxu0 0.0
    %6177 = vmatprep.subr.mxu0 0.0
    %6178 = vmatpush1.xpose.msra.mxu0 0.0
    %6179 = vmatprep.subr.mxu0 0.0
    %6180 = vmatpush1.xpose.msra.mxu0 0.0
    %6181 = vmatprep.subr.mxu0 0.0
    %6182 = vmatpush1.xpose.msra.mxu0 0.0
    %6183 = vmatprep.subr.mxu0 0.0
    %6184 = vmatpush1.xpose.msra.mxu0 0.0
    %6185 = vmatprep.subr.mxu0 0.0
    %6186 = vmatpush1.xpose.msra.mxu0 0.0
    %6187 = vmatprep.subr.mxu0 0.0
    %6188 = vmatpush1.xpose.msra.mxu0 0.0
    %6189 = vmatprep.subr.mxu0 0.0
    %6190 = vmatpush1.xpose.msra.mxu0 0.0
    %6191 = vmatprep.subr.mxu0 0.0
    %6192 = vmatpush1.xpose.msra.mxu0 0.0
    %6193 = vmatprep.subr.mxu0 0.0
    %6194 = vmatpush1.xpose.msra.mxu0 0.0
    %6195 = vmatprep.subr.mxu0 0.0
    %6196 = vmatpush1.xpose.msra.mxu0 0.0
    %6197 = vmatprep.subr.mxu0 0.0
    %6198 = vmatpush1.xpose.msra.mxu0 0.0
    %6199 = vmatprep.subr.mxu0 0.0
    %6200 = vmatpush1.xpose.msra.mxu0 0.0
    %6201 = vmatprep.subr.mxu0 0.0
    %6202 = vmatpush1.xpose.msra.mxu0 0.0
    %6203 = vmatprep.subr.mxu0 0.0
    %6204 = vmatpush1.xpose.msra.mxu0 0.0
    %6205 = vmatprep.subr.mxu0 0.0
    %6206 = vmatpush1.xpose.msra.mxu0 0.0
    %6207 = vmatprep.subr.mxu0 0.0
    %6208 = vmatpush1.xpose.msra.mxu0 0.0
    %6209 = vmatprep.subr.mxu0 0.0
    %6210 = vmatpush1.xpose.msra.mxu0 0.0
    %6211 = vmatprep.subr.mxu0 0.0
    %6212 = vmatpush1.xpose.msra.mxu0 0.0
    %6213 = vmatprep.subr.mxu0 0.0
    %6214 = vmatpush1.xpose.msra.mxu0 0.0
    %6215 = vmatprep.mubr.f32.mxu0 0.0
    %6216 = vmatmul.mubr.f32.gmra.mrb[0].mxu0 %v6147
    %v6217 = vpop.f32.mrb[0].mxu0
    %v6218 = vadd.f32 0.0, %v6217
    %v6219 = vpop.f32.mrb[0].mxu0
    %6220 = vdwg.mxu0
    %v6221 = vmul.f32 %v6140, 0.125
    %v6222 = vmul.f32 %v6218, 0.125
    %v6223 = vsel %vm221, %v6221, -inf
    %6224 = vmax.xlane.f32.xlu0 %v6223
    %v6225 = vpop.xlane.xlu0 %6224
    %v6226 = vsel %vm221, %v6222, -inf
    %6227 = vmax.xlane.f32.xlu0 %v6226
    %v6228 = vpop.xlane.xlu0 %6227
    %v6229 = vsub.f32 %v6221, %v6225
    %v6230 = vsub.f32 %v6222, %v6228
    %v6231 = vmul.f32 %v6229, 1.442695
    %v6232 = vpow.pop %v6231
    %v6233 = vmul.f32 %v6230, 1.442695
    %v6234 = vpow.pop %v6233
    %v6235 = vsel %vm221, %v6232, 0.0
    %6236 = vadd.xlane.f32.xlu0 %v6235
    %v6237 = vpop.xlane.xlu0 %6236
    %v6238 = vsel %vm221, %v6234, 0.0
    %6239 = vadd.xlane.f32.xlu0 %v6238
    %v6240 = vpop.xlane.xlu0 %6239
    %v6241 = vrcp.pop %v6237
    %v6242 = vrcp.pop %v6240
    %v6243 = vmul.f32 %v6232, %v6241
    %v6244 = vmul.f32 %v6234, %v6242
    %6246 = vrot.lane.b32.xlu0 %v4757, 64
    %v6247 = vpop.permute.xlu0 %6246
    %v6250 = vsel %vm221, %v6243, 0
    %6252 = vmatprep.subr.mxu0 0.0
    %6253 = vmatpush1.msra.mxu0 %v6247
    %6254 = vmatprep.subr.mxu0 0.0
    %6255 = vmatpush1.msra.mxu0 0.0
    %6256 = vmatprep.subr.mxu0 0.0
    %6257 = vmatpush1.msra.mxu0 0.0
    %6258 = vmatprep.subr.mxu0 0.0
    %6259 = vmatpush1.msra.mxu0 0.0
    %6260 = vmatprep.subr.mxu0 0.0
    %6261 = vmatpush1.msra.mxu0 0.0
    %6262 = vmatprep.subr.mxu0 0.0
    %6263 = vmatpush1.msra.mxu0 0.0
    %6264 = vmatprep.subr.mxu0 0.0
    %6265 = vmatpush1.msra.mxu0 0.0
    %6266 = vmatprep.subr.mxu0 0.0
    %6267 = vmatpush1.msra.mxu0 0.0
    %6268 = vmatprep.subr.mxu0 0.0
    %6269 = vmatpush1.msra.mxu0 0.0
    %6270 = vmatprep.subr.mxu0 0.0
    %6271 = vmatpush1.msra.mxu0 0.0
    %6272 = vmatprep.subr.mxu0 0.0
    %6273 = vmatpush1.msra.mxu0 0.0
    %6274 = vmatprep.subr.mxu0 0.0
    %6275 = vmatpush1.msra.mxu0 0.0
    %6276 = vmatprep.subr.mxu0 0.0
    %6277 = vmatpush1.msra.mxu0 0.0
    %6278 = vmatprep.subr.mxu0 0.0
    %6279 = vmatpush1.msra.mxu0 0.0
    %6280 = vmatprep.subr.mxu0 0.0
    %6281 = vmatpush1.msra.mxu0 0.0
    %6282 = vmatprep.subr.mxu0 0.0
    %6283 = vmatpush1.msra.mxu0 0.0
    %6284 = vmatprep.subr.mxu0 0.0
    %6285 = vmatpush1.msra.mxu0 0.0
    %6286 = vmatprep.subr.mxu0 0.0
    %6287 = vmatpush1.msra.mxu0 0.0
    %6288 = vmatprep.subr.mxu0 0.0
    %6289 = vmatpush1.msra.mxu0 0.0
    %6290 = vmatprep.subr.mxu0 0.0
    %6291 = vmatpush1.msra.mxu0 0.0
    %6292 = vmatprep.subr.mxu0 0.0
    %6293 = vmatpush1.msra.mxu0 0.0
    %6294 = vmatprep.subr.mxu0 0.0
    %6295 = vmatpush1.msra.mxu0 0.0
    %6296 = vmatprep.subr.mxu0 0.0
    %6297 = vmatpush1.msra.mxu0 0.0
    %6298 = vmatprep.subr.mxu0 0.0
    %6299 = vmatpush1.msra.mxu0 0.0
    %6300 = vmatprep.subr.mxu0 0.0
    %6301 = vmatpush1.msra.mxu0 0.0
    %6302 = vmatprep.subr.mxu0 0.0
    %6303 = vmatpush1.msra.mxu0 0.0
    %6304 = vmatprep.subr.mxu0 0.0
    %6305 = vmatpush1.msra.mxu0 0.0
    %6306 = vmatprep.subr.mxu0 0.0
    %6307 = vmatpush1.msra.mxu0 0.0
    %6308 = vmatprep.subr.mxu0 0.0
    %6309 = vmatpush1.msra.mxu0 0.0
    %6310 = vmatprep.subr.mxu0 0.0
    %6311 = vmatpush1.msra.mxu0 0.0
    %6312 = vmatprep.subr.mxu0 0.0
    %6313 = vmatpush1.msra.mxu0 0.0
    %6314 = vmatprep.subr.mxu0 0.0
    %6315 = vmatpush1.msra.mxu0 0.0
    %6316 = vmatprep.mubr.f32.mxu0 0.0
    %6317 = vmatmul.mubr.f32.gmra.mrb[0].mxu0 %v6250
    %v6318 = vpop.f32.mrb[0].mxu0
    %v6319 = vadd.f32 0.0, %v6318
    %v6320 = vpop.f32.mrb[0].mxu0
    %6321 = vdwg.mxu0
    %6323 = vrot.lane.b32.xlu0 %v4763, 64
    %v6324 = vpop.permute.xlu0 %6323
    %v6327 = vsel %vm221, %v6244, 0
    %6329 = vmatprep.subr.mxu0 0.0
    %6330 = vmatpush1.msra.mxu0 %v6324
    %6331 = vmatprep.subr.mxu0 0.0
    %6332 = vmatpush1.msra.mxu0 0.0
    %6333 = vmatprep.subr.mxu0 0.0
    %6334 = vmatpush1.msra.mxu0 0.0
    %6335 = vmatprep.subr.mxu0 0.0
    %6336 = vmatpush1.msra.mxu0 0.0
    %6337 = vmatprep.subr.mxu0 0.0
    %6338 = vmatpush1.msra.mxu0 0.0
    %6339 = vmatprep.subr.mxu0 0.0
    %6340 = vmatpush1.msra.mxu0 0.0
    %6341 = vmatprep.subr.mxu0 0.0
    %6342 = vmatpush1.msra.mxu0 0.0
    %6343 = vmatprep.subr.mxu0 0.0
    %6344 = vmatpush1.msra.mxu0 0.0
    %6345 = vmatprep.subr.mxu0 0.0
    %6346 = vmatpush1.msra.mxu0 0.0
    %6347 = vmatprep.subr.mxu0 0.0
    %6348 = vmatpush1.msra.mxu0 0.0
    %6349 = vmatprep.subr.mxu0 0.0
    %6350 = vmatpush1.msra.mxu0 0.0
    %6351 = vmatprep.subr.mxu0 0.0
    %6352 = vmatpush1.msra.mxu0 0.0
    %6353 = vmatprep.subr.mxu0 0.0
    %6354 = vmatpush1.msra.mxu0 0.0
    %6355 = vmatprep.subr.mxu0 0.0
    %6356 = vmatpush1.msra.mxu0 0.0
    %6357 = vmatprep.subr.mxu0 0.0
    %6358 = vmatpush1.msra.mxu0 0.0
    %6359 = vmatprep.subr.mxu0 0.0
    %6360 = vmatpush1.msra.mxu0 0.0
    %6361 = vmatprep.subr.mxu0 0.0
    %6362 = vmatpush1.msra.mxu0 0.0
    %6363 = vmatprep.subr.mxu0 0.0
    %6364 = vmatpush1.msra.mxu0 0.0
    %6365 = vmatprep.subr.mxu0 0.0
    %6366 = vmatpush1.msra.mxu0 0.0
    %6367 = vmatprep.subr.mxu0 0.0
    %6368 = vmatpush1.msra.mxu0 0.0
    %6369 = vmatprep.subr.mxu0 0.0
    %6370 = vmatpush1.msra.mxu0 0.0
    %6371 = vmatprep.subr.mxu0 0.0
    %6372 = vmatpush1.msra.mxu0 0.0
    %6373 = vmatprep.subr.mxu0 0.0
    %6374 = vmatpush1.msra.mxu0 0.0
    %6375 = vmatprep.subr.mxu0 0.0
    %6376 = vmatpush1.msra.mxu0 0.0
    %6377 = vmatprep.subr.mxu0 0.0
    %6378 = vmatpush1.msra.mxu0 0.0
    %6379 = vmatprep.subr.mxu0 0.0
    %6380 = vmatpush1.msra.mxu0 0.0
    %6381 = vmatprep.subr.mxu0 0.0
    %6382 = vmatpush1.msra.mxu0 0.0
    %6383 = vmatprep.subr.mxu0 0.0
    %6384 = vmatpush1.msra.mxu0 0.0
    %6385 = vmatprep.subr.mxu0 0.0
    %6386 = vmatpush1.msra.mxu0 0.0
    %6387 = vmatprep.subr.mxu0 0.0
    %6388 = vmatpush1.msra.mxu0 0.0
    %6389 = vmatprep.subr.mxu0 0.0
    %6390 = vmatpush1.msra.mxu0 0.0
    %6391 = vmatprep.subr.mxu0 0.0
    %6392 = vmatpush1.msra.mxu0 0.0
    %6393 = vmatprep.mubr.f32.mxu0 0.0
    %6394 = vmatmul.mubr.f32.gmra.mrb[0].mxu0 %v6327
    %v6395 = vpop.f32.mrb[0].mxu0
    %v6396 = vadd.f32 0.0, %v6395
    %v6397 = vpop.f32.mrb[0].mxu0
    %6398 = vdwg.mxu0
    %v6400 = vsel %vm2065, %v6319, 0
    %v6403 = vsel %vm2065, %v6396, 0
    %6405 = vmatprep.subr.mxu0 0.0
    %6406 = vmatpush1.msra.mxu0 %v4334
    %6407 = vmatprep.subr.mxu0 0.0
    %6408 = vmatpush1.msra.mxu0 %v4335
    %6409 = vmatprep.subr.mxu0 0.0
    %6410 = vmatpush1.msra.mxu0 %v4336
    %6411 = vmatprep.subr.mxu0 0.0
    %6412 = vmatpush1.msra.mxu0 %v4337
    %6413 = vmatprep.subr.mxu0 0.0
    %6414 = vmatpush1.msra.mxu0 %v4338
    %6415 = vmatprep.subr.mxu0 0.0
    %6416 = vmatpush1.msra.mxu0 %v4339
    %6417 = vmatprep.subr.mxu0 0.0
    %6418 = vmatpush1.msra.mxu0 %v4340
    %6419 = vmatprep.subr.mxu0 0.0
    %6420 = vmatpush1.msra.mxu0 %v4341
    %6421 = vmatprep.subr.mxu0 0.0
    %6422 = vmatpush1.msra.mxu0 0.0
    %6423 = vmatprep.subr.mxu0 0.0
    %6424 = vmatpush1.msra.mxu0 0.0
    %6425 = vmatprep.subr.mxu0 0.0
    %6426 = vmatpush1.msra.mxu0 0.0
    %6427 = vmatprep.subr.mxu0 0.0
    %6428 = vmatpush1.msra.mxu0 0.0
    %6429 = vmatprep.subr.mxu0 0.0
    %6430 = vmatpush1.msra.mxu0 0.0
    %6431 = vmatprep.subr.mxu0 0.0
    %6432 = vmatpush1.msra.mxu0 0.0
    %6433 = vmatprep.subr.mxu0 0.0
    %6434 = vmatpush1.msra.mxu0 0.0
    %6435 = vmatprep.subr.mxu0 0.0
    %6436 = vmatpush1.msra.mxu0 0.0
    %6437 = vmatprep.subr.mxu0 0.0
    %6438 = vmatpush1.msra.mxu0 0.0
    %6439 = vmatprep.subr.mxu0 0.0
    %6440 = vmatpush1.msra.mxu0 0.0
    %6441 = vmatprep.subr.mxu0 0.0
    %6442 = vmatpush1.msra.mxu0 0.0
    %6443 = vmatprep.subr.mxu0 0.0
    %6444 = vmatpush1.msra.mxu0 0.0
    %6445 = vmatprep.subr.mxu0 0.0
    %6446 = vmatpush1.msra.mxu0 0.0
    %6447 = vmatprep.subr.mxu0 0.0
    %6448 = vmatpush1.msra.mxu0 0.0
    %6449 = vmatprep.subr.mxu0 0.0
    %6450 = vmatpush1.msra.mxu0 0.0
    %6451 = vmatprep.subr.mxu0 0.0
    %6452 = vmatpush1.msra.mxu0 0.0
    %6453 = vmatprep.subr.mxu0 0.0
    %6454 = vmatpush1.msra.mxu0 0.0
    %6455 = vmatprep.subr.mxu0 0.0
    %6456 = vmatpush1.msra.mxu0 0.0
    %6457 = vmatprep.subr.mxu0 0.0
    %6458 = vmatpush1.msra.mxu0 0.0
    %6459 = vmatprep.subr.mxu0 0.0
    %6460 = vmatpush1.msra.mxu0 0.0
    %6461 = vmatprep.subr.mxu0 0.0
    %6462 = vmatpush1.msra.mxu0 0.0
    %6463 = vmatprep.subr.mxu0 0.0
    %6464 = vmatpush1.msra.mxu0 0.0
    %6465 = vmatprep.subr.mxu0 0.0
    %6466 = vmatpush1.msra.mxu0 0.0
    %6467 = vmatprep.subr.mxu0 0.0
    %6468 = vmatpush1.msra.mxu0 0.0
    %6469 = vmatprep.mubr.f32.mxu0 0.0
    %6470 = vmatmul.mubr.f32.gmra.mrb[0].mxu0 %v6400
    %v6471 = vpop.f32.mrb[0].mxu0
    %v6472 = vadd.f32 0.0, %v6471
    %v6473 = vpop.f32.mrb[0].mxu0
    %6474 = vmatprep.mubr.f32.mxu0 0.0
    %6475 = vmatmul.mubr.f32.gmra.mrb[0].mxu0 %v6403
    %v6476 = vpop.f32.mrb[0].mxu0
    %v6477 = vadd.f32 0.0, %v6476
    %v6478 = vpop.f32.mrb[0].mxu0
    %6479 = vdwg.mxu0
    %v6480 = vadd.f32 %v6063, %v6472
    %v6481 = vadd.f32 %v6064, %v6477
    %v6483 = vsel %vm2065, %v4524, 0
    %v6486 = vsel %vm2065, %v4678, 0
    %6488 = vmatprep.subr.mxu0 0.0
    %6489 = vmatpush1.xpose.msra.mxu0 %v6486
    %6490 = vmatprep.subr.mxu0 0.0
    %6491 = vmatpush1.xpose.msra.mxu0 0.0
    %6492 = vmatprep.subr.mxu0 0.0
    %6493 = vmatpush1.xpose.msra.mxu0 0.0
    %6494 = vmatprep.subr.mxu0 0.0
    %6495 = vmatpush1.xpose.msra.mxu0 0.0
    %6496 = vmatprep.subr.mxu0 0.0
    %6497 = vmatpush1.xpose.msra.mxu0 0.0
    %6498 = vmatprep.subr.mxu0 0.0
    %6499 = vmatpush1.xpose.msra.mxu0 0.0
    %6500 = vmatprep.subr.mxu0 0.0
    %6501 = vmatpush1.xpose.msra.mxu0 0.0
    %6502 = vmatprep.subr.mxu0 0.0
    %6503 = vmatpush1.xpose.msra.mxu0 0.0
    %6504 = vmatprep.subr.mxu0 0.0
    %6505 = vmatpush1.xpose.msra.mxu0 0.0
    %6506 = vmatprep.subr.mxu0 0.0
    %6507 = vmatpush1.xpose.msra.mxu0 0.0
    %6508 = vmatprep.subr.mxu0 0.0
    %6509 = vmatpush1.xpose.msra.mxu0 0.0
    %6510 = vmatprep.subr.mxu0 0.0
    %6511 = vmatpush1.xpose.msra.mxu0 0.0
    %6512 = vmatprep.subr.mxu0 0.0
    %6513 = vmatpush1.xpose.msra.mxu0 0.0
    %6514 = vmatprep.subr.mxu0 0.0
    %6515 = vmatpush1.xpose.msra.mxu0 0.0
    %6516 = vmatprep.subr.mxu0 0.0
    %6517 = vmatpush1.xpose.msra.mxu0 0.0
    %6518 = vmatprep.subr.mxu0 0.0
    %6519 = vmatpush1.xpose.msra.mxu0 0.0
    %6520 = vmatprep.subr.mxu0 0.0
    %6521 = vmatpush1.xpose.msra.mxu0 0.0
    %6522 = vmatprep.subr.mxu0 0.0
    %6523 = vmatpush1.xpose.msra.mxu0 0.0
    %6524 = vmatprep.subr.mxu0 0.0
    %6525 = vmatpush1.xpose.msra.mxu0 0.0
    %6526 = vmatprep.subr.mxu0 0.0
    %6527 = vmatpush1.xpose.msra.mxu0 0.0
    %6528 = vmatprep.subr.mxu0 0.0
    %6529 = vmatpush1.xpose.msra.mxu0 0.0
    %6530 = vmatprep.subr.mxu0 0.0
    %6531 = vmatpush1.xpose.msra.mxu0 0.0
    %6532 = vmatprep.subr.mxu0 0.0
    %6533 = vmatpush1.xpose.msra.mxu0 0.0
    %6534 = vmatprep.subr.mxu0 0.0
    %6535 = vmatpush1.xpose.msra.mxu0 0.0
    %6536 = vmatprep.subr.mxu0 0.0
    %6537 = vmatpush1.xpose.msra.mxu0 0.0
    %6538 = vmatprep.subr.mxu0 0.0
    %6539 = vmatpush1.xpose.msra.mxu0 0.0
    %6540 = vmatprep.subr.mxu0 0.0
    %6541 = vmatpush1.xpose.msra.mxu0 0.0
    %6542 = vmatprep.subr.mxu0 0.0
    %6543 = vmatpush1.xpose.msra.mxu0 0.0
    %6544 = vmatprep.subr.mxu0 0.0
    %6545 = vmatpush1.xpose.msra.mxu0 0.0
    %6546 = vmatprep.subr.mxu0 0.0
    %6547 = vmatpush1.xpose.msra.mxu0 0.0
    %6548 = vmatprep.subr.mxu0 0.0
    %6549 = vmatpush1.xpose.msra.mxu0 0.0
    %6550 = vmatprep.subr.mxu0 0.0
    %6551 = vmatpush1.xpose.msra.mxu0 0.0
    %6552 = vmatprep.mubr.f32.mxu0 0.0
    %6553 = vmatmul.mubr.f32.gmra.mrb[0].mxu0 %v6483
    %v6554 = vpop.f32.mrb[0].mxu0
    %v6555 = vadd.f32 0.0, %v6554
    %v6556 = vpop.f32.mrb[0].mxu0
    %6557 = vdwg.mxu0
    %v6559 = vsel %vm2065, %v4530, 0
    %v6562 = vsel %vm2065, %v4684, 0
    %6564 = vmatprep.subr.mxu0 0.0
    %6565 = vmatpush1.xpose.msra.mxu0 %v6562
    %6566 = vmatprep.subr.mxu0 0.0
    %6567 = vmatpush1.xpose.msra.mxu0 0.0
    %6568 = vmatprep.subr.mxu0 0.0
    %6569 = vmatpush1.xpose.msra.mxu0 0.0
    %6570 = vmatprep.subr.mxu0 0.0
    %6571 = vmatpush1.xpose.msra.mxu0 0.0
    %6572 = vmatprep.subr.mxu0 0.0
    %6573 = vmatpush1.xpose.msra.mxu0 0.0
    %6574 = vmatprep.subr.mxu0 0.0
    %6575 = vmatpush1.xpose.msra.mxu0 0.0
    %6576 = vmatprep.subr.mxu0 0.0
    %6577 = vmatpush1.xpose.msra.mxu0 0.0
    %6578 = vmatprep.subr.mxu0 0.0
    %6579 = vmatpush1.xpose.msra.mxu0 0.0
    %6580 = vmatprep.subr.mxu0 0.0
    %6581 = vmatpush1.xpose.msra.mxu0 0.0
    %6582 = vmatprep.subr.mxu0 0.0
    %6583 = vmatpush1.xpose.msra.mxu0 0.0
    %6584 = vmatprep.subr.mxu0 0.0
    %6585 = vmatpush1.xpose.msra.mxu0 0.0
    %6586 = vmatprep.subr.mxu0 0.0
    %6587 = vmatpush1.xpose.msra.mxu0 0.0
    %6588 = vmatprep.subr.mxu0 0.0
    %6589 = vmatpush1.xpose.msra.mxu0 0.0
    %6590 = vmatprep.subr.mxu0 0.0
    %6591 = vmatpush1.xpose.msra.mxu0 0.0
    %6592 = vmatprep.subr.mxu0 0.0
    %6593 = vmatpush1.xpose.msra.mxu0 0.0
    %6594 = vmatprep.subr.mxu0 0.0
    %6595 = vmatpush1.xpose.msra.mxu0 0.0
    %6596 = vmatprep.subr.mxu0 0.0
    %6597 = vmatpush1.xpose.msra.mxu0 0.0
    %6598 = vmatprep.subr.mxu0 0.0
    %6599 = vmatpush1.xpose.msra.mxu0 0.0
    %6600 = vmatprep.subr.mxu0 0.0
    %6601 = vmatpush1.xpose.msra.mxu0 0.0
    %6602 = vmatprep.subr.mxu0 0.0
    %6603 = vmatpush1.xpose.msra.mxu0 0.0
    %6604 = vmatprep.subr.mxu0 0.0
    %6605 = vmatpush1.xpose.msra.mxu0 0.0
    %6606 = vmatprep.subr.mxu0 0.0
    %6607 = vmatpush1.xpose.msra.mxu0 0.0
    %6608 = vmatprep.subr.mxu0 0.0
    %6609 = vmatpush1.xpose.msra.mxu0 0.0
    %6610 = vmatprep.subr.mxu0 0.0
    %6611 = vmatpush1.xpose.msra.mxu0 0.0
    %6612 = vmatprep.subr.mxu0 0.0
    %6613 = vmatpush1.xpose.msra.mxu0 0.0
    %6614 = vmatprep.subr.mxu0 0.0
    %6615 = vmatpush1.xpose.msra.mxu0 0.0
    %6616 = vmatprep.subr.mxu0 0.0
    %6617 = vmatpush1.xpose.msra.mxu0 0.0
    %6618 = vmatprep.subr.mxu0 0.0
    %6619 = vmatpush1.xpose.msra.mxu0 0.0
    %6620 = vmatprep.subr.mxu0 0.0
    %6621 = vmatpush1.xpose.msra.mxu0 0.0
    %6622 = vmatprep.subr.mxu0 0.0
    %6623 = vmatpush1.xpose.msra.mxu0 0.0
    %6624 = vmatprep.subr.mxu0 0.0
    %6625 = vmatpush1.xpose.msra.mxu0 0.0
    %6626 = vmatprep.subr.mxu0 0.0
    %6627 = vmatpush1.xpose.msra.mxu0 0.0
    %6628 = vmatprep.mubr.f32.mxu0 0.0
    %6629 = vmatmul.mubr.f32.gmra.mrb[0].mxu0 %v6559
    %v6630 = vpop.f32.mrb[0].mxu0
    %v6631 = vadd.f32 0.0, %v6630
    %v6632 = vpop.f32.mrb[0].mxu0
    %6633 = vdwg.mxu0
    %v6634 = vmul.f32 %v6555, 0.125
    %v6635 = vmul.f32 %v6631, 0.125
    %v6636 = vsel %vm221, %v6634, -inf
    %6637 = vmax.xlane.f32.xlu0 %v6636
    %v6638 = vpop.xlane.xlu0 %6637
    %v6639 = vsel %vm221, %v6635, -inf
    %6640 = vmax.xlane.f32.xlu0 %v6639
    %v6641 = vpop.xlane.xlu0 %6640
    %v6642 = vsub.f32 %v6634, %v6638
    %v6643 = vsub.f32 %v6635, %v6641
    %v6644 = vmul.f32 %v6642, 1.442695
    %v6645 = vpow.pop %v6644
    %v6646 = vmul.f32 %v6643, 1.442695
    %v6647 = vpow.pop %v6646
    %v6648 = vsel %vm221, %v6645, 0.0
    %6649 = vadd.xlane.f32.xlu0 %v6648
    %v6650 = vpop.xlane.xlu0 %6649
    %v6651 = vsel %vm221, %v6647, 0.0
    %6652 = vadd.xlane.f32.xlu0 %v6651
    %v6653 = vpop.xlane.xlu0 %6652
    %v6654 = vrcp.pop %v6650
    %v6655 = vrcp.pop %v6653
    %v6656 = vmul.f32 %v6645, %v6654
    %v6657 = vmul.f32 %v6647, %v6655
    %v6659 = vsel %vm221, %v6656, 0
    %6661 = vmatprep.subr.mxu0 0.0
    %6662 = vmatpush1.msra.mxu0 %v4832
    %6663 = vmatprep.subr.mxu0 0.0
    %6664 = vmatpush1.msra.mxu0 0.0
    %6665 = vmatprep.subr.mxu0 0.0
    %6666 = vmatpush1.msra.mxu0 0.0
    %6667 = vmatprep.subr.mxu0 0.0
    %6668 = vmatpush1.msra.mxu0 0.0
    %6669 = vmatprep.subr.mxu0 0.0
    %6670 = vmatpush1.msra.mxu0 0.0
    %6671 = vmatprep.subr.mxu0 0.0
    %6672 = vmatpush1.msra.mxu0 0.0
    %6673 = vmatprep.subr.mxu0 0.0
    %6674 = vmatpush1.msra.mxu0 0.0
    %6675 = vmatprep.subr.mxu0 0.0
    %6676 = vmatpush1.msra.mxu0 0.0
    %6677 = vmatprep.subr.mxu0 0.0
    %6678 = vmatpush1.msra.mxu0 0.0
    %6679 = vmatprep.subr.mxu0 0.0
    %6680 = vmatpush1.msra.mxu0 0.0
    %6681 = vmatprep.subr.mxu0 0.0
    %6682 = vmatpush1.msra.mxu0 0.0
    %6683 = vmatprep.subr.mxu0 0.0
    %6684 = vmatpush1.msra.mxu0 0.0
    %6685 = vmatprep.subr.mxu0 0.0
    %6686 = vmatpush1.msra.mxu0 0.0
    %6687 = vmatprep.subr.mxu0 0.0
    %6688 = vmatpush1.msra.mxu0 0.0
    %6689 = vmatprep.subr.mxu0 0.0
    %6690 = vmatpush1.msra.mxu0 0.0
    %6691 = vmatprep.subr.mxu0 0.0
    %6692 = vmatpush1.msra.mxu0 0.0
    %6693 = vmatprep.subr.mxu0 0.0
    %6694 = vmatpush1.msra.mxu0 0.0
    %6695 = vmatprep.subr.mxu0 0.0
    %6696 = vmatpush1.msra.mxu0 0.0
    %6697 = vmatprep.subr.mxu0 0.0
    %6698 = vmatpush1.msra.mxu0 0.0
    %6699 = vmatprep.subr.mxu0 0.0
    %6700 = vmatpush1.msra.mxu0 0.0
    %6701 = vmatprep.subr.mxu0 0.0
    %6702 = vmatpush1.msra.mxu0 0.0
    %6703 = vmatprep.subr.mxu0 0.0
    %6704 = vmatpush1.msra.mxu0 0.0
    %6705 = vmatprep.subr.mxu0 0.0
    %6706 = vmatpush1.msra.mxu0 0.0
    %6707 = vmatprep.subr.mxu0 0.0
    %6708 = vmatpush1.msra.mxu0 0.0
    %6709 = vmatprep.subr.mxu0 0.0
    %6710 = vmatpush1.msra.mxu0 0.0
    %6711 = vmatprep.subr.mxu0 0.0
    %6712 = vmatpush1.msra.mxu0 0.0
    %6713 = vmatprep.subr.mxu0 0.0
    %6714 = vmatpush1.msra.mxu0 0.0
    %6715 = vmatprep.subr.mxu0 0.0
    %6716 = vmatpush1.msra.mxu0 0.0
    %6717 = vmatprep.subr.mxu0 0.0
    %6718 = vmatpush1.msra.mxu0 0.0
    %6719 = vmatprep.subr.mxu0 0.0
    %6720 = vmatpush1.msra.mxu0 0.0
    %6721 = vmatprep.subr.mxu0 0.0
    %6722 = vmatpush1.msra.mxu0 0.0
    %6723 = vmatprep.subr.mxu0 0.0
    %6724 = vmatpush1.msra.mxu0 0.0
    %6725 = vmatprep.mubr.f32.mxu0 0.0
    %6726 = vmatmul.mubr.f32.gmra.mrb[0].mxu0 %v6659
    %v6727 = vpop.f32.mrb[0].mxu0
    %v6728 = vadd.f32 0.0, %v6727
    %v6729 = vpop.f32.mrb[0].mxu0
    %6730 = vdwg.mxu0
    %v6732 = vsel %vm221, %v6657, 0
    %6734 = vmatprep.subr.mxu0 0.0
    %6735 = vmatpush1.msra.mxu0 %v4838
    %6736 = vmatprep.subr.mxu0 0.0
    %6737 = vmatpush1.msra.mxu0 0.0
    %6738 = vmatprep.subr.mxu0 0.0
    %6739 = vmatpush1.msra.mxu0 0.0
    %6740 = vmatprep.subr.mxu0 0.0
    %6741 = vmatpush1.msra.mxu0 0.0
    %6742 = vmatprep.subr.mxu0 0.0
    %6743 = vmatpush1.msra.mxu0 0.0
    %6744 = vmatprep.subr.mxu0 0.0
    %6745 = vmatpush1.msra.mxu0 0.0
    %6746 = vmatprep.subr.mxu0 0.0
    %6747 = vmatpush1.msra.mxu0 0.0
    %6748 = vmatprep.subr.mxu0 0.0
    %6749 = vmatpush1.msra.mxu0 0.0
    %6750 = vmatprep.subr.mxu0 0.0
    %6751 = vmatpush1.msra.mxu0 0.0
    %6752 = vmatprep.subr.mxu0 0.0
    %6753 = vmatpush1.msra.mxu0 0.0
    %6754 = vmatprep.subr.mxu0 0.0
    %6755 = vmatpush1.msra.mxu0 0.0
    %6756 = vmatprep.subr.mxu0 0.0
    %6757 = vmatpush1.msra.mxu0 0.0
    %6758 = vmatprep.subr.mxu0 0.0
    %6759 = vmatpush1.msra.mxu0 0.0
    %6760 = vmatprep.subr.mxu0 0.0
    %6761 = vmatpush1.msra.mxu0 0.0
    %6762 = vmatprep.subr.mxu0 0.0
    %6763 = vmatpush1.msra.mxu0 0.0
    %6764 = vmatprep.subr.mxu0 0.0
    %6765 = vmatpush1.msra.mxu0 0.0
    %6766 = vmatprep.subr.mxu0 0.0
    %6767 = vmatpush1.msra.mxu0 0.0
    %6768 = vmatprep.subr.mxu0 0.0
    %6769 = vmatpush1.msra.mxu0 0.0
    %6770 = vmatprep.subr.mxu0 0.0
    %6771 = vmatpush1.msra.mxu0 0.0
    %6772 = vmatprep.subr.mxu0 0.0
    %6773 = vmatpush1.msra.mxu0 0.0
    %6774 = vmatprep.subr.mxu0 0.0
    %6775 = vmatpush1.msra.mxu0 0.0
    %6776 = vmatprep.subr.mxu0 0.0
    %6777 = vmatpush1.msra.mxu0 0.0
    %6778 = vmatprep.subr.mxu0 0.0
    %6779 = vmatpush1.msra.mxu0 0.0
    %6780 = vmatprep.subr.mxu0 0.0
    %6781 = vmatpush1.msra.mxu0 0.0
    %6782 = vmatprep.subr.mxu0 0.0
    %6783 = vmatpush1.msra.mxu0 0.0
    %6784 = vmatprep.subr.mxu0 0.0
    %6785 = vmatpush1.msra.mxu0 0.0
    %6786 = vmatprep.subr.mxu0 0.0
    %6787 = vmatpush1.msra.mxu0 0.0
    %6788 = vmatprep.subr.mxu0 0.0
    %6789 = vmatpush1.msra.mxu0 0.0
    %6790 = vmatprep.subr.mxu0 0.0
    %6791 = vmatpush1.msra.mxu0 0.0
    %6792 = vmatprep.subr.mxu0 0.0
    %6793 = vmatpush1.msra.mxu0 0.0
    %6794 = vmatprep.subr.mxu0 0.0
    %6795 = vmatpush1.msra.mxu0 0.0
    %6796 = vmatprep.subr.mxu0 0.0
    %6797 = vmatpush1.msra.mxu0 0.0
    %6798 = vmatprep.mubr.f32.mxu0 0.0
    %6799 = vmatmul.mubr.f32.gmra.mrb[0].mxu0 %v6732
    %v6800 = vpop.f32.mrb[0].mxu0
    %v6801 = vadd.f32 0.0, %v6800
    %v6802 = vpop.f32.mrb[0].mxu0
    %6803 = vdwg.mxu0
    %v6805 = vsel %vm2065, %v6728, 0
    %v6808 = vsel %vm2065, %v6801, 0
    %6810 = vmatprep.subr.mxu0 0.0
    %6811 = vmatpush1.msra.mxu0 %v4342
    %6812 = vmatprep.subr.mxu0 0.0
    %6813 = vmatpush1.msra.mxu0 %v4343
    %6814 = vmatprep.subr.mxu0 0.0
    %6815 = vmatpush1.msra.mxu0 %v4344
    %6816 = vmatprep.subr.mxu0 0.0
    %6817 = vmatpush1.msra.mxu0 %v4345
    %6818 = vmatprep.subr.mxu0 0.0
    %6819 = vmatpush1.msra.mxu0 %v4346
    %6820 = vmatprep.subr.mxu0 0.0
    %6821 = vmatpush1.msra.mxu0 %v4347
    %6822 = vmatprep.subr.mxu0 0.0
    %6823 = vmatpush1.msra.mxu0 %v4348
    %6824 = vmatprep.subr.mxu0 0.0
    %6825 = vmatpush1.msra.mxu0 %v4349
    %6826 = vmatprep.subr.mxu0 0.0
    %6827 = vmatpush1.msra.mxu0 0.0
    %6828 = vmatprep.subr.mxu0 0.0
    %6829 = vmatpush1.msra.mxu0 0.0
    %6830 = vmatprep.subr.mxu0 0.0
    %6831 = vmatpush1.msra.mxu0 0.0
    %6832 = vmatprep.subr.mxu0 0.0
    %6833 = vmatpush1.msra.mxu0 0.0
    %6834 = vmatprep.subr.mxu0 0.0
    %6835 = vmatpush1.msra.mxu0 0.0
    %6836 = vmatprep.subr.mxu0 0.0
    %6837 = vmatpush1.msra.mxu0 0.0
    %6838 = vmatprep.subr.mxu0 0.0
    %6839 = vmatpush1.msra.mxu0 0.0
    %6840 = vmatprep.subr.mxu0 0.0
    %6841 = vmatpush1.msra.mxu0 0.0
    %6842 = vmatprep.subr.mxu0 0.0
    %6843 = vmatpush1.msra.mxu0 0.0
    %6844 = vmatprep.subr.mxu0 0.0
    %6845 = vmatpush1.msra.mxu0 0.0
    %6846 = vmatprep.subr.mxu0 0.0
    %6847 = vmatpush1.msra.mxu0 0.0
    %6848 = vmatprep.subr.mxu0 0.0
    %6849 = vmatpush1.msra.mxu0 0.0
    %6850 = vmatprep.subr.mxu0 0.0
    %6851 = vmatpush1.msra.mxu0 0.0
    %6852 = vmatprep.subr.mxu0 0.0
    %6853 = vmatpush1.msra.mxu0 0.0
    %6854 = vmatprep.subr.mxu0 0.0
    %6855 = vmatpush1.msra.mxu0 0.0
    %6856 = vmatprep.subr.mxu0 0.0
    %6857 = vmatpush1.msra.mxu0 0.0
    %6858 = vmatprep.subr.mxu0 0.0
    %6859 = vmatpush1.msra.mxu0 0.0
    %6860 = vmatprep.subr.mxu0 0.0
    %6861 = vmatpush1.msra.mxu0 0.0
    %6862 = vmatprep.subr.mxu0 0.0
    %6863 = vmatpush1.msra.mxu0 0.0
    %6864 = vmatprep.subr.mxu0 0.0
    %6865 = vmatpush1.msra.mxu0 0.0
    %6866 = vmatprep.subr.mxu0 0.0
    %6867 = vmatpush1.msra.mxu0 0.0
    %6868 = vmatprep.subr.mxu0 0.0
    %6869 = vmatpush1.msra.mxu0 0.0
    %6870 = vmatprep.subr.mxu0 0.0
    %6871 = vmatpush1.msra.mxu0 0.0
    %6872 = vmatprep.subr.mxu0 0.0
    %6873 = vmatpush1.msra.mxu0 0.0
    %6874 = vmatprep.mubr.f32.mxu0 0.0
    %6875 = vmatmul.mubr.f32.gmra.mrb[0].mxu0 %v6805
    %v6876 = vpop.f32.mrb[0].mxu0
    %v6877 = vadd.f32 0.0, %v6876
    %v6878 = vpop.f32.mrb[0].mxu0
    %6879 = vmatprep.mubr.f32.mxu0 0.0
    %6880 = vmatmul.mubr.f32.gmra.mrb[0].mxu0 %v6808
    %v6881 = vpop.f32.mrb[0].mxu0
    %v6882 = vadd.f32 0.0, %v6881
    %v6883 = vpop.f32.mrb[0].mxu0
    %6884 = vdwg.mxu0
    %v6885 = vadd.f32 %v6480, %v6877
    %v6886 = vadd.f32 %v6481, %v6882
    %6887 = vrot.lane.b32.xlu0 %v4524, 64
    %v6888 = vpop.permute.xlu0 %6887
    %6889 = vrot.lane.b32.xlu0 %v4678, 64
    %v6890 = vpop.permute.xlu0 %6889
    %v6891 = vsel %vm2065, %v6888, 0
    %v6893 = vsel %vm2065, %v6890, 0
    %6895 = vmatprep.subr.mxu0 0.0
    %6896 = vmatpush1.xpose.msra.mxu0 %v6893
    %6897 = vmatprep.subr.mxu0 0.0
    %6898 = vmatpush1.xpose.msra.mxu0 0.0
    %6899 = vmatprep.subr.mxu0 0.0
    %6900 = vmatpush1.xpose.msra.mxu0 0.0
    %6901 = vmatprep.subr.mxu0 0.0
    %6902 = vmatpush1.xpose.msra.mxu0 0.0
    %6903 = vmatprep.subr.mxu0 0.0
    %6904 = vmatpush1.xpose.msra.mxu0 0.0
    %6905 = vmatprep.subr.mxu0 0.0
    %6906 = vmatpush1.xpose.msra.mxu0 0.0
    %6907 = vmatprep.subr.mxu0 0.0
    %6908 = vmatpush1.xpose.msra.mxu0 0.0
    %6909 = vmatprep.subr.mxu0 0.0
    %6910 = vmatpush1.xpose.msra.mxu0 0.0
    %6911 = vmatprep.subr.mxu0 0.0
    %6912 = vmatpush1.xpose.msra.mxu0 0.0
    %6913 = vmatprep.subr.mxu0 0.0
    %6914 = vmatpush1.xpose.msra.mxu0 0.0
    %6915 = vmatprep.subr.mxu0 0.0
    %6916 = vmatpush1.xpose.msra.mxu0 0.0
    %6917 = vmatprep.subr.mxu0 0.0
    %6918 = vmatpush1.xpose.msra.mxu0 0.0
    %6919 = vmatprep.subr.mxu0 0.0
    %6920 = vmatpush1.xpose.msra.mxu0 0.0
    %6921 = vmatprep.subr.mxu0 0.0
    %6922 = vmatpush1.xpose.msra.mxu0 0.0
    %6923 = vmatprep.subr.mxu0 0.0
    %6924 = vmatpush1.xpose.msra.mxu0 0.0
    %6925 = vmatprep.subr.mxu0 0.0
    %6926 = vmatpush1.xpose.msra.mxu0 0.0
    %6927 = vmatprep.subr.mxu0 0.0
    %6928 = vmatpush1.xpose.msra.mxu0 0.0
    %6929 = vmatprep.subr.mxu0 0.0
    %6930 = vmatpush1.xpose.msra.mxu0 0.0
    %6931 = vmatprep.subr.mxu0 0.0
    %6932 = vmatpush1.xpose.msra.mxu0 0.0
    %6933 = vmatprep.subr.mxu0 0.0
    %6934 = vmatpush1.xpose.msra.mxu0 0.0
    %6935 = vmatprep.subr.mxu0 0.0
    %6936 = vmatpush1.xpose.msra.mxu0 0.0
    %6937 = vmatprep.subr.mxu0 0.0
    %6938 = vmatpush1.xpose.msra.mxu0 0.0
    %6939 = vmatprep.subr.mxu0 0.0
    %6940 = vmatpush1.xpose.msra.mxu0 0.0
    %6941 = vmatprep.subr.mxu0 0.0
    %6942 = vmatpush1.xpose.msra.mxu0 0.0
    %6943 = vmatprep.subr.mxu0 0.0
    %6944 = vmatpush1.xpose.msra.mxu0 0.0
    %6945 = vmatprep.subr.mxu0 0.0
    %6946 = vmatpush1.xpose.msra.mxu0 0.0
    %6947 = vmatprep.subr.mxu0 0.0
    %6948 = vmatpush1.xpose.msra.mxu0 0.0
    %6949 = vmatprep.subr.mxu0 0.0
    %6950 = vmatpush1.xpose.msra.mxu0 0.0
    %6951 = vmatprep.subr.mxu0 0.0
    %6952 = vmatpush1.xpose.msra.mxu0 0.0
    %6953 = vmatprep.subr.mxu0 0.0
    %6954 = vmatpush1.xpose.msra.mxu0 0.0
    %6955 = vmatprep.subr.mxu0 0.0
    %6956 = vmatpush1.xpose.msra.mxu0 0.0
    %6957 = vmatprep.subr.mxu0 0.0
    %6958 = vmatpush1.xpose.msra.mxu0 0.0
    %6959 = vmatprep.mubr.f32.mxu0 0.0
    %6960 = vmatmul.mubr.f32.gmra.mrb[0].mxu0 %v6891
    %v6961 = vpop.f32.mrb[0].mxu0
    %v6962 = vadd.f32 0.0, %v6961
    %v6963 = vpop.f32.mrb[0].mxu0
    %6964 = vdwg.mxu0
    %6965 = vrot.lane.b32.xlu0 %v4530, 64
    %v6966 = vpop.permute.xlu0 %6965
    %6967 = vrot.lane.b32.xlu0 %v4684, 64
    %v6968 = vpop.permute.xlu0 %6967
    %v6969 = vsel %vm2065, %v6966, 0
    %v6971 = vsel %vm2065, %v6968, 0
    %6973 = vmatprep.subr.mxu0 0.0
    %6974 = vmatpush1.xpose.msra.mxu0 %v6971
    %6975 = vmatprep.subr.mxu0 0.0
    %6976 = vmatpush1.xpose.msra.mxu0 0.0
    %6977 = vmatprep.subr.mxu0 0.0
    %6978 = vmatpush1.xpose.msra.mxu0 0.0
    %6979 = vmatprep.subr.mxu0 0.0
    %6980 = vmatpush1.xpose.msra.mxu0 0.0
    %6981 = vmatprep.subr.mxu0 0.0
    %6982 = vmatpush1.xpose.msra.mxu0 0.0
    %6983 = vmatprep.subr.mxu0 0.0
    %6984 = vmatpush1.xpose.msra.mxu0 0.0
    %6985 = vmatprep.subr.mxu0 0.0
    %6986 = vmatpush1.xpose.msra.mxu0 0.0
    %6987 = vmatprep.subr.mxu0 0.0
    %6988 = vmatpush1.xpose.msra.mxu0 0.0
    %6989 = vmatprep.subr.mxu0 0.0
    %6990 = vmatpush1.xpose.msra.mxu0 0.0
    %6991 = vmatprep.subr.mxu0 0.0
    %6992 = vmatpush1.xpose.msra.mxu0 0.0
    %6993 = vmatprep.subr.mxu0 0.0
    %6994 = vmatpush1.xpose.msra.mxu0 0.0
    %6995 = vmatprep.subr.mxu0 0.0
    %6996 = vmatpush1.xpose.msra.mxu0 0.0
    %6997 = vmatprep.subr.mxu0 0.0
    %6998 = vmatpush1.xpose.msra.mxu0 0.0
    %6999 = vmatprep.subr.mxu0 0.0
    %7000 = vmatpush1.xpose.msra.mxu0 0.0
    %7001 = vmatprep.subr.mxu0 0.0
    %7002 = vmatpush1.xpose.msra.mxu0 0.0
    %7003 = vmatprep.subr.mxu0 0.0
    %7004 = vmatpush1.xpose.msra.mxu0 0.0
    %7005 = vmatprep.subr.mxu0 0.0
    %7006 = vmatpush1.xpose.msra.mxu0 0.0
    %7007 = vmatprep.subr.mxu0 0.0
    %7008 = vmatpush1.xpose.msra.mxu0 0.0
    %7009 = vmatprep.subr.mxu0 0.0
    %7010 = vmatpush1.xpose.msra.mxu0 0.0
    %7011 = vmatprep.subr.mxu0 0.0
    %7012 = vmatpush1.xpose.msra.mxu0 0.0
    %7013 = vmatprep.subr.mxu0 0.0
    %7014 = vmatpush1.xpose.msra.mxu0 0.0
    %7015 = vmatprep.subr.mxu0 0.0
    %7016 = vmatpush1.xpose.msra.mxu0 0.0
    %7017 = vmatprep.subr.mxu0 0.0
    %7018 = vmatpush1.xpose.msra.mxu0 0.0
    %7019 = vmatprep.subr.mxu0 0.0
    %7020 = vmatpush1.xpose.msra.mxu0 0.0
    %7021 = vmatprep.subr.mxu0 0.0
    %7022 = vmatpush1.xpose.msra.mxu0 0.0
    %7023 = vmatprep.subr.mxu0 0.0
    %7024 = vmatpush1.xpose.msra.mxu0 0.0
    %7025 = vmatprep.subr.mxu0 0.0
    %7026 = vmatpush1.xpose.msra.mxu0 0.0
    %7027 = vmatprep.subr.mxu0 0.0
    %7028 = vmatpush1.xpose.msra.mxu0 0.0
    %7029 = vmatprep.subr.mxu0 0.0
    %7030 = vmatpush1.xpose.msra.mxu0 0.0
    %7031 = vmatprep.subr.mxu0 0.0
    %7032 = vmatpush1.xpose.msra.mxu0 0.0
    %7033 = vmatprep.subr.mxu0 0.0
    %7034 = vmatpush1.xpose.msra.mxu0 0.0
    %7035 = vmatprep.subr.mxu0 0.0
    %7036 = vmatpush1.xpose.msra.mxu0 0.0
    %7037 = vmatprep.mubr.f32.mxu0 0.0
    %7038 = vmatmul.mubr.f32.gmra.mrb[0].mxu0 %v6969
    %v7039 = vpop.f32.mrb[0].mxu0
    %v7040 = vadd.f32 0.0, %v7039
    %v7041 = vpop.f32.mrb[0].mxu0
    %7042 = vdwg.mxu0
    %v7043 = vmul.f32 %v6962, 0.125
    %v7044 = vmul.f32 %v7040, 0.125
    %v7045 = vsel %vm221, %v7043, -inf
    %7046 = vmax.xlane.f32.xlu0 %v7045
    %v7047 = vpop.xlane.xlu0 %7046
    %v7048 = vsel %vm221, %v7044, -inf
    %7049 = vmax.xlane.f32.xlu0 %v7048
    %v7050 = vpop.xlane.xlu0 %7049
    %v7051 = vsub.f32 %v7043, %v7047
    %v7052 = vsub.f32 %v7044, %v7050
    %v7053 = vmul.f32 %v7051, 1.442695
    %v7054 = vpow.pop %v7053
    %v7055 = vmul.f32 %v7052, 1.442695
    %v7056 = vpow.pop %v7055
    %v7057 = vsel %vm221, %v7054, 0.0
    %7058 = vadd.xlane.f32.xlu0 %v7057
    %v7059 = vpop.xlane.xlu0 %7058
    %v7060 = vsel %vm221, %v7056, 0.0
    %7061 = vadd.xlane.f32.xlu0 %v7060
    %v7062 = vpop.xlane.xlu0 %7061
    %v7063 = vrcp.pop %v7059
    %v7064 = vrcp.pop %v7062
    %v7065 = vmul.f32 %v7054, %v7063
    %v7066 = vmul.f32 %v7056, %v7064
    %7068 = vrot.lane.b32.xlu0 %v4832, 64
    %v7069 = vpop.permute.xlu0 %7068
    %v7072 = vsel %vm221, %v7065, 0
    %7074 = vmatprep.subr.mxu0 0.0
    %7075 = vmatpush1.msra.mxu0 %v7069
    %7076 = vmatprep.subr.mxu0 0.0
    %7077 = vmatpush1.msra.mxu0 0.0
    %7078 = vmatprep.subr.mxu0 0.0
    %7079 = vmatpush1.msra.mxu0 0.0
    %7080 = vmatprep.subr.mxu0 0.0
    %7081 = vmatpush1.msra.mxu0 0.0
    %7082 = vmatprep.subr.mxu0 0.0
    %7083 = vmatpush1.msra.mxu0 0.0
    %7084 = vmatprep.subr.mxu0 0.0
    %7085 = vmatpush1.msra.mxu0 0.0
    %7086 = vmatprep.subr.mxu0 0.0
    %7087 = vmatpush1.msra.mxu0 0.0
    %7088 = vmatprep.subr.mxu0 0.0
    %7089 = vmatpush1.msra.mxu0 0.0
    %7090 = vmatprep.subr.mxu0 0.0
    %7091 = vmatpush1.msra.mxu0 0.0
    %7092 = vmatprep.subr.mxu0 0.0
    %7093 = vmatpush1.msra.mxu0 0.0
    %7094 = vmatprep.subr.mxu0 0.0
    %7095 = vmatpush1.msra.mxu0 0.0
    %7096 = vmatprep.subr.mxu0 0.0
    %7097 = vmatpush1.msra.mxu0 0.0
    %7098 = vmatprep.subr.mxu0 0.0
    %7099 = vmatpush1.msra.mxu0 0.0
    %7100 = vmatprep.subr.mxu0 0.0
    %7101 = vmatpush1.msra.mxu0 0.0
    %7102 = vmatprep.subr.mxu0 0.0
    %7103 = vmatpush1.msra.mxu0 0.0
    %7104 = vmatprep.subr.mxu0 0.0
    %7105 = vmatpush1.msra.mxu0 0.0
    %7106 = vmatprep.subr.mxu0 0.0
    %7107 = vmatpush1.msra.mxu0 0.0
    %7108 = vmatprep.subr.mxu0 0.0
    %7109 = vmatpush1.msra.mxu0 0.0
    %7110 = vmatprep.subr.mxu0 0.0
    %7111 = vmatpush1.msra.mxu0 0.0
    %7112 = vmatprep.subr.mxu0 0.0
    %7113 = vmatpush1.msra.mxu0 0.0
    %7114 = vmatprep.subr.mxu0 0.0
    %7115 = vmatpush1.msra.mxu0 0.0
    %7116 = vmatprep.subr.mxu0 0.0
    %7117 = vmatpush1.msra.mxu0 0.0
    %7118 = vmatprep.subr.mxu0 0.0
    %7119 = vmatpush1.msra.mxu0 0.0
    %7120 = vmatprep.subr.mxu0 0.0
    %7121 = vmatpush1.msra.mxu0 0.0
    %7122 = vmatprep.subr.mxu0 0.0
    %7123 = vmatpush1.msra.mxu0 0.0
    %7124 = vmatprep.subr.mxu0 0.0
    %7125 = vmatpush1.msra.mxu0 0.0
    %7126 = vmatprep.subr.mxu0 0.0
    %7127 = vmatpush1.msra.mxu0 0.0
    %7128 = vmatprep.subr.mxu0 0.0
    %7129 = vmatpush1.msra.mxu0 0.0
    %7130 = vmatprep.subr.mxu0 0.0
    %7131 = vmatpush1.msra.mxu0 0.0
    %7132 = vmatprep.subr.mxu0 0.0
    %7133 = vmatpush1.msra.mxu0 0.0
    %7134 = vmatprep.subr.mxu0 0.0
    %7135 = vmatpush1.msra.mxu0 0.0
    %7136 = vmatprep.subr.mxu0 0.0
    %7137 = vmatpush1.msra.mxu0 0.0
    %7138 = vmatprep.mubr.f32.mxu0 0.0
    %7139 = vmatmul.mubr.f32.gmra.mrb[0].mxu0 %v7072
    %v7140 = vpop.f32.mrb[0].mxu0
    %v7141 = vadd.f32 0.0, %v7140
    %v7142 = vpop.f32.mrb[0].mxu0
    %7143 = vdwg.mxu0
    %7145 = vrot.lane.b32.xlu0 %v4838, 64
    %v7146 = vpop.permute.xlu0 %7145
    %v7149 = vsel %vm221, %v7066, 0
    %7151 = vmatprep.subr.mxu0 0.0
    %7152 = vmatpush1.msra.mxu0 %v7146
    %7153 = vmatprep.subr.mxu0 0.0
    %7154 = vmatpush1.msra.mxu0 0.0
    %7155 = vmatprep.subr.mxu0 0.0
    %7156 = vmatpush1.msra.mxu0 0.0
    %7157 = vmatprep.subr.mxu0 0.0
    %7158 = vmatpush1.msra.mxu0 0.0
    %7159 = vmatprep.subr.mxu0 0.0
    %7160 = vmatpush1.msra.mxu0 0.0
    %7161 = vmatprep.subr.mxu0 0.0
    %7162 = vmatpush1.msra.mxu0 0.0
    %7163 = vmatprep.subr.mxu0 0.0
    %7164 = vmatpush1.msra.mxu0 0.0
    %7165 = vmatprep.subr.mxu0 0.0
    %7166 = vmatpush1.msra.mxu0 0.0
    %7167 = vmatprep.subr.mxu0 0.0
    %7168 = vmatpush1.msra.mxu0 0.0
    %7169 = vmatprep.subr.mxu0 0.0
    %7170 = vmatpush1.msra.mxu0 0.0
    %7171 = vmatprep.subr.mxu0 0.0
    %7172 = vmatpush1.msra.mxu0 0.0
    %7173 = vmatprep.subr.mxu0 0.0
    %7174 = vmatpush1.msra.mxu0 0.0
    %7175 = vmatprep.subr.mxu0 0.0
    %7176 = vmatpush1.msra.mxu0 0.0
    %7177 = vmatprep.subr.mxu0 0.0
    %7178 = vmatpush1.msra.mxu0 0.0
    %7179 = vmatprep.subr.mxu0 0.0
    %7180 = vmatpush1.msra.mxu0 0.0
    %7181 = vmatprep.subr.mxu0 0.0
    %7182 = vmatpush1.msra.mxu0 0.0
    %7183 = vmatprep.subr.mxu0 0.0
    %7184 = vmatpush1.msra.mxu0 0.0
    %7185 = vmatprep.subr.mxu0 0.0
    %7186 = vmatpush1.msra.mxu0 0.0
    %7187 = vmatprep.subr.mxu0 0.0
    %7188 = vmatpush1.msra.mxu0 0.0
    %7189 = vmatprep.subr.mxu0 0.0
    %7190 = vmatpush1.msra.mxu0 0.0
    %7191 = vmatprep.subr.mxu0 0.0
    %7192 = vmatpush1.msra.mxu0 0.0
    %7193 = vmatprep.subr.mxu0 0.0
    %7194 = vmatpush1.msra.mxu0 0.0
    %7195 = vmatprep.subr.mxu0 0.0
    %7196 = vmatpush1.msra.mxu0 0.0
    %7197 = vmatprep.subr.mxu0 0.0
    %7198 = vmatpush1.msra.mxu0 0.0
    %7199 = vmatprep.subr.mxu0 0.0
    %7200 = vmatpush1.msra.mxu0 0.0
    %7201 = vmatprep.subr.mxu0 0.0
    %7202 = vmatpush1.msra.mxu0 0.0
    %7203 = vmatprep.subr.mxu0 0.0
    %7204 = vmatpush1.msra.mxu0 0.0
    %7205 = vmatprep.subr.mxu0 0.0
    %7206 = vmatpush1.msra.mxu0 0.0
    %7207 = vmatprep.subr.mxu0 0.0
    %7208 = vmatpush1.msra.mxu0 0.0
    %7209 = vmatprep.subr.mxu0 0.0
    %7210 = vmatpush1.msra.mxu0 0.0
    %7211 = vmatprep.subr.mxu0 0.0
    %7212 = vmatpush1.msra.mxu0 0.0
    %7213 = vmatprep.subr.mxu0 0.0
    %7214 = vmatpush1.msra.mxu0 0.0
    %7215 = vmatprep.mubr.f32.mxu0 0.0
    %7216 = vmatmul.mubr.f32.gmra.mrb[0].mxu0 %v7149
    %v7217 = vpop.f32.mrb[0].mxu0
    %v7218 = vadd.f32 0.0, %v7217
    %v7219 = vpop.f32.mrb[0].mxu0
    %7220 = vdwg.mxu0
    %v7222 = vsel %vm2065, %v7141, 0
    %v7225 = vsel %vm2065, %v7218, 0
    %7227 = vmatprep.subr.mxu0 0.0
    %7228 = vmatpush1.msra.mxu0 %v4350
    %7229 = vmatprep.subr.mxu0 0.0
    %7230 = vmatpush1.msra.mxu0 %v4351
    %7231 = vmatprep.subr.mxu0 0.0
    %7232 = vmatpush1.msra.mxu0 %v4352
    %7233 = vmatprep.subr.mxu0 0.0
    %7234 = vmatpush1.msra.mxu0 %v4353
    %7235 = vmatprep.subr.mxu0 0.0
    %7236 = vmatpush1.msra.mxu0 %v4354
    %7237 = vmatprep.subr.mxu0 0.0
    %7238 = vmatpush1.msra.mxu0 %v4355
    %7239 = vmatprep.subr.mxu0 0.0
    %7240 = vmatpush1.msra.mxu0 %v4356
    %7241 = vmatprep.subr.mxu0 0.0
    %7242 = vmatpush1.msra.mxu0 %v4357
    %7243 = vmatprep.subr.mxu0 0.0
    %7244 = vmatpush1.msra.mxu0 0.0
    %7245 = vmatprep.subr.mxu0 0.0
    %7246 = vmatpush1.msra.mxu0 0.0
    %7247 = vmatprep.subr.mxu0 0.0
    %7248 = vmatpush1.msra.mxu0 0.0
    %7249 = vmatprep.subr.mxu0 0.0
    %7250 = vmatpush1.msra.mxu0 0.0
    %7251 = vmatprep.subr.mxu0 0.0
    %7252 = vmatpush1.msra.mxu0 0.0
    %7253 = vmatprep.subr.mxu0 0.0
    %7254 = vmatpush1.msra.mxu0 0.0
    %7255 = vmatprep.subr.mxu0 0.0
    %7256 = vmatpush1.msra.mxu0 0.0
    %7257 = vmatprep.subr.mxu0 0.0
    %7258 = vmatpush1.msra.mxu0 0.0
    %7259 = vmatprep.subr.mxu0 0.0
    %7260 = vmatpush1.msra.mxu0 0.0
    %7261 = vmatprep.subr.mxu0 0.0
    %7262 = vmatpush1.msra.mxu0 0.0
    %7263 = vmatprep.subr.mxu0 0.0
    %7264 = vmatpush1.msra.mxu0 0.0
    %7265 = vmatprep.subr.mxu0 0.0
    %7266 = vmatpush1.msra.mxu0 0.0
    %7267 = vmatprep.subr.mxu0 0.0
    %7268 = vmatpush1.msra.mxu0 0.0
    %7269 = vmatprep.subr.mxu0 0.0
    %7270 = vmatpush1.msra.mxu0 0.0
    %7271 = vmatprep.subr.mxu0 0.0
    %7272 = vmatpush1.msra.mxu0 0.0
    %7273 = vmatprep.subr.mxu0 0.0
    %7274 = vmatpush1.msra.mxu0 0.0
    %7275 = vmatprep.subr.mxu0 0.0
    %7276 = vmatpush1.msra.mxu0 0.0
    %7277 = vmatprep.subr.mxu0 0.0
    %7278 = vmatpush1.msra.mxu0 0.0
    %7279 = vmatprep.subr.mxu0 0.0
    %7280 = vmatpush1.msra.mxu0 0.0
    %7281 = vmatprep.subr.mxu0 0.0
    %7282 = vmatpush1.msra.mxu0 0.0
    %7283 = vmatprep.subr.mxu0 0.0
    %7284 = vmatpush1.msra.mxu0 0.0
    %7285 = vmatprep.subr.mxu0 0.0
    %7286 = vmatpush1.msra.mxu0 0.0
    %7287 = vmatprep.subr.mxu0 0.0
    %7288 = vmatpush1.msra.mxu0 0.0
    %7289 = vmatprep.subr.mxu0 0.0
    %7290 = vmatpush1.msra.mxu0 0.0
    %7291 = vmatprep.mubr.f32.mxu0 0.0
    %7292 = vmatmul.mubr.f32.gmra.mrb[0].mxu0 %v7222
    %v7293 = vpop.f32.mrb[0].mxu0
    %v7294 = vadd.f32 0.0, %v7293
    %v7295 = vpop.f32.mrb[0].mxu0
    %7296 = vmatprep.mubr.f32.mxu0 0.0
    %7297 = vmatmul.mubr.f32.gmra.mrb[0].mxu0 %v7225
    %v7298 = vpop.f32.mrb[0].mxu0
    %v7299 = vadd.f32 0.0, %v7298
    %v7300 = vpop.f32.mrb[0].mxu0
    %7301 = vdwg.mxu0
    %v7302 = vadd.f32 %v6885, %v7294
    %v7303 = vadd.f32 %v6886, %v7299
    %v7305 = vsel %vm2065, %v4526, 0
    %v7308 = vsel %vm2065, %v4680, 0
    %7310 = vmatprep.subr.mxu0 0.0
    %7311 = vmatpush1.xpose.msra.mxu0 %v7308
    %7312 = vmatprep.subr.mxu0 0.0
    %7313 = vmatpush1.xpose.msra.mxu0 0.0
    %7314 = vmatprep.subr.mxu0 0.0
    %7315 = vmatpush1.xpose.msra.mxu0 0.0
    %7316 = vmatprep.subr.mxu0 0.0
    %7317 = vmatpush1.xpose.msra.mxu0 0.0
    %7318 = vmatprep.subr.mxu0 0.0
    %7319 = vmatpush1.xpose.msra.mxu0 0.0
    %7320 = vmatprep.subr.mxu0 0.0
    %7321 = vmatpush1.xpose.msra.mxu0 0.0
    %7322 = vmatprep.subr.mxu0 0.0
    %7323 = vmatpush1.xpose.msra.mxu0 0.0
    %7324 = vmatprep.subr.mxu0 0.0
    %7325 = vmatpush1.xpose.msra.mxu0 0.0
    %7326 = vmatprep.subr.mxu0 0.0
    %7327 = vmatpush1.xpose.msra.mxu0 0.0
    %7328 = vmatprep.subr.mxu0 0.0
    %7329 = vmatpush1.xpose.msra.mxu0 0.0
    %7330 = vmatprep.subr.mxu0 0.0
    %7331 = vmatpush1.xpose.msra.mxu0 0.0
    %7332 = vmatprep.subr.mxu0 0.0
    %7333 = vmatpush1.xpose.msra.mxu0 0.0
    %7334 = vmatprep.subr.mxu0 0.0
    %7335 = vmatpush1.xpose.msra.mxu0 0.0
    %7336 = vmatprep.subr.mxu0 0.0
    %7337 = vmatpush1.xpose.msra.mxu0 0.0
    %7338 = vmatprep.subr.mxu0 0.0
    %7339 = vmatpush1.xpose.msra.mxu0 0.0
    %7340 = vmatprep.subr.mxu0 0.0
    %7341 = vmatpush1.xpose.msra.mxu0 0.0
    %7342 = vmatprep.subr.mxu0 0.0
    %7343 = vmatpush1.xpose.msra.mxu0 0.0
    %7344 = vmatprep.subr.mxu0 0.0
    %7345 = vmatpush1.xpose.msra.mxu0 0.0
    %7346 = vmatprep.subr.mxu0 0.0
    %7347 = vmatpush1.xpose.msra.mxu0 0.0
    %7348 = vmatprep.subr.mxu0 0.0
    %7349 = vmatpush1.xpose.msra.mxu0 0.0
    %7350 = vmatprep.subr.mxu0 0.0
    %7351 = vmatpush1.xpose.msra.mxu0 0.0
    %7352 = vmatprep.subr.mxu0 0.0
    %7353 = vmatpush1.xpose.msra.mxu0 0.0
    %7354 = vmatprep.subr.mxu0 0.0
    %7355 = vmatpush1.xpose.msra.mxu0 0.0
    %7356 = vmatprep.subr.mxu0 0.0
    %7357 = vmatpush1.xpose.msra.mxu0 0.0
    %7358 = vmatprep.subr.mxu0 0.0
    %7359 = vmatpush1.xpose.msra.mxu0 0.0
    %7360 = vmatprep.subr.mxu0 0.0
    %7361 = vmatpush1.xpose.msra.mxu0 0.0
    %7362 = vmatprep.subr.mxu0 0.0
    %7363 = vmatpush1.xpose.msra.mxu0 0.0
    %7364 = vmatprep.subr.mxu0 0.0
    %7365 = vmatpush1.xpose.msra.mxu0 0.0
    %7366 = vmatprep.subr.mxu0 0.0
    %7367 = vmatpush1.xpose.msra.mxu0 0.0
    %7368 = vmatprep.subr.mxu0 0.0
    %7369 = vmatpush1.xpose.msra.mxu0 0.0
    %7370 = vmatprep.subr.mxu0 0.0
    %7371 = vmatpush1.xpose.msra.mxu0 0.0
    %7372 = vmatprep.subr.mxu0 0.0
    %7373 = vmatpush1.xpose.msra.mxu0 0.0
    %7374 = vmatprep.mubr.f32.mxu0 0.0
    %7375 = vmatmul.mubr.f32.gmra.mrb[0].mxu0 %v7305
    %v7376 = vpop.f32.mrb[0].mxu0
    %v7377 = vadd.f32 0.0, %v7376
    %v7378 = vpop.f32.mrb[0].mxu0
    %7379 = vdwg.mxu0
    %v7381 = vsel %vm2065, %v4532, 0
    %v7384 = vsel %vm2065, %v4686, 0
    %7386 = vmatprep.subr.mxu0 0.0
    %7387 = vmatpush1.xpose.msra.mxu0 %v7384
    %7388 = vmatprep.subr.mxu0 0.0
    %7389 = vmatpush1.xpose.msra.mxu0 0.0
    %7390 = vmatprep.subr.mxu0 0.0
    %7391 = vmatpush1.xpose.msra.mxu0 0.0
    %7392 = vmatprep.subr.mxu0 0.0
    %7393 = vmatpush1.xpose.msra.mxu0 0.0
    %7394 = vmatprep.subr.mxu0 0.0
    %7395 = vmatpush1.xpose.msra.mxu0 0.0
    %7396 = vmatprep.subr.mxu0 0.0
    %7397 = vmatpush1.xpose.msra.mxu0 0.0
    %7398 = vmatprep.subr.mxu0 0.0
    %7399 = vmatpush1.xpose.msra.mxu0 0.0
    %7400 = vmatprep.subr.mxu0 0.0
    %7401 = vmatpush1.xpose.msra.mxu0 0.0
    %7402 = vmatprep.subr.mxu0 0.0
    %7403 = vmatpush1.xpose.msra.mxu0 0.0
    %7404 = vmatprep.subr.mxu0 0.0
    %7405 = vmatpush1.xpose.msra.mxu0 0.0
    %7406 = vmatprep.subr.mxu0 0.0
    %7407 = vmatpush1.xpose.msra.mxu0 0.0
    %7408 = vmatprep.subr.mxu0 0.0
    %7409 = vmatpush1.xpose.msra.mxu0 0.0
    %7410 = vmatprep.subr.mxu0 0.0
    %7411 = vmatpush1.xpose.msra.mxu0 0.0
    %7412 = vmatprep.subr.mxu0 0.0
    %7413 = vmatpush1.xpose.msra.mxu0 0.0
    %7414 = vmatprep.subr.mxu0 0.0
    %7415 = vmatpush1.xpose.msra.mxu0 0.0
    %7416 = vmatprep.subr.mxu0 0.0
    %7417 = vmatpush1.xpose.msra.mxu0 0.0
    %7418 = vmatprep.subr.mxu0 0.0
    %7419 = vmatpush1.xpose.msra.mxu0 0.0
    %7420 = vmatprep.subr.mxu0 0.0
    %7421 = vmatpush1.xpose.msra.mxu0 0.0
    %7422 = vmatprep.subr.mxu0 0.0
    %7423 = vmatpush1.xpose.msra.mxu0 0.0
    %7424 = vmatprep.subr.mxu0 0.0
    %7425 = vmatpush1.xpose.msra.mxu0 0.0
    %7426 = vmatprep.subr.mxu0 0.0
    %7427 = vmatpush1.xpose.msra.mxu0 0.0
    %7428 = vmatprep.subr.mxu0 0.0
    %7429 = vmatpush1.xpose.msra.mxu0 0.0
    %7430 = vmatprep.subr.mxu0 0.0
    %7431 = vmatpush1.xpose.msra.mxu0 0.0
    %7432 = vmatprep.subr.mxu0 0.0
    %7433 = vmatpush1.xpose.msra.mxu0 0.0
    %7434 = vmatprep.subr.mxu0 0.0
    %7435 = vmatpush1.xpose.msra.mxu0 0.0
    %7436 = vmatprep.subr.mxu0 0.0
    %7437 = vmatpush1.xpose.msra.mxu0 0.0
    %7438 = vmatprep.subr.mxu0 0.0
    %7439 = vmatpush1.xpose.msra.mxu0 0.0
    %7440 = vmatprep.subr.mxu0 0.0
    %7441 = vmatpush1.xpose.msra.mxu0 0.0
    %7442 = vmatprep.subr.mxu0 0.0
    %7443 = vmatpush1.xpose.msra.mxu0 0.0
    %7444 = vmatprep.subr.mxu0 0.0
    %7445 = vmatpush1.xpose.msra.mxu0 0.0
    %7446 = vmatprep.subr.mxu0 0.0
    %7447 = vmatpush1.xpose.msra.mxu0 0.0
    %7448 = vmatprep.subr.mxu0 0.0
    %7449 = vmatpush1.xpose.msra.mxu0 0.0
    %7450 = vmatprep.mubr.f32.mxu0 0.0
    %7451 = vmatmul.mubr.f32.gmra.mrb[0].mxu0 %v7381
    %v7452 = vpop.f32.mrb[0].mxu0
    %v7453 = vadd.f32 0.0, %v7452
    %v7454 = vpop.f32.mrb[0].mxu0
    %7455 = vdwg.mxu0
    %v7456 = vmul.f32 %v7377, 0.125
    %v7457 = vmul.f32 %v7453, 0.125
    %v7458 = vsel %vm221, %v7456, -inf
    %7459 = vmax.xlane.f32.xlu0 %v7458
    %v7460 = vpop.xlane.xlu0 %7459
    %v7461 = vsel %vm221, %v7457, -inf
    %7462 = vmax.xlane.f32.xlu0 %v7461
    %v7463 = vpop.xlane.xlu0 %7462
    %v7464 = vsub.f32 %v7456, %v7460
    %v7465 = vsub.f32 %v7457, %v7463
    %v7466 = vmul.f32 %v7464, 1.442695
    %v7467 = vpow.pop %v7466
    %v7468 = vmul.f32 %v7465, 1.442695
    %v7469 = vpow.pop %v7468
    %v7470 = vsel %vm221, %v7467, 0.0
    %7471 = vadd.xlane.f32.xlu0 %v7470
    %v7472 = vpop.xlane.xlu0 %7471
    %v7473 = vsel %vm221, %v7469, 0.0
    %7474 = vadd.xlane.f32.xlu0 %v7473
    %v7475 = vpop.xlane.xlu0 %7474
    %v7476 = vrcp.pop %v7472
    %v7477 = vrcp.pop %v7475
    %v7478 = vmul.f32 %v7467, %v7476
    %v7479 = vmul.f32 %v7469, %v7477
    %v7481 = vsel %vm221, %v7478, 0
    %7483 = vmatprep.subr.mxu0 0.0
    %7484 = vmatpush1.msra.mxu0 %v4834
    %7485 = vmatprep.subr.mxu0 0.0
    %7486 = vmatpush1.msra.mxu0 0.0
    %7487 = vmatprep.subr.mxu0 0.0
    %7488 = vmatpush1.msra.mxu0 0.0
    %7489 = vmatprep.subr.mxu0 0.0
    %7490 = vmatpush1.msra.mxu0 0.0
    %7491 = vmatprep.subr.mxu0 0.0
    %7492 = vmatpush1.msra.mxu0 0.0
    %7493 = vmatprep.subr.mxu0 0.0
    %7494 = vmatpush1.msra.mxu0 0.0
    %7495 = vmatprep.subr.mxu0 0.0
    %7496 = vmatpush1.msra.mxu0 0.0
    %7497 = vmatprep.subr.mxu0 0.0
    %7498 = vmatpush1.msra.mxu0 0.0
    %7499 = vmatprep.subr.mxu0 0.0
    %7500 = vmatpush1.msra.mxu0 0.0
    %7501 = vmatprep.subr.mxu0 0.0
    %7502 = vmatpush1.msra.mxu0 0.0
    %7503 = vmatprep.subr.mxu0 0.0
    %7504 = vmatpush1.msra.mxu0 0.0
    %7505 = vmatprep.subr.mxu0 0.0
    %7506 = vmatpush1.msra.mxu0 0.0
    %7507 = vmatprep.subr.mxu0 0.0
    %7508 = vmatpush1.msra.mxu0 0.0
    %7509 = vmatprep.subr.mxu0 0.0
    %7510 = vmatpush1.msra.mxu0 0.0
    %7511 = vmatprep.subr.mxu0 0.0
    %7512 = vmatpush1.msra.mxu0 0.0
    %7513 = vmatprep.subr.mxu0 0.0
    %7514 = vmatpush1.msra.mxu0 0.0
    %7515 = vmatprep.subr.mxu0 0.0
    %7516 = vmatpush1.msra.mxu0 0.0
    %7517 = vmatprep.subr.mxu0 0.0
    %7518 = vmatpush1.msra.mxu0 0.0
    %7519 = vmatprep.subr.mxu0 0.0
    %7520 = vmatpush1.msra.mxu0 0.0
    %7521 = vmatprep.subr.mxu0 0.0
    %7522 = vmatpush1.msra.mxu0 0.0
    %7523 = vmatprep.subr.mxu0 0.0
    %7524 = vmatpush1.msra.mxu0 0.0
    %7525 = vmatprep.subr.mxu0 0.0
    %7526 = vmatpush1.msra.mxu0 0.0
    %7527 = vmatprep.subr.mxu0 0.0
    %7528 = vmatpush1.msra.mxu0 0.0
    %7529 = vmatprep.subr.mxu0 0.0
    %7530 = vmatpush1.msra.mxu0 0.0
    %7531 = vmatprep.subr.mxu0 0.0
    %7532 = vmatpush1.msra.mxu0 0.0
    %7533 = vmatprep.subr.mxu0 0.0
    %7534 = vmatpush1.msra.mxu0 0.0
    %7535 = vmatprep.subr.mxu0 0.0
    %7536 = vmatpush1.msra.mxu0 0.0
    %7537 = vmatprep.subr.mxu0 0.0
    %7538 = vmatpush1.msra.mxu0 0.0
    %7539 = vmatprep.subr.mxu0 0.0
    %7540 = vmatpush1.msra.mxu0 0.0
    %7541 = vmatprep.subr.mxu0 0.0
    %7542 = vmatpush1.msra.mxu0 0.0
    %7543 = vmatprep.subr.mxu0 0.0
    %7544 = vmatpush1.msra.mxu0 0.0
    %7545 = vmatprep.subr.mxu0 0.0
    %7546 = vmatpush1.msra.mxu0 0.0
    %7547 = vmatprep.mubr.f32.mxu0 0.0
    %7548 = vmatmul.mubr.f32.gmra.mrb[0].mxu0 %v7481
    %v7549 = vpop.f32.mrb[0].mxu0
    %v7550 = vadd.f32 0.0, %v7549
    %v7551 = vpop.f32.mrb[0].mxu0
    %7552 = vdwg.mxu0
    %v7554 = vsel %vm221, %v7479, 0
    %7556 = vmatprep.subr.mxu0 0.0
    %7557 = vmatpush1.msra.mxu0 %v4840
    %7558 = vmatprep.subr.mxu0 0.0
    %7559 = vmatpush1.msra.mxu0 0.0
    %7560 = vmatprep.subr.mxu0 0.0
    %7561 = vmatpush1.msra.mxu0 0.0
    %7562 = vmatprep.subr.mxu0 0.0
    %7563 = vmatpush1.msra.mxu0 0.0
    %7564 = vmatprep.subr.mxu0 0.0
    %7565 = vmatpush1.msra.mxu0 0.0
    %7566 = vmatprep.subr.mxu0 0.0
    %7567 = vmatpush1.msra.mxu0 0.0
    %7568 = vmatprep.subr.mxu0 0.0
    %7569 = vmatpush1.msra.mxu0 0.0
    %7570 = vmatprep.subr.mxu0 0.0
    %7571 = vmatpush1.msra.mxu0 0.0
    %7572 = vmatprep.subr.mxu0 0.0
    %7573 = vmatpush1.msra.mxu0 0.0
    %7574 = vmatprep.subr.mxu0 0.0
    %7575 = vmatpush1.msra.mxu0 0.0
    %7576 = vmatprep.subr.mxu0 0.0
    %7577 = vmatpush1.msra.mxu0 0.0
    %7578 = vmatprep.subr.mxu0 0.0
    %7579 = vmatpush1.msra.mxu0 0.0
    %7580 = vmatprep.subr.mxu0 0.0
    %7581 = vmatpush1.msra.mxu0 0.0
    %7582 = vmatprep.subr.mxu0 0.0
    %7583 = vmatpush1.msra.mxu0 0.0
    %7584 = vmatprep.subr.mxu0 0.0
    %7585 = vmatpush1.msra.mxu0 0.0
    %7586 = vmatprep.subr.mxu0 0.0
    %7587 = vmatpush1.msra.mxu0 0.0
    %7588 = vmatprep.subr.mxu0 0.0
    %7589 = vmatpush1.msra.mxu0 0.0
    %7590 = vmatprep.subr.mxu0 0.0
    %7591 = vmatpush1.msra.mxu0 0.0
    %7592 = vmatprep.subr.mxu0 0.0
    %7593 = vmatpush1.msra.mxu0 0.0
    %7594 = vmatprep.subr.mxu0 0.0
    %7595 = vmatpush1.msra.mxu0 0.0
    %7596 = vmatprep.subr.mxu0 0.0
    %7597 = vmatpush1.msra.mxu0 0.0
    %7598 = vmatprep.subr.mxu0 0.0
    %7599 = vmatpush1.msra.mxu0 0.0
    %7600 = vmatprep.subr.mxu0 0.0
    %7601 = vmatpush1.msra.mxu0 0.0
    %7602 = vmatprep.subr.mxu0 0.0
    %7603 = vmatpush1.msra.mxu0 0.0
    %7604 = vmatprep.subr.mxu0 0.0
    %7605 = vmatpush1.msra.mxu0 0.0
    %7606 = vmatprep.subr.mxu0 0.0
    %7607 = vmatpush1.msra.mxu0 0.0
    %7608 = vmatprep.subr.mxu0 0.0
    %7609 = vmatpush1.msra.mxu0 0.0
    %7610 = vmatprep.subr.mxu0 0.0
    %7611 = vmatpush1.msra.mxu0 0.0
    %7612 = vmatprep.subr.mxu0 0.0
    %7613 = vmatpush1.msra.mxu0 0.0
    %7614 = vmatprep.subr.mxu0 0.0
    %7615 = vmatpush1.msra.mxu0 0.0
    %7616 = vmatprep.subr.mxu0 0.0
    %7617 = vmatpush1.msra.mxu0 0.0
    %7618 = vmatprep.subr.mxu0 0.0
    %7619 = vmatpush1.msra.mxu0 0.0
    %7620 = vmatprep.mubr.f32.mxu0 0.0
    %7621 = vmatmul.mubr.f32.gmra.mrb[0].mxu0 %v7554
    %v7622 = vpop.f32.mrb[0].mxu0
    %v7623 = vadd.f32 0.0, %v7622
    %v7624 = vpop.f32.mrb[0].mxu0
    %7625 = vdwg.mxu0
    %v7627 = vsel %vm2065, %v7550, 0
    %v7630 = vsel %vm2065, %v7623, 0
    %7632 = vmatprep.subr.mxu0 0.0
    %7633 = vmatpush1.msra.mxu0 %v4358
    %7634 = vmatprep.subr.mxu0 0.0
    %7635 = vmatpush1.msra.mxu0 %v4359
    %7636 = vmatprep.subr.mxu0 0.0
    %7637 = vmatpush1.msra.mxu0 %v4360
    %7638 = vmatprep.subr.mxu0 0.0
    %7639 = vmatpush1.msra.mxu0 %v4361
    %7640 = vmatprep.subr.mxu0 0.0
    %7641 = vmatpush1.msra.mxu0 %v4362
    %7642 = vmatprep.subr.mxu0 0.0
    %7643 = vmatpush1.msra.mxu0 %v4363
    %7644 = vmatprep.subr.mxu0 0.0
    %7645 = vmatpush1.msra.mxu0 %v4364
    %7646 = vmatprep.subr.mxu0 0.0
    %7647 = vmatpush1.msra.mxu0 %v4365
    %7648 = vmatprep.subr.mxu0 0.0
    %7649 = vmatpush1.msra.mxu0 0.0
    %7650 = vmatprep.subr.mxu0 0.0
    %7651 = vmatpush1.msra.mxu0 0.0
    %7652 = vmatprep.subr.mxu0 0.0
    %7653 = vmatpush1.msra.mxu0 0.0
    %7654 = vmatprep.subr.mxu0 0.0
    %7655 = vmatpush1.msra.mxu0 0.0
    %7656 = vmatprep.subr.mxu0 0.0
    %7657 = vmatpush1.msra.mxu0 0.0
    %7658 = vmatprep.subr.mxu0 0.0
    %7659 = vmatpush1.msra.mxu0 0.0
    %7660 = vmatprep.subr.mxu0 0.0
    %7661 = vmatpush1.msra.mxu0 0.0
    %7662 = vmatprep.subr.mxu0 0.0
    %7663 = vmatpush1.msra.mxu0 0.0
    %7664 = vmatprep.subr.mxu0 0.0
    %7665 = vmatpush1.msra.mxu0 0.0
    %7666 = vmatprep.subr.mxu0 0.0
    %7667 = vmatpush1.msra.mxu0 0.0
    %7668 = vmatprep.subr.mxu0 0.0
    %7669 = vmatpush1.msra.mxu0 0.0
    %7670 = vmatprep.subr.mxu0 0.0
    %7671 = vmatpush1.msra.mxu0 0.0
    %7672 = vmatprep.subr.mxu0 0.0
    %7673 = vmatpush1.msra.mxu0 0.0
    %7674 = vmatprep.subr.mxu0 0.0
    %7675 = vmatpush1.msra.mxu0 0.0
    %7676 = vmatprep.subr.mxu0 0.0
    %7677 = vmatpush1.msra.mxu0 0.0
    %7678 = vmatprep.subr.mxu0 0.0
    %7679 = vmatpush1.msra.mxu0 0.0
    %7680 = vmatprep.subr.mxu0 0.0
    %7681 = vmatpush1.msra.mxu0 0.0
    %7682 = vmatprep.subr.mxu0 0.0
    %7683 = vmatpush1.msra.mxu0 0.0
    %7684 = vmatprep.subr.mxu0 0.0
    %7685 = vmatpush1.msra.mxu0 0.0
    %7686 = vmatprep.subr.mxu0 0.0
    %7687 = vmatpush1.msra.mxu0 0.0
    %7688 = vmatprep.subr.mxu0 0.0
    %7689 = vmatpush1.msra.mxu0 0.0
    %7690 = vmatprep.subr.mxu0 0.0
    %7691 = vmatpush1.msra.mxu0 0.0
    %7692 = vmatprep.subr.mxu0 0.0
    %7693 = vmatpush1.msra.mxu0 0.0
    %7694 = vmatprep.subr.mxu0 0.0
    %7695 = vmatpush1.msra.mxu0 0.0
    %7696 = vmatprep.mubr.f32.mxu0 0.0
    %7697 = vmatmul.mubr.f32.gmra.mrb[0].mxu0 %v7627
    %v7698 = vpop.f32.mrb[0].mxu0
    %v7699 = vadd.f32 0.0, %v7698
    %v7700 = vpop.f32.mrb[0].mxu0
    %7701 = vmatprep.mubr.f32.mxu0 0.0
    %7702 = vmatmul.mubr.f32.gmra.mrb[0].mxu0 %v7630
    %v7703 = vpop.f32.mrb[0].mxu0
    %v7704 = vadd.f32 0.0, %v7703
    %v7705 = vpop.f32.mrb[0].mxu0
    %7706 = vdwg.mxu0
    %v7707 = vadd.f32 %v7302, %v7699
    %v7708 = vadd.f32 %v7303, %v7704
    %7709 = vrot.lane.b32.xlu0 %v4526, 64
    %v7710 = vpop.permute.xlu0 %7709
    %7711 = vrot.lane.b32.xlu0 %v4680, 64
    %v7712 = vpop.permute.xlu0 %7711
    %v7713 = vsel %vm2065, %v7710, 0
    %v7715 = vsel %vm2065, %v7712, 0
    %7717 = vmatprep.subr.mxu0 0.0
    %7718 = vmatpush1.xpose.msra.mxu0 %v7715
    %7719 = vmatprep.subr.mxu0 0.0
    %7720 = vmatpush1.xpose.msra.mxu0 0.0
    %7721 = vmatprep.subr.mxu0 0.0
    %7722 = vmatpush1.xpose.msra.mxu0 0.0
    %7723 = vmatprep.subr.mxu0 0.0
    %7724 = vmatpush1.xpose.msra.mxu0 0.0
    %7725 = vmatprep.subr.mxu0 0.0
    %7726 = vmatpush1.xpose.msra.mxu0 0.0
    %7727 = vmatprep.subr.mxu0 0.0
    %7728 = vmatpush1.xpose.msra.mxu0 0.0
    %7729 = vmatprep.subr.mxu0 0.0
    %7730 = vmatpush1.xpose.msra.mxu0 0.0
    %7731 = vmatprep.subr.mxu0 0.0
    %7732 = vmatpush1.xpose.msra.mxu0 0.0
    %7733 = vmatprep.subr.mxu0 0.0
    %7734 = vmatpush1.xpose.msra.mxu0 0.0
    %7735 = vmatprep.subr.mxu0 0.0
    %7736 = vmatpush1.xpose.msra.mxu0 0.0
    %7737 = vmatprep.subr.mxu0 0.0
    %7738 = vmatpush1.xpose.msra.mxu0 0.0
    %7739 = vmatprep.subr.mxu0 0.0
    %7740 = vmatpush1.xpose.msra.mxu0 0.0
    %7741 = vmatprep.subr.mxu0 0.0
    %7742 = vmatpush1.xpose.msra.mxu0 0.0
    %7743 = vmatprep.subr.mxu0 0.0
    %7744 = vmatpush1.xpose.msra.mxu0 0.0
    %7745 = vmatprep.subr.mxu0 0.0
    %7746 = vmatpush1.xpose.msra.mxu0 0.0
    %7747 = vmatprep.subr.mxu0 0.0
    %7748 = vmatpush1.xpose.msra.mxu0 0.0
    %7749 = vmatprep.subr.mxu0 0.0
    %7750 = vmatpush1.xpose.msra.mxu0 0.0
    %7751 = vmatprep.subr.mxu0 0.0
    %7752 = vmatpush1.xpose.msra.mxu0 0.0
    %7753 = vmatprep.subr.mxu0 0.0
    %7754 = vmatpush1.xpose.msra.mxu0 0.0
    %7755 = vmatprep.subr.mxu0 0.0
    %7756 = vmatpush1.xpose.msra.mxu0 0.0
    %7757 = vmatprep.subr.mxu0 0.0
    %7758 = vmatpush1.xpose.msra.mxu0 0.0
    %7759 = vmatprep.subr.mxu0 0.0
    %7760 = vmatpush1.xpose.msra.mxu0 0.0
    %7761 = vmatprep.subr.mxu0 0.0
    %7762 = vmatpush1.xpose.msra.mxu0 0.0
    %7763 = vmatprep.subr.mxu0 0.0
    %7764 = vmatpush1.xpose.msra.mxu0 0.0
    %7765 = vmatprep.subr.mxu0 0.0
    %7766 = vmatpush1.xpose.msra.mxu0 0.0
    %7767 = vmatprep.subr.mxu0 0.0
    %7768 = vmatpush1.xpose.msra.mxu0 0.0
    %7769 = vmatprep.subr.mxu0 0.0
    %7770 = vmatpush1.xpose.msra.mxu0 0.0
    %7771 = vmatprep.subr.mxu0 0.0
    %7772 = vmatpush1.xpose.msra.mxu0 0.0
    %7773 = vmatprep.subr.mxu0 0.0
    %7774 = vmatpush1.xpose.msra.mxu0 0.0
    %7775 = vmatprep.subr.mxu0 0.0
    %7776 = vmatpush1.xpose.msra.mxu0 0.0
    %7777 = vmatprep.subr.mxu0 0.0
    %7778 = vmatpush1.xpose.msra.mxu0 0.0
    %7779 = vmatprep.subr.mxu0 0.0
    %7780 = vmatpush1.xpose.msra.mxu0 0.0
    %7781 = vmatprep.mubr.f32.mxu0 0.0
    %7782 = vmatmul.mubr.f32.gmra.mrb[0].mxu0 %v7713
    %v7783 = vpop.f32.mrb[0].mxu0
    %v7784 = vadd.f32 0.0, %v7783
    %v7785 = vpop.f32.mrb[0].mxu0
    %7786 = vdwg.mxu0
    %7787 = vrot.lane.b32.xlu0 %v4532, 64
    %v7788 = vpop.permute.xlu0 %7787
    %7789 = vrot.lane.b32.xlu0 %v4686, 64
    %v7790 = vpop.permute.xlu0 %7789
    %v7791 = vsel %vm2065, %v7788, 0
    %v7793 = vsel %vm2065, %v7790, 0
    %7795 = vmatprep.subr.mxu0 0.0
    %7796 = vmatpush1.xpose.msra.mxu0 %v7793
    %7797 = vmatprep.subr.mxu0 0.0
    %7798 = vmatpush1.xpose.msra.mxu0 0.0
    %7799 = vmatprep.subr.mxu0 0.0
    %7800 = vmatpush1.xpose.msra.mxu0 0.0
    %7801 = vmatprep.subr.mxu0 0.0
    %7802 = vmatpush1.xpose.msra.mxu0 0.0
    %7803 = vmatprep.subr.mxu0 0.0
    %7804 = vmatpush1.xpose.msra.mxu0 0.0
    %7805 = vmatprep.subr.mxu0 0.0
    %7806 = vmatpush1.xpose.msra.mxu0 0.0
    %7807 = vmatprep.subr.mxu0 0.0
    %7808 = vmatpush1.xpose.msra.mxu0 0.0
    %7809 = vmatprep.subr.mxu0 0.0
    %7810 = vmatpush1.xpose.msra.mxu0 0.0
    %7811 = vmatprep.subr.mxu0 0.0
    %7812 = vmatpush1.xpose.msra.mxu0 0.0
    %7813 = vmatprep.subr.mxu0 0.0
    %7814 = vmatpush1.xpose.msra.mxu0 0.0
    %7815 = vmatprep.subr.mxu0 0.0
    %7816 = vmatpush1.xpose.msra.mxu0 0.0
    %7817 = vmatprep.subr.mxu0 0.0
    %7818 = vmatpush1.xpose.msra.mxu0 0.0
    %7819 = vmatprep.subr.mxu0 0.0
    %7820 = vmatpush1.xpose.msra.mxu0 0.0
    %7821 = vmatprep.subr.mxu0 0.0
    %7822 = vmatpush1.xpose.msra.mxu0 0.0
    %7823 = vmatprep.subr.mxu0 0.0
    %7824 = vmatpush1.xpose.msra.mxu0 0.0
    %7825 = vmatprep.subr.mxu0 0.0
    %7826 = vmatpush1.xpose.msra.mxu0 0.0
    %7827 = vmatprep.subr.mxu0 0.0
    %7828 = vmatpush1.xpose.msra.mxu0 0.0
    %7829 = vmatprep.subr.mxu0 0.0
    %7830 = vmatpush1.xpose.msra.mxu0 0.0
    %7831 = vmatprep.subr.mxu0 0.0
    %7832 = vmatpush1.xpose.msra.mxu0 0.0
    %7833 = vmatprep.subr.mxu0 0.0
    %7834 = vmatpush1.xpose.msra.mxu0 0.0
    %7835 = vmatprep.subr.mxu0 0.0
    %7836 = vmatpush1.xpose.msra.mxu0 0.0
    %7837 = vmatprep.subr.mxu0 0.0
    %7838 = vmatpush1.xpose.msra.mxu0 0.0
    %7839 = vmatprep.subr.mxu0 0.0
    %7840 = vmatpush1.xpose.msra.mxu0 0.0
    %7841 = vmatprep.subr.mxu0 0.0
    %7842 = vmatpush1.xpose.msra.mxu0 0.0
    %7843 = vmatprep.subr.mxu0 0.0
    %7844 = vmatpush1.xpose.msra.mxu0 0.0
    %7845 = vmatprep.subr.mxu0 0.0
    %7846 = vmatpush1.xpose.msra.mxu0 0.0
    %7847 = vmatprep.subr.mxu0 0.0
    %7848 = vmatpush1.xpose.msra.mxu0 0.0
    %7849 = vmatprep.subr.mxu0 0.0
    %7850 = vmatpush1.xpose.msra.mxu0 0.0
    %7851 = vmatprep.subr.mxu0 0.0
    %7852 = vmatpush1.xpose.msra.mxu0 0.0
    %7853 = vmatprep.subr.mxu0 0.0
    %7854 = vmatpush1.xpose.msra.mxu0 0.0
    %7855 = vmatprep.subr.mxu0 0.0
    %7856 = vmatpush1.xpose.msra.mxu0 0.0
    %7857 = vmatprep.subr.mxu0 0.0
    %7858 = vmatpush1.xpose.msra.mxu0 0.0
    %7859 = vmatprep.mubr.f32.mxu0 0.0
    %7860 = vmatmul.mubr.f32.gmra.mrb[0].mxu0 %v7791
    %v7861 = vpop.f32.mrb[0].mxu0
    %v7862 = vadd.f32 0.0, %v7861
    %v7863 = vpop.f32.mrb[0].mxu0
    %7864 = vdwg.mxu0
    %v7865 = vmul.f32 %v7784, 0.125
    %v7866 = vmul.f32 %v7862, 0.125
    %v7867 = vsel %vm221, %v7865, -inf
    %7868 = vmax.xlane.f32.xlu0 %v7867
    %v7869 = vpop.xlane.xlu0 %7868
    %v7870 = vsel %vm221, %v7866, -inf
    %7871 = vmax.xlane.f32.xlu0 %v7870
    %v7872 = vpop.xlane.xlu0 %7871
    %v7873 = vsub.f32 %v7865, %v7869
    %v7874 = vsub.f32 %v7866, %v7872
    %v7875 = vmul.f32 %v7873, 1.442695
    %v7876 = vpow.pop %v7875
    %v7877 = vmul.f32 %v7874, 1.442695
    %v7878 = vpow.pop %v7877
    %v7879 = vsel %vm221, %v7876, 0.0
    %7880 = vadd.xlane.f32.xlu0 %v7879
    %v7881 = vpop.xlane.xlu0 %7880
    %v7882 = vsel %vm221, %v7878, 0.0
    %7883 = vadd.xlane.f32.xlu0 %v7882
    %v7884 = vpop.xlane.xlu0 %7883
    %v7885 = vrcp.pop %v7881
    %v7886 = vrcp.pop %v7884
    %v7887 = vmul.f32 %v7876, %v7885
    %v7888 = vmul.f32 %v7878, %v7886
    %7890 = vrot.lane.b32.xlu0 %v4834, 64
    %v7891 = vpop.permute.xlu0 %7890
    %v7894 = vsel %vm221, %v7887, 0
    %7896 = vmatprep.subr.mxu0 0.0
    %7897 = vmatpush1.msra.mxu0 %v7891
    %7898 = vmatprep.subr.mxu0 0.0
    %7899 = vmatpush1.msra.mxu0 0.0
    %7900 = vmatprep.subr.mxu0 0.0
    %7901 = vmatpush1.msra.mxu0 0.0
    %7902 = vmatprep.subr.mxu0 0.0
    %7903 = vmatpush1.msra.mxu0 0.0
    %7904 = vmatprep.subr.mxu0 0.0
    %7905 = vmatpush1.msra.mxu0 0.0
    %7906 = vmatprep.subr.mxu0 0.0
    %7907 = vmatpush1.msra.mxu0 0.0
    %7908 = vmatprep.subr.mxu0 0.0
    %7909 = vmatpush1.msra.mxu0 0.0
    %7910 = vmatprep.subr.mxu0 0.0
    %7911 = vmatpush1.msra.mxu0 0.0
    %7912 = vmatprep.subr.mxu0 0.0
    %7913 = vmatpush1.msra.mxu0 0.0
    %7914 = vmatprep.subr.mxu0 0.0
    %7915 = vmatpush1.msra.mxu0 0.0
    %7916 = vmatprep.subr.mxu0 0.0
    %7917 = vmatpush1.msra.mxu0 0.0
    %7918 = vmatprep.subr.mxu0 0.0
    %7919 = vmatpush1.msra.mxu0 0.0
    %7920 = vmatprep.subr.mxu0 0.0
    %7921 = vmatpush1.msra.mxu0 0.0
    %7922 = vmatprep.subr.mxu0 0.0
    %7923 = vmatpush1.msra.mxu0 0.0
    %7924 = vmatprep.subr.mxu0 0.0
    %7925 = vmatpush1.msra.mxu0 0.0
    %7926 = vmatprep.subr.mxu0 0.0
    %7927 = vmatpush1.msra.mxu0 0.0
    %7928 = vmatprep.subr.mxu0 0.0
    %7929 = vmatpush1.msra.mxu0 0.0
    %7930 = vmatprep.subr.mxu0 0.0
    %7931 = vmatpush1.msra.mxu0 0.0
    %7932 = vmatprep.subr.mxu0 0.0
    %7933 = vmatpush1.msra.mxu0 0.0
    %7934 = vmatprep.subr.mxu0 0.0
    %7935 = vmatpush1.msra.mxu0 0.0
    %7936 = vmatprep.subr.mxu0 0.0
    %7937 = vmatpush1.msra.mxu0 0.0
    %7938 = vmatprep.subr.mxu0 0.0
    %7939 = vmatpush1.msra.mxu0 0.0
    %7940 = vmatprep.subr.mxu0 0.0
    %7941 = vmatpush1.msra.mxu0 0.0
    %7942 = vmatprep.subr.mxu0 0.0
    %7943 = vmatpush1.msra.mxu0 0.0
    %7944 = vmatprep.subr.mxu0 0.0
    %7945 = vmatpush1.msra.mxu0 0.0
    %7946 = vmatprep.subr.mxu0 0.0
    %7947 = vmatpush1.msra.mxu0 0.0
    %7948 = vmatprep.subr.mxu0 0.0
    %7949 = vmatpush1.msra.mxu0 0.0
    %7950 = vmatprep.subr.mxu0 0.0
    %7951 = vmatpush1.msra.mxu0 0.0
    %7952 = vmatprep.subr.mxu0 0.0
    %7953 = vmatpush1.msra.mxu0 0.0
    %7954 = vmatprep.subr.mxu0 0.0
    %7955 = vmatpush1.msra.mxu0 0.0
    %7956 = vmatprep.subr.mxu0 0.0
    %7957 = vmatpush1.msra.mxu0 0.0
    %7958 = vmatprep.subr.mxu0 0.0
    %7959 = vmatpush1.msra.mxu0 0.0
    %7960 = vmatprep.mubr.f32.mxu0 0.0
    %7961 = vmatmul.mubr.f32.gmra.mrb[0].mxu0 %v7894
    %v7962 = vpop.f32.mrb[0].mxu0
    %v7963 = vadd.f32 0.0, %v7962
    %v7964 = vpop.f32.mrb[0].mxu0
    %7965 = vdwg.mxu0
    %7967 = vrot.lane.b32.xlu0 %v4840, 64
    %v7968 = vpop.permute.xlu0 %7967
    %v7971 = vsel %vm221, %v7888, 0
    %7973 = vmatprep.subr.mxu0 0.0
    %7974 = vmatpush1.msra.mxu0 %v7968
    %7975 = vmatprep.subr.mxu0 0.0
    %7976 = vmatpush1.msra.mxu0 0.0
    %7977 = vmatprep.subr.mxu0 0.0
    %7978 = vmatpush1.msra.mxu0 0.0
    %7979 = vmatprep.subr.mxu0 0.0
    %7980 = vmatpush1.msra.mxu0 0.0
    %7981 = vmatprep.subr.mxu0 0.0
    %7982 = vmatpush1.msra.mxu0 0.0
    %7983 = vmatprep.subr.mxu0 0.0
    %7984 = vmatpush1.msra.mxu0 0.0
    %7985 = vmatprep.subr.mxu0 0.0
    %7986 = vmatpush1.msra.mxu0 0.0
    %7987 = vmatprep.subr.mxu0 0.0
    %7988 = vmatpush1.msra.mxu0 0.0
    %7989 = vmatprep.subr.mxu0 0.0
    %7990 = vmatpush1.msra.mxu0 0.0
    %7991 = vmatprep.subr.mxu0 0.0
    %7992 = vmatpush1.msra.mxu0 0.0
    %7993 = vmatprep.subr.mxu0 0.0
    %7994 = vmatpush1.msra.mxu0 0.0
    %7995 = vmatprep.subr.mxu0 0.0
    %7996 = vmatpush1.msra.mxu0 0.0
    %7997 = vmatprep.subr.mxu0 0.0
    %7998 = vmatpush1.msra.mxu0 0.0
    %7999 = vmatprep.subr.mxu0 0.0
    %8000 = vmatpush1.msra.mxu0 0.0
    %8001 = vmatprep.subr.mxu0 0.0
    %8002 = vmatpush1.msra.mxu0 0.0
    %8003 = vmatprep.subr.mxu0 0.0
    %8004 = vmatpush1.msra.mxu0 0.0
    %8005 = vmatprep.subr.mxu0 0.0
    %8006 = vmatpush1.msra.mxu0 0.0
    %8007 = vmatprep.subr.mxu0 0.0
    %8008 = vmatpush1.msra.mxu0 0.0
    %8009 = vmatprep.subr.mxu0 0.0
    %8010 = vmatpush1.msra.mxu0 0.0
    %8011 = vmatprep.subr.mxu0 0.0
    %8012 = vmatpush1.msra.mxu0 0.0
    %8013 = vmatprep.subr.mxu0 0.0
    %8014 = vmatpush1.msra.mxu0 0.0
    %8015 = vmatprep.subr.mxu0 0.0
    %8016 = vmatpush1.msra.mxu0 0.0
    %8017 = vmatprep.subr.mxu0 0.0
    %8018 = vmatpush1.msra.mxu0 0.0
    %8019 = vmatprep.subr.mxu0 0.0
    %8020 = vmatpush1.msra.mxu0 0.0
    %8021 = vmatprep.subr.mxu0 0.0
    %8022 = vmatpush1.msra.mxu0 0.0
    %8023 = vmatprep.subr.mxu0 0.0
    %8024 = vmatpush1.msra.mxu0 0.0
    %8025 = vmatprep.subr.mxu0 0.0
    %8026 = vmatpush1.msra.mxu0 0.0
    %8027 = vmatprep.subr.mxu0 0.0
    %8028 = vmatpush1.msra.mxu0 0.0
    %8029 = vmatprep.subr.mxu0 0.0
    %8030 = vmatpush1.msra.mxu0 0.0
    %8031 = vmatprep.subr.mxu0 0.0
    %8032 = vmatpush1.msra.mxu0 0.0
    %8033 = vmatprep.subr.mxu0 0.0
    %8034 = vmatpush1.msra.mxu0 0.0
    %8035 = vmatprep.subr.mxu0 0.0
    %8036 = vmatpush1.msra.mxu0 0.0
    %8037 = vmatprep.mubr.f32.mxu0 0.0
    %8038 = vmatmul.mubr.f32.gmra.mrb[0].mxu0 %v7971
    %v8039 = vpop.f32.mrb[0].mxu0
    %v8040 = vadd.f32 0.0, %v8039
    %v8041 = vpop.f32.mrb[0].mxu0
    %8042 = vdwg.mxu0
    %v8044 = vsel %vm2065, %v7963, 0
    %v8047 = vsel %vm2065, %v8040, 0
    %8049 = vmatprep.subr.mxu0 0.0
    %8050 = vmatpush1.msra.mxu0 %v4366
    %8051 = vmatprep.subr.mxu0 0.0
    %8052 = vmatpush1.msra.mxu0 %v4367
    %8053 = vmatprep.subr.mxu0 0.0
    %8054 = vmatpush1.msra.mxu0 %v4368
    %8055 = vmatprep.subr.mxu0 0.0
    %8056 = vmatpush1.msra.mxu0 %v4369
    %8057 = vmatprep.subr.mxu0 0.0
    %8058 = vmatpush1.msra.mxu0 %v4370
    %8059 = vmatprep.subr.mxu0 0.0
    %8060 = vmatpush1.msra.mxu0 %v4371
    %8061 = vmatprep.subr.mxu0 0.0
    %8062 = vmatpush1.msra.mxu0 %v4372
    %8063 = vmatprep.subr.mxu0 0.0
    %8064 = vmatpush1.msra.mxu0 %v4373
    %8065 = vmatprep.subr.mxu0 0.0
    %8066 = vmatpush1.msra.mxu0 0.0
    %8067 = vmatprep.subr.mxu0 0.0
    %8068 = vmatpush1.msra.mxu0 0.0
    %8069 = vmatprep.subr.mxu0 0.0
    %8070 = vmatpush1.msra.mxu0 0.0
    %8071 = vmatprep.subr.mxu0 0.0
    %8072 = vmatpush1.msra.mxu0 0.0
    %8073 = vmatprep.subr.mxu0 0.0
    %8074 = vmatpush1.msra.mxu0 0.0
    %8075 = vmatprep.subr.mxu0 0.0
    %8076 = vmatpush1.msra.mxu0 0.0
    %8077 = vmatprep.subr.mxu0 0.0
    %8078 = vmatpush1.msra.mxu0 0.0
    %8079 = vmatprep.subr.mxu0 0.0
    %8080 = vmatpush1.msra.mxu0 0.0
    %8081 = vmatprep.subr.mxu0 0.0
    %8082 = vmatpush1.msra.mxu0 0.0
    %8083 = vmatprep.subr.mxu0 0.0
    %8084 = vmatpush1.msra.mxu0 0.0
    %8085 = vmatprep.subr.mxu0 0.0
    %8086 = vmatpush1.msra.mxu0 0.0
    %8087 = vmatprep.subr.mxu0 0.0
    %8088 = vmatpush1.msra.mxu0 0.0
    %8089 = vmatprep.subr.mxu0 0.0
    %8090 = vmatpush1.msra.mxu0 0.0
    %8091 = vmatprep.subr.mxu0 0.0
    %8092 = vmatpush1.msra.mxu0 0.0
    %8093 = vmatprep.subr.mxu0 0.0
    %8094 = vmatpush1.msra.mxu0 0.0
    %8095 = vmatprep.subr.mxu0 0.0
    %8096 = vmatpush1.msra.mxu0 0.0
    %8097 = vmatprep.subr.mxu0 0.0
    %8098 = vmatpush1.msra.mxu0 0.0
    %8099 = vmatprep.subr.mxu0 0.0
    %8100 = vmatpush1.msra.mxu0 0.0
    %8101 = vmatprep.subr.mxu0 0.0
    %8102 = vmatpush1.msra.mxu0 0.0
    %8103 = vmatprep.subr.mxu0 0.0
    %8104 = vmatpush1.msra.mxu0 0.0
    %8105 = vmatprep.subr.mxu0 0.0
    %8106 = vmatpush1.msra.mxu0 0.0
    %8107 = vmatprep.subr.mxu0 0.0
    %8108 = vmatpush1.msra.mxu0 0.0
    %8109 = vmatprep.subr.mxu0 0.0
    %8110 = vmatpush1.msra.mxu0 0.0
    %8111 = vmatprep.subr.mxu0 0.0
    %8112 = vmatpush1.msra.mxu0 0.0
    %8113 = vmatprep.mubr.f32.mxu0 0.0
    %8114 = vmatmul.mubr.f32.gmra.mrb[0].mxu0 %v8044
    %v8115 = vpop.f32.mrb[0].mxu0
    %v8116 = vadd.f32 0.0, %v8115
    %v8117 = vpop.f32.mrb[0].mxu0
    %8118 = vmatprep.mubr.f32.mxu0 0.0
    %8119 = vmatmul.mubr.f32.gmra.mrb[0].mxu0 %v8047
    %v8120 = vpop.f32.mrb[0].mxu0
    %v8121 = vadd.f32 0.0, %v8120
    %v8122 = vpop.f32.mrb[0].mxu0
    %8123 = vdwg.mxu0
    %v8124 = vadd.f32 %v7707, %v8116
    %v8125 = vadd.f32 %v7708, %v8121
    %v8126 = vadd.f32 %v8124, %v4260
    %v8127 = vadd.f32 %v8125, %v4261
    %v8128 = vld [vmem:[%s18] sm:$0x1]
    %v8129 = vld [vmem:[%s19] sm:$0x1]
    %v8130 = vsel %vm78, %v8126, 0.0
    %8131 = vadd.xlane.f32.xlu0 %v8130
    %v8132 = vpop.xlane.xlu0 %8131
    %v8133 = vsel %vm78, %v8127, 0.0
    %8134 = vadd.xlane.f32.xlu0 %v8133
    %v8135 = vpop.xlane.xlu0 %8134
    %v8136 = vmul.f32 %v8132, %v85
    %v8137 = vmul.f32 %v8135, %v85
    %v8138 = vsub.f32 %v8126, %v8136
    %v8139 = vsub.f32 %v8127, %v8137
    %v8140 = vmul.f32 %v8138, %v8138
    %v8141 = vmul.f32 %v8139, %v8139
    %v8142 = vsel %vm78, %v8140, 0.0
    %8143 = vadd.xlane.f32.xlu0 %v8142
    %v8144 = vpop.xlane.xlu0 %8143
    %v8145 = vsel %vm78, %v8141, 0.0
    %8146 = vadd.xlane.f32.xlu0 %v8145
    %v8147 = vpop.xlane.xlu0 %8146
    %v8148 = vmul.f32 %v8144, %v85
    %v8149 = vmul.f32 %v8147, %v85
    %v8150 = vadd.f32 %v8148, 1e-06
    %v8151 = vadd.f32 %v8149, 1e-06
    %v8152 = vrsqrt.pop %v8150
    %v8153 = vrsqrt.pop %v8151
    %v8154 = vmul.f32 %v8138, %v8152
    %v8155 = vmul.f32 %v8139, %v8153
    %v8157 = vlaneseq
    %v8158 = vshrl.u32 %v8157, 7
    %v8159 = vsub.s32 0, %v8158
    %v8160 = vrot.slane %v8128, %v8159
    %v8162 = vmul.f32 %v8154, %v8160
    %v8163 = vmul.f32 %v8155, %v8160
    %v8165 = vlaneseq
    %v8166 = vshrl.u32 %v8165, 7
    %v8167 = vsub.s32 0, %v8166
    %v8168 = vrot.slane %v8129, %v8167
    %v8170 = vadd.f32 %v8162, %v8168
    %v8171 = vadd.f32 %v8163, %v8168
    %v8172 = vsel %vm78, %v8170, 0.0
    %v8173 = vrot.slane %v8172, 4
    %v8174 = vadd.f32 %v8172, %v8173
    %v8175 = vrot.slane %v8174, 2
    %v8176 = vadd.f32 %v8174, %v8175
    %v8177 = vrot.slane %v8176, 1
    %v8178 = vadd.f32 %v8176, %v8177
    %v8179 = vsel %vm78, %v8171, 0.0
    %v8180 = vrot.slane %v8179, 4
    %v8181 = vadd.f32 %v8179, %v8180
    %v8182 = vrot.slane %v8181, 2
    %v8183 = vadd.f32 %v8181, %v8182
    %v8184 = vrot.slane %v8183, 1
    %v8185 = vadd.f32 %v8183, %v8184
    %v8186 = vmax.f32 %v8178, 0.0
    %v8187 = vmax.f32 %v8185, 0.0
    %v8188 = vld [vmem:[%s20] sm:$0xff]
    %v8189 = vld [vmem:[%s20 + $0x8] sm:$0xff]
    %v8190 = vld [vmem:[%s20 + $0x10] sm:$0xff]
    %v8191 = vld [vmem:[%s20 + $0x18] sm:$0xff]
    %v8192 = vld [vmem:[%s21] sm:$0x1]
    %v8194 = vlaneseq
    %v8195 = vshrl.u32 %v8194, 7
    %v8196 = vsub.s32 0, %v8195
    %v8197 = vrot.slane %v8192, %v8196
    %vm8201 = vcmask 1041409
    %v8202 = vsel %vm8201, %v8187, %v8186
    %v8203 = vsel %vm78, %v8202, 0
    %8205 = vmatprep.subr.mxu0 0.0
    %8206 = vmatpush1.msra.mxu0 %v8188
    %8207 = vmatprep.subr.mxu0 0.0
    %8208 = vmatpush1.msra.mxu0 %v8189
    %8209 = vmatprep.subr.mxu0 0.0
    %8210 = vmatpush1.msra.mxu0 %v8190
    %8211 = vmatprep.subr.mxu0 0.0
    %8212 = vmatpush1.msra.mxu0 %v8191
    %8213 = vmatprep.subr.mxu0 0.0
    %8214 = vmatpush1.msra.mxu0 0.0
    %8215 = vmatprep.subr.mxu0 0.0
    %8216 = vmatpush1.msra.mxu0 0.0
    %8217 = vmatprep.subr.mxu0 0.0
    %8218 = vmatpush1.msra.mxu0 0.0
    %8219 = vmatprep.subr.mxu0 0.0
    %8220 = vmatpush1.msra.mxu0 0.0
    %8221 = vmatprep.subr.mxu0 0.0
    %8222 = vmatpush1.msra.mxu0 0.0
    %8223 = vmatprep.subr.mxu0 0.0
    %8224 = vmatpush1.msra.mxu0 0.0
    %8225 = vmatprep.subr.mxu0 0.0
    %8226 = vmatpush1.msra.mxu0 0.0
    %8227 = vmatprep.subr.mxu0 0.0
    %8228 = vmatpush1.msra.mxu0 0.0
    %8229 = vmatprep.subr.mxu0 0.0
    %8230 = vmatpush1.msra.mxu0 0.0
    %8231 = vmatprep.subr.mxu0 0.0
    %8232 = vmatpush1.msra.mxu0 0.0
    %8233 = vmatprep.subr.mxu0 0.0
    %8234 = vmatpush1.msra.mxu0 0.0
    %8235 = vmatprep.subr.mxu0 0.0
    %8236 = vmatpush1.msra.mxu0 0.0
    %8237 = vmatprep.subr.mxu0 0.0
    %8238 = vmatpush1.msra.mxu0 0.0
    %8239 = vmatprep.subr.mxu0 0.0
    %8240 = vmatpush1.msra.mxu0 0.0
    %8241 = vmatprep.subr.mxu0 0.0
    %8242 = vmatpush1.msra.mxu0 0.0
    %8243 = vmatprep.subr.mxu0 0.0
    %8244 = vmatpush1.msra.mxu0 0.0
    %8245 = vmatprep.subr.mxu0 0.0
    %8246 = vmatpush1.msra.mxu0 0.0
    %8247 = vmatprep.subr.mxu0 0.0
    %8248 = vmatpush1.msra.mxu0 0.0
    %8249 = vmatprep.subr.mxu0 0.0
    %8250 = vmatpush1.msra.mxu0 0.0
    %8251 = vmatprep.subr.mxu0 0.0
    %8252 = vmatpush1.msra.mxu0 0.0
    %8253 = vmatprep.subr.mxu0 0.0
    %8254 = vmatpush1.msra.mxu0 0.0
    %8255 = vmatprep.subr.mxu0 0.0
    %8256 = vmatpush1.msra.mxu0 0.0
    %8257 = vmatprep.subr.mxu0 0.0
    %8258 = vmatpush1.msra.mxu0 0.0
    %8259 = vmatprep.subr.mxu0 0.0
    %8260 = vmatpush1.msra.mxu0 0.0
    %8261 = vmatprep.subr.mxu0 0.0
    %8262 = vmatpush1.msra.mxu0 0.0
    %8263 = vmatprep.subr.mxu0 0.0
    %8264 = vmatpush1.msra.mxu0 0.0
    %8265 = vmatprep.subr.mxu0 0.0
    %8266 = vmatpush1.msra.mxu0 0.0
    %8267 = vmatprep.subr.mxu0 0.0
    %8268 = vmatpush1.msra.mxu0 0.0
    %8269 = vmatprep.mubr.f32.mxu0 0.0
    %8270 = vmatmul.mubr.f32.gmra.mrb[0].mxu0 %v8203
    %v8271 = vpop.f32.mrb[0].mxu0
    %v8272 = vadd.f32 %v8197, %v8271
    %v8273 = vpop.f32.mrb[0].mxu0
    %8274 = vdwg.mxu0
    %8275 = vst [vmem:[#allocation2] sm:$0x3] %v8272
    // Predicated region
    $region90: #{joint_forward.1} parent=1 // pred_check
      _
    $region91: #{joint_forward.1} parent=1 // pred_check_branch
      %8277 = sbr.rel (0) target = $region93
    $region92: #{joint_forward.1} parent=1 // pred_region
      %s8279 = ssub.s32 32, 32
      %8280 = vsyncadd [#allocation3], %s8279
      %s8282 = sshll.u32 [#allocation2], 4
      %s8283 = int_to_ptr.vmem [resolvable:$true] %s8282
      %8285 = dma.vmem_to_hbm [thread:$0]  %s8283, 32, %s22, [#allocation3]
    $region93: #{joint_forward.1} parent=1 // pred_fallthru
      _
    // Predicated region
    $region94: #{joint_forward.1} parent=1 // pred_check
      _
    $region95: #{joint_forward.1} parent=1 // pred_check_branch
      %8287 = sbr.rel (0) target = $region97
    $region96: #{joint_forward.1} parent=1 // pred_region
      %8288 = dma.done [#allocation3], 32
    $region97: #{joint_forward.1} parent=1 // pred_fallthru
      _
    %8289 = vsyncpa [#allocation3], 1

</llo_original>
